<compile_context>
chip_gen: v7x
topology: tpu7x:2x2x1
jax: 0.10.0
libtpu: 0.0.40
codegen_flags: <defaults>
</compile_context>

<pallas_src>
import functools

import numpy as np

import jax
import jax.numpy as jnp
from jax.experimental import pallas as pl
from jax.experimental.pallas import tpu as pltpu

KSIZE, STRIDE, PAD = 4, 2, 1


# ---------------------------------------------------------------------------
# Parameter preparation (hoisted out of the forward path, runs once)
# ---------------------------------------------------------------------------
def _axis_taps(phase_bit):
    """(kernel index, source shift) pairs for one spatial axis of a
    ConvTranspose2d(k=4, stride=2, pad=1) output phase:  o = 2q+phase = 2i+k-1."""
    taps = []
    for k in range(KSIZE):
        if (k - phase_bit - 1) % 2 == 0:
            taps.append((k, (phase_bit + 1 - k) // 2))
    return taps


def _prepare_layer(w, H, W):
    """Stacked tap weights (exact conv weights, no inflation), per-tap boundary
    masks over the flattened (H*W) lane axis, and static tap metadata."""
    w = np.asarray(w, np.float32)                 # (C_in, C_out, 4, 4) torch layout
    C_in, C_out = w.shape[0], w.shape[1]
    HW = H * W
    wcat = np.zeros((16 * C_out, C_in), np.float32)
    masks = np.zeros((16, 1, HW), np.float32)
    taps = []
    qy = np.arange(H).repeat(W)
    qx = np.tile(np.arange(W), H)
    t = 0
    for py in range(2):
        for px in range(2):
            phase = py * 2 + px
            for kh, sy in _axis_taps(py):
                for kw, sx in _axis_taps(px):
                    wcat[t * C_out:(t + 1) * C_out, :] = w[:, :, kh, kw].T
                    valid = ((qy + sy >= 0) & (qy + sy < H) &
                             (qx + sx >= 0) & (qx + sx < W))
                    masks[t, 0, :] = valid.astype(np.float32)
                    taps.append((phase, sy * W + sx))
                    t += 1
    return wcat, masks, tuple(taps)


def _interleave_matrix(H, W):
    """0/1 lane permutation: phase-blocked lane (p*HW + qy*W + qx) ->
    row-major lane ((2qy+py)*2W + 2qx+px) of the 2x-upsampled image."""
    HW = H * W
    G = np.zeros((4 * HW, 4 * HW), np.float32)
    for py in range(2):
        for px in range(2):
            p = py * 2 + px
            for yy in range(H):
                for xx in range(W):
                    G[p * HW + yy * W + xx,
                      (2 * yy + py) * (2 * W) + (2 * xx + px)] = 1.0
    return G


def prepare_decoder_params(params, latent_dim, num_channels):
    C0, L = num_channels[0], latent_dim
    chans = list(num_channels) + [1]
    w1 = np.asarray(params["w1"], np.float32)     # (L, C0*16)
    b1 = np.asarray(params["b1"], np.float32)
    # W1p[c, e*L+l] = W1[l, c*16+e]  -> fc output lands directly as (C0, 16) slab
    w1p = w1.reshape(L, C0, 16).transpose(1, 2, 0).reshape(C0, 16 * L)
    arrays = {
        "w1p": jnp.asarray(w1p, jnp.float32),
        "b1map": jnp.asarray(b1.reshape(C0, 16), jnp.float32),
    }
    layers = []
    H = W = 4
    for i in range(4):
        C_out = chans[i + 1]
        wcat, masks, taps = _prepare_layer(params[f"wd{i + 1}"], H, W)
        arrays[f"wcat{i + 1}"] = jnp.asarray(wcat, jnp.bfloat16)   # bf16 weights
        arrays[f"mask{i + 1}"] = jnp.asarray(masks, jnp.float32)
        arrays[f"bias{i + 1}"] = jnp.asarray(
            np.asarray(params[f"bd{i + 1}"], np.float32).reshape(C_out, 1))
        has_g = i < 3
        if has_g:
            arrays[f"g{i + 1}"] = jnp.asarray(_interleave_matrix(H, W), jnp.bfloat16)
        layers.append((C_out, H, W, taps, has_g, i < 3))           # last layer: no ReLU
        H, W = 2 * H, 2 * W
    cfg = (L, C0, tuple(layers))
    return arrays, cfg


# ---------------------------------------------------------------------------
# Pallas kernel: full decoder for one batch element
# ---------------------------------------------------------------------------
def _lane_shift(x, s):
    """y[:, i] = x[:, (i + s) % n] for a static s, via two static lane slices."""
    n = x.shape[1]
    s = s % n
    if s == 0:
        return x
    return jnp.concatenate([x[:, s:], x[:, :s]], axis=1)


def _decoder_kernel(cfg, *refs):
    L, C0, layers = cfg
    out_ref = refs[-1]
    it = iter(refs[:-1])
    latb_ref, w1_ref, b1_ref = next(it), next(it), next(it)

    # fc1 + ReLU, produced directly in the (C0, 16) channels x spatial layout.
    a = jnp.dot(w1_ref[...], latb_ref[0], preferred_element_type=jnp.float32)
    a = jnp.maximum(a + b1_ref[...], 0.0)

    for C_out, H, W, taps, has_g, relu in layers:
        wcat_ref, bias_ref, mask_ref = next(it), next(it), next(it)
        g_ref = next(it) if has_g else None
        # One MXU matmul per layer covering all 16 taps.
        p_all = jnp.dot(wcat_ref[...], a.astype(jnp.bfloat16),
                        preferred_element_type=jnp.float32)       # (16*C_out, H*W) f32
        acc = [None, None, None, None]
        for t, (phase, s) in enumerate(taps):
            blk = _lane_shift(p_all[t * C_out:(t + 1) * C_out, :], s) * mask_ref[t]
            acc[phase] = blk if acc[phase] is None else acc[phase] + blk
        o = jnp.concatenate(acc, axis=1) + bias_ref[...]          # (C_out, 4*H*W)
        if relu:
            o = jnp.maximum(o, 0.0)
        if has_g:
            # lane permutation: phase-blocked -> row-major input of the next layer
            a = jnp.dot(o.astype(jnp.bfloat16), g_ref[...],
                        preferred_element_type=jnp.float32)
        else:
            a = o                                                 # last layer: keep phase-blocked

    out_ref[0] = a.astype(out_ref.dtype)                          # lane-dense (1, 4096) store


# ---------------------------------------------------------------------------
# Forward wrapper: one fused pallas_call
# ---------------------------------------------------------------------------
def conv_decoder_forward(latent, arrays, cfg):
    L, C0, layers = cfg
    B = latent.shape[0]

    # kron trick so fc1 is a plain 2-D matmul inside the kernel:
    #   LatB[b, e*L + l, j] = latent[b, l] * (e == j)     (tiny XLA glue)
    eye16 = jnp.eye(16, dtype=jnp.float32)
    latb = (latent.astype(jnp.float32)[:, None, :, None]
            * eye16[None, :, None, :]).reshape(B, 16 * L, 16)

    operands = [latb, arrays["w1p"], arrays["b1map"]]
    for i, (_, _, _, _, has_g, _) in enumerate(layers):
        operands += [arrays[f"wcat{i + 1}"], arrays[f"bias{i + 1}"], arrays[f"mask{i + 1}"]]
        if has_g:
            operands.append(arrays[f"g{i + 1}"])

    in_specs = [pl.BlockSpec((1, 16 * L, 16), lambda b: (b, 0, 0))]
    for op in operands[1:]:
        if op.ndim == 2:
            in_specs.append(pl.BlockSpec(op.shape, lambda b: (0, 0)))
        else:
            in_specs.append(pl.BlockSpec(op.shape, lambda b: (0, 0, 0)))

    C_last, H_last, W_last = layers[-1][0], layers[-1][1], layers[-1][2]
    N_out = 4 * H_last * W_last

    # Advisory cost estimate: DMA (weight bytes) dominated at small batch.
    flops = 2 * C0 * 16 * 16 * L
    for i, (C_out, H, W, _, has_g, _) in enumerate(layers):
        C_in = arrays[f"wcat{i + 1}"].shape[1]
        flops += 2 * 16 * C_out * C_in * H * W
        if has_g:
            flops += 2 * C_out * (4 * H * W) ** 2
    flops *= B
    bytes_accessed = sum(int(np.prod(op.shape)) * op.dtype.itemsize for op in operands)
    bytes_accessed += B * C_last * N_out * 4

    out = pl.pallas_call(
        functools.partial(_decoder_kernel, cfg),
        out_shape=jax.ShapeDtypeStruct((B, C_last, N_out), jnp.float32),
        grid_spec=pltpu.PrefetchScalarGridSpec(
            num_scalar_prefetch=0,
            grid=(B,),
            in_specs=in_specs,
            out_specs=pl.BlockSpec((1, C_last, N_out), lambda b: (b, 0, 0)),
        ),
        compiler_params=pltpu.CompilerParams(
            dimension_semantics=("parallel",),
            vmem_limit_bytes=48 * 1024 * 1024),
        cost_estimate=pl.CostEstimate(flops=int(flops), transcendentals=0,
                                      bytes_accessed=int(bytes_accessed)),
    )(*operands)

    # Tiny XLA depth-to-space: phase-blocked (B, C, 4*H*W) -> NCHW (B, C, 2H, 2W).
    img = out.reshape(B, C_last, 2, 2, H_last, W_last)
    img = img.transpose(0, 1, 4, 2, 5, 3).reshape(B, C_last, 2 * H_last, 2 * W_last)
    return img


# ---------------------------------------------------------------------------
# NumPy reference (straight from the ConvTranspose2d scatter definition)
# ---------------------------------------------------------------------------
def ref_conv_transpose(x, w, b, stride=STRIDE, pad=PAD):
    B, C_in, H, W = x.shape
    _, C_out, kH, kW = w.shape
    Ho = (H - 1) * stride - 2 * pad + kH
    Wo = (W - 1) * stride - 2 * pad + kW
    full = np.zeros((B, C_out, Ho + 2 * pad, Wo + 2 * pad), dtype=np.float32)
    for m in range(H):
        for n in range(W):
            full[:, :, m * stride:m * stride + kH, n * stride:n * stride + kW] += \
                np.einsum("bi,iokl->bokl", x[:, :, m, n], w)
    return full[:, :, pad:pad + Ho, pad:pad + Wo] + b[None, :, None, None]


def ref_forward(latent, params, num_channels):
    h = np.maximum(latent @ params["w1"] + params["b1"], 0.0)
    x = h.reshape(-1, num_channels[0], 4, 4)
    x = np.maximum(ref_conv_transpose(x, params["wd1"], params["bd1"]), 0.0)
    x = np.maximum(ref_conv_transpose(x, params["wd2"], params["bd2"]), 0.0)
    x = np.maximum(ref_conv_transpose(x, params["wd3"], params["bd3"]), 0.0)
    x = ref_conv_transpose(x, params["wd4"], params["bd4"])
    return x


# ---------------------------------------------------------------------------
if __name__ == "__main__":
    latent_dim = 16
    num_channels = [32, 16, 8, 4]        # small stand-in for [256, 128, 64, 32]
    B = 2
    h_dim = num_channels[0] * 16

    key = jax.random.PRNGKey(0)
    keys = jax.random.split(key, 12)

    params = {
        "w1": jax.random.normal(keys[0], (latent_dim, h_dim), jnp.float32) * 0.1,
        "b1": jax.random.normal(keys[1], (h_dim,), jnp.float32) * 0.05,
    }
    chans = num_channels + [1]
    for i in range(4):
        fan = chans[i] * KSIZE * KSIZE
        params[f"wd{i + 1}"] = (
            jax.random.normal(keys[2 + 2 * i], (chans[i], chans[i + 1], KSIZE, KSIZE),
                              jnp.float32) / np.sqrt(fan))
        params[f"bd{i + 1}"] = (
            jax.random.normal(keys[3 + 2 * i], (chans[i + 1],), jnp.float32) * 0.05)

    latent = jax.random.normal(keys[10], (B, latent_dim), jnp.float32)

    # weight transforms hoisted out of the forward path (computed once)
    np_params = {k: np.asarray(v) for k, v in params.items()}
    arrays, cfg = prepare_decoder_params(np_params, latent_dim, num_channels)

    fwd = jax.jit(functools.partial(conv_decoder_forward, cfg=cfg))
    out = jax.block_until_ready(fwd(latent, arrays))
    assert out.shape == (B, 1, 64, 64), out.shape

    # verify against the definitional f32 NumPy reference
    # (tolerance loosened to 2e-2 because the big constants are stored/fed in
    #  bfloat16 with f32 accumulation, per the perf review)
    ref = ref_forward(np.asarray(latent), np_params, num_channels)
    np.testing.assert_allclose(np.asarray(out), ref, rtol=2e-2, atol=2e-2)

    print("KERNEL_OK")
</pallas_src>

<mosaic_0001>
module attributes {stable_mosaic.version = 11 : i64} {
  func.func @_decoder_kernel(%arg0: i32, %arg1: memref<1x256x16xf32, #tpu.memory_space<vmem>>, %arg2: memref<32x256xf32, #tpu.memory_space<vmem>>, %arg3: memref<32x16xf32, #tpu.memory_space<vmem>>, %arg4: memref<256x32xbf16, #tpu.memory_space<vmem>>, %arg5: memref<16x1xf32, #tpu.memory_space<vmem>>, %arg6: memref<16x1x16xf32, #tpu.memory_space<vmem>>, %arg7: memref<64x64xbf16, #tpu.memory_space<vmem>>, %arg8: memref<128x16xbf16, #tpu.memory_space<vmem>>, %arg9: memref<8x1xf32, #tpu.memory_space<vmem>>, %arg10: memref<16x1x64xf32, #tpu.memory_space<vmem>>, %arg11: memref<256x256xbf16, #tpu.memory_space<vmem>>, %arg12: memref<64x8xbf16, #tpu.memory_space<vmem>>, %arg13: memref<4x1xf32, #tpu.memory_space<vmem>>, %arg14: memref<16x1x256xf32, #tpu.memory_space<vmem>>, %arg15: memref<1024x1024xbf16, #tpu.memory_space<vmem>>, %arg16: memref<16x4xbf16, #tpu.memory_space<vmem>>, %arg17: memref<1x1xf32, #tpu.memory_space<vmem>>, %arg18: memref<16x1x1024xf32, #tpu.memory_space<vmem>>, %arg19: memref<1x1x4096xf32, #tpu.memory_space<vmem>>) attributes {dimension_semantics = [#tpu.dimension_semantics<parallel>], iteration_bounds = array<i64: 2>, scalar_prefetch = 0 : i64, scratch_operands = 0 : i64, tpu.core_type = #tpu.core_type<tc>, window_params = [{transform_indices = @transform_0, window_bounds = array<i64: 1, 256, 16>}, {pipeline_mode = #tpu.pipeline_mode<synchronous>, transform_indices = @transform_1, window_bounds = array<i64: 32, 256>}, {pipeline_mode = #tpu.pipeline_mode<synchronous>, transform_indices = @transform_2, window_bounds = array<i64: 32, 16>}, {pipeline_mode = #tpu.pipeline_mode<synchronous>, transform_indices = @transform_3, window_bounds = array<i64: 256, 32>}, {pipeline_mode = #tpu.pipeline_mode<synchronous>, transform_indices = @transform_4, window_bounds = array<i64: 16, 1>}, {pipeline_mode = #tpu.pipeline_mode<synchronous>, transform_indices = @transform_5, window_bounds = array<i64: 16, 1, 16>}, {pipeline_mode = #tpu.pipeline_mode<synchronous>, transform_indices = @transform_6, window_bounds = array<i64: 64, 64>}, {pipeline_mode = #tpu.pipeline_mode<synchronous>, transform_indices = @transform_7, window_bounds = array<i64: 128, 16>}, {pipeline_mode = #tpu.pipeline_mode<synchronous>, transform_indices = @transform_8, window_bounds = array<i64: 8, 1>}, {pipeline_mode = #tpu.pipeline_mode<synchronous>, transform_indices = @transform_9, window_bounds = array<i64: 16, 1, 64>}, {pipeline_mode = #tpu.pipeline_mode<synchronous>, transform_indices = @transform_10, window_bounds = array<i64: 256, 256>}, {pipeline_mode = #tpu.pipeline_mode<synchronous>, transform_indices = @transform_11, window_bounds = array<i64: 64, 8>}, {pipeline_mode = #tpu.pipeline_mode<synchronous>, transform_indices = @transform_12, window_bounds = array<i64: 4, 1>}, {pipeline_mode = #tpu.pipeline_mode<synchronous>, transform_indices = @transform_13, window_bounds = array<i64: 16, 1, 256>}, {pipeline_mode = #tpu.pipeline_mode<synchronous>, transform_indices = @transform_14, window_bounds = array<i64: 1024, 1024>}, {pipeline_mode = #tpu.pipeline_mode<synchronous>, transform_indices = @transform_15, window_bounds = array<i64: 16, 4>}, {pipeline_mode = #tpu.pipeline_mode<synchronous>, transform_indices = @transform_16, window_bounds = array<i64: 1, 1>}, {pipeline_mode = #tpu.pipeline_mode<synchronous>, transform_indices = @transform_17, window_bounds = array<i64: 16, 1, 1024>}, {transform_indices = @transform_18, window_bounds = array<i64: 1, 1, 4096>}]} {
    %c0 = arith.constant 0 : index
    %c0_0 = arith.constant 0 : index
    %0 = vector.load %arg2[%c0, %c0_0] : memref<32x256xf32, #tpu.memory_space<vmem>>, vector<32x256xf32>
    %c0_1 = arith.constant 0 : index
    %c0_2 = arith.constant 0 : index
    %c0_3 = arith.constant 0 : index
    %1 = vector.load %arg1[%c0_1, %c0_2, %c0_3] : memref<1x256x16xf32, #tpu.memory_space<vmem>>, vector<1x256x16xf32>
    %2 = vector.shape_cast %1 : vector<1x256x16xf32> to vector<256x16xf32>
    %cst = arith.constant dense<0.000000e+00> : vector<32x16xf32>
    %3 = tpu.matmul %0, %2, %cst {dimension_numbers = #tpu.dot_dimension_numbers<[1], [0], [0], [1], [0, 0, 1, 1], [], []>} : vector<32x256xf32>, vector<256x16xf32>, vector<32x16xf32> -> vector<32x16xf32>
    %c0_4 = arith.constant 0 : index
    %c0_5 = arith.constant 0 : index
    %4 = vector.load %arg3[%c0_4, %c0_5] : memref<32x16xf32, #tpu.memory_space<vmem>>, vector<32x16xf32>
    %5 = arith.addf %3, %4 : vector<32x16xf32>
    %cst_6 = arith.constant 0.000000e+00 : f32
    %6 = vector.broadcast %cst_6 : f32 to vector<32x16xf32>
    %7 = arith.maximumf %5, %6 : vector<32x16xf32>
    %c0_7 = arith.constant 0 : index
    %c0_8 = arith.constant 0 : index
    %8 = vector.load %arg4[%c0_7, %c0_8] : memref<256x32xbf16, #tpu.memory_space<vmem>>, vector<256x32xbf16>
    %9 = arith.truncf %7 : vector<32x16xf32> to vector<32x16xbf16>
    %cst_9 = arith.constant dense<0.000000e+00> : vector<256x16xf32>
    %10 = tpu.matmul %8, %9, %cst_9 {dimension_numbers = #tpu.dot_dimension_numbers<[1], [0], [0], [1], [0, 0, 1, 1], [], []>} : vector<256x32xbf16>, vector<32x16xbf16>, vector<256x16xf32> -> vector<256x16xf32>
    %11 = vector.extract_strided_slice %10 {offsets = [0, 0], sizes = [16, 16], strides = [1, 1]} : vector<256x16xf32> to vector<16x16xf32>
    %c0_10 = arith.constant 0 : index
    %c0_11 = arith.constant 0 : index
    %c0_12 = arith.constant 0 : index
    %12 = vector.load %arg6[%c0_10, %c0_11, %c0_12] : memref<16x1x16xf32, #tpu.memory_space<vmem>>, vector<1x1x16xf32>
    %13 = vector.shape_cast %12 : vector<1x1x16xf32> to vector<1x16xf32>
    %14 = vector.broadcast %13 : vector<1x16xf32> to vector<16x16xf32>
    %15 = arith.mulf %11, %14 : vector<16x16xf32>
    %16 = vector.extract_strided_slice %10 {offsets = [16, 0], sizes = [16, 16], strides = [1, 1]} : vector<256x16xf32> to vector<16x16xf32>
    %17 = vector.extract_strided_slice %16 {offsets = [0, 15], sizes = [16, 1], strides = [1, 1]} : vector<16x16xf32> to vector<16x1xf32>
    %18 = vector.extract_strided_slice %16 {offsets = [0, 0], sizes = [16, 15], strides = [1, 1]} : vector<16x16xf32> to vector<16x15xf32>
    %19 = tpu.concatenate %17, %18 in 1 : vector<16x1xf32>, vector<16x15xf32> -> vector<16x16xf32>
    %c1 = arith.constant 1 : index
    %c0_13 = arith.constant 0 : index
    %c0_14 = arith.constant 0 : index
    %20 = vector.load %arg6[%c1, %c0_13, %c0_14] : memref<16x1x16xf32, #tpu.memory_space<vmem>>, vector<1x1x16xf32>
    %21 = vector.shape_cast %20 : vector<1x1x16xf32> to vector<1x16xf32>
    %22 = vector.broadcast %21 : vector<1x16xf32> to vector<16x16xf32>
    %23 = arith.mulf %19, %22 : vector<16x16xf32>
    %24 = arith.addf %15, %23 : vector<16x16xf32>
    %25 = vector.extract_strided_slice %10 {offsets = [32, 0], sizes = [16, 16], strides = [1, 1]} : vector<256x16xf32> to vector<16x16xf32>
    %26 = vector.extract_strided_slice %25 {offsets = [0, 12], sizes = [16, 4], strides = [1, 1]} : vector<16x16xf32> to vector<16x4xf32>
    %27 = vector.extract_strided_slice %25 {offsets = [0, 0], sizes = [16, 12], strides = [1, 1]} : vector<16x16xf32> to vector<16x12xf32>
    %28 = tpu.concatenate %26, %27 in 1 : vector<16x4xf32>, vector<16x12xf32> -> vector<16x16xf32>
    %c2 = arith.constant 2 : index
    %c0_15 = arith.constant 0 : index
    %c0_16 = arith.constant 0 : index
    %29 = vector.load %arg6[%c2, %c0_15, %c0_16] : memref<16x1x16xf32, #tpu.memory_space<vmem>>, vector<1x1x16xf32>
    %30 = vector.shape_cast %29 : vector<1x1x16xf32> to vector<1x16xf32>
    %31 = vector.broadcast %30 : vector<1x16xf32> to vector<16x16xf32>
    %32 = arith.mulf %28, %31 : vector<16x16xf32>
    %33 = arith.addf %24, %32 : vector<16x16xf32>
    %34 = vector.extract_strided_slice %10 {offsets = [48, 0], sizes = [16, 16], strides = [1, 1]} : vector<256x16xf32> to vector<16x16xf32>
    %35 = vector.extract_strided_slice %34 {offsets = [0, 11], sizes = [16, 5], strides = [1, 1]} : vector<16x16xf32> to vector<16x5xf32>
    %36 = vector.extract_strided_slice %34 {offsets = [0, 0], sizes = [16, 11], strides = [1, 1]} : vector<16x16xf32> to vector<16x11xf32>
    %37 = tpu.concatenate %35, %36 in 1 : vector<16x5xf32>, vector<16x11xf32> -> vector<16x16xf32>
    %c3 = arith.constant 3 : index
    %c0_17 = arith.constant 0 : index
    %c0_18 = arith.constant 0 : index
    %38 = vector.load %arg6[%c3, %c0_17, %c0_18] : memref<16x1x16xf32, #tpu.memory_space<vmem>>, vector<1x1x16xf32>
    %39 = vector.shape_cast %38 : vector<1x1x16xf32> to vector<1x16xf32>
    %40 = vector.broadcast %39 : vector<1x16xf32> to vector<16x16xf32>
    %41 = arith.mulf %37, %40 : vector<16x16xf32>
    %42 = arith.addf %33, %41 : vector<16x16xf32>
    %43 = vector.extract_strided_slice %10 {offsets = [64, 0], sizes = [16, 16], strides = [1, 1]} : vector<256x16xf32> to vector<16x16xf32>
    %44 = vector.extract_strided_slice %43 {offsets = [0, 1], sizes = [16, 15], strides = [1, 1]} : vector<16x16xf32> to vector<16x15xf32>
    %45 = vector.extract_strided_slice %43 {offsets = [0, 0], sizes = [16, 1], strides = [1, 1]} : vector<16x16xf32> to vector<16x1xf32>
    %46 = tpu.concatenate %44, %45 in 1 : vector<16x15xf32>, vector<16x1xf32> -> vector<16x16xf32>
    %c4 = arith.constant 4 : index
    %c0_19 = arith.constant 0 : index
    %c0_20 = arith.constant 0 : index
    %47 = vector.load %arg6[%c4, %c0_19, %c0_20] : memref<16x1x16xf32, #tpu.memory_space<vmem>>, vector<1x1x16xf32>
    %48 = vector.shape_cast %47 : vector<1x1x16xf32> to vector<1x16xf32>
    %49 = vector.broadcast %48 : vector<1x16xf32> to vector<16x16xf32>
    %50 = arith.mulf %46, %49 : vector<16x16xf32>
    %51 = vector.extract_strided_slice %10 {offsets = [80, 0], sizes = [16, 16], strides = [1, 1]} : vector<256x16xf32> to vector<16x16xf32>
    %c5 = arith.constant 5 : index
    %c0_21 = arith.constant 0 : index
    %c0_22 = arith.constant 0 : index
    %52 = vector.load %arg6[%c5, %c0_21, %c0_22] : memref<16x1x16xf32, #tpu.memory_space<vmem>>, vector<1x1x16xf32>
    %53 = vector.shape_cast %52 : vector<1x1x16xf32> to vector<1x16xf32>
    %54 = vector.broadcast %53 : vector<1x16xf32> to vector<16x16xf32>
    %55 = arith.mulf %51, %54 : vector<16x16xf32>
    %56 = arith.addf %50, %55 : vector<16x16xf32>
    %57 = vector.extract_strided_slice %10 {offsets = [96, 0], sizes = [16, 16], strides = [1, 1]} : vector<256x16xf32> to vector<16x16xf32>
    %58 = vector.extract_strided_slice %57 {offsets = [0, 13], sizes = [16, 3], strides = [1, 1]} : vector<16x16xf32> to vector<16x3xf32>
    %59 = vector.extract_strided_slice %57 {offsets = [0, 0], sizes = [16, 13], strides = [1, 1]} : vector<16x16xf32> to vector<16x13xf32>
    %60 = tpu.concatenate %58, %59 in 1 : vector<16x3xf32>, vector<16x13xf32> -> vector<16x16xf32>
    %c6 = arith.constant 6 : index
    %c0_23 = arith.constant 0 : index
    %c0_24 = arith.constant 0 : index
    %61 = vector.load %arg6[%c6, %c0_23, %c0_24] : memref<16x1x16xf32, #tpu.memory_space<vmem>>, vector<1x1x16xf32>
    %62 = vector.shape_cast %61 : vector<1x1x16xf32> to vector<1x16xf32>
    %63 = vector.broadcast %62 : vector<1x16xf32> to vector<16x16xf32>
    %64 = arith.mulf %60, %63 : vector<16x16xf32>
    %65 = arith.addf %56, %64 : vector<16x16xf32>
    %66 = vector.extract_strided_slice %10 {offsets = [112, 0], sizes = [16, 16], strides = [1, 1]} : vector<256x16xf32> to vector<16x16xf32>
    %67 = vector.extract_strided_slice %66 {offsets = [0, 12], sizes = [16, 4], strides = [1, 1]} : vector<16x16xf32> to vector<16x4xf32>
    %68 = vector.extract_strided_slice %66 {offsets = [0, 0], sizes = [16, 12], strides = [1, 1]} : vector<16x16xf32> to vector<16x12xf32>
    %69 = tpu.concatenate %67, %68 in 1 : vector<16x4xf32>, vector<16x12xf32> -> vector<16x16xf32>
    %c7 = arith.constant 7 : index
    %c0_25 = arith.constant 0 : index
    %c0_26 = arith.constant 0 : index
    %70 = vector.load %arg6[%c7, %c0_25, %c0_26] : memref<16x1x16xf32, #tpu.memory_space<vmem>>, vector<1x1x16xf32>
    %71 = vector.shape_cast %70 : vector<1x1x16xf32> to vector<1x16xf32>
    %72 = vector.broadcast %71 : vector<1x16xf32> to vector<16x16xf32>
    %73 = arith.mulf %69, %72 : vector<16x16xf32>
    %74 = arith.addf %65, %73 : vector<16x16xf32>
    %75 = vector.extract_strided_slice %10 {offsets = [128, 0], sizes = [16, 16], strides = [1, 1]} : vector<256x16xf32> to vector<16x16xf32>
    %76 = vector.extract_strided_slice %75 {offsets = [0, 4], sizes = [16, 12], strides = [1, 1]} : vector<16x16xf32> to vector<16x12xf32>
    %77 = vector.extract_strided_slice %75 {offsets = [0, 0], sizes = [16, 4], strides = [1, 1]} : vector<16x16xf32> to vector<16x4xf32>
    %78 = tpu.concatenate %76, %77 in 1 : vector<16x12xf32>, vector<16x4xf32> -> vector<16x16xf32>
    %c8 = arith.constant 8 : index
    %c0_27 = arith.constant 0 : index
    %c0_28 = arith.constant 0 : index
    %79 = vector.load %arg6[%c8, %c0_27, %c0_28] : memref<16x1x16xf32, #tpu.memory_space<vmem>>, vector<1x1x16xf32>
    %80 = vector.shape_cast %79 : vector<1x1x16xf32> to vector<1x16xf32>
    %81 = vector.broadcast %80 : vector<1x16xf32> to vector<16x16xf32>
    %82 = arith.mulf %78, %81 : vector<16x16xf32>
    %83 = vector.extract_strided_slice %10 {offsets = [144, 0], sizes = [16, 16], strides = [1, 1]} : vector<256x16xf32> to vector<16x16xf32>
    %84 = vector.extract_strided_slice %83 {offsets = [0, 3], sizes = [16, 13], strides = [1, 1]} : vector<16x16xf32> to vector<16x13xf32>
    %85 = vector.extract_strided_slice %83 {offsets = [0, 0], sizes = [16, 3], strides = [1, 1]} : vector<16x16xf32> to vector<16x3xf32>
    %86 = tpu.concatenate %84, %85 in 1 : vector<16x13xf32>, vector<16x3xf32> -> vector<16x16xf32>
    %c9 = arith.constant 9 : index
    %c0_29 = arith.constant 0 : index
    %c0_30 = arith.constant 0 : index
    %87 = vector.load %arg6[%c9, %c0_29, %c0_30] : memref<16x1x16xf32, #tpu.memory_space<vmem>>, vector<1x1x16xf32>
    %88 = vector.shape_cast %87 : vector<1x1x16xf32> to vector<1x16xf32>
    %89 = vector.broadcast %88 : vector<1x16xf32> to vector<16x16xf32>
    %90 = arith.mulf %86, %89 : vector<16x16xf32>
    %91 = arith.addf %82, %90 : vector<16x16xf32>
    %92 = vector.extract_strided_slice %10 {offsets = [160, 0], sizes = [16, 16], strides = [1, 1]} : vector<256x16xf32> to vector<16x16xf32>
    %c10 = arith.constant 10 : index
    %c0_31 = arith.constant 0 : index
    %c0_32 = arith.constant 0 : index
    %93 = vector.load %arg6[%c10, %c0_31, %c0_32] : memref<16x1x16xf32, #tpu.memory_space<vmem>>, vector<1x1x16xf32>
    %94 = vector.shape_cast %93 : vector<1x1x16xf32> to vector<1x16xf32>
    %95 = vector.broadcast %94 : vector<1x16xf32> to vector<16x16xf32>
    %96 = arith.mulf %92, %95 : vector<16x16xf32>
    %97 = arith.addf %91, %96 : vector<16x16xf32>
    %98 = vector.extract_strided_slice %10 {offsets = [176, 0], sizes = [16, 16], strides = [1, 1]} : vector<256x16xf32> to vector<16x16xf32>
    %99 = vector.extract_strided_slice %98 {offsets = [0, 15], sizes = [16, 1], strides = [1, 1]} : vector<16x16xf32> to vector<16x1xf32>
    %100 = vector.extract_strided_slice %98 {offsets = [0, 0], sizes = [16, 15], strides = [1, 1]} : vector<16x16xf32> to vector<16x15xf32>
    %101 = tpu.concatenate %99, %100 in 1 : vector<16x1xf32>, vector<16x15xf32> -> vector<16x16xf32>
    %c11 = arith.constant 11 : index
    %c0_33 = arith.constant 0 : index
    %c0_34 = arith.constant 0 : index
    %102 = vector.load %arg6[%c11, %c0_33, %c0_34] : memref<16x1x16xf32, #tpu.memory_space<vmem>>, vector<1x1x16xf32>
    %103 = vector.shape_cast %102 : vector<1x1x16xf32> to vector<1x16xf32>
    %104 = vector.broadcast %103 : vector<1x16xf32> to vector<16x16xf32>
    %105 = arith.mulf %101, %104 : vector<16x16xf32>
    %106 = arith.addf %97, %105 : vector<16x16xf32>
    %107 = vector.extract_strided_slice %10 {offsets = [192, 0], sizes = [16, 16], strides = [1, 1]} : vector<256x16xf32> to vector<16x16xf32>
    %108 = vector.extract_strided_slice %107 {offsets = [0, 5], sizes = [16, 11], strides = [1, 1]} : vector<16x16xf32> to vector<16x11xf32>
    %109 = vector.extract_strided_slice %107 {offsets = [0, 0], sizes = [16, 5], strides = [1, 1]} : vector<16x16xf32> to vector<16x5xf32>
    %110 = tpu.concatenate %108, %109 in 1 : vector<16x11xf32>, vector<16x5xf32> -> vector<16x16xf32>
    %c12 = arith.constant 12 : index
    %c0_35 = arith.constant 0 : index
    %c0_36 = arith.constant 0 : index
    %111 = vector.load %arg6[%c12, %c0_35, %c0_36] : memref<16x1x16xf32, #tpu.memory_space<vmem>>, vector<1x1x16xf32>
    %112 = vector.shape_cast %111 : vector<1x1x16xf32> to vector<1x16xf32>
    %113 = vector.broadcast %112 : vector<1x16xf32> to vector<16x16xf32>
    %114 = arith.mulf %110, %113 : vector<16x16xf32>
    %115 = vector.extract_strided_slice %10 {offsets = [208, 0], sizes = [16, 16], strides = [1, 1]} : vector<256x16xf32> to vector<16x16xf32>
    %116 = vector.extract_strided_slice %115 {offsets = [0, 4], sizes = [16, 12], strides = [1, 1]} : vector<16x16xf32> to vector<16x12xf32>
    %117 = vector.extract_strided_slice %115 {offsets = [0, 0], sizes = [16, 4], strides = [1, 1]} : vector<16x16xf32> to vector<16x4xf32>
    %118 = tpu.concatenate %116, %117 in 1 : vector<16x12xf32>, vector<16x4xf32> -> vector<16x16xf32>
    %c13 = arith.constant 13 : index
    %c0_37 = arith.constant 0 : index
    %c0_38 = arith.constant 0 : index
    %119 = vector.load %arg6[%c13, %c0_37, %c0_38] : memref<16x1x16xf32, #tpu.memory_space<vmem>>, vector<1x1x16xf32>
    %120 = vector.shape_cast %119 : vector<1x1x16xf32> to vector<1x16xf32>
    %121 = vector.broadcast %120 : vector<1x16xf32> to vector<16x16xf32>
    %122 = arith.mulf %118, %121 : vector<16x16xf32>
    %123 = arith.addf %114, %122 : vector<16x16xf32>
    %124 = vector.extract_strided_slice %10 {offsets = [224, 0], sizes = [16, 16], strides = [1, 1]} : vector<256x16xf32> to vector<16x16xf32>
    %125 = vector.extract_strided_slice %124 {offsets = [0, 1], sizes = [16, 15], strides = [1, 1]} : vector<16x16xf32> to vector<16x15xf32>
    %126 = vector.extract_strided_slice %124 {offsets = [0, 0], sizes = [16, 1], strides = [1, 1]} : vector<16x16xf32> to vector<16x1xf32>
    %127 = tpu.concatenate %125, %126 in 1 : vector<16x15xf32>, vector<16x1xf32> -> vector<16x16xf32>
    %c14 = arith.constant 14 : index
    %c0_39 = arith.constant 0 : index
    %c0_40 = arith.constant 0 : index
    %128 = vector.load %arg6[%c14, %c0_39, %c0_40] : memref<16x1x16xf32, #tpu.memory_space<vmem>>, vector<1x1x16xf32>
    %129 = vector.shape_cast %128 : vector<1x1x16xf32> to vector<1x16xf32>
    %130 = vector.broadcast %129 : vector<1x16xf32> to vector<16x16xf32>
    %131 = arith.mulf %127, %130 : vector<16x16xf32>
    %132 = arith.addf %123, %131 : vector<16x16xf32>
    %133 = vector.extract_strided_slice %10 {offsets = [240, 0], sizes = [16, 16], strides = [1, 1]} : vector<256x16xf32> to vector<16x16xf32>
    %c15 = arith.constant 15 : index
    %c0_41 = arith.constant 0 : index
    %c0_42 = arith.constant 0 : index
    %134 = vector.load %arg6[%c15, %c0_41, %c0_42] : memref<16x1x16xf32, #tpu.memory_space<vmem>>, vector<1x1x16xf32>
    %135 = vector.shape_cast %134 : vector<1x1x16xf32> to vector<1x16xf32>
    %136 = vector.broadcast %135 : vector<1x16xf32> to vector<16x16xf32>
    %137 = arith.mulf %133, %136 : vector<16x16xf32>
    %138 = arith.addf %132, %137 : vector<16x16xf32>
    %139 = tpu.concatenate %42, %74, %106, %138 in 1 : vector<16x16xf32>, vector<16x16xf32>, vector<16x16xf32>, vector<16x16xf32> -> vector<16x64xf32>
    %c0_43 = arith.constant 0 : index
    %c0_44 = arith.constant 0 : index
    %140 = vector.load %arg5[%c0_43, %c0_44] : memref<16x1xf32, #tpu.memory_space<vmem>>, vector<16x1xf32>
    %141 = vector.broadcast %140 : vector<16x1xf32> to vector<16x64xf32>
    %142 = arith.addf %139, %141 : vector<16x64xf32>
    %cst_45 = arith.constant 0.000000e+00 : f32
    %143 = vector.broadcast %cst_45 : f32 to vector<16x64xf32>
    %144 = arith.maximumf %142, %143 : vector<16x64xf32>
    %145 = arith.truncf %144 : vector<16x64xf32> to vector<16x64xbf16>
    %c0_46 = arith.constant 0 : index
    %c0_47 = arith.constant 0 : index
    %146 = vector.load %arg7[%c0_46, %c0_47] : memref<64x64xbf16, #tpu.memory_space<vmem>>, vector<64x64xbf16>
    %cst_48 = arith.constant dense<0.000000e+00> : vector<16x64xf32>
    %147 = tpu.matmul %145, %146, %cst_48 {dimension_numbers = #tpu.dot_dimension_numbers<[1], [0], [0], [1], [0, 0, 1, 1], [], []>} : vector<16x64xbf16>, vector<64x64xbf16>, vector<16x64xf32> -> vector<16x64xf32>
    %c0_49 = arith.constant 0 : index
    %c0_50 = arith.constant 0 : index
    %148 = vector.load %arg8[%c0_49, %c0_50] : memref<128x16xbf16, #tpu.memory_space<vmem>>, vector<128x16xbf16>
    %149 = arith.truncf %147 : vector<16x64xf32> to vector<16x64xbf16>
    %cst_51 = arith.constant dense<0.000000e+00> : vector<128x64xf32>
    %150 = tpu.matmul %148, %149, %cst_51 {dimension_numbers = #tpu.dot_dimension_numbers<[1], [0], [0], [1], [0, 0, 1, 1], [], []>} : vector<128x16xbf16>, vector<16x64xbf16>, vector<128x64xf32> -> vector<128x64xf32>
    %151 = vector.extract_strided_slice %150 {offsets = [0, 0], sizes = [8, 64], strides = [1, 1]} : vector<128x64xf32> to vector<8x64xf32>
    %c0_52 = arith.constant 0 : index
    %c0_53 = arith.constant 0 : index
    %c0_54 = arith.constant 0 : index
    %152 = vector.load %arg10[%c0_52, %c0_53, %c0_54] : memref<16x1x64xf32, #tpu.memory_space<vmem>>, vector<1x1x64xf32>
    %153 = vector.shape_cast %152 : vector<1x1x64xf32> to vector<1x64xf32>
    %154 = vector.broadcast %153 : vector<1x64xf32> to vector<8x64xf32>
    %155 = arith.mulf %151, %154 : vector<8x64xf32>
    %156 = vector.extract_strided_slice %150 {offsets = [8, 0], sizes = [8, 64], strides = [1, 1]} : vector<128x64xf32> to vector<8x64xf32>
    %157 = vector.extract_strided_slice %156 {offsets = [0, 63], sizes = [8, 1], strides = [1, 1]} : vector<8x64xf32> to vector<8x1xf32>
    %158 = vector.extract_strided_slice %156 {offsets = [0, 0], sizes = [8, 63], strides = [1, 1]} : vector<8x64xf32> to vector<8x63xf32>
    %159 = tpu.concatenate %157, %158 in 1 : vector<8x1xf32>, vector<8x63xf32> -> vector<8x64xf32>
    %c1_55 = arith.constant 1 : index
    %c0_56 = arith.constant 0 : index
    %c0_57 = arith.constant 0 : index
    %160 = vector.load %arg10[%c1_55, %c0_56, %c0_57] : memref<16x1x64xf32, #tpu.memory_space<vmem>>, vector<1x1x64xf32>
    %161 = vector.shape_cast %160 : vector<1x1x64xf32> to vector<1x64xf32>
    %162 = vector.broadcast %161 : vector<1x64xf32> to vector<8x64xf32>
    %163 = arith.mulf %159, %162 : vector<8x64xf32>
    %164 = arith.addf %155, %163 : vector<8x64xf32>
    %165 = vector.extract_strided_slice %150 {offsets = [16, 0], sizes = [8, 64], strides = [1, 1]} : vector<128x64xf32> to vector<8x64xf32>
    %166 = vector.extract_strided_slice %165 {offsets = [0, 56], sizes = [8, 8], strides = [1, 1]} : vector<8x64xf32> to vector<8x8xf32>
    %167 = vector.extract_strided_slice %165 {offsets = [0, 0], sizes = [8, 56], strides = [1, 1]} : vector<8x64xf32> to vector<8x56xf32>
    %168 = tpu.concatenate %166, %167 in 1 : vector<8x8xf32>, vector<8x56xf32> -> vector<8x64xf32>
    %c2_58 = arith.constant 2 : index
    %c0_59 = arith.constant 0 : index
    %c0_60 = arith.constant 0 : index
    %169 = vector.load %arg10[%c2_58, %c0_59, %c0_60] : memref<16x1x64xf32, #tpu.memory_space<vmem>>, vector<1x1x64xf32>
    %170 = vector.shape_cast %169 : vector<1x1x64xf32> to vector<1x64xf32>
    %171 = vector.broadcast %170 : vector<1x64xf32> to vector<8x64xf32>
    %172 = arith.mulf %168, %171 : vector<8x64xf32>
    %173 = arith.addf %164, %172 : vector<8x64xf32>
    %174 = vector.extract_strided_slice %150 {offsets = [24, 0], sizes = [8, 64], strides = [1, 1]} : vector<128x64xf32> to vector<8x64xf32>
    %175 = vector.extract_strided_slice %174 {offsets = [0, 55], sizes = [8, 9], strides = [1, 1]} : vector<8x64xf32> to vector<8x9xf32>
    %176 = vector.extract_strided_slice %174 {offsets = [0, 0], sizes = [8, 55], strides = [1, 1]} : vector<8x64xf32> to vector<8x55xf32>
    %177 = tpu.concatenate %175, %176 in 1 : vector<8x9xf32>, vector<8x55xf32> -> vector<8x64xf32>
    %c3_61 = arith.constant 3 : index
    %c0_62 = arith.constant 0 : index
    %c0_63 = arith.constant 0 : index
    %178 = vector.load %arg10[%c3_61, %c0_62, %c0_63] : memref<16x1x64xf32, #tpu.memory_space<vmem>>, vector<1x1x64xf32>
    %179 = vector.shape_cast %178 : vector<1x1x64xf32> to vector<1x64xf32>
    %180 = vector.broadcast %179 : vector<1x64xf32> to vector<8x64xf32>
    %181 = arith.mulf %177, %180 : vector<8x64xf32>
    %182 = arith.addf %173, %181 : vector<8x64xf32>
    %183 = vector.extract_strided_slice %150 {offsets = [32, 0], sizes = [8, 64], strides = [1, 1]} : vector<128x64xf32> to vector<8x64xf32>
    %184 = vector.extract_strided_slice %183 {offsets = [0, 1], sizes = [8, 63], strides = [1, 1]} : vector<8x64xf32> to vector<8x63xf32>
    %185 = vector.extract_strided_slice %183 {offsets = [0, 0], sizes = [8, 1], strides = [1, 1]} : vector<8x64xf32> to vector<8x1xf32>
    %186 = tpu.concatenate %184, %185 in 1 : vector<8x63xf32>, vector<8x1xf32> -> vector<8x64xf32>
    %c4_64 = arith.constant 4 : index
    %c0_65 = arith.constant 0 : index
    %c0_66 = arith.constant 0 : index
    %187 = vector.load %arg10[%c4_64, %c0_65, %c0_66] : memref<16x1x64xf32, #tpu.memory_space<vmem>>, vector<1x1x64xf32>
    %188 = vector.shape_cast %187 : vector<1x1x64xf32> to vector<1x64xf32>
    %189 = vector.broadcast %188 : vector<1x64xf32> to vector<8x64xf32>
    %190 = arith.mulf %186, %189 : vector<8x64xf32>
    %191 = vector.extract_strided_slice %150 {offsets = [40, 0], sizes = [8, 64], strides = [1, 1]} : vector<128x64xf32> to vector<8x64xf32>
    %c5_67 = arith.constant 5 : index
    %c0_68 = arith.constant 0 : index
    %c0_69 = arith.constant 0 : index
    %192 = vector.load %arg10[%c5_67, %c0_68, %c0_69] : memref<16x1x64xf32, #tpu.memory_space<vmem>>, vector<1x1x64xf32>
    %193 = vector.shape_cast %192 : vector<1x1x64xf32> to vector<1x64xf32>
    %194 = vector.broadcast %193 : vector<1x64xf32> to vector<8x64xf32>
    %195 = arith.mulf %191, %194 : vector<8x64xf32>
    %196 = arith.addf %190, %195 : vector<8x64xf32>
    %197 = vector.extract_strided_slice %150 {offsets = [48, 0], sizes = [8, 64], strides = [1, 1]} : vector<128x64xf32> to vector<8x64xf32>
    %198 = vector.extract_strided_slice %197 {offsets = [0, 57], sizes = [8, 7], strides = [1, 1]} : vector<8x64xf32> to vector<8x7xf32>
    %199 = vector.extract_strided_slice %197 {offsets = [0, 0], sizes = [8, 57], strides = [1, 1]} : vector<8x64xf32> to vector<8x57xf32>
    %200 = tpu.concatenate %198, %199 in 1 : vector<8x7xf32>, vector<8x57xf32> -> vector<8x64xf32>
    %c6_70 = arith.constant 6 : index
    %c0_71 = arith.constant 0 : index
    %c0_72 = arith.constant 0 : index
    %201 = vector.load %arg10[%c6_70, %c0_71, %c0_72] : memref<16x1x64xf32, #tpu.memory_space<vmem>>, vector<1x1x64xf32>
    %202 = vector.shape_cast %201 : vector<1x1x64xf32> to vector<1x64xf32>
    %203 = vector.broadcast %202 : vector<1x64xf32> to vector<8x64xf32>
    %204 = arith.mulf %200, %203 : vector<8x64xf32>
    %205 = arith.addf %196, %204 : vector<8x64xf32>
    %206 = vector.extract_strided_slice %150 {offsets = [56, 0], sizes = [8, 64], strides = [1, 1]} : vector<128x64xf32> to vector<8x64xf32>
    %207 = vector.extract_strided_slice %206 {offsets = [0, 56], sizes = [8, 8], strides = [1, 1]} : vector<8x64xf32> to vector<8x8xf32>
    %208 = vector.extract_strided_slice %206 {offsets = [0, 0], sizes = [8, 56], strides = [1, 1]} : vector<8x64xf32> to vector<8x56xf32>
    %209 = tpu.concatenate %207, %208 in 1 : vector<8x8xf32>, vector<8x56xf32> -> vector<8x64xf32>
    %c7_73 = arith.constant 7 : index
    %c0_74 = arith.constant 0 : index
    %c0_75 = arith.constant 0 : index
    %210 = vector.load %arg10[%c7_73, %c0_74, %c0_75] : memref<16x1x64xf32, #tpu.memory_space<vmem>>, vector<1x1x64xf32>
    %211 = vector.shape_cast %210 : vector<1x1x64xf32> to vector<1x64xf32>
    %212 = vector.broadcast %211 : vector<1x64xf32> to vector<8x64xf32>
    %213 = arith.mulf %209, %212 : vector<8x64xf32>
    %214 = arith.addf %205, %213 : vector<8x64xf32>
    %215 = vector.extract_strided_slice %150 {offsets = [64, 0], sizes = [8, 64], strides = [1, 1]} : vector<128x64xf32> to vector<8x64xf32>
    %216 = vector.extract_strided_slice %215 {offsets = [0, 8], sizes = [8, 56], strides = [1, 1]} : vector<8x64xf32> to vector<8x56xf32>
    %217 = vector.extract_strided_slice %215 {offsets = [0, 0], sizes = [8, 8], strides = [1, 1]} : vector<8x64xf32> to vector<8x8xf32>
    %218 = tpu.concatenate %216, %217 in 1 : vector<8x56xf32>, vector<8x8xf32> -> vector<8x64xf32>
    %c8_76 = arith.constant 8 : index
    %c0_77 = arith.constant 0 : index
    %c0_78 = arith.constant 0 : index
    %219 = vector.load %arg10[%c8_76, %c0_77, %c0_78] : memref<16x1x64xf32, #tpu.memory_space<vmem>>, vector<1x1x64xf32>
    %220 = vector.shape_cast %219 : vector<1x1x64xf32> to vector<1x64xf32>
    %221 = vector.broadcast %220 : vector<1x64xf32> to vector<8x64xf32>
    %222 = arith.mulf %218, %221 : vector<8x64xf32>
    %223 = vector.extract_strided_slice %150 {offsets = [72, 0], sizes = [8, 64], strides = [1, 1]} : vector<128x64xf32> to vector<8x64xf32>
    %224 = vector.extract_strided_slice %223 {offsets = [0, 7], sizes = [8, 57], strides = [1, 1]} : vector<8x64xf32> to vector<8x57xf32>
    %225 = vector.extract_strided_slice %223 {offsets = [0, 0], sizes = [8, 7], strides = [1, 1]} : vector<8x64xf32> to vector<8x7xf32>
    %226 = tpu.concatenate %224, %225 in 1 : vector<8x57xf32>, vector<8x7xf32> -> vector<8x64xf32>
    %c9_79 = arith.constant 9 : index
    %c0_80 = arith.constant 0 : index
    %c0_81 = arith.constant 0 : index
    %227 = vector.load %arg10[%c9_79, %c0_80, %c0_81] : memref<16x1x64xf32, #tpu.memory_space<vmem>>, vector<1x1x64xf32>
    %228 = vector.shape_cast %227 : vector<1x1x64xf32> to vector<1x64xf32>
    %229 = vector.broadcast %228 : vector<1x64xf32> to vector<8x64xf32>
    %230 = arith.mulf %226, %229 : vector<8x64xf32>
    %231 = arith.addf %222, %230 : vector<8x64xf32>
    %232 = vector.extract_strided_slice %150 {offsets = [80, 0], sizes = [8, 64], strides = [1, 1]} : vector<128x64xf32> to vector<8x64xf32>
    %c10_82 = arith.constant 10 : index
    %c0_83 = arith.constant 0 : index
    %c0_84 = arith.constant 0 : index
    %233 = vector.load %arg10[%c10_82, %c0_83, %c0_84] : memref<16x1x64xf32, #tpu.memory_space<vmem>>, vector<1x1x64xf32>
    %234 = vector.shape_cast %233 : vector<1x1x64xf32> to vector<1x64xf32>
    %235 = vector.broadcast %234 : vector<1x64xf32> to vector<8x64xf32>
    %236 = arith.mulf %232, %235 : vector<8x64xf32>
    %237 = arith.addf %231, %236 : vector<8x64xf32>
    %238 = vector.extract_strided_slice %150 {offsets = [88, 0], sizes = [8, 64], strides = [1, 1]} : vector<128x64xf32> to vector<8x64xf32>
    %239 = vector.extract_strided_slice %238 {offsets = [0, 63], sizes = [8, 1], strides = [1, 1]} : vector<8x64xf32> to vector<8x1xf32>
    %240 = vector.extract_strided_slice %238 {offsets = [0, 0], sizes = [8, 63], strides = [1, 1]} : vector<8x64xf32> to vector<8x63xf32>
    %241 = tpu.concatenate %239, %240 in 1 : vector<8x1xf32>, vector<8x63xf32> -> vector<8x64xf32>
    %c11_85 = arith.constant 11 : index
    %c0_86 = arith.constant 0 : index
    %c0_87 = arith.constant 0 : index
    %242 = vector.load %arg10[%c11_85, %c0_86, %c0_87] : memref<16x1x64xf32, #tpu.memory_space<vmem>>, vector<1x1x64xf32>
    %243 = vector.shape_cast %242 : vector<1x1x64xf32> to vector<1x64xf32>
    %244 = vector.broadcast %243 : vector<1x64xf32> to vector<8x64xf32>
    %245 = arith.mulf %241, %244 : vector<8x64xf32>
    %246 = arith.addf %237, %245 : vector<8x64xf32>
    %247 = vector.extract_strided_slice %150 {offsets = [96, 0], sizes = [8, 64], strides = [1, 1]} : vector<128x64xf32> to vector<8x64xf32>
    %248 = vector.extract_strided_slice %247 {offsets = [0, 9], sizes = [8, 55], strides = [1, 1]} : vector<8x64xf32> to vector<8x55xf32>
    %249 = vector.extract_strided_slice %247 {offsets = [0, 0], sizes = [8, 9], strides = [1, 1]} : vector<8x64xf32> to vector<8x9xf32>
    %250 = tpu.concatenate %248, %249 in 1 : vector<8x55xf32>, vector<8x9xf32> -> vector<8x64xf32>
    %c12_88 = arith.constant 12 : index
    %c0_89 = arith.constant 0 : index
    %c0_90 = arith.constant 0 : index
    %251 = vector.load %arg10[%c12_88, %c0_89, %c0_90] : memref<16x1x64xf32, #tpu.memory_space<vmem>>, vector<1x1x64xf32>
    %252 = vector.shape_cast %251 : vector<1x1x64xf32> to vector<1x64xf32>
    %253 = vector.broadcast %252 : vector<1x64xf32> to vector<8x64xf32>
    %254 = arith.mulf %250, %253 : vector<8x64xf32>
    %255 = vector.extract_strided_slice %150 {offsets = [104, 0], sizes = [8, 64], strides = [1, 1]} : vector<128x64xf32> to vector<8x64xf32>
    %256 = vector.extract_strided_slice %255 {offsets = [0, 8], sizes = [8, 56], strides = [1, 1]} : vector<8x64xf32> to vector<8x56xf32>
    %257 = vector.extract_strided_slice %255 {offsets = [0, 0], sizes = [8, 8], strides = [1, 1]} : vector<8x64xf32> to vector<8x8xf32>
    %258 = tpu.concatenate %256, %257 in 1 : vector<8x56xf32>, vector<8x8xf32> -> vector<8x64xf32>
    %c13_91 = arith.constant 13 : index
    %c0_92 = arith.constant 0 : index
    %c0_93 = arith.constant 0 : index
    %259 = vector.load %arg10[%c13_91, %c0_92, %c0_93] : memref<16x1x64xf32, #tpu.memory_space<vmem>>, vector<1x1x64xf32>
    %260 = vector.shape_cast %259 : vector<1x1x64xf32> to vector<1x64xf32>
    %261 = vector.broadcast %260 : vector<1x64xf32> to vector<8x64xf32>
    %262 = arith.mulf %258, %261 : vector<8x64xf32>
    %263 = arith.addf %254, %262 : vector<8x64xf32>
    %264 = vector.extract_strided_slice %150 {offsets = [112, 0], sizes = [8, 64], strides = [1, 1]} : vector<128x64xf32> to vector<8x64xf32>
    %265 = vector.extract_strided_slice %264 {offsets = [0, 1], sizes = [8, 63], strides = [1, 1]} : vector<8x64xf32> to vector<8x63xf32>
    %266 = vector.extract_strided_slice %264 {offsets = [0, 0], sizes = [8, 1], strides = [1, 1]} : vector<8x64xf32> to vector<8x1xf32>
    %267 = tpu.concatenate %265, %266 in 1 : vector<8x63xf32>, vector<8x1xf32> -> vector<8x64xf32>
    %c14_94 = arith.constant 14 : index
    %c0_95 = arith.constant 0 : index
    %c0_96 = arith.constant 0 : index
    %268 = vector.load %arg10[%c14_94, %c0_95, %c0_96] : memref<16x1x64xf32, #tpu.memory_space<vmem>>, vector<1x1x64xf32>
    %269 = vector.shape_cast %268 : vector<1x1x64xf32> to vector<1x64xf32>
    %270 = vector.broadcast %269 : vector<1x64xf32> to vector<8x64xf32>
    %271 = arith.mulf %267, %270 : vector<8x64xf32>
    %272 = arith.addf %263, %271 : vector<8x64xf32>
    %273 = vector.extract_strided_slice %150 {offsets = [120, 0], sizes = [8, 64], strides = [1, 1]} : vector<128x64xf32> to vector<8x64xf32>
    %c15_97 = arith.constant 15 : index
    %c0_98 = arith.constant 0 : index
    %c0_99 = arith.constant 0 : index
    %274 = vector.load %arg10[%c15_97, %c0_98, %c0_99] : memref<16x1x64xf32, #tpu.memory_space<vmem>>, vector<1x1x64xf32>
    %275 = vector.shape_cast %274 : vector<1x1x64xf32> to vector<1x64xf32>
    %276 = vector.broadcast %275 : vector<1x64xf32> to vector<8x64xf32>
    %277 = arith.mulf %273, %276 : vector<8x64xf32>
    %278 = arith.addf %272, %277 : vector<8x64xf32>
    %279 = tpu.concatenate %182, %214, %246, %278 in 1 : vector<8x64xf32>, vector<8x64xf32>, vector<8x64xf32>, vector<8x64xf32> -> vector<8x256xf32>
    %c0_100 = arith.constant 0 : index
    %c0_101 = arith.constant 0 : index
    %280 = vector.load %arg9[%c0_100, %c0_101] : memref<8x1xf32, #tpu.memory_space<vmem>>, vector<8x1xf32>
    %281 = vector.broadcast %280 : vector<8x1xf32> to vector<8x256xf32>
    %282 = arith.addf %279, %281 : vector<8x256xf32>
    %cst_102 = arith.constant 0.000000e+00 : f32
    %283 = vector.broadcast %cst_102 : f32 to vector<8x256xf32>
    %284 = arith.maximumf %282, %283 : vector<8x256xf32>
    %285 = arith.truncf %284 : vector<8x256xf32> to vector<8x256xbf16>
    %c0_103 = arith.constant 0 : index
    %c0_104 = arith.constant 0 : index
    %286 = vector.load %arg11[%c0_103, %c0_104] : memref<256x256xbf16, #tpu.memory_space<vmem>>, vector<256x256xbf16>
    %cst_105 = arith.constant dense<0.000000e+00> : vector<8x256xf32>
    %287 = tpu.matmul %285, %286, %cst_105 {dimension_numbers = #tpu.dot_dimension_numbers<[1], [0], [0], [1], [0, 0, 1, 1], [], []>} : vector<8x256xbf16>, vector<256x256xbf16>, vector<8x256xf32> -> vector<8x256xf32>
    %c0_106 = arith.constant 0 : index
    %c0_107 = arith.constant 0 : index
    %288 = vector.load %arg12[%c0_106, %c0_107] : memref<64x8xbf16, #tpu.memory_space<vmem>>, vector<64x8xbf16>
    %289 = arith.truncf %287 : vector<8x256xf32> to vector<8x256xbf16>
    %cst_108 = arith.constant dense<0.000000e+00> : vector<64x256xf32>
    %290 = tpu.matmul %288, %289, %cst_108 {dimension_numbers = #tpu.dot_dimension_numbers<[1], [0], [0], [1], [0, 0, 1, 1], [], []>} : vector<64x8xbf16>, vector<8x256xbf16>, vector<64x256xf32> -> vector<64x256xf32>
    %291 = vector.extract_strided_slice %290 {offsets = [0, 0], sizes = [4, 256], strides = [1, 1]} : vector<64x256xf32> to vector<4x256xf32>
    %c0_109 = arith.constant 0 : index
    %c0_110 = arith.constant 0 : index
    %c0_111 = arith.constant 0 : index
    %292 = vector.load %arg14[%c0_109, %c0_110, %c0_111] : memref<16x1x256xf32, #tpu.memory_space<vmem>>, vector<1x1x256xf32>
    %293 = vector.shape_cast %292 : vector<1x1x256xf32> to vector<1x256xf32>
    %294 = vector.broadcast %293 : vector<1x256xf32> to vector<4x256xf32>
    %295 = arith.mulf %291, %294 : vector<4x256xf32>
    %296 = vector.extract_strided_slice %290 {offsets = [4, 0], sizes = [4, 256], strides = [1, 1]} : vector<64x256xf32> to vector<4x256xf32>
    %297 = vector.extract_strided_slice %296 {offsets = [0, 255], sizes = [4, 1], strides = [1, 1]} : vector<4x256xf32> to vector<4x1xf32>
    %298 = vector.extract_strided_slice %296 {offsets = [0, 0], sizes = [4, 255], strides = [1, 1]} : vector<4x256xf32> to vector<4x255xf32>
    %299 = tpu.concatenate %297, %298 in 1 : vector<4x1xf32>, vector<4x255xf32> -> vector<4x256xf32>
    %c1_112 = arith.constant 1 : index
    %c0_113 = arith.constant 0 : index
    %c0_114 = arith.constant 0 : index
    %300 = vector.load %arg14[%c1_112, %c0_113, %c0_114] : memref<16x1x256xf32, #tpu.memory_space<vmem>>, vector<1x1x256xf32>
    %301 = vector.shape_cast %300 : vector<1x1x256xf32> to vector<1x256xf32>
    %302 = vector.broadcast %301 : vector<1x256xf32> to vector<4x256xf32>
    %303 = arith.mulf %299, %302 : vector<4x256xf32>
    %304 = arith.addf %295, %303 : vector<4x256xf32>
    %305 = vector.extract_strided_slice %290 {offsets = [8, 0], sizes = [4, 256], strides = [1, 1]} : vector<64x256xf32> to vector<4x256xf32>
    %306 = vector.extract_strided_slice %305 {offsets = [0, 240], sizes = [4, 16], strides = [1, 1]} : vector<4x256xf32> to vector<4x16xf32>
    %307 = vector.extract_strided_slice %305 {offsets = [0, 0], sizes = [4, 240], strides = [1, 1]} : vector<4x256xf32> to vector<4x240xf32>
    %308 = tpu.concatenate %306, %307 in 1 : vector<4x16xf32>, vector<4x240xf32> -> vector<4x256xf32>
    %c2_115 = arith.constant 2 : index
    %c0_116 = arith.constant 0 : index
    %c0_117 = arith.constant 0 : index
    %309 = vector.load %arg14[%c2_115, %c0_116, %c0_117] : memref<16x1x256xf32, #tpu.memory_space<vmem>>, vector<1x1x256xf32>
    %310 = vector.shape_cast %309 : vector<1x1x256xf32> to vector<1x256xf32>
    %311 = vector.broadcast %310 : vector<1x256xf32> to vector<4x256xf32>
    %312 = arith.mulf %308, %311 : vector<4x256xf32>
    %313 = arith.addf %304, %312 : vector<4x256xf32>
    %314 = vector.extract_strided_slice %290 {offsets = [12, 0], sizes = [4, 256], strides = [1, 1]} : vector<64x256xf32> to vector<4x256xf32>
    %315 = vector.extract_strided_slice %314 {offsets = [0, 239], sizes = [4, 17], strides = [1, 1]} : vector<4x256xf32> to vector<4x17xf32>
    %316 = vector.extract_strided_slice %314 {offsets = [0, 0], sizes = [4, 239], strides = [1, 1]} : vector<4x256xf32> to vector<4x239xf32>
    %317 = tpu.concatenate %315, %316 in 1 : vector<4x17xf32>, vector<4x239xf32> -> vector<4x256xf32>
    %c3_118 = arith.constant 3 : index
    %c0_119 = arith.constant 0 : index
    %c0_120 = arith.constant 0 : index
    %318 = vector.load %arg14[%c3_118, %c0_119, %c0_120] : memref<16x1x256xf32, #tpu.memory_space<vmem>>, vector<1x1x256xf32>
    %319 = vector.shape_cast %318 : vector<1x1x256xf32> to vector<1x256xf32>
    %320 = vector.broadcast %319 : vector<1x256xf32> to vector<4x256xf32>
    %321 = arith.mulf %317, %320 : vector<4x256xf32>
    %322 = arith.addf %313, %321 : vector<4x256xf32>
    %323 = vector.extract_strided_slice %290 {offsets = [16, 0], sizes = [4, 256], strides = [1, 1]} : vector<64x256xf32> to vector<4x256xf32>
    %324 = vector.extract_strided_slice %323 {offsets = [0, 1], sizes = [4, 255], strides = [1, 1]} : vector<4x256xf32> to vector<4x255xf32>
    %325 = vector.extract_strided_slice %323 {offsets = [0, 0], sizes = [4, 1], strides = [1, 1]} : vector<4x256xf32> to vector<4x1xf32>
    %326 = tpu.concatenate %324, %325 in 1 : vector<4x255xf32>, vector<4x1xf32> -> vector<4x256xf32>
    %c4_121 = arith.constant 4 : index
    %c0_122 = arith.constant 0 : index
    %c0_123 = arith.constant 0 : index
    %327 = vector.load %arg14[%c4_121, %c0_122, %c0_123] : memref<16x1x256xf32, #tpu.memory_space<vmem>>, vector<1x1x256xf32>
    %328 = vector.shape_cast %327 : vector<1x1x256xf32> to vector<1x256xf32>
    %329 = vector.broadcast %328 : vector<1x256xf32> to vector<4x256xf32>
    %330 = arith.mulf %326, %329 : vector<4x256xf32>
    %331 = vector.extract_strided_slice %290 {offsets = [20, 0], sizes = [4, 256], strides = [1, 1]} : vector<64x256xf32> to vector<4x256xf32>
    %c5_124 = arith.constant 5 : index
    %c0_125 = arith.constant 0 : index
    %c0_126 = arith.constant 0 : index
    %332 = vector.load %arg14[%c5_124, %c0_125, %c0_126] : memref<16x1x256xf32, #tpu.memory_space<vmem>>, vector<1x1x256xf32>
    %333 = vector.shape_cast %332 : vector<1x1x256xf32> to vector<1x256xf32>
    %334 = vector.broadcast %333 : vector<1x256xf32> to vector<4x256xf32>
    %335 = arith.mulf %331, %334 : vector<4x256xf32>
    %336 = arith.addf %330, %335 : vector<4x256xf32>
    %337 = vector.extract_strided_slice %290 {offsets = [24, 0], sizes = [4, 256], strides = [1, 1]} : vector<64x256xf32> to vector<4x256xf32>
    %338 = vector.extract_strided_slice %337 {offsets = [0, 241], sizes = [4, 15], strides = [1, 1]} : vector<4x256xf32> to vector<4x15xf32>
    %339 = vector.extract_strided_slice %337 {offsets = [0, 0], sizes = [4, 241], strides = [1, 1]} : vector<4x256xf32> to vector<4x241xf32>
    %340 = tpu.concatenate %338, %339 in 1 : vector<4x15xf32>, vector<4x241xf32> -> vector<4x256xf32>
    %c6_127 = arith.constant 6 : index
    %c0_128 = arith.constant 0 : index
    %c0_129 = arith.constant 0 : index
    %341 = vector.load %arg14[%c6_127, %c0_128, %c0_129] : memref<16x1x256xf32, #tpu.memory_space<vmem>>, vector<1x1x256xf32>
    %342 = vector.shape_cast %341 : vector<1x1x256xf32> to vector<1x256xf32>
    %343 = vector.broadcast %342 : vector<1x256xf32> to vector<4x256xf32>
    %344 = arith.mulf %340, %343 : vector<4x256xf32>
    %345 = arith.addf %336, %344 : vector<4x256xf32>
    %346 = vector.extract_strided_slice %290 {offsets = [28, 0], sizes = [4, 256], strides = [1, 1]} : vector<64x256xf32> to vector<4x256xf32>
    %347 = vector.extract_strided_slice %346 {offsets = [0, 240], sizes = [4, 16], strides = [1, 1]} : vector<4x256xf32> to vector<4x16xf32>
    %348 = vector.extract_strided_slice %346 {offsets = [0, 0], sizes = [4, 240], strides = [1, 1]} : vector<4x256xf32> to vector<4x240xf32>
    %349 = tpu.concatenate %347, %348 in 1 : vector<4x16xf32>, vector<4x240xf32> -> vector<4x256xf32>
    %c7_130 = arith.constant 7 : index
    %c0_131 = arith.constant 0 : index
    %c0_132 = arith.constant 0 : index
    %350 = vector.load %arg14[%c7_130, %c0_131, %c0_132] : memref<16x1x256xf32, #tpu.memory_space<vmem>>, vector<1x1x256xf32>
    %351 = vector.shape_cast %350 : vector<1x1x256xf32> to vector<1x256xf32>
    %352 = vector.broadcast %351 : vector<1x256xf32> to vector<4x256xf32>
    %353 = arith.mulf %349, %352 : vector<4x256xf32>
    %354 = arith.addf %345, %353 : vector<4x256xf32>
    %355 = vector.extract_strided_slice %290 {offsets = [32, 0], sizes = [4, 256], strides = [1, 1]} : vector<64x256xf32> to vector<4x256xf32>
    %356 = vector.extract_strided_slice %355 {offsets = [0, 16], sizes = [4, 240], strides = [1, 1]} : vector<4x256xf32> to vector<4x240xf32>
    %357 = vector.extract_strided_slice %355 {offsets = [0, 0], sizes = [4, 16], strides = [1, 1]} : vector<4x256xf32> to vector<4x16xf32>
    %358 = tpu.concatenate %356, %357 in 1 : vector<4x240xf32>, vector<4x16xf32> -> vector<4x256xf32>
    %c8_133 = arith.constant 8 : index
    %c0_134 = arith.constant 0 : index
    %c0_135 = arith.constant 0 : index
    %359 = vector.load %arg14[%c8_133, %c0_134, %c0_135] : memref<16x1x256xf32, #tpu.memory_space<vmem>>, vector<1x1x256xf32>
    %360 = vector.shape_cast %359 : vector<1x1x256xf32> to vector<1x256xf32>
    %361 = vector.broadcast %360 : vector<1x256xf32> to vector<4x256xf32>
    %362 = arith.mulf %358, %361 : vector<4x256xf32>
    %363 = vector.extract_strided_slice %290 {offsets = [36, 0], sizes = [4, 256], strides = [1, 1]} : vector<64x256xf32> to vector<4x256xf32>
    %364 = vector.extract_strided_slice %363 {offsets = [0, 15], sizes = [4, 241], strides = [1, 1]} : vector<4x256xf32> to vector<4x241xf32>
    %365 = vector.extract_strided_slice %363 {offsets = [0, 0], sizes = [4, 15], strides = [1, 1]} : vector<4x256xf32> to vector<4x15xf32>
    %366 = tpu.concatenate %364, %365 in 1 : vector<4x241xf32>, vector<4x15xf32> -> vector<4x256xf32>
    %c9_136 = arith.constant 9 : index
    %c0_137 = arith.constant 0 : index
    %c0_138 = arith.constant 0 : index
    %367 = vector.load %arg14[%c9_136, %c0_137, %c0_138] : memref<16x1x256xf32, #tpu.memory_space<vmem>>, vector<1x1x256xf32>
    %368 = vector.shape_cast %367 : vector<1x1x256xf32> to vector<1x256xf32>
    %369 = vector.broadcast %368 : vector<1x256xf32> to vector<4x256xf32>
    %370 = arith.mulf %366, %369 : vector<4x256xf32>
    %371 = arith.addf %362, %370 : vector<4x256xf32>
    %372 = vector.extract_strided_slice %290 {offsets = [40, 0], sizes = [4, 256], strides = [1, 1]} : vector<64x256xf32> to vector<4x256xf32>
    %c10_139 = arith.constant 10 : index
    %c0_140 = arith.constant 0 : index
    %c0_141 = arith.constant 0 : index
    %373 = vector.load %arg14[%c10_139, %c0_140, %c0_141] : memref<16x1x256xf32, #tpu.memory_space<vmem>>, vector<1x1x256xf32>
    %374 = vector.shape_cast %373 : vector<1x1x256xf32> to vector<1x256xf32>
    %375 = vector.broadcast %374 : vector<1x256xf32> to vector<4x256xf32>
    %376 = arith.mulf %372, %375 : vector<4x256xf32>
    %377 = arith.addf %371, %376 : vector<4x256xf32>
    %378 = vector.extract_strided_slice %290 {offsets = [44, 0], sizes = [4, 256], strides = [1, 1]} : vector<64x256xf32> to vector<4x256xf32>
    %379 = vector.extract_strided_slice %378 {offsets = [0, 255], sizes = [4, 1], strides = [1, 1]} : vector<4x256xf32> to vector<4x1xf32>
    %380 = vector.extract_strided_slice %378 {offsets = [0, 0], sizes = [4, 255], strides = [1, 1]} : vector<4x256xf32> to vector<4x255xf32>
    %381 = tpu.concatenate %379, %380 in 1 : vector<4x1xf32>, vector<4x255xf32> -> vector<4x256xf32>
    %c11_142 = arith.constant 11 : index
    %c0_143 = arith.constant 0 : index
    %c0_144 = arith.constant 0 : index
    %382 = vector.load %arg14[%c11_142, %c0_143, %c0_144] : memref<16x1x256xf32, #tpu.memory_space<vmem>>, vector<1x1x256xf32>
    %383 = vector.shape_cast %382 : vector<1x1x256xf32> to vector<1x256xf32>
    %384 = vector.broadcast %383 : vector<1x256xf32> to vector<4x256xf32>
    %385 = arith.mulf %381, %384 : vector<4x256xf32>
    %386 = arith.addf %377, %385 : vector<4x256xf32>
    %387 = vector.extract_strided_slice %290 {offsets = [48, 0], sizes = [4, 256], strides = [1, 1]} : vector<64x256xf32> to vector<4x256xf32>
    %388 = vector.extract_strided_slice %387 {offsets = [0, 17], sizes = [4, 239], strides = [1, 1]} : vector<4x256xf32> to vector<4x239xf32>
    %389 = vector.extract_strided_slice %387 {offsets = [0, 0], sizes = [4, 17], strides = [1, 1]} : vector<4x256xf32> to vector<4x17xf32>
    %390 = tpu.concatenate %388, %389 in 1 : vector<4x239xf32>, vector<4x17xf32> -> vector<4x256xf32>
    %c12_145 = arith.constant 12 : index
    %c0_146 = arith.constant 0 : index
    %c0_147 = arith.constant 0 : index
    %391 = vector.load %arg14[%c12_145, %c0_146, %c0_147] : memref<16x1x256xf32, #tpu.memory_space<vmem>>, vector<1x1x256xf32>
    %392 = vector.shape_cast %391 : vector<1x1x256xf32> to vector<1x256xf32>
    %393 = vector.broadcast %392 : vector<1x256xf32> to vector<4x256xf32>
    %394 = arith.mulf %390, %393 : vector<4x256xf32>
    %395 = vector.extract_strided_slice %290 {offsets = [52, 0], sizes = [4, 256], strides = [1, 1]} : vector<64x256xf32> to vector<4x256xf32>
    %396 = vector.extract_strided_slice %395 {offsets = [0, 16], sizes = [4, 240], strides = [1, 1]} : vector<4x256xf32> to vector<4x240xf32>
    %397 = vector.extract_strided_slice %395 {offsets = [0, 0], sizes = [4, 16], strides = [1, 1]} : vector<4x256xf32> to vector<4x16xf32>
    %398 = tpu.concatenate %396, %397 in 1 : vector<4x240xf32>, vector<4x16xf32> -> vector<4x256xf32>
    %c13_148 = arith.constant 13 : index
    %c0_149 = arith.constant 0 : index
    %c0_150 = arith.constant 0 : index
    %399 = vector.load %arg14[%c13_148, %c0_149, %c0_150] : memref<16x1x256xf32, #tpu.memory_space<vmem>>, vector<1x1x256xf32>
    %400 = vector.shape_cast %399 : vector<1x1x256xf32> to vector<1x256xf32>
    %401 = vector.broadcast %400 : vector<1x256xf32> to vector<4x256xf32>
    %402 = arith.mulf %398, %401 : vector<4x256xf32>
    %403 = arith.addf %394, %402 : vector<4x256xf32>
    %404 = vector.extract_strided_slice %290 {offsets = [56, 0], sizes = [4, 256], strides = [1, 1]} : vector<64x256xf32> to vector<4x256xf32>
    %405 = vector.extract_strided_slice %404 {offsets = [0, 1], sizes = [4, 255], strides = [1, 1]} : vector<4x256xf32> to vector<4x255xf32>
    %406 = vector.extract_strided_slice %404 {offsets = [0, 0], sizes = [4, 1], strides = [1, 1]} : vector<4x256xf32> to vector<4x1xf32>
    %407 = tpu.concatenate %405, %406 in 1 : vector<4x255xf32>, vector<4x1xf32> -> vector<4x256xf32>
    %c14_151 = arith.constant 14 : index
    %c0_152 = arith.constant 0 : index
    %c0_153 = arith.constant 0 : index
    %408 = vector.load %arg14[%c14_151, %c0_152, %c0_153] : memref<16x1x256xf32, #tpu.memory_space<vmem>>, vector<1x1x256xf32>
    %409 = vector.shape_cast %408 : vector<1x1x256xf32> to vector<1x256xf32>
    %410 = vector.broadcast %409 : vector<1x256xf32> to vector<4x256xf32>
    %411 = arith.mulf %407, %410 : vector<4x256xf32>
    %412 = arith.addf %403, %411 : vector<4x256xf32>
    %413 = vector.extract_strided_slice %290 {offsets = [60, 0], sizes = [4, 256], strides = [1, 1]} : vector<64x256xf32> to vector<4x256xf32>
    %c15_154 = arith.constant 15 : index
    %c0_155 = arith.constant 0 : index
    %c0_156 = arith.constant 0 : index
    %414 = vector.load %arg14[%c15_154, %c0_155, %c0_156] : memref<16x1x256xf32, #tpu.memory_space<vmem>>, vector<1x1x256xf32>
    %415 = vector.shape_cast %414 : vector<1x1x256xf32> to vector<1x256xf32>
    %416 = vector.broadcast %415 : vector<1x256xf32> to vector<4x256xf32>
    %417 = arith.mulf %413, %416 : vector<4x256xf32>
    %418 = arith.addf %412, %417 : vector<4x256xf32>
    %419 = tpu.concatenate %322, %354, %386, %418 in 1 : vector<4x256xf32>, vector<4x256xf32>, vector<4x256xf32>, vector<4x256xf32> -> vector<4x1024xf32>
    %c0_157 = arith.constant 0 : index
    %c0_158 = arith.constant 0 : index
    %420 = vector.load %arg13[%c0_157, %c0_158] : memref<4x1xf32, #tpu.memory_space<vmem>>, vector<4x1xf32>
    %421 = vector.broadcast %420 : vector<4x1xf32> to vector<4x1024xf32>
    %422 = arith.addf %419, %421 : vector<4x1024xf32>
    %cst_159 = arith.constant 0.000000e+00 : f32
    %423 = vector.broadcast %cst_159 : f32 to vector<4x1024xf32>
    %424 = arith.maximumf %422, %423 : vector<4x1024xf32>
    %425 = arith.truncf %424 : vector<4x1024xf32> to vector<4x1024xbf16>
    %c0_160 = arith.constant 0 : index
    %c0_161 = arith.constant 0 : index
    %426 = vector.load %arg15[%c0_160, %c0_161] : memref<1024x1024xbf16, #tpu.memory_space<vmem>>, vector<1024x1024xbf16>
    %cst_162 = arith.constant dense<0.000000e+00> : vector<4x1024xf32>
    %427 = tpu.matmul %425, %426, %cst_162 {dimension_numbers = #tpu.dot_dimension_numbers<[1], [0], [0], [1], [0, 0, 1, 1], [], []>} : vector<4x1024xbf16>, vector<1024x1024xbf16>, vector<4x1024xf32> -> vector<4x1024xf32>
    %c0_163 = arith.constant 0 : index
    %c0_164 = arith.constant 0 : index
    %428 = vector.load %arg16[%c0_163, %c0_164] : memref<16x4xbf16, #tpu.memory_space<vmem>>, vector<16x4xbf16>
    %429 = arith.truncf %427 : vector<4x1024xf32> to vector<4x1024xbf16>
    %cst_165 = arith.constant dense<0.000000e+00> : vector<16x1024xf32>
    %430 = tpu.matmul %428, %429, %cst_165 {dimension_numbers = #tpu.dot_dimension_numbers<[1], [0], [0], [1], [0, 0, 1, 1], [], []>} : vector<16x4xbf16>, vector<4x1024xbf16>, vector<16x1024xf32> -> vector<16x1024xf32>
    %431 = vector.extract_strided_slice %430 {offsets = [0, 0], sizes = [1, 1024], strides = [1, 1]} : vector<16x1024xf32> to vector<1x1024xf32>
    %c0_166 = arith.constant 0 : index
    %c0_167 = arith.constant 0 : index
    %c0_168 = arith.constant 0 : index
    %432 = vector.load %arg18[%c0_166, %c0_167, %c0_168] : memref<16x1x1024xf32, #tpu.memory_space<vmem>>, vector<1x1x1024xf32>
    %433 = vector.shape_cast %432 : vector<1x1x1024xf32> to vector<1x1024xf32>
    %434 = arith.mulf %431, %433 : vector<1x1024xf32>
    %435 = vector.extract_strided_slice %430 {offsets = [1, 0], sizes = [1, 1024], strides = [1, 1]} : vector<16x1024xf32> to vector<1x1024xf32>
    %436 = vector.extract_strided_slice %435 {offsets = [0, 1023], sizes = [1, 1], strides = [1, 1]} : vector<1x1024xf32> to vector<1x1xf32>
    %437 = vector.extract_strided_slice %435 {offsets = [0, 0], sizes = [1, 1023], strides = [1, 1]} : vector<1x1024xf32> to vector<1x1023xf32>
    %438 = tpu.concatenate %436, %437 in 1 : vector<1x1xf32>, vector<1x1023xf32> -> vector<1x1024xf32>
    %c1_169 = arith.constant 1 : index
    %c0_170 = arith.constant 0 : index
    %c0_171 = arith.constant 0 : index
    %439 = vector.load %arg18[%c1_169, %c0_170, %c0_171] : memref<16x1x1024xf32, #tpu.memory_space<vmem>>, vector<1x1x1024xf32>
    %440 = vector.shape_cast %439 : vector<1x1x1024xf32> to vector<1x1024xf32>
    %441 = arith.mulf %438, %440 : vector<1x1024xf32>
    %442 = arith.addf %434, %441 : vector<1x1024xf32>
    %443 = vector.extract_strided_slice %430 {offsets = [2, 0], sizes = [1, 1024], strides = [1, 1]} : vector<16x1024xf32> to vector<1x1024xf32>
    %444 = vector.extract_strided_slice %443 {offsets = [0, 992], sizes = [1, 32], strides = [1, 1]} : vector<1x1024xf32> to vector<1x32xf32>
    %445 = vector.extract_strided_slice %443 {offsets = [0, 0], sizes = [1, 992], strides = [1, 1]} : vector<1x1024xf32> to vector<1x992xf32>
    %446 = tpu.concatenate %444, %445 in 1 : vector<1x32xf32>, vector<1x992xf32> -> vector<1x1024xf32>
    %c2_172 = arith.constant 2 : index
    %c0_173 = arith.constant 0 : index
    %c0_174 = arith.constant 0 : index
    %447 = vector.load %arg18[%c2_172, %c0_173, %c0_174] : memref<16x1x1024xf32, #tpu.memory_space<vmem>>, vector<1x1x1024xf32>
    %448 = vector.shape_cast %447 : vector<1x1x1024xf32> to vector<1x1024xf32>
    %449 = arith.mulf %446, %448 : vector<1x1024xf32>
    %450 = arith.addf %442, %449 : vector<1x1024xf32>
    %451 = vector.extract_strided_slice %430 {offsets = [3, 0], sizes = [1, 1024], strides = [1, 1]} : vector<16x1024xf32> to vector<1x1024xf32>
    %452 = vector.extract_strided_slice %451 {offsets = [0, 991], sizes = [1, 33], strides = [1, 1]} : vector<1x1024xf32> to vector<1x33xf32>
    %453 = vector.extract_strided_slice %451 {offsets = [0, 0], sizes = [1, 991], strides = [1, 1]} : vector<1x1024xf32> to vector<1x991xf32>
    %454 = tpu.concatenate %452, %453 in 1 : vector<1x33xf32>, vector<1x991xf32> -> vector<1x1024xf32>
    %c3_175 = arith.constant 3 : index
    %c0_176 = arith.constant 0 : index
    %c0_177 = arith.constant 0 : index
    %455 = vector.load %arg18[%c3_175, %c0_176, %c0_177] : memref<16x1x1024xf32, #tpu.memory_space<vmem>>, vector<1x1x1024xf32>
    %456 = vector.shape_cast %455 : vector<1x1x1024xf32> to vector<1x1024xf32>
    %457 = arith.mulf %454, %456 : vector<1x1024xf32>
    %458 = arith.addf %450, %457 : vector<1x1024xf32>
    %459 = vector.extract_strided_slice %430 {offsets = [4, 0], sizes = [1, 1024], strides = [1, 1]} : vector<16x1024xf32> to vector<1x1024xf32>
    %460 = vector.extract_strided_slice %459 {offsets = [0, 1], sizes = [1, 1023], strides = [1, 1]} : vector<1x1024xf32> to vector<1x1023xf32>
    %461 = vector.extract_strided_slice %459 {offsets = [0, 0], sizes = [1, 1], strides = [1, 1]} : vector<1x1024xf32> to vector<1x1xf32>
    %462 = tpu.concatenate %460, %461 in 1 : vector<1x1023xf32>, vector<1x1xf32> -> vector<1x1024xf32>
    %c4_178 = arith.constant 4 : index
    %c0_179 = arith.constant 0 : index
    %c0_180 = arith.constant 0 : index
    %463 = vector.load %arg18[%c4_178, %c0_179, %c0_180] : memref<16x1x1024xf32, #tpu.memory_space<vmem>>, vector<1x1x1024xf32>
    %464 = vector.shape_cast %463 : vector<1x1x1024xf32> to vector<1x1024xf32>
    %465 = arith.mulf %462, %464 : vector<1x1024xf32>
    %466 = vector.extract_strided_slice %430 {offsets = [5, 0], sizes = [1, 1024], strides = [1, 1]} : vector<16x1024xf32> to vector<1x1024xf32>
    %c5_181 = arith.constant 5 : index
    %c0_182 = arith.constant 0 : index
    %c0_183 = arith.constant 0 : index
    %467 = vector.load %arg18[%c5_181, %c0_182, %c0_183] : memref<16x1x1024xf32, #tpu.memory_space<vmem>>, vector<1x1x1024xf32>
    %468 = vector.shape_cast %467 : vector<1x1x1024xf32> to vector<1x1024xf32>
    %469 = arith.mulf %466, %468 : vector<1x1024xf32>
    %470 = arith.addf %465, %469 : vector<1x1024xf32>
    %471 = vector.extract_strided_slice %430 {offsets = [6, 0], sizes = [1, 1024], strides = [1, 1]} : vector<16x1024xf32> to vector<1x1024xf32>
    %472 = vector.extract_strided_slice %471 {offsets = [0, 993], sizes = [1, 31], strides = [1, 1]} : vector<1x1024xf32> to vector<1x31xf32>
    %473 = vector.extract_strided_slice %471 {offsets = [0, 0], sizes = [1, 993], strides = [1, 1]} : vector<1x1024xf32> to vector<1x993xf32>
    %474 = tpu.concatenate %472, %473 in 1 : vector<1x31xf32>, vector<1x993xf32> -> vector<1x1024xf32>
    %c6_184 = arith.constant 6 : index
    %c0_185 = arith.constant 0 : index
    %c0_186 = arith.constant 0 : index
    %475 = vector.load %arg18[%c6_184, %c0_185, %c0_186] : memref<16x1x1024xf32, #tpu.memory_space<vmem>>, vector<1x1x1024xf32>
    %476 = vector.shape_cast %475 : vector<1x1x1024xf32> to vector<1x1024xf32>
    %477 = arith.mulf %474, %476 : vector<1x1024xf32>
    %478 = arith.addf %470, %477 : vector<1x1024xf32>
    %479 = vector.extract_strided_slice %430 {offsets = [7, 0], sizes = [1, 1024], strides = [1, 1]} : vector<16x1024xf32> to vector<1x1024xf32>
    %480 = vector.extract_strided_slice %479 {offsets = [0, 992], sizes = [1, 32], strides = [1, 1]} : vector<1x1024xf32> to vector<1x32xf32>
    %481 = vector.extract_strided_slice %479 {offsets = [0, 0], sizes = [1, 992], strides = [1, 1]} : vector<1x1024xf32> to vector<1x992xf32>
    %482 = tpu.concatenate %480, %481 in 1 : vector<1x32xf32>, vector<1x992xf32> -> vector<1x1024xf32>
    %c7_187 = arith.constant 7 : index
    %c0_188 = arith.constant 0 : index
    %c0_189 = arith.constant 0 : index
    %483 = vector.load %arg18[%c7_187, %c0_188, %c0_189] : memref<16x1x1024xf32, #tpu.memory_space<vmem>>, vector<1x1x1024xf32>
    %484 = vector.shape_cast %483 : vector<1x1x1024xf32> to vector<1x1024xf32>
    %485 = arith.mulf %482, %484 : vector<1x1024xf32>
    %486 = arith.addf %478, %485 : vector<1x1024xf32>
    %487 = vector.extract_strided_slice %430 {offsets = [8, 0], sizes = [1, 1024], strides = [1, 1]} : vector<16x1024xf32> to vector<1x1024xf32>
    %488 = vector.extract_strided_slice %487 {offsets = [0, 32], sizes = [1, 992], strides = [1, 1]} : vector<1x1024xf32> to vector<1x992xf32>
    %489 = vector.extract_strided_slice %487 {offsets = [0, 0], sizes = [1, 32], strides = [1, 1]} : vector<1x1024xf32> to vector<1x32xf32>
    %490 = tpu.concatenate %488, %489 in 1 : vector<1x992xf32>, vector<1x32xf32> -> vector<1x1024xf32>
    %c8_190 = arith.constant 8 : index
    %c0_191 = arith.constant 0 : index
    %c0_192 = arith.constant 0 : index
    %491 = vector.load %arg18[%c8_190, %c0_191, %c0_192] : memref<16x1x1024xf32, #tpu.memory_space<vmem>>, vector<1x1x1024xf32>
    %492 = vector.shape_cast %491 : vector<1x1x1024xf32> to vector<1x1024xf32>
    %493 = arith.mulf %490, %492 : vector<1x1024xf32>
    %494 = vector.extract_strided_slice %430 {offsets = [9, 0], sizes = [1, 1024], strides = [1, 1]} : vector<16x1024xf32> to vector<1x1024xf32>
    %495 = vector.extract_strided_slice %494 {offsets = [0, 31], sizes = [1, 993], strides = [1, 1]} : vector<1x1024xf32> to vector<1x993xf32>
    %496 = vector.extract_strided_slice %494 {offsets = [0, 0], sizes = [1, 31], strides = [1, 1]} : vector<1x1024xf32> to vector<1x31xf32>
    %497 = tpu.concatenate %495, %496 in 1 : vector<1x993xf32>, vector<1x31xf32> -> vector<1x1024xf32>
    %c9_193 = arith.constant 9 : index
    %c0_194 = arith.constant 0 : index
    %c0_195 = arith.constant 0 : index
    %498 = vector.load %arg18[%c9_193, %c0_194, %c0_195] : memref<16x1x1024xf32, #tpu.memory_space<vmem>>, vector<1x1x1024xf32>
    %499 = vector.shape_cast %498 : vector<1x1x1024xf32> to vector<1x1024xf32>
    %500 = arith.mulf %497, %499 : vector<1x1024xf32>
    %501 = arith.addf %493, %500 : vector<1x1024xf32>
    %502 = vector.extract_strided_slice %430 {offsets = [10, 0], sizes = [1, 1024], strides = [1, 1]} : vector<16x1024xf32> to vector<1x1024xf32>
    %c10_196 = arith.constant 10 : index
    %c0_197 = arith.constant 0 : index
    %c0_198 = arith.constant 0 : index
    %503 = vector.load %arg18[%c10_196, %c0_197, %c0_198] : memref<16x1x1024xf32, #tpu.memory_space<vmem>>, vector<1x1x1024xf32>
    %504 = vector.shape_cast %503 : vector<1x1x1024xf32> to vector<1x1024xf32>
    %505 = arith.mulf %502, %504 : vector<1x1024xf32>
    %506 = arith.addf %501, %505 : vector<1x1024xf32>
    %507 = vector.extract_strided_slice %430 {offsets = [11, 0], sizes = [1, 1024], strides = [1, 1]} : vector<16x1024xf32> to vector<1x1024xf32>
    %508 = vector.extract_strided_slice %507 {offsets = [0, 1023], sizes = [1, 1], strides = [1, 1]} : vector<1x1024xf32> to vector<1x1xf32>
    %509 = vector.extract_strided_slice %507 {offsets = [0, 0], sizes = [1, 1023], strides = [1, 1]} : vector<1x1024xf32> to vector<1x1023xf32>
    %510 = tpu.concatenate %508, %509 in 1 : vector<1x1xf32>, vector<1x1023xf32> -> vector<1x1024xf32>
    %c11_199 = arith.constant 11 : index
    %c0_200 = arith.constant 0 : index
    %c0_201 = arith.constant 0 : index
    %511 = vector.load %arg18[%c11_199, %c0_200, %c0_201] : memref<16x1x1024xf32, #tpu.memory_space<vmem>>, vector<1x1x1024xf32>
    %512 = vector.shape_cast %511 : vector<1x1x1024xf32> to vector<1x1024xf32>
    %513 = arith.mulf %510, %512 : vector<1x1024xf32>
    %514 = arith.addf %506, %513 : vector<1x1024xf32>
    %515 = vector.extract_strided_slice %430 {offsets = [12, 0], sizes = [1, 1024], strides = [1, 1]} : vector<16x1024xf32> to vector<1x1024xf32>
    %516 = vector.extract_strided_slice %515 {offsets = [0, 33], sizes = [1, 991], strides = [1, 1]} : vector<1x1024xf32> to vector<1x991xf32>
    %517 = vector.extract_strided_slice %515 {offsets = [0, 0], sizes = [1, 33], strides = [1, 1]} : vector<1x1024xf32> to vector<1x33xf32>
    %518 = tpu.concatenate %516, %517 in 1 : vector<1x991xf32>, vector<1x33xf32> -> vector<1x1024xf32>
    %c12_202 = arith.constant 12 : index
    %c0_203 = arith.constant 0 : index
    %c0_204 = arith.constant 0 : index
    %519 = vector.load %arg18[%c12_202, %c0_203, %c0_204] : memref<16x1x1024xf32, #tpu.memory_space<vmem>>, vector<1x1x1024xf32>
    %520 = vector.shape_cast %519 : vector<1x1x1024xf32> to vector<1x1024xf32>
    %521 = arith.mulf %518, %520 : vector<1x1024xf32>
    %522 = vector.extract_strided_slice %430 {offsets = [13, 0], sizes = [1, 1024], strides = [1, 1]} : vector<16x1024xf32> to vector<1x1024xf32>
    %523 = vector.extract_strided_slice %522 {offsets = [0, 32], sizes = [1, 992], strides = [1, 1]} : vector<1x1024xf32> to vector<1x992xf32>
    %524 = vector.extract_strided_slice %522 {offsets = [0, 0], sizes = [1, 32], strides = [1, 1]} : vector<1x1024xf32> to vector<1x32xf32>
    %525 = tpu.concatenate %523, %524 in 1 : vector<1x992xf32>, vector<1x32xf32> -> vector<1x1024xf32>
    %c13_205 = arith.constant 13 : index
    %c0_206 = arith.constant 0 : index
    %c0_207 = arith.constant 0 : index
    %526 = vector.load %arg18[%c13_205, %c0_206, %c0_207] : memref<16x1x1024xf32, #tpu.memory_space<vmem>>, vector<1x1x1024xf32>
    %527 = vector.shape_cast %526 : vector<1x1x1024xf32> to vector<1x1024xf32>
    %528 = arith.mulf %525, %527 : vector<1x1024xf32>
    %529 = arith.addf %521, %528 : vector<1x1024xf32>
    %530 = vector.extract_strided_slice %430 {offsets = [14, 0], sizes = [1, 1024], strides = [1, 1]} : vector<16x1024xf32> to vector<1x1024xf32>
    %531 = vector.extract_strided_slice %530 {offsets = [0, 1], sizes = [1, 1023], strides = [1, 1]} : vector<1x1024xf32> to vector<1x1023xf32>
    %532 = vector.extract_strided_slice %530 {offsets = [0, 0], sizes = [1, 1], strides = [1, 1]} : vector<1x1024xf32> to vector<1x1xf32>
    %533 = tpu.concatenate %531, %532 in 1 : vector<1x1023xf32>, vector<1x1xf32> -> vector<1x1024xf32>
    %c14_208 = arith.constant 14 : index
    %c0_209 = arith.constant 0 : index
    %c0_210 = arith.constant 0 : index
    %534 = vector.load %arg18[%c14_208, %c0_209, %c0_210] : memref<16x1x1024xf32, #tpu.memory_space<vmem>>, vector<1x1x1024xf32>
    %535 = vector.shape_cast %534 : vector<1x1x1024xf32> to vector<1x1024xf32>
    %536 = arith.mulf %533, %535 : vector<1x1024xf32>
    %537 = arith.addf %529, %536 : vector<1x1024xf32>
    %538 = vector.extract_strided_slice %430 {offsets = [15, 0], sizes = [1, 1024], strides = [1, 1]} : vector<16x1024xf32> to vector<1x1024xf32>
    %c15_211 = arith.constant 15 : index
    %c0_212 = arith.constant 0 : index
    %c0_213 = arith.constant 0 : index
    %539 = vector.load %arg18[%c15_211, %c0_212, %c0_213] : memref<16x1x1024xf32, #tpu.memory_space<vmem>>, vector<1x1x1024xf32>
    %540 = vector.shape_cast %539 : vector<1x1x1024xf32> to vector<1x1024xf32>
    %541 = arith.mulf %538, %540 : vector<1x1024xf32>
    %542 = arith.addf %537, %541 : vector<1x1024xf32>
    %543 = tpu.concatenate %458, %486, %514, %542 in 1 : vector<1x1024xf32>, vector<1x1024xf32>, vector<1x1024xf32>, vector<1x1024xf32> -> vector<1x4096xf32>
    %c0_214 = arith.constant 0 : index
    %c0_215 = arith.constant 0 : index
    %544 = vector.load %arg17[%c0_214, %c0_215] : memref<1x1xf32, #tpu.memory_space<vmem>>, vector<1x1xf32>
    %545 = vector.broadcast %544 : vector<1x1xf32> to vector<1x4096xf32>
    %546 = arith.addf %543, %545 : vector<1x4096xf32>
    %c0_216 = arith.constant 0 : index
    %c0_217 = arith.constant 0 : index
    %c0_218 = arith.constant 0 : index
    %547 = vector.load %arg19[%c0_216, %c0_217, %c0_218] : memref<1x1x4096xf32, #tpu.memory_space<vmem>>, vector<1x1x4096xf32>
    %548 = vector.shape_cast %547 : vector<1x1x4096xf32> to vector<1x4096xf32>
    %549 = vector.shape_cast %546 : vector<1x4096xf32> to vector<1x1x4096xf32>
    tpu.vector_store %arg19[%c0_216, %c0_217, %c0_218], %549 {strides = array<i32>} : memref<1x1x4096xf32, #tpu.memory_space<vmem>>, vector<1x1x4096xf32>,
    return
  }
  func.func @transform_0(%arg0: i32) -> (i32, i32, i32) {
    %c0_i32 = arith.constant 0 : i32
    %c0_i32_0 = arith.constant 0 : i32
    %c0_i32_1 = arith.constant 0 : i32
    return %arg0, %c0_i32, %c0_i32_0 : i32, i32, i32
  }
  func.func @transform_1(%arg0: i32) -> (i32, i32) {
    %c0_i32 = arith.constant 0 : i32
    %c0_i32_0 = arith.constant 0 : i32
    %c0_i32_1 = arith.constant 0 : i32
    return %c0_i32, %c0_i32_0 : i32, i32
  }
  func.func @transform_2(%arg0: i32) -> (i32, i32) {
    %c0_i32 = arith.constant 0 : i32
    %c0_i32_0 = arith.constant 0 : i32
    %c0_i32_1 = arith.constant 0 : i32
    return %c0_i32, %c0_i32_0 : i32, i32
  }
  func.func @transform_3(%arg0: i32) -> (i32, i32) {
    %c0_i32 = arith.constant 0 : i32
    %c0_i32_0 = arith.constant 0 : i32
    %c0_i32_1 = arith.constant 0 : i32
    return %c0_i32, %c0_i32_0 : i32, i32
  }
  func.func @transform_4(%arg0: i32) -> (i32, i32) {
    %c0_i32 = arith.constant 0 : i32
    %c0_i32_0 = arith.constant 0 : i32
    %c0_i32_1 = arith.constant 0 : i32
    return %c0_i32, %c0_i32_0 : i32, i32
  }
  func.func @transform_5(%arg0: i32) -> (i32, i32, i32) {
    %c0_i32 = arith.constant 0 : i32
    %c0_i32_0 = arith.constant 0 : i32
    %c0_i32_1 = arith.constant 0 : i32
    %c0_i32_2 = arith.constant 0 : i32
    return %c0_i32, %c0_i32_0, %c0_i32_1 : i32, i32, i32
  }
  func.func @transform_6(%arg0: i32) -> (i32, i32) {
    %c0_i32 = arith.constant 0 : i32
    %c0_i32_0 = arith.constant 0 : i32
    %c0_i32_1 = arith.constant 0 : i32
    return %c0_i32, %c0_i32_0 : i32, i32
  }
  func.func @transform_7(%arg0: i32) -> (i32, i32) {
    %c0_i32 = arith.constant 0 : i32
    %c0_i32_0 = arith.constant 0 : i32
    %c0_i32_1 = arith.constant 0 : i32
    return %c0_i32, %c0_i32_0 : i32, i32
  }
  func.func @transform_8(%arg0: i32) -> (i32, i32) {
    %c0_i32 = arith.constant 0 : i32
    %c0_i32_0 = arith.constant 0 : i32
    %c0_i32_1 = arith.constant 0 : i32
    return %c0_i32, %c0_i32_0 : i32, i32
  }
  func.func @transform_9(%arg0: i32) -> (i32, i32, i32) {
    %c0_i32 = arith.constant 0 : i32
    %c0_i32_0 = arith.constant 0 : i32
    %c0_i32_1 = arith.constant 0 : i32
    %c0_i32_2 = arith.constant 0 : i32
    return %c0_i32, %c0_i32_0, %c0_i32_1 : i32, i32, i32
  }
  func.func @transform_10(%arg0: i32) -> (i32, i32) {
    %c0_i32 = arith.constant 0 : i32
    %c0_i32_0 = arith.constant 0 : i32
    %c0_i32_1 = arith.constant 0 : i32
    return %c0_i32, %c0_i32_0 : i32, i32
  }
  func.func @transform_11(%arg0: i32) -> (i32, i32) {
    %c0_i32 = arith.constant 0 : i32
    %c0_i32_0 = arith.constant 0 : i32
    %c0_i32_1 = arith.constant 0 : i32
    return %c0_i32, %c0_i32_0 : i32, i32
  }
  func.func @transform_12(%arg0: i32) -> (i32, i32) {
    %c0_i32 = arith.constant 0 : i32
    %c0_i32_0 = arith.constant 0 : i32
    %c0_i32_1 = arith.constant 0 : i32
    return %c0_i32, %c0_i32_0 : i32, i32
  }
  func.func @transform_13(%arg0: i32) -> (i32, i32, i32) {
    %c0_i32 = arith.constant 0 : i32
    %c0_i32_0 = arith.constant 0 : i32
    %c0_i32_1 = arith.constant 0 : i32
    %c0_i32_2 = arith.constant 0 : i32
    return %c0_i32, %c0_i32_0, %c0_i32_1 : i32, i32, i32
  }
  func.func @transform_14(%arg0: i32) -> (i32, i32) {
    %c0_i32 = arith.constant 0 : i32
    %c0_i32_0 = arith.constant 0 : i32
    %c0_i32_1 = arith.constant 0 : i32
    return %c0_i32, %c0_i32_0 : i32, i32
  }
  func.func @transform_15(%arg0: i32) -> (i32, i32) {
    %c0_i32 = arith.constant 0 : i32
    %c0_i32_0 = arith.constant 0 : i32
    %c0_i32_1 = arith.constant 0 : i32
    return %c0_i32, %c0_i32_0 : i32, i32
  }
  func.func @transform_16(%arg0: i32) -> (i32, i32) {
    %c0_i32 = arith.constant 0 : i32
    %c0_i32_0 = arith.constant 0 : i32
    %c0_i32_1 = arith.constant 0 : i32
    return %c0_i32, %c0_i32_0 : i32, i32
  }
  func.func @transform_17(%arg0: i32) -> (i32, i32, i32) {
    %c0_i32 = arith.constant 0 : i32
    %c0_i32_0 = arith.constant 0 : i32
    %c0_i32_1 = arith.constant 0 : i32
    %c0_i32_2 = arith.constant 0 : i32
    return %c0_i32, %c0_i32_0, %c0_i32_1 : i32, i32, i32
  }
  func.func @transform_18(%arg0: i32) -> (i32, i32, i32) {
    %c0_i32 = arith.constant 0 : i32
    %c0_i32_0 = arith.constant 0 : i32
    %c0_i32_1 = arith.constant 0 : i32
    return %arg0, %c0_i32, %c0_i32_0 : i32, i32, i32
  }
}

</mosaic_0001>

<llo_original>
// kernel: conv_decoder_forward.1
$region0: #{conv_decoder_forward.1}
  #allocation0 [shape = 'u32[]', space=smem, size = 0x4, offset = 0x4, fixed_abs, tag = 'smem constant byte address 0x4 - core index']
  #allocation1 [shape = 'u32[144,128]{1,0:T(1,128)}', space=vmem, size = 0x12000, scoped, tag = 'internal scratch']
  #allocation2 [shape = 'f32[1,1]{1,0:T(1,128)S(1)}', space=vmem, size = 0x200, scoped, tag = 'scoped memory for conv_decoder_forward.1']
  %s0 = inlined_call_operand.vmem [shape: f32[2,256,16], index: 0, kind: input, shape index: {}]
  %s1 = inlined_call_operand.hbm [shape: f32[32,256], index: 1, kind: input, shape index: {}]
  %s2 = inlined_call_operand.vmem [shape: f32[32,16], index: 2, kind: input, shape index: {}]
  %s3 = inlined_call_operand.vmem [shape: bf16[256,32], index: 3, kind: input, shape index: {}]
  %s4 = inlined_call_operand.vmem [shape: f32[16,1], index: 4, kind: input, shape index: {}]
  %s5 = inlined_call_operand.hbm [shape: f32[16,1,16], index: 5, kind: input, shape index: {}]
  %s6 = inlined_call_operand.hbm [shape: bf16[64,64], index: 6, kind: input, shape index: {}]
  %s7 = inlined_call_operand.vmem [shape: bf16[128,16], index: 7, kind: input, shape index: {}]
  %s8 = inlined_call_operand.vmem [shape: f32[8,1], index: 8, kind: input, shape index: {}]
  %s9 = inlined_call_operand.hbm [shape: f32[16,1,64], index: 9, kind: input, shape index: {}]
  %s10 = inlined_call_operand.hbm [shape: bf16[256,256], index: 10, kind: input, shape index: {}]
  %s11 = inlined_call_operand.vmem [shape: bf16[64,8], index: 11, kind: input, shape index: {}]
  %s12 = inlined_call_operand.vmem [shape: f32[4,1], index: 12, kind: input, shape index: {}]
  %s13 = inlined_call_operand.hbm [shape: f32[16,1,256], index: 13, kind: input, shape index: {}]
  %s14 = inlined_call_operand.hbm [shape: bf16[1024,1024], index: 14, kind: input, shape index: {}]
  %s15 = inlined_call_operand.vmem [shape: bf16[16,4], index: 15, kind: input, shape index: {}]
  %s16 = inlined_call_operand.<no memory space> [shape: f32[1,1], index: 16, kind: input, shape index: {}]
  %s17 = inlined_call_operand.hbm [shape: f32[16,1,1024], index: 17, kind: input, shape index: {}]
  %s18 = inlined_call_operand.vmem [shape: f32[2,1,4096], index: 18, kind: output, shape index: {}]
  %s19 = sld [smem:[#allocation0]]
  $region137: #{conv_decoder_forward.1} parent=0
    _
  %s21 = ssub.s32 1, %s19
  %s22 = scalar_select 0, %s21, %s19
  %v23 = vstv %s16
  %24 = vst [vmem:[#allocation2] sm:$0x1] %v23
  $region1: #{conv_decoder_forward.1} parent=0
    #allocation3 [shape = 'u8[32768]{0}', space=vmem, size = 0x8000, scoped, tag = 'input window, operand 1, single buffered']
    #allocation4 [shape = 's32[2]{0}', space=sflag, size = 0x8, scoped, tag = 'scoped memory for conv_decoder_forward.1']
    #allocation5 [shape = 'u8[8192]{0}', space=vmem, size = 0x2000, scoped, tag = 'input window, operand 5, single buffered']
    #allocation6 [shape = 's32[1]{0}', space=sflag, size = 0x4, scoped, tag = 'scoped memory for conv_decoder_forward.1']
    #allocation7 [shape = 'u8[16384]{0}', space=vmem, size = 0x4000, scoped, tag = 'input window, operand 6, single buffered']
    #allocation8 [shape = 'u8[8192]{0}', space=vmem, size = 0x2000, scoped, tag = 'input window, operand 9, single buffered']
    #allocation9 [shape = 's32[1]{0}', space=sflag, size = 0x4, scoped, tag = 'scoped memory for conv_decoder_forward.1']
    #allocation10 [shape = 'u8[131072]{0}', space=vmem, size = 0x20000, scoped, tag = 'input window, operand 10, single buffered']
    #allocation11 [shape = 'u8[16384]{0}', space=vmem, size = 0x4000, scoped, tag = 'input window, operand 13, single buffered']
    #allocation12 [shape = 's32[1]{0}', space=sflag, size = 0x4, scoped, tag = 'scoped memory for conv_decoder_forward.1']
    #allocation13 [shape = 'u8[2097152]{0}', space=vmem, size = 0x200000, scoped, tag = 'input window, operand 14, single buffered']
    #allocation14 [shape = 'u8[65536]{0}', space=vmem, size = 0x10000, scoped, tag = 'input window, operand 17, single buffered']
    #allocation15 [shape = 's32[1]{0}', space=sflag, size = 0x4, scoped, tag = 'scoped memory for conv_decoder_forward.1']
    %25 = vsyncpa [#allocation4], 0
    %26 = vsyncpa [#allocation6], 0
    %27 = vsyncpa [#allocation9], 0
    %28 = vsyncpa [#allocation12], 0
    %29 = vsyncpa [#allocation15], 0
    loop: start=0, step=1, limit=4
    $region2: #{conv_decoder_forward.1} parent=1 // loop_pre_header
      _
    $region3: #{conv_decoder_forward.1} parent=1 // loop_header
      %s31 = sphi 0, %s35
      %p32 = scmp.ge.s32.totalorder %s31, 4
      %s41 = sphi 0, %s43
      %s44 = sphi 0, %s41
      %s45 = sphi 0, %s44
      %s61 = sphi 0, %s45
      %s65 = sphi 0, %s65
      %s67 = sphi 0, %s65
      %s68 = sphi 0, %s67
      %s82 = sphi 0, %s68
      %s86 = sphi 0, %s86
      %s88 = sphi 0, %s86
      %s89 = sphi 0, %s88
      %s103 = sphi 0, %s89
      %s107 = sphi 0, %s107
      %s109 = sphi 0, %s107
      %s110 = sphi 0, %s109
      %s124 = sphi 0, %s110
      %s128 = sphi 0, %s128
      %s130 = sphi 0, %s128
      %s131 = sphi 0, %s130
      %s145 = sphi 0, %s131
      %s149 = sphi 0, %s149
      %s151 = sphi 0, %s149
      %s152 = sphi 0, %s151
      %s166 = sphi 0, %s152
      %s170 = sphi 0, %s170
      %s172 = sphi 0, %s170
      %s173 = sphi 0, %s172
      %s187 = sphi 0, %s173
      %s191 = sphi 0, %s191
      %s193 = sphi 0, %s191
      %s194 = sphi 0, %s193
      %s208 = sphi 0, %s194
      %s212 = sphi 0, %s212
      %s214 = sphi 0, %s212
      %s215 = sphi 0, %s214
      %s229 = sphi 0, %s215
      %s233 = sphi 0, %s233
      %s235 = sphi 0, %s233
      %s236 = sphi 0, %s235
      %s250 = sphi 0, %s236
      %s254 = sphi 0, %s254
      %s256 = sphi 0, %s254
      %s257 = sphi 0, %s256
      %s271 = sphi 0, %s257
      %s275 = sphi 0, %s275
      %s277 = sphi 0, %s275
      %s278 = sphi 0, %s277
      %s292 = sphi 0, %s278
      %s296 = sphi 0, %s296
      %s298 = sphi 0, %s296
      %s299 = sphi 0, %s298
      %s313 = sphi 0, %s299
      %s317 = sphi 0, %s317
      %s319 = sphi 0, %s317
      %s320 = sphi 0, %s319
      %s334 = sphi 0, %s320
      %s338 = sphi 0, %s338
      %s340 = sphi 0, %s338
      %s341 = sphi 0, %s340
      %s355 = sphi 0, %s341
      %s359 = sphi 0, %s359
      %s361 = sphi 0, %s359
      %s362 = sphi 0, %s361
      %s376 = sphi 0, %s362
      %s380 = sphi 0, %s380
      %s382 = sphi 0, %s380
      %s383 = sphi 0, %s382
      %s397 = sphi 0, %s383
      %s401 = sphi 0, %s401
      %s403 = sphi 0, %s401
      %s404 = sphi 0, %s403
      %s418 = sphi 0, %s404
      %s424 = sphi 0, %s426
      %s427 = sphi 0, %s424
      %s428 = sphi 0, %s427
      %s444 = sphi 0, %s428
    $region4: #{conv_decoder_forward.1} parent=1 // loop_header_branch
      %34 = sbr.rel (%p32) target = $region8
    $region5: #{conv_decoder_forward.1} parent=1 // loop_body
      %s36 = ssub.s32 %s31, 1
      %s37 = ssub.s32 %s31, 2
      %s38 = sadd.s32 %s31, 1
      %s39 = ssub.s32 %s31, %s38
      %p40 = scmp.eq.s32.totalorder %s39, 0
      %s42 = sadd.s32 %s41, 1
      %s43 = scalar_select %p40, %s41, %s42
      %p46 = pneg %p40
      %p47 = scmp.eq.s32.totalorder %s31, 1
      %p48 = por %p46, %p47
      %p49 = scmp.ne.s32.totalorder %s41, %s44
      %p50 = scmp.eq.s32.totalorder %s31, 0
      %p51 = por %p49, %p50
      %p52 = scmp.ne.s32.totalorder %s41, %s44
      %p53 = scmp.eq.s32.totalorder %s36, 1
      %p54 = por %p52, %p53
      %p55 = scmp.ne.s32.totalorder %s44, %s45
      %p56 = scmp.eq.s32.totalorder %s36, 0
      %p57 = por %p55, %p56
      %p58 = scmp.ne.s32.totalorder %s44, %s45
      %p59 = scmp.eq.s32.totalorder %s37, 1
      %p60 = por %p58, %p59
      %p62 = scmp.ne.s32.totalorder %s45, %s61
      %p63 = scmp.eq.s32.totalorder %s37, 0
      %p64 = por %p62, %p63
      %s66 = sadd.s32 %s65, 1
      %p69 = scmp.eq.s32.totalorder %s31, 1
      %p70 = scmp.ne.s32.totalorder %s65, %s67
      %p71 = scmp.eq.s32.totalorder %s31, 0
      %p72 = por %p70, %p71
      %p73 = scmp.ne.s32.totalorder %s65, %s67
      %p74 = scmp.eq.s32.totalorder %s36, 1
      %p75 = por %p73, %p74
      %p76 = scmp.ne.s32.totalorder %s67, %s68
      %p77 = scmp.eq.s32.totalorder %s36, 0
      %p78 = por %p76, %p77
      %p79 = scmp.ne.s32.totalorder %s67, %s68
      %p80 = scmp.eq.s32.totalorder %s37, 1
      %p81 = por %p79, %p80
      %p83 = scmp.ne.s32.totalorder %s68, %s82
      %p84 = scmp.eq.s32.totalorder %s37, 0
      %p85 = por %p83, %p84
      %s87 = sadd.s32 %s86, 1
      %p90 = scmp.eq.s32.totalorder %s31, 1
      %p91 = scmp.ne.s32.totalorder %s86, %s88
      %p92 = scmp.eq.s32.totalorder %s31, 0
      %p93 = por %p91, %p92
      %p94 = scmp.ne.s32.totalorder %s86, %s88
      %p95 = scmp.eq.s32.totalorder %s36, 1
      %p96 = por %p94, %p95
      %p97 = scmp.ne.s32.totalorder %s88, %s89
      %p98 = scmp.eq.s32.totalorder %s36, 0
      %p99 = por %p97, %p98
      %p100 = scmp.ne.s32.totalorder %s88, %s89
      %p101 = scmp.eq.s32.totalorder %s37, 1
      %p102 = por %p100, %p101
      %p104 = scmp.ne.s32.totalorder %s89, %s103
      %p105 = scmp.eq.s32.totalorder %s37, 0
      %p106 = por %p104, %p105
      %s108 = sadd.s32 %s107, 1
      %p111 = scmp.eq.s32.totalorder %s31, 1
      %p112 = scmp.ne.s32.totalorder %s107, %s109
      %p113 = scmp.eq.s32.totalorder %s31, 0
      %p114 = por %p112, %p113
      %p115 = scmp.ne.s32.totalorder %s107, %s109
      %p116 = scmp.eq.s32.totalorder %s36, 1
      %p117 = por %p115, %p116
      %p118 = scmp.ne.s32.totalorder %s109, %s110
      %p119 = scmp.eq.s32.totalorder %s36, 0
      %p120 = por %p118, %p119
      %p121 = scmp.ne.s32.totalorder %s109, %s110
      %p122 = scmp.eq.s32.totalorder %s37, 1
      %p123 = por %p121, %p122
      %p125 = scmp.ne.s32.totalorder %s110, %s124
      %p126 = scmp.eq.s32.totalorder %s37, 0
      %p127 = por %p125, %p126
      %s129 = sadd.s32 %s128, 1
      %p132 = scmp.eq.s32.totalorder %s31, 1
      %p133 = scmp.ne.s32.totalorder %s128, %s130
      %p134 = scmp.eq.s32.totalorder %s31, 0
      %p135 = por %p133, %p134
      %p136 = scmp.ne.s32.totalorder %s128, %s130
      %p137 = scmp.eq.s32.totalorder %s36, 1
      %p138 = por %p136, %p137
      %p139 = scmp.ne.s32.totalorder %s130, %s131
      %p140 = scmp.eq.s32.totalorder %s36, 0
      %p141 = por %p139, %p140
      %p142 = scmp.ne.s32.totalorder %s130, %s131
      %p143 = scmp.eq.s32.totalorder %s37, 1
      %p144 = por %p142, %p143
      %p146 = scmp.ne.s32.totalorder %s131, %s145
      %p147 = scmp.eq.s32.totalorder %s37, 0
      %p148 = por %p146, %p147
      %s150 = sadd.s32 %s149, 1
      %p153 = scmp.eq.s32.totalorder %s31, 1
      %p154 = scmp.ne.s32.totalorder %s149, %s151
      %p155 = scmp.eq.s32.totalorder %s31, 0
      %p156 = por %p154, %p155
      %p157 = scmp.ne.s32.totalorder %s149, %s151
      %p158 = scmp.eq.s32.totalorder %s36, 1
      %p159 = por %p157, %p158
      %p160 = scmp.ne.s32.totalorder %s151, %s152
      %p161 = scmp.eq.s32.totalorder %s36, 0
      %p162 = por %p160, %p161
      %p163 = scmp.ne.s32.totalorder %s151, %s152
      %p164 = scmp.eq.s32.totalorder %s37, 1
      %p165 = por %p163, %p164
      %p167 = scmp.ne.s32.totalorder %s152, %s166
      %p168 = scmp.eq.s32.totalorder %s37, 0
      %p169 = por %p167, %p168
      %s171 = sadd.s32 %s170, 1
      %p174 = scmp.eq.s32.totalorder %s31, 1
      %p175 = scmp.ne.s32.totalorder %s170, %s172
      %p176 = scmp.eq.s32.totalorder %s31, 0
      %p177 = por %p175, %p176
      %p178 = scmp.ne.s32.totalorder %s170, %s172
      %p179 = scmp.eq.s32.totalorder %s36, 1
      %p180 = por %p178, %p179
      %p181 = scmp.ne.s32.totalorder %s172, %s173
      %p182 = scmp.eq.s32.totalorder %s36, 0
      %p183 = por %p181, %p182
      %p184 = scmp.ne.s32.totalorder %s172, %s173
      %p185 = scmp.eq.s32.totalorder %s37, 1
      %p186 = por %p184, %p185
      %p188 = scmp.ne.s32.totalorder %s173, %s187
      %p189 = scmp.eq.s32.totalorder %s37, 0
      %p190 = por %p188, %p189
      %s192 = sadd.s32 %s191, 1
      %p195 = scmp.eq.s32.totalorder %s31, 1
      %p196 = scmp.ne.s32.totalorder %s191, %s193
      %p197 = scmp.eq.s32.totalorder %s31, 0
      %p198 = por %p196, %p197
      %p199 = scmp.ne.s32.totalorder %s191, %s193
      %p200 = scmp.eq.s32.totalorder %s36, 1
      %p201 = por %p199, %p200
      %p202 = scmp.ne.s32.totalorder %s193, %s194
      %p203 = scmp.eq.s32.totalorder %s36, 0
      %p204 = por %p202, %p203
      %p205 = scmp.ne.s32.totalorder %s193, %s194
      %p206 = scmp.eq.s32.totalorder %s37, 1
      %p207 = por %p205, %p206
      %p209 = scmp.ne.s32.totalorder %s194, %s208
      %p210 = scmp.eq.s32.totalorder %s37, 0
      %p211 = por %p209, %p210
      %s213 = sadd.s32 %s212, 1
      %p216 = scmp.eq.s32.totalorder %s31, 1
      %p217 = scmp.ne.s32.totalorder %s212, %s214
      %p218 = scmp.eq.s32.totalorder %s31, 0
      %p219 = por %p217, %p218
      %p220 = scmp.ne.s32.totalorder %s212, %s214
      %p221 = scmp.eq.s32.totalorder %s36, 1
      %p222 = por %p220, %p221
      %p223 = scmp.ne.s32.totalorder %s214, %s215
      %p224 = scmp.eq.s32.totalorder %s36, 0
      %p225 = por %p223, %p224
      %p226 = scmp.ne.s32.totalorder %s214, %s215
      %p227 = scmp.eq.s32.totalorder %s37, 1
      %p228 = por %p226, %p227
      %p230 = scmp.ne.s32.totalorder %s215, %s229
      %p231 = scmp.eq.s32.totalorder %s37, 0
      %p232 = por %p230, %p231
      %s234 = sadd.s32 %s233, 1
      %p237 = scmp.eq.s32.totalorder %s31, 1
      %p238 = scmp.ne.s32.totalorder %s233, %s235
      %p239 = scmp.eq.s32.totalorder %s31, 0
      %p240 = por %p238, %p239
      %p241 = scmp.ne.s32.totalorder %s233, %s235
      %p242 = scmp.eq.s32.totalorder %s36, 1
      %p243 = por %p241, %p242
      %p244 = scmp.ne.s32.totalorder %s235, %s236
      %p245 = scmp.eq.s32.totalorder %s36, 0
      %p246 = por %p244, %p245
      %p247 = scmp.ne.s32.totalorder %s235, %s236
      %p248 = scmp.eq.s32.totalorder %s37, 1
      %p249 = por %p247, %p248
      %p251 = scmp.ne.s32.totalorder %s236, %s250
      %p252 = scmp.eq.s32.totalorder %s37, 0
      %p253 = por %p251, %p252
      %s255 = sadd.s32 %s254, 1
      %p258 = scmp.eq.s32.totalorder %s31, 1
      %p259 = scmp.ne.s32.totalorder %s254, %s256
      %p260 = scmp.eq.s32.totalorder %s31, 0
      %p261 = por %p259, %p260
      %p262 = scmp.ne.s32.totalorder %s254, %s256
      %p263 = scmp.eq.s32.totalorder %s36, 1
      %p264 = por %p262, %p263
      %p265 = scmp.ne.s32.totalorder %s256, %s257
      %p266 = scmp.eq.s32.totalorder %s36, 0
      %p267 = por %p265, %p266
      %p268 = scmp.ne.s32.totalorder %s256, %s257
      %p269 = scmp.eq.s32.totalorder %s37, 1
      %p270 = por %p268, %p269
      %p272 = scmp.ne.s32.totalorder %s257, %s271
      %p273 = scmp.eq.s32.totalorder %s37, 0
      %p274 = por %p272, %p273
      %s276 = sadd.s32 %s275, 1
      %p279 = scmp.eq.s32.totalorder %s31, 1
      %p280 = scmp.ne.s32.totalorder %s275, %s277
      %p281 = scmp.eq.s32.totalorder %s31, 0
      %p282 = por %p280, %p281
      %p283 = scmp.ne.s32.totalorder %s275, %s277
      %p284 = scmp.eq.s32.totalorder %s36, 1
      %p285 = por %p283, %p284
      %p286 = scmp.ne.s32.totalorder %s277, %s278
      %p287 = scmp.eq.s32.totalorder %s36, 0
      %p288 = por %p286, %p287
      %p289 = scmp.ne.s32.totalorder %s277, %s278
      %p290 = scmp.eq.s32.totalorder %s37, 1
      %p291 = por %p289, %p290
      %p293 = scmp.ne.s32.totalorder %s278, %s292
      %p294 = scmp.eq.s32.totalorder %s37, 0
      %p295 = por %p293, %p294
      %s297 = sadd.s32 %s296, 1
      %p300 = scmp.eq.s32.totalorder %s31, 1
      %p301 = scmp.ne.s32.totalorder %s296, %s298
      %p302 = scmp.eq.s32.totalorder %s31, 0
      %p303 = por %p301, %p302
      %p304 = scmp.ne.s32.totalorder %s296, %s298
      %p305 = scmp.eq.s32.totalorder %s36, 1
      %p306 = por %p304, %p305
      %p307 = scmp.ne.s32.totalorder %s298, %s299
      %p308 = scmp.eq.s32.totalorder %s36, 0
      %p309 = por %p307, %p308
      %p310 = scmp.ne.s32.totalorder %s298, %s299
      %p311 = scmp.eq.s32.totalorder %s37, 1
      %p312 = por %p310, %p311
      %p314 = scmp.ne.s32.totalorder %s299, %s313
      %p315 = scmp.eq.s32.totalorder %s37, 0
      %p316 = por %p314, %p315
      %s318 = sadd.s32 %s317, 1
      %p321 = scmp.eq.s32.totalorder %s31, 1
      %p322 = scmp.ne.s32.totalorder %s317, %s319
      %p323 = scmp.eq.s32.totalorder %s31, 0
      %p324 = por %p322, %p323
      %p325 = scmp.ne.s32.totalorder %s317, %s319
      %p326 = scmp.eq.s32.totalorder %s36, 1
      %p327 = por %p325, %p326
      %p328 = scmp.ne.s32.totalorder %s319, %s320
      %p329 = scmp.eq.s32.totalorder %s36, 0
      %p330 = por %p328, %p329
      %p331 = scmp.ne.s32.totalorder %s319, %s320
      %p332 = scmp.eq.s32.totalorder %s37, 1
      %p333 = por %p331, %p332
      %p335 = scmp.ne.s32.totalorder %s320, %s334
      %p336 = scmp.eq.s32.totalorder %s37, 0
      %p337 = por %p335, %p336
      %s339 = sadd.s32 %s338, 1
      %p342 = scmp.eq.s32.totalorder %s31, 1
      %p343 = scmp.ne.s32.totalorder %s338, %s340
      %p344 = scmp.eq.s32.totalorder %s31, 0
      %p345 = por %p343, %p344
      %p346 = scmp.ne.s32.totalorder %s338, %s340
      %p347 = scmp.eq.s32.totalorder %s36, 1
      %p348 = por %p346, %p347
      %p349 = scmp.ne.s32.totalorder %s340, %s341
      %p350 = scmp.eq.s32.totalorder %s36, 0
      %p351 = por %p349, %p350
      %p352 = scmp.ne.s32.totalorder %s340, %s341
      %p353 = scmp.eq.s32.totalorder %s37, 1
      %p354 = por %p352, %p353
      %p356 = scmp.ne.s32.totalorder %s341, %s355
      %p357 = scmp.eq.s32.totalorder %s37, 0
      %p358 = por %p356, %p357
      %s360 = sadd.s32 %s359, 1
      %p363 = scmp.eq.s32.totalorder %s31, 1
      %p364 = scmp.ne.s32.totalorder %s359, %s361
      %p365 = scmp.eq.s32.totalorder %s31, 0
      %p366 = por %p364, %p365
      %p367 = scmp.ne.s32.totalorder %s359, %s361
      %p368 = scmp.eq.s32.totalorder %s36, 1
      %p369 = por %p367, %p368
      %p370 = scmp.ne.s32.totalorder %s361, %s362
      %p371 = scmp.eq.s32.totalorder %s36, 0
      %p372 = por %p370, %p371
      %p373 = scmp.ne.s32.totalorder %s361, %s362
      %p374 = scmp.eq.s32.totalorder %s37, 1
      %p375 = por %p373, %p374
      %p377 = scmp.ne.s32.totalorder %s362, %s376
      %p378 = scmp.eq.s32.totalorder %s37, 0
      %p379 = por %p377, %p378
      %s381 = sadd.s32 %s380, 1
      %p384 = scmp.eq.s32.totalorder %s31, 1
      %p385 = scmp.ne.s32.totalorder %s380, %s382
      %p386 = scmp.eq.s32.totalorder %s31, 0
      %p387 = por %p385, %p386
      %p388 = scmp.ne.s32.totalorder %s380, %s382
      %p389 = scmp.eq.s32.totalorder %s36, 1
      %p390 = por %p388, %p389
      %p391 = scmp.ne.s32.totalorder %s382, %s383
      %p392 = scmp.eq.s32.totalorder %s36, 0
      %p393 = por %p391, %p392
      %p394 = scmp.ne.s32.totalorder %s382, %s383
      %p395 = scmp.eq.s32.totalorder %s37, 1
      %p396 = por %p394, %p395
      %p398 = scmp.ne.s32.totalorder %s383, %s397
      %p399 = scmp.eq.s32.totalorder %s37, 0
      %p400 = por %p398, %p399
      %s402 = sadd.s32 %s401, 1
      %p405 = scmp.eq.s32.totalorder %s31, 1
      %p406 = scmp.ne.s32.totalorder %s401, %s403
      %p407 = scmp.eq.s32.totalorder %s31, 0
      %p408 = por %p406, %p407
      %p409 = scmp.ne.s32.totalorder %s401, %s403
      %p410 = scmp.eq.s32.totalorder %s36, 1
      %p411 = por %p409, %p410
      %p412 = scmp.ne.s32.totalorder %s403, %s404
      %p413 = scmp.eq.s32.totalorder %s36, 0
      %p414 = por %p412, %p413
      %p415 = scmp.ne.s32.totalorder %s403, %s404
      %p416 = scmp.eq.s32.totalorder %s37, 1
      %p417 = por %p415, %p416
      %p419 = scmp.ne.s32.totalorder %s404, %s418
      %p420 = scmp.eq.s32.totalorder %s37, 0
      %p421 = por %p419, %p420
      %s422 = ssub.s32 %s31, %s38
      %p423 = scmp.eq.s32.totalorder %s422, 0
      %s425 = sadd.s32 %s424, 1
      %s426 = scalar_select %p423, %s424, %s425
      %p429 = pneg %p423
      %p430 = scmp.eq.s32.totalorder %s31, 1
      %p431 = por %p429, %p430
      %p432 = scmp.ne.s32.totalorder %s424, %s427
      %p433 = scmp.eq.s32.totalorder %s31, 0
      %p434 = por %p432, %p433
      %p435 = scmp.ne.s32.totalorder %s424, %s427
      %p436 = scmp.eq.s32.totalorder %s36, 1
      %p437 = por %p435, %p436
      %p438 = scmp.ne.s32.totalorder %s427, %s428
      %p439 = scmp.eq.s32.totalorder %s36, 0
      %p440 = por %p438, %p439
      %p441 = scmp.ne.s32.totalorder %s427, %s428
      %p442 = scmp.eq.s32.totalorder %s37, 1
      %p443 = por %p441, %p442
      %p445 = scmp.ne.s32.totalorder %s428, %s444
      %p446 = scmp.eq.s32.totalorder %s37, 0
      %p447 = por %p445, %p446
      %p448 = scmp.le.s32.totalorder 1, %s31
      %p449 = scmp.lt.s32.totalorder %s31, 3
      %p450 = pnand %p448, %p449
      %p451 = pneg %p450
      // Predicated region
      $region9: #{conv_decoder_forward.1} parent=5 // pred_check
        _
      $region10: #{conv_decoder_forward.1} parent=5 // pred_check_branch
        %453 = sbr.rel (%p450) target = $region12
      $region11: #{conv_decoder_forward.1} parent=5 // pred_region
        %s454 = ssub.s32 %s31, 1
        // Predicated region
        $region13: #{conv_decoder_forward.1} parent=11 // pred_check
          %p455 = pneg %p78
        $region14: #{conv_decoder_forward.1} parent=11 // pred_check_branch
          %457 = sbr.rel (%p455) target = $region16
        $region15: #{conv_decoder_forward.1} parent=11 // pred_region
          %s459 = ssub.s32 1024, 1024
          %460 = vsyncadd [#allocation4], %s459
          %s461 = sshll.u32 [#allocation3], 4
          %s462 = int_to_ptr.vmem [resolvable:$true] %s461
          %467 = dma.hbm_to_vmem [thread:$0]  %s1, 1024, %s462, [#allocation4], 256, 256, 16
        $region16: #{conv_decoder_forward.1} parent=11 // pred_fallthru
          _
        // Predicated region
        $region17: #{conv_decoder_forward.1} parent=11 // pred_check
          %p468 = pneg %p99
        $region18: #{conv_decoder_forward.1} parent=11 // pred_check_branch
          %470 = sbr.rel (%p468) target = $region20
        $region19: #{conv_decoder_forward.1} parent=11 // pred_region
          _
        $region20: #{conv_decoder_forward.1} parent=11 // pred_fallthru
          _
        // Predicated region
        $region21: #{conv_decoder_forward.1} parent=11 // pred_check
          %p471 = pneg %p120
        $region22: #{conv_decoder_forward.1} parent=11 // pred_check_branch
          %473 = sbr.rel (%p471) target = $region24
        $region23: #{conv_decoder_forward.1} parent=11 // pred_region
          _
        $region24: #{conv_decoder_forward.1} parent=11 // pred_fallthru
          _
        // Predicated region
        $region25: #{conv_decoder_forward.1} parent=11 // pred_check
          %p474 = pneg %p141
        $region26: #{conv_decoder_forward.1} parent=11 // pred_check_branch
          %476 = sbr.rel (%p474) target = $region28
        $region27: #{conv_decoder_forward.1} parent=11 // pred_region
          _
        $region28: #{conv_decoder_forward.1} parent=11 // pred_fallthru
          _
        // Predicated region
        $region29: #{conv_decoder_forward.1} parent=11 // pred_check
          %p477 = pneg %p162
        $region30: #{conv_decoder_forward.1} parent=11 // pred_check_branch
          %479 = sbr.rel (%p477) target = $region32
        $region31: #{conv_decoder_forward.1} parent=11 // pred_region
          %s481 = ssub.s32 256, 256
          %482 = vsyncadd [#allocation6], %s481
          %s483 = sshll.u32 [#allocation5], 4
          %s484 = int_to_ptr.vmem [resolvable:$true] %s483
          %489 = dma.hbm_to_vmem [thread:$0]  %s5, 256, %s484, [#allocation6], 16, 16, 1
        $region32: #{conv_decoder_forward.1} parent=11 // pred_fallthru
          _
        // Predicated region
        $region33: #{conv_decoder_forward.1} parent=11 // pred_check
          %p490 = pneg %p183
        $region34: #{conv_decoder_forward.1} parent=11 // pred_check_branch
          %492 = sbr.rel (%p490) target = $region36
        $region35: #{conv_decoder_forward.1} parent=11 // pred_region
          %s494 = ssub.s32 512, 512
          %495 = vsyncadd [#allocation6], %s494
          %s496 = sshll.u32 [#allocation7], 4
          %s497 = int_to_ptr.vmem [resolvable:$true] %s496
          %502 = dma.hbm_to_vmem [thread:$0]  %s6, 512, %s497, [#allocation6], 64, 64, 4
        $region36: #{conv_decoder_forward.1} parent=11 // pred_fallthru
          _
        // Predicated region
        $region37: #{conv_decoder_forward.1} parent=11 // pred_check
          %p503 = pneg %p204
        $region38: #{conv_decoder_forward.1} parent=11 // pred_check_branch
          %505 = sbr.rel (%p503) target = $region40
        $region39: #{conv_decoder_forward.1} parent=11 // pred_region
          _
        $region40: #{conv_decoder_forward.1} parent=11 // pred_fallthru
          _
        // Predicated region
        $region41: #{conv_decoder_forward.1} parent=11 // pred_check
          %p506 = pneg %p225
        $region42: #{conv_decoder_forward.1} parent=11 // pred_check_branch
          %508 = sbr.rel (%p506) target = $region44
        $region43: #{conv_decoder_forward.1} parent=11 // pred_region
          _
        $region44: #{conv_decoder_forward.1} parent=11 // pred_fallthru
          _
        // Predicated region
        $region45: #{conv_decoder_forward.1} parent=11 // pred_check
          %p509 = pneg %p246
        $region46: #{conv_decoder_forward.1} parent=11 // pred_check_branch
          %511 = sbr.rel (%p509) target = $region48
        $region47: #{conv_decoder_forward.1} parent=11 // pred_region
          %s513 = ssub.s32 256, 256
          %514 = vsyncadd [#allocation9], %s513
          %s515 = sshll.u32 [#allocation8], 4
          %s516 = int_to_ptr.vmem [resolvable:$true] %s515
          %521 = dma.hbm_to_vmem [thread:$0]  %s9, 256, %s516, [#allocation9], 16, 16, 1
        $region48: #{conv_decoder_forward.1} parent=11 // pred_fallthru
          _
        // Predicated region
        $region49: #{conv_decoder_forward.1} parent=11 // pred_check
          %p522 = pneg %p267
        $region50: #{conv_decoder_forward.1} parent=11 // pred_check_branch
          %524 = sbr.rel (%p522) target = $region52
        $region51: #{conv_decoder_forward.1} parent=11 // pred_region
          %s526 = ssub.s32 4096, 4096
          %527 = vsyncadd [#allocation9], %s526
          %s528 = sshll.u32 [#allocation10], 4
          %s529 = int_to_ptr.vmem [resolvable:$true] %s528
          %534 = dma.hbm_to_vmem [thread:$0]  %s10, 4096, %s529, [#allocation9], 128, 128, 8
        $region52: #{conv_decoder_forward.1} parent=11 // pred_fallthru
          _
        // Predicated region
        $region53: #{conv_decoder_forward.1} parent=11 // pred_check
          %p535 = pneg %p288
        $region54: #{conv_decoder_forward.1} parent=11 // pred_check_branch
          %537 = sbr.rel (%p535) target = $region56
        $region55: #{conv_decoder_forward.1} parent=11 // pred_region
          _
        $region56: #{conv_decoder_forward.1} parent=11 // pred_fallthru
          _
        // Predicated region
        $region57: #{conv_decoder_forward.1} parent=11 // pred_check
          %p538 = pneg %p309
        $region58: #{conv_decoder_forward.1} parent=11 // pred_check_branch
          %540 = sbr.rel (%p538) target = $region60
        $region59: #{conv_decoder_forward.1} parent=11 // pred_region
          _
        $region60: #{conv_decoder_forward.1} parent=11 // pred_fallthru
          _
        // Predicated region
        $region61: #{conv_decoder_forward.1} parent=11 // pred_check
          %p541 = pneg %p330
        $region62: #{conv_decoder_forward.1} parent=11 // pred_check_branch
          %543 = sbr.rel (%p541) target = $region64
        $region63: #{conv_decoder_forward.1} parent=11 // pred_region
          %s545 = ssub.s32 512, 512
          %546 = vsyncadd [#allocation12], %s545
          %s547 = sshll.u32 [#allocation11], 4
          %s548 = int_to_ptr.vmem [resolvable:$true] %s547
          %553 = dma.hbm_to_vmem [thread:$0]  %s13, 512, %s548, [#allocation12], 32, 32, 2
        $region64: #{conv_decoder_forward.1} parent=11 // pred_fallthru
          _
        // Predicated region
        $region65: #{conv_decoder_forward.1} parent=11 // pred_check
          %p554 = pneg %p351
        $region66: #{conv_decoder_forward.1} parent=11 // pred_check_branch
          %556 = sbr.rel (%p554) target = $region68
        $region67: #{conv_decoder_forward.1} parent=11 // pred_region
          %s558 = ssub.s32 65536, 65536
          %559 = vsyncadd [#allocation12], %s558
          %s560 = sshll.u32 [#allocation13], 4
          %s561 = int_to_ptr.vmem [resolvable:$true] %s560
          %566 = dma.hbm_to_vmem [thread:$0]  %s14, 65536, %s561, [#allocation12], 512, 512, 32
        $region68: #{conv_decoder_forward.1} parent=11 // pred_fallthru
          _
        // Predicated region
        $region69: #{conv_decoder_forward.1} parent=11 // pred_check
          %p567 = pneg %p372
        $region70: #{conv_decoder_forward.1} parent=11 // pred_check_branch
          %569 = sbr.rel (%p567) target = $region72
        $region71: #{conv_decoder_forward.1} parent=11 // pred_region
          _
        $region72: #{conv_decoder_forward.1} parent=11 // pred_fallthru
          _
        // Predicated region
        $region73: #{conv_decoder_forward.1} parent=11 // pred_check
          %p570 = pneg %p393
        $region74: #{conv_decoder_forward.1} parent=11 // pred_check_branch
          %572 = sbr.rel (%p570) target = $region76
        $region75: #{conv_decoder_forward.1} parent=11 // pred_region
          _
        $region76: #{conv_decoder_forward.1} parent=11 // pred_fallthru
          _
        // Predicated region
        $region77: #{conv_decoder_forward.1} parent=11 // pred_check
          %p573 = pneg %p414
        $region78: #{conv_decoder_forward.1} parent=11 // pred_check_branch
          %575 = sbr.rel (%p573) target = $region80
        $region79: #{conv_decoder_forward.1} parent=11 // pred_region
          %s577 = ssub.s32 2048, 2048
          %578 = vsyncadd [#allocation15], %s577
          %s579 = sshll.u32 [#allocation14], 4
          %s580 = int_to_ptr.vmem [resolvable:$true] %s579
          %585 = dma.hbm_to_vmem [thread:$0]  %s17, 2048, %s580, [#allocation15], 128, 128, 8
        $region80: #{conv_decoder_forward.1} parent=11 // pred_fallthru
          _
      $region12: #{conv_decoder_forward.1} parent=5 // pred_fallthru
        _
      %p586 = scmp.lt.s32.totalorder %s31, 2
      // Predicated region
      $region81: #{conv_decoder_forward.1} parent=5 // pred_check
        %p587 = pneg %p586
      $region82: #{conv_decoder_forward.1} parent=5 // pred_check_branch
        %589 = sbr.rel (%p587) target = $region84
      $region83: #{conv_decoder_forward.1} parent=5 // pred_region
        // Predicated region
        $region85: #{conv_decoder_forward.1} parent=83 // pred_check
          %p590 = pneg %p51
        $region86: #{conv_decoder_forward.1} parent=83 // pred_check_branch
          %592 = sbr.rel (%p590) target = $region88
        $region87: #{conv_decoder_forward.1} parent=83 // pred_region
          %p593 = scmp.lt.s32.totalorder %s31, 1
          %s594 = scalar_select %p593, %s31, 1
          %s595 = smul.addr %s594, 32
          %s596 = smul.addr %s595, 8
          %s597 = scalar_lea.vmem %s0, %s596
        $region88: #{conv_decoder_forward.1} parent=83 // pred_fallthru
          _
      $region84: #{conv_decoder_forward.1} parent=5 // pred_fallthru
        _
      %p598 = scmp.le.s32.totalorder 1, %s31
      %p599 = scmp.lt.s32.totalorder %s31, 3
      %p600 = pnand %p598, %p599
      %p601 = pneg %p600
      // Predicated region
      $region89: #{conv_decoder_forward.1} parent=5 // pred_check
        _
      $region90: #{conv_decoder_forward.1} parent=5 // pred_check_branch
        %603 = sbr.rel (%p600) target = $region92
      $region91: #{conv_decoder_forward.1} parent=5 // pred_region
        %s604 = ssub.s32 %s31, 1
        // Predicated region
        $region93: #{conv_decoder_forward.1} parent=91 // pred_check
          %p605 = pneg %p78
        $region94: #{conv_decoder_forward.1} parent=91 // pred_check_branch
          %607 = sbr.rel (%p605) target = $region96
        $region95: #{conv_decoder_forward.1} parent=91 // pred_region
          %608 = dma.done [#allocation4], 1024
        $region96: #{conv_decoder_forward.1} parent=91 // pred_fallthru
          _
        // Predicated region
        $region97: #{conv_decoder_forward.1} parent=91 // pred_check
          %p609 = pneg %p162
        $region98: #{conv_decoder_forward.1} parent=91 // pred_check_branch
          %611 = sbr.rel (%p609) target = $region100
        $region99: #{conv_decoder_forward.1} parent=91 // pred_region
          %612 = dma.done [#allocation6], 256
        $region100: #{conv_decoder_forward.1} parent=91 // pred_fallthru
          _
        // Predicated region
        $region101: #{conv_decoder_forward.1} parent=91 // pred_check
          %p613 = pneg %p183
        $region102: #{conv_decoder_forward.1} parent=91 // pred_check_branch
          %615 = sbr.rel (%p613) target = $region104
        $region103: #{conv_decoder_forward.1} parent=91 // pred_region
          %616 = dma.done [#allocation6], 512
        $region104: #{conv_decoder_forward.1} parent=91 // pred_fallthru
          _
        // Predicated region
        $region105: #{conv_decoder_forward.1} parent=91 // pred_check
          %p617 = pneg %p246
        $region106: #{conv_decoder_forward.1} parent=91 // pred_check_branch
          %619 = sbr.rel (%p617) target = $region108
        $region107: #{conv_decoder_forward.1} parent=91 // pred_region
          %620 = dma.done [#allocation9], 256
        $region108: #{conv_decoder_forward.1} parent=91 // pred_fallthru
          _
        // Predicated region
        $region109: #{conv_decoder_forward.1} parent=91 // pred_check
          %p621 = pneg %p267
        $region110: #{conv_decoder_forward.1} parent=91 // pred_check_branch
          %623 = sbr.rel (%p621) target = $region112
        $region111: #{conv_decoder_forward.1} parent=91 // pred_region
          %624 = dma.done [#allocation9], 4096
        $region112: #{conv_decoder_forward.1} parent=91 // pred_fallthru
          _
        // Predicated region
        $region113: #{conv_decoder_forward.1} parent=91 // pred_check
          %p625 = pneg %p330
        $region114: #{conv_decoder_forward.1} parent=91 // pred_check_branch
          %627 = sbr.rel (%p625) target = $region116
        $region115: #{conv_decoder_forward.1} parent=91 // pred_region
          %628 = dma.done [#allocation12], 512
        $region116: #{conv_decoder_forward.1} parent=91 // pred_fallthru
          _
        // Predicated region
        $region117: #{conv_decoder_forward.1} parent=91 // pred_check
          %p629 = pneg %p351
        $region118: #{conv_decoder_forward.1} parent=91 // pred_check_branch
          %631 = sbr.rel (%p629) target = $region120
        $region119: #{conv_decoder_forward.1} parent=91 // pred_region
          %632 = dma.done [#allocation12], 65536
        $region120: #{conv_decoder_forward.1} parent=91 // pred_fallthru
          _
        // Predicated region
        $region121: #{conv_decoder_forward.1} parent=91 // pred_check
          %p633 = pneg %p414
        $region122: #{conv_decoder_forward.1} parent=91 // pred_check_branch
          %635 = sbr.rel (%p633) target = $region124
        $region123: #{conv_decoder_forward.1} parent=91 // pred_region
          %636 = dma.done [#allocation15], 2048
        $region124: #{conv_decoder_forward.1} parent=91 // pred_fallthru
          _
        %p637 = scmp.lt.s32.totalorder %s36, 1
        %s638 = scalar_select %p637, %s36, 1
        %s639 = smul.addr %s638, 32
        %s640 = smul.addr %s639, 8
        %s641 = scalar_lea.vmem %s0, %s640
        %p642 = pneg %p57
        %p643 = pneg %p54
        %p644 = pneg %p78
        %p645 = pneg %p75
        %p646 = pneg %p99
        %p647 = pneg %p96
        %p648 = pneg %p120
        %p649 = pneg %p117
        %p650 = pneg %p141
        %p651 = pneg %p138
        %p652 = pneg %p162
        %p653 = pneg %p159
        %p654 = pneg %p183
        %p655 = pneg %p180
        %p656 = pneg %p204
        %p657 = pneg %p201
        %p658 = pneg %p225
        %p659 = pneg %p222
        %p660 = pneg %p246
        %p661 = pneg %p243
        %p662 = pneg %p267
        %p663 = pneg %p264
        %p664 = pneg %p288
        %p665 = pneg %p285
        %p666 = pneg %p309
        %p667 = pneg %p306
        %p668 = pneg %p330
        %p669 = pneg %p327
        %p670 = pneg %p351
        %p671 = pneg %p348
        %p672 = pneg %p372
        %p673 = pneg %p369
        %p674 = pneg %p393
        %p675 = pneg %p390
        %p676 = pneg %p414
        %p677 = pneg %p411
        %p678 = pneg %p440
        %p679 = pneg %p437
        %p680 = scmp.lt.s32.totalorder %s36, 1
        %s681 = scalar_select %p680, %s36, 1
        %s682 = smul.addr %s681, 32
        %s683 = scalar_lea.vmem %s18, %s682
        %p684 = scmp.lt.s32.totalorder %s36, 1
        %s685 = scalar_select %p684, %s36, 1
        %s686 = smul.addr %s685, 32
        %s687 = smul.addr %s686, 8
        %s688 = scalar_lea.vmem %s0, %s687
        %p689 = scmp.lt.s32.totalorder %s36, 1
        %s690 = scalar_select %p689, %s36, 1
        %s691 = smul.addr %s690, 32
        %s692 = scalar_lea.vmem %s18, %s691
        %v694 = vld [vmem:[#allocation3] sm:$0xff]
        %v695 = vld [vmem:[#allocation3 + $0x8] sm:$0xff]
        %v696 = vld [vmem:[#allocation3 + $0x10] sm:$0xff]
        %v697 = vld [vmem:[#allocation3 + $0x18] sm:$0xff]
        %v698 = vld [vmem:[#allocation3 + $0x20] sm:$0xff]
        %v699 = vld [vmem:[#allocation3 + $0x28] sm:$0xff]
        %v700 = vld [vmem:[#allocation3 + $0x30] sm:$0xff]
        %v701 = vld [vmem:[#allocation3 + $0x38] sm:$0xff]
        %v702 = vld [vmem:[%s688] sm:$0xff]
        %v703 = vld [vmem:[%s688 + $0x8] sm:$0xff]
        %v704 = vld [vmem:[%s688 + $0x10] sm:$0xff]
        %v705 = vld [vmem:[%s688 + $0x18] sm:$0xff]
        %v706 = vld [vmem:[%s688 + $0x20] sm:$0xff]
        %v707 = vld [vmem:[%s688 + $0x28] sm:$0xff]
        %v708 = vld [vmem:[%s688 + $0x30] sm:$0xff]
        %v709 = vld [vmem:[%s688 + $0x38] sm:$0xff]
        %v710 = vld [vmem:[%s688 + $0x40] sm:$0xff]
        %v711 = vld [vmem:[%s688 + $0x48] sm:$0xff]
        %v712 = vld [vmem:[%s688 + $0x50] sm:$0xff]
        %v713 = vld [vmem:[%s688 + $0x58] sm:$0xff]
        %v714 = vld [vmem:[%s688 + $0x60] sm:$0xff]
        %v715 = vld [vmem:[%s688 + $0x68] sm:$0xff]
        %v716 = vld [vmem:[%s688 + $0x70] sm:$0xff]
        %v717 = vld [vmem:[%s688 + $0x78] sm:$0xff]
        %v718 = vld [vmem:[%s688 + $0x80] sm:$0xff]
        %v719 = vld [vmem:[%s688 + $0x88] sm:$0xff]
        %v720 = vld [vmem:[%s688 + $0x90] sm:$0xff]
        %v721 = vld [vmem:[%s688 + $0x98] sm:$0xff]
        %v722 = vld [vmem:[%s688 + $0xa0] sm:$0xff]
        %v723 = vld [vmem:[%s688 + $0xa8] sm:$0xff]
        %v724 = vld [vmem:[%s688 + $0xb0] sm:$0xff]
        %v725 = vld [vmem:[%s688 + $0xb8] sm:$0xff]
        %v726 = vld [vmem:[%s688 + $0xc0] sm:$0xff]
        %v727 = vld [vmem:[%s688 + $0xc8] sm:$0xff]
        %v728 = vld [vmem:[%s688 + $0xd0] sm:$0xff]
        %v729 = vld [vmem:[%s688 + $0xd8] sm:$0xff]
        %v730 = vld [vmem:[%s688 + $0xe0] sm:$0xff]
        %v731 = vld [vmem:[%s688 + $0xe8] sm:$0xff]
        %v732 = vld [vmem:[%s688 + $0xf0] sm:$0xff]
        %v733 = vld [vmem:[%s688 + $0xf8] sm:$0xff]
        %v734 = vld [vmem:[%s2] sm:$0xff]
        %v735 = vld [vmem:[%s2 + $0x8] sm:$0xff]
        %v736 = vld [vmem:[%s2 + $0x10] sm:$0xff]
        %v737 = vld [vmem:[%s2 + $0x18] sm:$0xff]
        %738 = vmatprep.subr.mxu0 0.0
        %739 = vmatpush1.msra.mxu0 %v702
        %740 = vmatprep.subr.mxu0 0.0
        %741 = vmatpush1.msra.mxu0 %v703
        %742 = vmatprep.subr.mxu0 0.0
        %743 = vmatpush1.msra.mxu0 %v704
        %744 = vmatprep.subr.mxu0 0.0
        %745 = vmatpush1.msra.mxu0 %v705
        %746 = vmatprep.subr.mxu0 0.0
        %747 = vmatpush1.msra.mxu0 %v706
        %748 = vmatprep.subr.mxu0 0.0
        %749 = vmatpush1.msra.mxu0 %v707
        %750 = vmatprep.subr.mxu0 0.0
        %751 = vmatpush1.msra.mxu0 %v708
        %752 = vmatprep.subr.mxu0 0.0
        %753 = vmatpush1.msra.mxu0 %v709
        %754 = vmatprep.subr.mxu0 0.0
        %755 = vmatpush1.msra.mxu0 %v710
        %756 = vmatprep.subr.mxu0 0.0
        %757 = vmatpush1.msra.mxu0 %v711
        %758 = vmatprep.subr.mxu0 0.0
        %759 = vmatpush1.msra.mxu0 %v712
        %760 = vmatprep.subr.mxu0 0.0
        %761 = vmatpush1.msra.mxu0 %v713
        %762 = vmatprep.subr.mxu0 0.0
        %763 = vmatpush1.msra.mxu0 %v714
        %764 = vmatprep.subr.mxu0 0.0
        %765 = vmatpush1.msra.mxu0 %v715
        %766 = vmatprep.subr.mxu0 0.0
        %767 = vmatpush1.msra.mxu0 %v716
        %768 = vmatprep.subr.mxu0 0.0
        %769 = vmatpush1.msra.mxu0 %v717
        %770 = vmatprep.subr.mxu0 0.0
        %771 = vmatpush1.msra.mxu0 %v718
        %772 = vmatprep.subr.mxu0 0.0
        %773 = vmatpush1.msra.mxu0 %v719
        %774 = vmatprep.subr.mxu0 0.0
        %775 = vmatpush1.msra.mxu0 %v720
        %776 = vmatprep.subr.mxu0 0.0
        %777 = vmatpush1.msra.mxu0 %v721
        %778 = vmatprep.subr.mxu0 0.0
        %779 = vmatpush1.msra.mxu0 %v722
        %780 = vmatprep.subr.mxu0 0.0
        %781 = vmatpush1.msra.mxu0 %v723
        %782 = vmatprep.subr.mxu0 0.0
        %783 = vmatpush1.msra.mxu0 %v724
        %784 = vmatprep.subr.mxu0 0.0
        %785 = vmatpush1.msra.mxu0 %v725
        %786 = vmatprep.subr.mxu0 0.0
        %787 = vmatpush1.msra.mxu0 %v726
        %788 = vmatprep.subr.mxu0 0.0
        %789 = vmatpush1.msra.mxu0 %v727
        %790 = vmatprep.subr.mxu0 0.0
        %791 = vmatpush1.msra.mxu0 %v728
        %792 = vmatprep.subr.mxu0 0.0
        %793 = vmatpush1.msra.mxu0 %v729
        %794 = vmatprep.subr.mxu0 0.0
        %795 = vmatpush1.msra.mxu0 %v730
        %796 = vmatprep.subr.mxu0 0.0
        %797 = vmatpush1.msra.mxu0 %v731
        %798 = vmatprep.subr.mxu0 0.0
        %799 = vmatpush1.msra.mxu0 %v732
        %800 = vmatprep.subr.mxu0 0.0
        %801 = vmatpush1.msra.mxu0 %v733
        %802 = vmatprep.mubr.f32.mxu0 %v695
        %803 = vmatmul.mubr.f32.gmra.mrb[0].mxu0 %v694
        %v804 = vpop.f32.mrb[0].mxu0
        %v805 = vadd.f32 %v734, %v804
        %v806 = vpop.f32.mrb[0].mxu0
        %807 = vmatprep.mubr.f32.mxu0 %v697
        %808 = vmatmul.mubr.f32.gmra.mrb[0].mxu0 %v696
        %v809 = vpop.f32.mrb[0].mxu0
        %v810 = vadd.f32 %v735, %v809
        %v811 = vpop.f32.mrb[0].mxu0
        %812 = vmatprep.mubr.f32.mxu0 %v699
        %813 = vmatmul.mubr.f32.gmra.mrb[0].mxu0 %v698
        %v814 = vpop.f32.mrb[0].mxu0
        %v815 = vadd.f32 %v736, %v814
        %v816 = vpop.f32.mrb[0].mxu0
        %817 = vmatprep.mubr.f32.mxu0 %v701
        %818 = vmatmul.mubr.f32.gmra.mrb[0].mxu0 %v700
        %v819 = vpop.f32.mrb[0].mxu0
        %v820 = vadd.f32 %v737, %v819
        %v821 = vpop.f32.mrb[0].mxu0
        %822 = vdwg.mxu0
        %v823 = vmax.f32 %v805, 0.0
        %v824 = vmax.f32 %v810, 0.0
        %v825 = vmax.f32 %v815, 0.0
        %v826 = vmax.f32 %v820, 0.0
        %v827 = vld [vmem:[%s3] sm:$0xf]
        %v828 = vld [vmem:[%s3 + $0x4] sm:$0xf]
        %v829 = vld [vmem:[%s3 + $0x8] sm:$0xf]
        %v830 = vld [vmem:[%s3 + $0xc] sm:$0xf]
        %v831 = vld [vmem:[%s3 + $0x10] sm:$0xf]
        %v832 = vld [vmem:[%s3 + $0x14] sm:$0xf]
        %v833 = vld [vmem:[%s3 + $0x18] sm:$0xf]
        %v834 = vld [vmem:[%s3 + $0x1c] sm:$0xf]
        %v835 = vld [vmem:[%s3 + $0x20] sm:$0xf]
        %v836 = vld [vmem:[%s3 + $0x24] sm:$0xf]
        %v837 = vld [vmem:[%s3 + $0x28] sm:$0xf]
        %v838 = vld [vmem:[%s3 + $0x2c] sm:$0xf]
        %v839 = vld [vmem:[%s3 + $0x30] sm:$0xf]
        %v840 = vld [vmem:[%s3 + $0x34] sm:$0xf]
        %v841 = vld [vmem:[%s3 + $0x38] sm:$0xf]
        %v842 = vld [vmem:[%s3 + $0x3c] sm:$0xf]
        %v843 = vld [vmem:[%s3 + $0x40] sm:$0xf]
        %v844 = vld [vmem:[%s3 + $0x44] sm:$0xf]
        %v845 = vld [vmem:[%s3 + $0x48] sm:$0xf]
        %v846 = vld [vmem:[%s3 + $0x4c] sm:$0xf]
        %v847 = vld [vmem:[%s3 + $0x50] sm:$0xf]
        %v848 = vld [vmem:[%s3 + $0x54] sm:$0xf]
        %v849 = vld [vmem:[%s3 + $0x58] sm:$0xf]
        %v850 = vld [vmem:[%s3 + $0x5c] sm:$0xf]
        %v851 = vld [vmem:[%s3 + $0x60] sm:$0xf]
        %v852 = vld [vmem:[%s3 + $0x64] sm:$0xf]
        %v853 = vld [vmem:[%s3 + $0x68] sm:$0xf]
        %v854 = vld [vmem:[%s3 + $0x6c] sm:$0xf]
        %v855 = vld [vmem:[%s3 + $0x70] sm:$0xf]
        %v856 = vld [vmem:[%s3 + $0x74] sm:$0xf]
        %v857 = vld [vmem:[%s3 + $0x78] sm:$0xf]
        %v858 = vld [vmem:[%s3 + $0x7c] sm:$0xf]
        %v859 = vpack.c.bf16 %v824, %v823
        %v860 = vpack.c.bf16 %v826, %v825
        %v893 = vunpack.c.l.b16 %v827
        %v894 = vunpack.c.l.b16 %v828
        %v895 = vunpack.c.l.b16 %v829
        %v896 = vunpack.c.l.b16 %v830
        %v897 = vunpack.c.l.b16 %v831
        %v898 = vunpack.c.l.b16 %v832
        %v899 = vunpack.c.l.b16 %v833
        %v900 = vunpack.c.l.b16 %v834
        %v901 = vunpack.c.l.b16 %v835
        %v902 = vunpack.c.l.b16 %v836
        %v903 = vunpack.c.l.b16 %v837
        %v904 = vunpack.c.l.b16 %v838
        %v905 = vunpack.c.l.b16 %v839
        %v906 = vunpack.c.l.b16 %v840
        %v907 = vunpack.c.l.b16 %v841
        %v908 = vunpack.c.l.b16 %v842
        %v909 = vunpack.c.l.b16 %v843
        %v910 = vunpack.c.l.b16 %v844
        %v911 = vunpack.c.l.b16 %v845
        %v912 = vunpack.c.l.b16 %v846
        %v913 = vunpack.c.l.b16 %v847
        %v914 = vunpack.c.l.b16 %v848
        %v915 = vunpack.c.l.b16 %v849
        %v916 = vunpack.c.l.b16 %v850
        %v917 = vunpack.c.l.b16 %v851
        %v918 = vunpack.c.l.b16 %v852
        %v919 = vunpack.c.l.b16 %v853
        %v920 = vunpack.c.l.b16 %v854
        %v921 = vunpack.c.l.b16 %v855
        %v922 = vunpack.c.l.b16 %v856
        %v923 = vunpack.c.l.b16 %v857
        %v924 = vunpack.c.l.b16 %v858
        %v925 = vpack.c.b16 %v894, %v893
        %v926 = vpack.c.b16 %v896, %v895
        %v927 = vpack.c.b16 %v898, %v897
        %v928 = vpack.c.b16 %v900, %v899
        %v929 = vpack.c.b16 %v902, %v901
        %v930 = vpack.c.b16 %v904, %v903
        %v931 = vpack.c.b16 %v906, %v905
        %v932 = vpack.c.b16 %v908, %v907
        %v933 = vpack.c.b16 %v910, %v909
        %v934 = vpack.c.b16 %v912, %v911
        %v935 = vpack.c.b16 %v914, %v913
        %v936 = vpack.c.b16 %v916, %v915
        %v937 = vpack.c.b16 %v918, %v917
        %v938 = vpack.c.b16 %v920, %v919
        %v939 = vpack.c.b16 %v922, %v921
        %v940 = vpack.c.b16 %v924, %v923
        %vm941 = vcmask 261120
        %v943 = vsel %vm941, %v925, 0
        %v946 = vsel %vm941, %v926, 0
        %v949 = vsel %vm941, %v927, 0
        %v952 = vsel %vm941, %v928, 0
        %v955 = vsel %vm941, %v929, 0
        %v958 = vsel %vm941, %v930, 0
        %v961 = vsel %vm941, %v931, 0
        %v964 = vsel %vm941, %v932, 0
        %v967 = vsel %vm941, %v933, 0
        %v970 = vsel %vm941, %v934, 0
        %v973 = vsel %vm941, %v935, 0
        %v976 = vsel %vm941, %v936, 0
        %v979 = vsel %vm941, %v937, 0
        %v982 = vsel %vm941, %v938, 0
        %v985 = vsel %vm941, %v939, 0
        %v988 = vsel %vm941, %v940, 0
        %990 = vmatprep.subr.bf16.mxu0 0
        %991 = vmatpush1.bf16.msra.mxu0 %v859
        %992 = vmatprep.subr.bf16.mxu0 0
        %993 = vmatpush1.bf16.msra.mxu0 %v860
        %994 = vmatprep.subr.bf16.mxu0 0
        %995 = vmatpush1.bf16.msra.mxu0 0
        %996 = vmatprep.subr.bf16.mxu0 0
        %997 = vmatpush1.bf16.msra.mxu0 0
        %998 = vmatprep.subr.bf16.mxu0 0
        %999 = vmatpush1.bf16.msra.mxu0 0
        %1000 = vmatprep.subr.bf16.mxu0 0
        %1001 = vmatpush1.bf16.msra.mxu0 0
        %1002 = vmatprep.subr.bf16.mxu0 0
        %1003 = vmatpush1.bf16.msra.mxu0 0
        %1004 = vmatprep.subr.bf16.mxu0 0
        %1005 = vmatpush1.bf16.msra.mxu0 0
        %1006 = vmatprep.subr.bf16.mxu0 0
        %1007 = vmatpush1.bf16.msra.mxu0 0
        %1008 = vmatprep.subr.bf16.mxu0 0
        %1009 = vmatpush1.bf16.msra.mxu0 0
        %1010 = vmatprep.subr.bf16.mxu0 0
        %1011 = vmatpush1.bf16.msra.mxu0 0
        %1012 = vmatprep.subr.bf16.mxu0 0
        %1013 = vmatpush1.bf16.msra.mxu0 0
        %1014 = vmatprep.subr.bf16.mxu0 0
        %1015 = vmatpush1.bf16.msra.mxu0 0
        %1016 = vmatprep.subr.bf16.mxu0 0
        %1017 = vmatpush1.bf16.msra.mxu0 0
        %1018 = vmatprep.subr.bf16.mxu0 0
        %1019 = vmatpush1.bf16.msra.mxu0 0
        %1020 = vmatprep.subr.bf16.mxu0 0
        %1021 = vmatpush1.bf16.msra.mxu0 0
        %1022 = vmatprep.mubr.bf16.mxu0 0
        %1023 = vmatmul.mubr.bf16.gmra.mrb[0].mxu0 %v943
        %v1024 = vpop.f32.mrb[0].mxu0
        %v1025 = vadd.f32 0.0, %v1024
        %v1026 = vpop.f32.mrb[0].mxu0
        %v1027 = vpop.f32.mrb[0].mxu0
        %v1028 = vadd.f32 0.0, %v1027
        %v1029 = vpop.f32.mrb[0].mxu0
        %1030 = vmatprep.mubr.bf16.mxu0 0
        %1031 = vmatmul.mubr.bf16.gmra.mrb[0].mxu0 %v946
        %v1032 = vpop.f32.mrb[0].mxu0
        %v1033 = vadd.f32 0.0, %v1032
        %v1034 = vpop.f32.mrb[0].mxu0
        %v1035 = vpop.f32.mrb[0].mxu0
        %v1036 = vadd.f32 0.0, %v1035
        %v1037 = vpop.f32.mrb[0].mxu0
        %1038 = vmatprep.mubr.bf16.mxu0 0
        %1039 = vmatmul.mubr.bf16.gmra.mrb[0].mxu0 %v949
        %v1040 = vpop.f32.mrb[0].mxu0
        %v1041 = vadd.f32 0.0, %v1040
        %v1042 = vpop.f32.mrb[0].mxu0
        %v1043 = vpop.f32.mrb[0].mxu0
        %v1044 = vadd.f32 0.0, %v1043
        %v1045 = vpop.f32.mrb[0].mxu0
        %1046 = vmatprep.mubr.bf16.mxu0 0
        %1047 = vmatmul.mubr.bf16.gmra.mrb[0].mxu0 %v952
        %v1048 = vpop.f32.mrb[0].mxu0
        %v1049 = vadd.f32 0.0, %v1048
        %v1050 = vpop.f32.mrb[0].mxu0
        %v1051 = vpop.f32.mrb[0].mxu0
        %v1052 = vadd.f32 0.0, %v1051
        %v1053 = vpop.f32.mrb[0].mxu0
        %1054 = vmatprep.mubr.bf16.mxu0 0
        %1055 = vmatmul.mubr.bf16.gmra.mrb[0].mxu0 %v955
        %v1056 = vpop.f32.mrb[0].mxu0
        %v1057 = vadd.f32 0.0, %v1056
        %v1058 = vpop.f32.mrb[0].mxu0
        %v1059 = vpop.f32.mrb[0].mxu0
        %v1060 = vadd.f32 0.0, %v1059
        %v1061 = vpop.f32.mrb[0].mxu0
        %1062 = vmatprep.mubr.bf16.mxu0 0
        %1063 = vmatmul.mubr.bf16.gmra.mrb[0].mxu0 %v958
        %v1064 = vpop.f32.mrb[0].mxu0
        %v1065 = vadd.f32 0.0, %v1064
        %v1066 = vpop.f32.mrb[0].mxu0
        %v1067 = vpop.f32.mrb[0].mxu0
        %v1068 = vadd.f32 0.0, %v1067
        %v1069 = vpop.f32.mrb[0].mxu0
        %1070 = vmatprep.mubr.bf16.mxu0 0
        %1071 = vmatmul.mubr.bf16.gmra.mrb[0].mxu0 %v961
        %v1072 = vpop.f32.mrb[0].mxu0
        %v1073 = vadd.f32 0.0, %v1072
        %v1074 = vpop.f32.mrb[0].mxu0
        %v1075 = vpop.f32.mrb[0].mxu0
        %v1076 = vadd.f32 0.0, %v1075
        %v1077 = vpop.f32.mrb[0].mxu0
        %1078 = vmatprep.mubr.bf16.mxu0 0
        %1079 = vmatmul.mubr.bf16.gmra.mrb[0].mxu0 %v964
        %v1080 = vpop.f32.mrb[0].mxu0
        %v1081 = vadd.f32 0.0, %v1080
        %v1082 = vpop.f32.mrb[0].mxu0
        %v1083 = vpop.f32.mrb[0].mxu0
        %v1084 = vadd.f32 0.0, %v1083
        %v1085 = vpop.f32.mrb[0].mxu0
        %1086 = vmatprep.mubr.bf16.mxu0 0
        %1087 = vmatmul.mubr.bf16.gmra.mrb[0].mxu0 %v967
        %v1088 = vpop.f32.mrb[0].mxu0
        %v1089 = vadd.f32 0.0, %v1088
        %v1090 = vpop.f32.mrb[0].mxu0
        %v1091 = vpop.f32.mrb[0].mxu0
        %v1092 = vadd.f32 0.0, %v1091
        %v1093 = vpop.f32.mrb[0].mxu0
        %1094 = vmatprep.mubr.bf16.mxu0 0
        %1095 = vmatmul.mubr.bf16.gmra.mrb[0].mxu0 %v970
        %v1096 = vpop.f32.mrb[0].mxu0
        %v1097 = vadd.f32 0.0, %v1096
        %v1098 = vpop.f32.mrb[0].mxu0
        %v1099 = vpop.f32.mrb[0].mxu0
        %v1100 = vadd.f32 0.0, %v1099
        %v1101 = vpop.f32.mrb[0].mxu0
        %1102 = vmatprep.mubr.bf16.mxu0 0
        %1103 = vmatmul.mubr.bf16.gmra.mrb[0].mxu0 %v973
        %v1104 = vpop.f32.mrb[0].mxu0
        %v1105 = vadd.f32 0.0, %v1104
        %v1106 = vpop.f32.mrb[0].mxu0
        %v1107 = vpop.f32.mrb[0].mxu0
        %v1108 = vadd.f32 0.0, %v1107
        %v1109 = vpop.f32.mrb[0].mxu0
        %1110 = vmatprep.mubr.bf16.mxu0 0
        %1111 = vmatmul.mubr.bf16.gmra.mrb[0].mxu0 %v976
        %v1112 = vpop.f32.mrb[0].mxu0
        %v1113 = vadd.f32 0.0, %v1112
        %v1114 = vpop.f32.mrb[0].mxu0
        %v1115 = vpop.f32.mrb[0].mxu0
        %v1116 = vadd.f32 0.0, %v1115
        %v1117 = vpop.f32.mrb[0].mxu0
        %1118 = vmatprep.mubr.bf16.mxu0 0
        %1119 = vmatmul.mubr.bf16.gmra.mrb[0].mxu0 %v979
        %v1120 = vpop.f32.mrb[0].mxu0
        %v1121 = vadd.f32 0.0, %v1120
        %v1122 = vpop.f32.mrb[0].mxu0
        %v1123 = vpop.f32.mrb[0].mxu0
        %v1124 = vadd.f32 0.0, %v1123
        %v1125 = vpop.f32.mrb[0].mxu0
        %1126 = vmatprep.mubr.bf16.mxu0 0
        %1127 = vmatmul.mubr.bf16.gmra.mrb[0].mxu0 %v982
        %v1128 = vpop.f32.mrb[0].mxu0
        %v1129 = vadd.f32 0.0, %v1128
        %v1130 = vpop.f32.mrb[0].mxu0
        %v1131 = vpop.f32.mrb[0].mxu0
        %v1132 = vadd.f32 0.0, %v1131
        %v1133 = vpop.f32.mrb[0].mxu0
        %1134 = vmatprep.mubr.bf16.mxu0 0
        %1135 = vmatmul.mubr.bf16.gmra.mrb[0].mxu0 %v985
        %v1136 = vpop.f32.mrb[0].mxu0
        %v1137 = vadd.f32 0.0, %v1136
        %v1138 = vpop.f32.mrb[0].mxu0
        %v1139 = vpop.f32.mrb[0].mxu0
        %v1140 = vadd.f32 0.0, %v1139
        %v1141 = vpop.f32.mrb[0].mxu0
        %1142 = vmatprep.mubr.bf16.mxu0 0
        %1143 = vmatmul.mubr.bf16.gmra.mrb[0].mxu0 %v988
        %v1144 = vpop.f32.mrb[0].mxu0
        %v1145 = vadd.f32 0.0, %v1144
        %v1146 = vpop.f32.mrb[0].mxu0
        %v1147 = vpop.f32.mrb[0].mxu0
        %v1148 = vadd.f32 0.0, %v1147
        %v1149 = vpop.f32.mrb[0].mxu0
        %1150 = vdwg.mxu0
        %v1151 = vld [vmem:[#allocation5] sm:$0x1]
        %v1153 = vlaneseq
        %v1154 = vshrl.u32 %v1153, 7
        %v1155 = vsub.s32 0, %v1154
        %v1156 = vrot.slane %v1151, %v1155
        %v1158 = vmul.f32 %v1025, %v1156
        %v1159 = vmul.f32 %v1028, %v1156
        %1162 = vrot.lane.b32.xlu0 %v1033, 113
        %v1163 = vpop.permute.xlu0 %1162
        %1164 = vrot.lane.b32.xlu0 %v1036, 113
        %v1165 = vpop.permute.xlu0 %1164
        %1168 = vrot.lane.b32.xlu0 %v1033, 1
        %v1169 = vpop.permute.xlu0 %1168
        %1170 = vrot.lane.b32.xlu0 %v1036, 1
        %v1171 = vpop.permute.xlu0 %1170
        %vm1174 = vcmask 7168
        %v1175 = vsel %vm1174, %v1163, %v1169
        %v1176 = vsel %vm1174, %v1165, %v1171
        %s1177 = scalar_lea.vmem [#allocation5], 1
        %v1178 = vld [vmem:[%s1177] sm:$0x1]
        %v1180 = vlaneseq
        %v1181 = vshrl.u32 %v1180, 7
        %v1182 = vsub.s32 0, %v1181
        %v1183 = vrot.slane %v1178, %v1182
        %v1185 = vmul.f32 %v1175, %v1183
        %v1186 = vmul.f32 %v1176, %v1183
        %v1187 = vadd.f32 %v1158, %v1185
        %v1188 = vadd.f32 %v1159, %v1186
        %1191 = vrot.lane.b32.xlu0 %v1041, 116
        %v1192 = vpop.permute.xlu0 %1191
        %1193 = vrot.lane.b32.xlu0 %v1044, 116
        %v1194 = vpop.permute.xlu0 %1193
        %1197 = vrot.lane.b32.xlu0 %v1041, 4
        %v1198 = vpop.permute.xlu0 %1197
        %1199 = vrot.lane.b32.xlu0 %v1044, 4
        %v1200 = vpop.permute.xlu0 %1199
        %vm1203 = vcmask 31744
        %v1204 = vsel %vm1203, %v1192, %v1198
        %v1205 = vsel %vm1203, %v1194, %v1200
        %s1206 = scalar_lea.vmem [#allocation5], 2
        %v1207 = vld [vmem:[%s1206] sm:$0x1]
        %v1209 = vlaneseq
        %v1210 = vshrl.u32 %v1209, 7
        %v1211 = vsub.s32 0, %v1210
        %v1212 = vrot.slane %v1207, %v1211
        %v1214 = vmul.f32 %v1204, %v1212
        %v1215 = vmul.f32 %v1205, %v1212
        %v1216 = vadd.f32 %v1187, %v1214
        %v1217 = vadd.f32 %v1188, %v1215
        %1220 = vrot.lane.b32.xlu0 %v1049, 117
        %v1221 = vpop.permute.xlu0 %1220
        %1222 = vrot.lane.b32.xlu0 %v1052, 117
        %v1223 = vpop.permute.xlu0 %1222
        %1226 = vrot.lane.b32.xlu0 %v1049, 5
        %v1227 = vpop.permute.xlu0 %1226
        %1228 = vrot.lane.b32.xlu0 %v1052, 5
        %v1229 = vpop.permute.xlu0 %1228
        %vm1232 = vcmask 39936
        %v1233 = vsel %vm1232, %v1221, %v1227
        %v1234 = vsel %vm1232, %v1223, %v1229
        %s1235 = scalar_lea.vmem [#allocation5], 3
        %v1236 = vld [vmem:[%s1235] sm:$0x1]
        %v1238 = vlaneseq
        %v1239 = vshrl.u32 %v1238, 7
        %v1240 = vsub.s32 0, %v1239
        %v1241 = vrot.slane %v1236, %v1240
        %v1243 = vmul.f32 %v1233, %v1241
        %v1244 = vmul.f32 %v1234, %v1241
        %v1245 = vadd.f32 %v1216, %v1243
        %v1246 = vadd.f32 %v1217, %v1244
        %1249 = vrot.lane.b32.xlu0 %v1057, 127
        %v1250 = vpop.permute.xlu0 %1249
        %1251 = vrot.lane.b32.xlu0 %v1060, 127
        %v1252 = vpop.permute.xlu0 %1251
        %1255 = vrot.lane.b32.xlu0 %v1057, 15
        %v1256 = vpop.permute.xlu0 %1255
        %1257 = vrot.lane.b32.xlu0 %v1060, 15
        %v1258 = vpop.permute.xlu0 %1257
        %vm1261 = vcmask 121856
        %v1262 = vsel %vm1261, %v1250, %v1256
        %v1263 = vsel %vm1261, %v1252, %v1258
        %s1264 = scalar_lea.vmem [#allocation5], 4
        %v1265 = vld [vmem:[%s1264] sm:$0x1]
        %v1267 = vlaneseq
        %v1268 = vshrl.u32 %v1267, 7
        %v1269 = vsub.s32 0, %v1268
        %v1270 = vrot.slane %v1265, %v1269
        %v1272 = vmul.f32 %v1262, %v1270
        %v1273 = vmul.f32 %v1263, %v1270
        %s1274 = scalar_lea.vmem [#allocation5], 5
        %v1275 = vld [vmem:[%s1274] sm:$0x1]
        %v1277 = vlaneseq
        %v1278 = vshrl.u32 %v1277, 7
        %v1279 = vsub.s32 0, %v1278
        %v1280 = vrot.slane %v1275, %v1279
        %v1282 = vmul.f32 %v1065, %v1280
        %v1283 = vmul.f32 %v1068, %v1280
        %v1284 = vadd.f32 %v1272, %v1282
        %v1285 = vadd.f32 %v1273, %v1283
        %1288 = vrot.lane.b32.xlu0 %v1073, 115
        %v1289 = vpop.permute.xlu0 %1288
        %1290 = vrot.lane.b32.xlu0 %v1076, 115
        %v1291 = vpop.permute.xlu0 %1290
        %1294 = vrot.lane.b32.xlu0 %v1073, 3
        %v1295 = vpop.permute.xlu0 %1294
        %1296 = vrot.lane.b32.xlu0 %v1076, 3
        %v1297 = vpop.permute.xlu0 %1296
        %vm1300 = vcmask 23552
        %v1301 = vsel %vm1300, %v1289, %v1295
        %v1302 = vsel %vm1300, %v1291, %v1297
        %s1303 = scalar_lea.vmem [#allocation5], 6
        %v1304 = vld [vmem:[%s1303] sm:$0x1]
        %v1306 = vlaneseq
        %v1307 = vshrl.u32 %v1306, 7
        %v1308 = vsub.s32 0, %v1307
        %v1309 = vrot.slane %v1304, %v1308
        %v1311 = vmul.f32 %v1301, %v1309
        %v1312 = vmul.f32 %v1302, %v1309
        %v1313 = vadd.f32 %v1284, %v1311
        %v1314 = vadd.f32 %v1285, %v1312
        %1317 = vrot.lane.b32.xlu0 %v1081, 116
        %v1318 = vpop.permute.xlu0 %1317
        %1319 = vrot.lane.b32.xlu0 %v1084, 116
        %v1320 = vpop.permute.xlu0 %1319
        %1323 = vrot.lane.b32.xlu0 %v1081, 4
        %v1324 = vpop.permute.xlu0 %1323
        %1325 = vrot.lane.b32.xlu0 %v1084, 4
        %v1326 = vpop.permute.xlu0 %1325
        %v1329 = vsel %vm1203, %v1318, %v1324
        %v1330 = vsel %vm1203, %v1320, %v1326
        %s1331 = scalar_lea.vmem [#allocation5], 7
        %v1332 = vld [vmem:[%s1331] sm:$0x1]
        %v1334 = vlaneseq
        %v1335 = vshrl.u32 %v1334, 7
        %v1336 = vsub.s32 0, %v1335
        %v1337 = vrot.slane %v1332, %v1336
        %v1339 = vmul.f32 %v1329, %v1337
        %v1340 = vmul.f32 %v1330, %v1337
        %v1341 = vadd.f32 %v1313, %v1339
        %v1342 = vadd.f32 %v1314, %v1340
        %1345 = vrot.lane.b32.xlu0 %v1089, 124
        %v1346 = vpop.permute.xlu0 %1345
        %1347 = vrot.lane.b32.xlu0 %v1092, 124
        %v1348 = vpop.permute.xlu0 %1347
        %1351 = vrot.lane.b32.xlu0 %v1089, 12
        %v1352 = vpop.permute.xlu0 %1351
        %1353 = vrot.lane.b32.xlu0 %v1092, 12
        %v1354 = vpop.permute.xlu0 %1353
        %vm1357 = vcmask 97280
        %v1358 = vsel %vm1357, %v1346, %v1352
        %v1359 = vsel %vm1357, %v1348, %v1354
        %s1360 = scalar_lea.vmem [#allocation5], 8
        %v1361 = vld [vmem:[%s1360] sm:$0x1]
        %v1363 = vlaneseq
        %v1364 = vshrl.u32 %v1363, 7
        %v1365 = vsub.s32 0, %v1364
        %v1366 = vrot.slane %v1361, %v1365
        %v1368 = vmul.f32 %v1358, %v1366
        %v1369 = vmul.f32 %v1359, %v1366
        %1372 = vrot.lane.b32.xlu0 %v1097, 125
        %v1373 = vpop.permute.xlu0 %1372
        %1374 = vrot.lane.b32.xlu0 %v1100, 125
        %v1375 = vpop.permute.xlu0 %1374
        %1378 = vrot.lane.b32.xlu0 %v1097, 13
        %v1379 = vpop.permute.xlu0 %1378
        %1380 = vrot.lane.b32.xlu0 %v1100, 13
        %v1381 = vpop.permute.xlu0 %1380
        %vm1384 = vcmask 105472
        %v1385 = vsel %vm1384, %v1373, %v1379
        %v1386 = vsel %vm1384, %v1375, %v1381
        %s1387 = scalar_lea.vmem [#allocation5], 9
        %v1388 = vld [vmem:[%s1387] sm:$0x1]
        %v1390 = vlaneseq
        %v1391 = vshrl.u32 %v1390, 7
        %v1392 = vsub.s32 0, %v1391
        %v1393 = vrot.slane %v1388, %v1392
        %v1395 = vmul.f32 %v1385, %v1393
        %v1396 = vmul.f32 %v1386, %v1393
        %v1397 = vadd.f32 %v1368, %v1395
        %v1398 = vadd.f32 %v1369, %v1396
        %s1399 = scalar_lea.vmem [#allocation5], 10
        %v1400 = vld [vmem:[%s1399] sm:$0x1]
        %v1402 = vlaneseq
        %v1403 = vshrl.u32 %v1402, 7
        %v1404 = vsub.s32 0, %v1403
        %v1405 = vrot.slane %v1400, %v1404
        %v1407 = vmul.f32 %v1105, %v1405
        %v1408 = vmul.f32 %v1108, %v1405
        %v1409 = vadd.f32 %v1397, %v1407
        %v1410 = vadd.f32 %v1398, %v1408
        %1413 = vrot.lane.b32.xlu0 %v1113, 113
        %v1414 = vpop.permute.xlu0 %1413
        %1415 = vrot.lane.b32.xlu0 %v1116, 113
        %v1416 = vpop.permute.xlu0 %1415
        %1419 = vrot.lane.b32.xlu0 %v1113, 1
        %v1420 = vpop.permute.xlu0 %1419
        %1421 = vrot.lane.b32.xlu0 %v1116, 1
        %v1422 = vpop.permute.xlu0 %1421
        %v1425 = vsel %vm1174, %v1414, %v1420
        %v1426 = vsel %vm1174, %v1416, %v1422
        %s1427 = scalar_lea.vmem [#allocation5], 11
        %v1428 = vld [vmem:[%s1427] sm:$0x1]
        %v1430 = vlaneseq
        %v1431 = vshrl.u32 %v1430, 7
        %v1432 = vsub.s32 0, %v1431
        %v1433 = vrot.slane %v1428, %v1432
        %v1435 = vmul.f32 %v1425, %v1433
        %v1436 = vmul.f32 %v1426, %v1433
        %v1437 = vadd.f32 %v1409, %v1435
        %v1438 = vadd.f32 %v1410, %v1436
        %1441 = vrot.lane.b32.xlu0 %v1121, 123
        %v1442 = vpop.permute.xlu0 %1441
        %1443 = vrot.lane.b32.xlu0 %v1124, 123
        %v1444 = vpop.permute.xlu0 %1443
        %1447 = vrot.lane.b32.xlu0 %v1121, 11
        %v1448 = vpop.permute.xlu0 %1447
        %1449 = vrot.lane.b32.xlu0 %v1124, 11
        %v1450 = vpop.permute.xlu0 %1449
        %vm1453 = vcmask 89088
        %v1454 = vsel %vm1453, %v1442, %v1448
        %v1455 = vsel %vm1453, %v1444, %v1450
        %s1456 = scalar_lea.vmem [#allocation5], 12
        %v1457 = vld [vmem:[%s1456] sm:$0x1]
        %v1459 = vlaneseq
        %v1460 = vshrl.u32 %v1459, 7
        %v1461 = vsub.s32 0, %v1460
        %v1462 = vrot.slane %v1457, %v1461
        %v1464 = vmul.f32 %v1454, %v1462
        %v1465 = vmul.f32 %v1455, %v1462
        %1468 = vrot.lane.b32.xlu0 %v1129, 124
        %v1469 = vpop.permute.xlu0 %1468
        %1470 = vrot.lane.b32.xlu0 %v1132, 124
        %v1471 = vpop.permute.xlu0 %1470
        %1474 = vrot.lane.b32.xlu0 %v1129, 12
        %v1475 = vpop.permute.xlu0 %1474
        %1476 = vrot.lane.b32.xlu0 %v1132, 12
        %v1477 = vpop.permute.xlu0 %1476
        %v1480 = vsel %vm1357, %v1469, %v1475
        %v1481 = vsel %vm1357, %v1471, %v1477
        %s1482 = scalar_lea.vmem [#allocation5], 13
        %v1483 = vld [vmem:[%s1482] sm:$0x1]
        %v1485 = vlaneseq
        %v1486 = vshrl.u32 %v1485, 7
        %v1487 = vsub.s32 0, %v1486
        %v1488 = vrot.slane %v1483, %v1487
        %v1490 = vmul.f32 %v1480, %v1488
        %v1491 = vmul.f32 %v1481, %v1488
        %v1492 = vadd.f32 %v1464, %v1490
        %v1493 = vadd.f32 %v1465, %v1491
        %1496 = vrot.lane.b32.xlu0 %v1137, 127
        %v1497 = vpop.permute.xlu0 %1496
        %1498 = vrot.lane.b32.xlu0 %v1140, 127
        %v1499 = vpop.permute.xlu0 %1498
        %1502 = vrot.lane.b32.xlu0 %v1137, 15
        %v1503 = vpop.permute.xlu0 %1502
        %1504 = vrot.lane.b32.xlu0 %v1140, 15
        %v1505 = vpop.permute.xlu0 %1504
        %v1508 = vsel %vm1261, %v1497, %v1503
        %v1509 = vsel %vm1261, %v1499, %v1505
        %s1510 = scalar_lea.vmem [#allocation5], 14
        %v1511 = vld [vmem:[%s1510] sm:$0x1]
        %v1513 = vlaneseq
        %v1514 = vshrl.u32 %v1513, 7
        %v1515 = vsub.s32 0, %v1514
        %v1516 = vrot.slane %v1511, %v1515
        %v1518 = vmul.f32 %v1508, %v1516
        %v1519 = vmul.f32 %v1509, %v1516
        %v1520 = vadd.f32 %v1492, %v1518
        %v1521 = vadd.f32 %v1493, %v1519
        %s1522 = scalar_lea.vmem [#allocation5], 15
        %v1523 = vld [vmem:[%s1522] sm:$0x1]
        %v1525 = vlaneseq
        %v1526 = vshrl.u32 %v1525, 7
        %v1527 = vsub.s32 0, %v1526
        %v1528 = vrot.slane %v1523, %v1527
        %v1530 = vmul.f32 %v1145, %v1528
        %v1531 = vmul.f32 %v1148, %v1528
        %v1532 = vadd.f32 %v1520, %v1530
        %v1533 = vadd.f32 %v1521, %v1531
        %1536 = vrot.lane.b32.xlu0 %v1341, 16
        %v1537 = vpop.permute.xlu0 %1536
        %1538 = vrot.lane.b32.xlu0 %v1342, 16
        %v1539 = vpop.permute.xlu0 %1538
        %1544 = vrot.lane.b32.xlu0 %v1437, 32
        %v1545 = vpop.permute.xlu0 %1544
        %1546 = vrot.lane.b32.xlu0 %v1438, 32
        %v1547 = vpop.permute.xlu0 %1546
        %1552 = vrot.lane.b32.xlu0 %v1532, 48
        %v1553 = vpop.permute.xlu0 %1552
        %1554 = vrot.lane.b32.xlu0 %v1533, 48
        %v1555 = vpop.permute.xlu0 %1554
        %vm1558 = vcmask 130048
        %v1559 = vsel %vm1558, %v1245, %v1537
        %v1560 = vsel %vm1558, %v1246, %v1539
        %v1561 = vsel %vm941, %v1559, %v1545
        %v1562 = vsel %vm941, %v1560, %v1547
        %vm1563 = vcmask 392192
        %v1564 = vsel %vm1563, %v1561, %v1553
        %v1565 = vsel %vm1563, %v1562, %v1555
        %v1566 = vld [vmem:[%s4] sm:$0xff]
        %v1567 = vld [vmem:[%s4 + $0x8] sm:$0xff]
        %1569 = vset.pattern.permute.xlu0 0
        %1570 = vperm.xlu0 %1569, %v1566
        %v1571 = vpop.permute.xlu0 %1570
        %1574 = vset.pattern.permute.xlu0 0
        %1575 = vperm.xlu0 %1574, %v1567
        %v1576 = vpop.permute.xlu0 %1575
        %v1578 = vadd.f32 %v1564, %v1571
        %v1579 = vadd.f32 %v1565, %v1576
        %v1580 = vmax.f32 %v1578, 0.0
        %v1581 = vmax.f32 %v1579, 0.0
        %v1582 = vpack.c.bf16 %v1581, %v1580
        %v1583 = vld [vmem:[#allocation7] sm:$0xf]
        %v1584 = vld [vmem:[#allocation7 + $0x4] sm:$0xf]
        %v1585 = vld [vmem:[#allocation7 + $0x8] sm:$0xf]
        %v1586 = vld [vmem:[#allocation7 + $0xc] sm:$0xf]
        %v1587 = vld [vmem:[#allocation7 + $0x10] sm:$0xf]
        %v1588 = vld [vmem:[#allocation7 + $0x14] sm:$0xf]
        %v1589 = vld [vmem:[#allocation7 + $0x18] sm:$0xf]
        %v1590 = vld [vmem:[#allocation7 + $0x1c] sm:$0xf]
        %v1599 = vunpack.c.l.b16 %v1583
        %v1600 = vunpack.c.l.b16 %v1584
        %v1601 = vunpack.c.l.b16 %v1585
        %v1602 = vunpack.c.l.b16 %v1586
        %v1603 = vunpack.c.l.b16 %v1587
        %v1604 = vunpack.c.l.b16 %v1588
        %v1605 = vunpack.c.l.b16 %v1589
        %v1606 = vunpack.c.l.b16 %v1590
        %v1607 = vpack.c.b16 %v1600, %v1599
        %v1608 = vpack.c.b16 %v1602, %v1601
        %v1609 = vpack.c.b16 %v1604, %v1603
        %v1610 = vpack.c.b16 %v1606, %v1605
        %vm1615 = vcmask 523264
        %v1617 = vsel %vm1615, %v1582, 0
        %1619 = vmatprep.subr.bf16.mxu0 0
        %1620 = vmatpush1.bf16.msra.mxu0 %v1607
        %1621 = vmatprep.subr.bf16.mxu0 0
        %1622 = vmatpush1.bf16.msra.mxu0 %v1608
        %1623 = vmatprep.subr.bf16.mxu0 0
        %1624 = vmatpush1.bf16.msra.mxu0 %v1609
        %1625 = vmatprep.subr.bf16.mxu0 0
        %1626 = vmatpush1.bf16.msra.mxu0 %v1610
        %1627 = vmatprep.subr.bf16.mxu0 0
        %1628 = vmatpush1.bf16.msra.mxu0 0
        %1629 = vmatprep.subr.bf16.mxu0 0
        %1630 = vmatpush1.bf16.msra.mxu0 0
        %1631 = vmatprep.subr.bf16.mxu0 0
        %1632 = vmatpush1.bf16.msra.mxu0 0
        %1633 = vmatprep.subr.bf16.mxu0 0
        %1634 = vmatpush1.bf16.msra.mxu0 0
        %1635 = vmatprep.subr.bf16.mxu0 0
        %1636 = vmatpush1.bf16.msra.mxu0 0
        %1637 = vmatprep.subr.bf16.mxu0 0
        %1638 = vmatpush1.bf16.msra.mxu0 0
        %1639 = vmatprep.subr.bf16.mxu0 0
        %1640 = vmatpush1.bf16.msra.mxu0 0
        %1641 = vmatprep.subr.bf16.mxu0 0
        %1642 = vmatpush1.bf16.msra.mxu0 0
        %1643 = vmatprep.subr.bf16.mxu0 0
        %1644 = vmatpush1.bf16.msra.mxu0 0
        %1645 = vmatprep.subr.bf16.mxu0 0
        %1646 = vmatpush1.bf16.msra.mxu0 0
        %1647 = vmatprep.subr.bf16.mxu0 0
        %1648 = vmatpush1.bf16.msra.mxu0 0
        %1649 = vmatprep.subr.bf16.mxu0 0
        %1650 = vmatpush1.bf16.msra.mxu0 0
        %1651 = vmatprep.mubr.bf16.mxu0 0
        %1652 = vmatmul.mubr.bf16.gmra.mrb[0].mxu0 %v1617
        %v1653 = vpop.f32.mrb[0].mxu0
        %v1654 = vadd.f32 0.0, %v1653
        %v1655 = vpop.f32.mrb[0].mxu0
        %v1656 = vpop.f32.mrb[0].mxu0
        %v1657 = vadd.f32 0.0, %v1656
        %v1658 = vpop.f32.mrb[0].mxu0
        %1659 = vdwg.mxu0
        %v1660 = vld [vmem:[%s7] sm:$0xf]
        %v1661 = vld [vmem:[%s7 + $0x4] sm:$0xf]
        %v1662 = vld [vmem:[%s7 + $0x8] sm:$0xf]
        %v1663 = vld [vmem:[%s7 + $0xc] sm:$0xf]
        %v1664 = vld [vmem:[%s7 + $0x10] sm:$0xf]
        %v1665 = vld [vmem:[%s7 + $0x14] sm:$0xf]
        %v1666 = vld [vmem:[%s7 + $0x18] sm:$0xf]
        %v1667 = vld [vmem:[%s7 + $0x1c] sm:$0xf]
        %v1668 = vld [vmem:[%s7 + $0x20] sm:$0xf]
        %v1669 = vld [vmem:[%s7 + $0x24] sm:$0xf]
        %v1670 = vld [vmem:[%s7 + $0x28] sm:$0xf]
        %v1671 = vld [vmem:[%s7 + $0x2c] sm:$0xf]
        %v1672 = vld [vmem:[%s7 + $0x30] sm:$0xf]
        %v1673 = vld [vmem:[%s7 + $0x34] sm:$0xf]
        %v1674 = vld [vmem:[%s7 + $0x38] sm:$0xf]
        %v1675 = vld [vmem:[%s7 + $0x3c] sm:$0xf]
        %v1676 = vpack.c.bf16 %v1657, %v1654
        %v1693 = vunpack.c.l.b16 %v1660
        %v1694 = vunpack.c.l.b16 %v1661
        %v1695 = vunpack.c.l.b16 %v1662
        %v1696 = vunpack.c.l.b16 %v1663
        %v1697 = vunpack.c.l.b16 %v1664
        %v1698 = vunpack.c.l.b16 %v1665
        %v1699 = vunpack.c.l.b16 %v1666
        %v1700 = vunpack.c.l.b16 %v1667
        %v1701 = vunpack.c.l.b16 %v1668
        %v1702 = vunpack.c.l.b16 %v1669
        %v1703 = vunpack.c.l.b16 %v1670
        %v1704 = vunpack.c.l.b16 %v1671
        %v1705 = vunpack.c.l.b16 %v1672
        %v1706 = vunpack.c.l.b16 %v1673
        %v1707 = vunpack.c.l.b16 %v1674
        %v1708 = vunpack.c.l.b16 %v1675
        %v1709 = vpack.c.b16 %v1694, %v1693
        %v1710 = vpack.c.b16 %v1696, %v1695
        %v1711 = vpack.c.b16 %v1698, %v1697
        %v1712 = vpack.c.b16 %v1700, %v1699
        %v1713 = vpack.c.b16 %v1702, %v1701
        %v1714 = vpack.c.b16 %v1704, %v1703
        %v1715 = vpack.c.b16 %v1706, %v1705
        %v1716 = vpack.c.b16 %v1708, %v1707
        %v1718 = vsel %vm1558, %v1709, 0
        %v1721 = vsel %vm1558, %v1710, 0
        %v1724 = vsel %vm1558, %v1711, 0
        %v1727 = vsel %vm1558, %v1712, 0
        %v1730 = vsel %vm1558, %v1713, 0
        %v1733 = vsel %vm1558, %v1714, 0
        %v1736 = vsel %vm1558, %v1715, 0
        %v1739 = vsel %vm1558, %v1716, 0
        %1741 = vmatprep.subr.bf16.mxu0 0
        %1742 = vmatpush1.bf16.msra.mxu0 %v1676
        %1743 = vmatprep.subr.bf16.mxu0 0
        %1744 = vmatpush1.bf16.msra.mxu0 0
        %1745 = vmatprep.subr.bf16.mxu0 0
        %1746 = vmatpush1.bf16.msra.mxu0 0
        %1747 = vmatprep.subr.bf16.mxu0 0
        %1748 = vmatpush1.bf16.msra.mxu0 0
        %1749 = vmatprep.subr.bf16.mxu0 0
        %1750 = vmatpush1.bf16.msra.mxu0 0
        %1751 = vmatprep.subr.bf16.mxu0 0
        %1752 = vmatpush1.bf16.msra.mxu0 0
        %1753 = vmatprep.subr.bf16.mxu0 0
        %1754 = vmatpush1.bf16.msra.mxu0 0
        %1755 = vmatprep.subr.bf16.mxu0 0
        %1756 = vmatpush1.bf16.msra.mxu0 0
        %1757 = vmatprep.subr.bf16.mxu0 0
        %1758 = vmatpush1.bf16.msra.mxu0 0
        %1759 = vmatprep.subr.bf16.mxu0 0
        %1760 = vmatpush1.bf16.msra.mxu0 0
        %1761 = vmatprep.subr.bf16.mxu0 0
        %1762 = vmatpush1.bf16.msra.mxu0 0
        %1763 = vmatprep.subr.bf16.mxu0 0
        %1764 = vmatpush1.bf16.msra.mxu0 0
        %1765 = vmatprep.subr.bf16.mxu0 0
        %1766 = vmatpush1.bf16.msra.mxu0 0
        %1767 = vmatprep.subr.bf16.mxu0 0
        %1768 = vmatpush1.bf16.msra.mxu0 0
        %1769 = vmatprep.subr.bf16.mxu0 0
        %1770 = vmatpush1.bf16.msra.mxu0 0
        %1771 = vmatprep.subr.bf16.mxu0 0
        %1772 = vmatpush1.bf16.msra.mxu0 0
        %1773 = vmatprep.mubr.bf16.mxu0 0
        %1774 = vmatmul.mubr.bf16.gmra.mrb[0].mxu0 %v1718
        %v1775 = vpop.f32.mrb[0].mxu0
        %v1776 = vadd.f32 0.0, %v1775
        %v1777 = vpop.f32.mrb[0].mxu0
        %v1778 = vpop.f32.mrb[0].mxu0
        %v1779 = vadd.f32 0.0, %v1778
        %v1780 = vpop.f32.mrb[0].mxu0
        %1781 = vmatprep.mubr.bf16.mxu0 0
        %1782 = vmatmul.mubr.bf16.gmra.mrb[0].mxu0 %v1721
        %v1783 = vpop.f32.mrb[0].mxu0
        %v1784 = vadd.f32 0.0, %v1783
        %v1785 = vpop.f32.mrb[0].mxu0
        %v1786 = vpop.f32.mrb[0].mxu0
        %v1787 = vadd.f32 0.0, %v1786
        %v1788 = vpop.f32.mrb[0].mxu0
        %1789 = vmatprep.mubr.bf16.mxu0 0
        %1790 = vmatmul.mubr.bf16.gmra.mrb[0].mxu0 %v1724
        %v1791 = vpop.f32.mrb[0].mxu0
        %v1792 = vadd.f32 0.0, %v1791
        %v1793 = vpop.f32.mrb[0].mxu0
        %v1794 = vpop.f32.mrb[0].mxu0
        %v1795 = vadd.f32 0.0, %v1794
        %v1796 = vpop.f32.mrb[0].mxu0
        %1797 = vmatprep.mubr.bf16.mxu0 0
        %1798 = vmatmul.mubr.bf16.gmra.mrb[0].mxu0 %v1727
        %v1799 = vpop.f32.mrb[0].mxu0
        %v1800 = vadd.f32 0.0, %v1799
        %v1801 = vpop.f32.mrb[0].mxu0
        %v1802 = vpop.f32.mrb[0].mxu0
        %v1803 = vadd.f32 0.0, %v1802
        %v1804 = vpop.f32.mrb[0].mxu0
        %1805 = vmatprep.mubr.bf16.mxu0 0
        %1806 = vmatmul.mubr.bf16.gmra.mrb[0].mxu0 %v1730
        %v1807 = vpop.f32.mrb[0].mxu0
        %v1808 = vadd.f32 0.0, %v1807
        %v1809 = vpop.f32.mrb[0].mxu0
        %v1810 = vpop.f32.mrb[0].mxu0
        %v1811 = vadd.f32 0.0, %v1810
        %v1812 = vpop.f32.mrb[0].mxu0
        %1813 = vmatprep.mubr.bf16.mxu0 0
        %1814 = vmatmul.mubr.bf16.gmra.mrb[0].mxu0 %v1733
        %v1815 = vpop.f32.mrb[0].mxu0
        %v1816 = vadd.f32 0.0, %v1815
        %v1817 = vpop.f32.mrb[0].mxu0
        %v1818 = vpop.f32.mrb[0].mxu0
        %v1819 = vadd.f32 0.0, %v1818
        %v1820 = vpop.f32.mrb[0].mxu0
        %1821 = vmatprep.mubr.bf16.mxu0 0
        %1822 = vmatmul.mubr.bf16.gmra.mrb[0].mxu0 %v1736
        %v1823 = vpop.f32.mrb[0].mxu0
        %v1824 = vadd.f32 0.0, %v1823
        %v1825 = vpop.f32.mrb[0].mxu0
        %v1826 = vpop.f32.mrb[0].mxu0
        %v1827 = vadd.f32 0.0, %v1826
        %v1828 = vpop.f32.mrb[0].mxu0
        %1829 = vmatprep.mubr.bf16.mxu0 0
        %1830 = vmatmul.mubr.bf16.gmra.mrb[0].mxu0 %v1739
        %v1831 = vpop.f32.mrb[0].mxu0
        %v1832 = vadd.f32 0.0, %v1831
        %v1833 = vpop.f32.mrb[0].mxu0
        %v1834 = vpop.f32.mrb[0].mxu0
        %v1835 = vadd.f32 0.0, %v1834
        %v1836 = vpop.f32.mrb[0].mxu0
        %1837 = vdwg.mxu0
        %v1838 = vld [vmem:[#allocation8] sm:$0x1]
        %v1840 = vlaneseq
        %v1841 = vshrl.u32 %v1840, 7
        %v1842 = vsub.s32 0, %v1841
        %v1843 = vrot.slane %v1838, %v1842
        %v1845 = vmul.f32 %v1776, %v1843
        %1847 = vrot.lane.b32.xlu0 %v1779, 65
        %v1848 = vpop.permute.xlu0 %1847
        %1850 = vrot.lane.b32.xlu0 %v1779, 1
        %v1851 = vpop.permute.xlu0 %1850
        %v1853 = vsel %vm1174, %v1848, %v1851
        %s1854 = scalar_lea.vmem [#allocation8], 1
        %v1855 = vld [vmem:[%s1854] sm:$0x1]
        %v1857 = vlaneseq
        %v1858 = vshrl.u32 %v1857, 7
        %v1859 = vsub.s32 0, %v1858
        %v1860 = vrot.slane %v1855, %v1859
        %v1862 = vmul.f32 %v1853, %v1860
        %v1863 = vadd.f32 %v1845, %v1862
        %1865 = vrot.lane.b32.xlu0 %v1784, 72
        %v1866 = vpop.permute.xlu0 %1865
        %1868 = vrot.lane.b32.xlu0 %v1784, 8
        %v1869 = vpop.permute.xlu0 %1868
        %vm1871 = vcmask 64512
        %v1872 = vsel %vm1871, %v1866, %v1869
        %s1873 = scalar_lea.vmem [#allocation8], 2
        %v1874 = vld [vmem:[%s1873] sm:$0x1]
        %v1876 = vlaneseq
        %v1877 = vshrl.u32 %v1876, 7
        %v1878 = vsub.s32 0, %v1877
        %v1879 = vrot.slane %v1874, %v1878
        %v1881 = vmul.f32 %v1872, %v1879
        %v1882 = vadd.f32 %v1863, %v1881
        %1884 = vrot.lane.b32.xlu0 %v1787, 73
        %v1885 = vpop.permute.xlu0 %1884
        %1887 = vrot.lane.b32.xlu0 %v1787, 9
        %v1888 = vpop.permute.xlu0 %1887
        %vm1890 = vcmask 72704
        %v1891 = vsel %vm1890, %v1885, %v1888
        %s1892 = scalar_lea.vmem [#allocation8], 3
        %v1893 = vld [vmem:[%s1892] sm:$0x1]
        %v1895 = vlaneseq
        %v1896 = vshrl.u32 %v1895, 7
        %v1897 = vsub.s32 0, %v1896
        %v1898 = vrot.slane %v1893, %v1897
        %v1900 = vmul.f32 %v1891, %v1898
        %v1901 = vadd.f32 %v1882, %v1900
        %1903 = vrot.lane.b32.xlu0 %v1792, 127
        %v1904 = vpop.permute.xlu0 %1903
        %1906 = vrot.lane.b32.xlu0 %v1792, 63
        %v1907 = vpop.permute.xlu0 %1906
        %vm1909 = vcmask 515072
        %v1910 = vsel %vm1909, %v1904, %v1907
        %s1911 = scalar_lea.vmem [#allocation8], 4
        %v1912 = vld [vmem:[%s1911] sm:$0x1]
        %v1914 = vlaneseq
        %v1915 = vshrl.u32 %v1914, 7
        %v1916 = vsub.s32 0, %v1915
        %v1917 = vrot.slane %v1912, %v1916
        %v1919 = vmul.f32 %v1910, %v1917
        %s1920 = scalar_lea.vmem [#allocation8], 5
        %v1921 = vld [vmem:[%s1920] sm:$0x1]
        %v1923 = vlaneseq
        %v1924 = vshrl.u32 %v1923, 7
        %v1925 = vsub.s32 0, %v1924
        %v1926 = vrot.slane %v1921, %v1925
        %v1928 = vmul.f32 %v1795, %v1926
        %v1929 = vadd.f32 %v1919, %v1928
        %1931 = vrot.lane.b32.xlu0 %v1800, 71
        %v1932 = vpop.permute.xlu0 %1931
        %1934 = vrot.lane.b32.xlu0 %v1800, 7
        %v1935 = vpop.permute.xlu0 %1934
        %vm1937 = vcmask 56320
        %v1938 = vsel %vm1937, %v1932, %v1935
        %s1939 = scalar_lea.vmem [#allocation8], 6
        %v1940 = vld [vmem:[%s1939] sm:$0x1]
        %v1942 = vlaneseq
        %v1943 = vshrl.u32 %v1942, 7
        %v1944 = vsub.s32 0, %v1943
        %v1945 = vrot.slane %v1940, %v1944
        %v1947 = vmul.f32 %v1938, %v1945
        %v1948 = vadd.f32 %v1929, %v1947
        %1950 = vrot.lane.b32.xlu0 %v1803, 72
        %v1951 = vpop.permute.xlu0 %1950
        %1953 = vrot.lane.b32.xlu0 %v1803, 8
        %v1954 = vpop.permute.xlu0 %1953
        %v1956 = vsel %vm1871, %v1951, %v1954
        %s1957 = scalar_lea.vmem [#allocation8], 7
        %v1958 = vld [vmem:[%s1957] sm:$0x1]
        %v1960 = vlaneseq
        %v1961 = vshrl.u32 %v1960, 7
        %v1962 = vsub.s32 0, %v1961
        %v1963 = vrot.slane %v1958, %v1962
        %v1965 = vmul.f32 %v1956, %v1963
        %v1966 = vadd.f32 %v1948, %v1965
        %1968 = vrot.lane.b32.xlu0 %v1808, 120
        %v1969 = vpop.permute.xlu0 %1968
        %1971 = vrot.lane.b32.xlu0 %v1808, 56
        %v1972 = vpop.permute.xlu0 %1971
        %vm1974 = vcmask 457728
        %v1975 = vsel %vm1974, %v1969, %v1972
        %s1976 = scalar_lea.vmem [#allocation8], 8
        %v1977 = vld [vmem:[%s1976] sm:$0x1]
        %v1979 = vlaneseq
        %v1980 = vshrl.u32 %v1979, 7
        %v1981 = vsub.s32 0, %v1980
        %v1982 = vrot.slane %v1977, %v1981
        %v1984 = vmul.f32 %v1975, %v1982
        %1986 = vrot.lane.b32.xlu0 %v1811, 121
        %v1987 = vpop.permute.xlu0 %1986
        %1989 = vrot.lane.b32.xlu0 %v1811, 57
        %v1990 = vpop.permute.xlu0 %1989
        %vm1992 = vcmask 465920
        %v1993 = vsel %vm1992, %v1987, %v1990
        %s1994 = scalar_lea.vmem [#allocation8], 9
        %v1995 = vld [vmem:[%s1994] sm:$0x1]
        %v1997 = vlaneseq
        %v1998 = vshrl.u32 %v1997, 7
        %v1999 = vsub.s32 0, %v1998
        %v2000 = vrot.slane %v1995, %v1999
        %v2002 = vmul.f32 %v1993, %v2000
        %v2003 = vadd.f32 %v1984, %v2002
        %s2004 = scalar_lea.vmem [#allocation8], 10
        %v2005 = vld [vmem:[%s2004] sm:$0x1]
        %v2007 = vlaneseq
        %v2008 = vshrl.u32 %v2007, 7
        %v2009 = vsub.s32 0, %v2008
        %v2010 = vrot.slane %v2005, %v2009
        %v2012 = vmul.f32 %v1816, %v2010
        %v2013 = vadd.f32 %v2003, %v2012
        %2015 = vrot.lane.b32.xlu0 %v1819, 65
        %v2016 = vpop.permute.xlu0 %2015
        %2018 = vrot.lane.b32.xlu0 %v1819, 1
        %v2019 = vpop.permute.xlu0 %2018
        %v2021 = vsel %vm1174, %v2016, %v2019
        %s2022 = scalar_lea.vmem [#allocation8], 11
        %v2023 = vld [vmem:[%s2022] sm:$0x1]
        %v2025 = vlaneseq
        %v2026 = vshrl.u32 %v2025, 7
        %v2027 = vsub.s32 0, %v2026
        %v2028 = vrot.slane %v2023, %v2027
        %v2030 = vmul.f32 %v2021, %v2028
        %v2031 = vadd.f32 %v2013, %v2030
        %2033 = vrot.lane.b32.xlu0 %v1824, 119
        %v2034 = vpop.permute.xlu0 %2033
        %2036 = vrot.lane.b32.xlu0 %v1824, 55
        %v2037 = vpop.permute.xlu0 %2036
        %vm2039 = vcmask 449536
        %v2040 = vsel %vm2039, %v2034, %v2037
        %s2041 = scalar_lea.vmem [#allocation8], 12
        %v2042 = vld [vmem:[%s2041] sm:$0x1]
        %v2044 = vlaneseq
        %v2045 = vshrl.u32 %v2044, 7
        %v2046 = vsub.s32 0, %v2045
        %v2047 = vrot.slane %v2042, %v2046
        %v2049 = vmul.f32 %v2040, %v2047
        %2051 = vrot.lane.b32.xlu0 %v1827, 120
        %v2052 = vpop.permute.xlu0 %2051
        %2054 = vrot.lane.b32.xlu0 %v1827, 56
        %v2055 = vpop.permute.xlu0 %2054
        %v2057 = vsel %vm1974, %v2052, %v2055
        %s2058 = scalar_lea.vmem [#allocation8], 13
        %v2059 = vld [vmem:[%s2058] sm:$0x1]
        %v2061 = vlaneseq
        %v2062 = vshrl.u32 %v2061, 7
        %v2063 = vsub.s32 0, %v2062
        %v2064 = vrot.slane %v2059, %v2063
        %v2066 = vmul.f32 %v2057, %v2064
        %v2067 = vadd.f32 %v2049, %v2066
        %2069 = vrot.lane.b32.xlu0 %v1832, 127
        %v2070 = vpop.permute.xlu0 %2069
        %2072 = vrot.lane.b32.xlu0 %v1832, 63
        %v2073 = vpop.permute.xlu0 %2072
        %v2075 = vsel %vm1909, %v2070, %v2073
        %s2076 = scalar_lea.vmem [#allocation8], 14
        %v2077 = vld [vmem:[%s2076] sm:$0x1]
        %v2079 = vlaneseq
        %v2080 = vshrl.u32 %v2079, 7
        %v2081 = vsub.s32 0, %v2080
        %v2082 = vrot.slane %v2077, %v2081
        %v2084 = vmul.f32 %v2075, %v2082
        %v2085 = vadd.f32 %v2067, %v2084
        %s2086 = scalar_lea.vmem [#allocation8], 15
        %v2087 = vld [vmem:[%s2086] sm:$0x1]
        %v2089 = vlaneseq
        %v2090 = vshrl.u32 %v2089, 7
        %v2091 = vsub.s32 0, %v2090
        %v2092 = vrot.slane %v2087, %v2091
        %v2094 = vmul.f32 %v1835, %v2092
        %v2095 = vadd.f32 %v2085, %v2094
        %2097 = vrot.lane.b32.xlu0 %v1966, 64
        %v2098 = vpop.permute.xlu0 %2097
        %2101 = vrot.lane.b32.xlu0 %v2095, 64
        %v2102 = vpop.permute.xlu0 %2101
        %v2104 = vsel %vm1615, %v1901, %v2098
        %v2105 = vsel %vm1615, %v2031, %v2102
        %v2106 = vld [vmem:[%s8] sm:$0xff]
        %2108 = vset.pattern.permute.xlu0 0
        %2109 = vperm.xlu0 %2108, %v2106
        %v2110 = vpop.permute.xlu0 %2109
        %v2112 = vadd.f32 %v2104, %v2110
        %v2113 = vadd.f32 %v2105, %v2110
        %v2114 = vmax.f32 %v2112, 0.0
        %v2115 = vmax.f32 %v2113, 0.0
        %v2116 = vpack.c.bf16 %v2114, %v2114
        %v2117 = vpack.c.bf16 %v2115, %v2115
        %v2118 = vld [vmem:[#allocation10] sm:$0xff]
        %v2119 = vld [vmem:[#allocation10 + $0x8] sm:$0xff]
        %v2120 = vld [vmem:[#allocation10 + $0x10] sm:$0xff]
        %v2121 = vld [vmem:[#allocation10 + $0x18] sm:$0xff]
        %v2122 = vld [vmem:[#allocation10 + $0x20] sm:$0xff]
        %v2123 = vld [vmem:[#allocation10 + $0x28] sm:$0xff]
        %v2124 = vld [vmem:[#allocation10 + $0x30] sm:$0xff]
        %v2125 = vld [vmem:[#allocation10 + $0x38] sm:$0xff]
        %v2126 = vld [vmem:[#allocation10 + $0x40] sm:$0xff]
        %v2127 = vld [vmem:[#allocation10 + $0x48] sm:$0xff]
        %v2128 = vld [vmem:[#allocation10 + $0x50] sm:$0xff]
        %v2129 = vld [vmem:[#allocation10 + $0x58] sm:$0xff]
        %v2130 = vld [vmem:[#allocation10 + $0x60] sm:$0xff]
        %v2131 = vld [vmem:[#allocation10 + $0x68] sm:$0xff]
        %v2132 = vld [vmem:[#allocation10 + $0x70] sm:$0xff]
        %v2133 = vld [vmem:[#allocation10 + $0x78] sm:$0xff]
        %v2134 = vld [vmem:[#allocation10 + $0x80] sm:$0xff]
        %v2135 = vld [vmem:[#allocation10 + $0x88] sm:$0xff]
        %v2136 = vld [vmem:[#allocation10 + $0x90] sm:$0xff]
        %v2137 = vld [vmem:[#allocation10 + $0x98] sm:$0xff]
        %v2138 = vld [vmem:[#allocation10 + $0xa0] sm:$0xff]
        %v2139 = vld [vmem:[#allocation10 + $0xa8] sm:$0xff]
        %v2140 = vld [vmem:[#allocation10 + $0xb0] sm:$0xff]
        %v2141 = vld [vmem:[#allocation10 + $0xb8] sm:$0xff]
        %v2142 = vld [vmem:[#allocation10 + $0xc0] sm:$0xff]
        %v2143 = vld [vmem:[#allocation10 + $0xc8] sm:$0xff]
        %v2144 = vld [vmem:[#allocation10 + $0xd0] sm:$0xff]
        %v2145 = vld [vmem:[#allocation10 + $0xd8] sm:$0xff]
        %v2146 = vld [vmem:[#allocation10 + $0xe0] sm:$0xff]
        %v2147 = vld [vmem:[#allocation10 + $0xe8] sm:$0xff]
        %v2148 = vld [vmem:[#allocation10 + $0xf0] sm:$0xff]
        %v2149 = vld [vmem:[#allocation10 + $0xf8] sm:$0xff]
        %v2182 = vunpack.c.l.b16 %v2118
        %v2183 = vunpack.c.h.b16 %v2118
        %v2184 = vunpack.c.l.b16 %v2119
        %v2185 = vunpack.c.h.b16 %v2119
        %v2186 = vunpack.c.l.b16 %v2120
        %v2187 = vunpack.c.h.b16 %v2120
        %v2188 = vunpack.c.l.b16 %v2121
        %v2189 = vunpack.c.h.b16 %v2121
        %v2190 = vunpack.c.l.b16 %v2122
        %v2191 = vunpack.c.h.b16 %v2122
        %v2192 = vunpack.c.l.b16 %v2123
        %v2193 = vunpack.c.h.b16 %v2123
        %v2194 = vunpack.c.l.b16 %v2124
        %v2195 = vunpack.c.h.b16 %v2124
        %v2196 = vunpack.c.l.b16 %v2125
        %v2197 = vunpack.c.h.b16 %v2125
        %v2198 = vunpack.c.l.b16 %v2126
        %v2199 = vunpack.c.h.b16 %v2126
        %v2200 = vunpack.c.l.b16 %v2127
        %v2201 = vunpack.c.h.b16 %v2127
        %v2202 = vunpack.c.l.b16 %v2128
        %v2203 = vunpack.c.h.b16 %v2128
        %v2204 = vunpack.c.l.b16 %v2129
        %v2205 = vunpack.c.h.b16 %v2129
        %v2206 = vunpack.c.l.b16 %v2130
        %v2207 = vunpack.c.h.b16 %v2130
        %v2208 = vunpack.c.l.b16 %v2131
        %v2209 = vunpack.c.h.b16 %v2131
        %v2210 = vunpack.c.l.b16 %v2132
        %v2211 = vunpack.c.h.b16 %v2132
        %v2212 = vunpack.c.l.b16 %v2133
        %v2213 = vunpack.c.h.b16 %v2133
        %v2214 = vunpack.c.l.b16 %v2134
        %v2215 = vunpack.c.h.b16 %v2134
        %v2216 = vunpack.c.l.b16 %v2135
        %v2217 = vunpack.c.h.b16 %v2135
        %v2218 = vunpack.c.l.b16 %v2136
        %v2219 = vunpack.c.h.b16 %v2136
        %v2220 = vunpack.c.l.b16 %v2137
        %v2221 = vunpack.c.h.b16 %v2137
        %v2222 = vunpack.c.l.b16 %v2138
        %v2223 = vunpack.c.h.b16 %v2138
        %v2224 = vunpack.c.l.b16 %v2139
        %v2225 = vunpack.c.h.b16 %v2139
        %v2226 = vunpack.c.l.b16 %v2140
        %v2227 = vunpack.c.h.b16 %v2140
        %v2228 = vunpack.c.l.b16 %v2141
        %v2229 = vunpack.c.h.b16 %v2141
        %v2230 = vunpack.c.l.b16 %v2142
        %v2231 = vunpack.c.h.b16 %v2142
        %v2232 = vunpack.c.l.b16 %v2143
        %v2233 = vunpack.c.h.b16 %v2143
        %v2234 = vunpack.c.l.b16 %v2144
        %v2235 = vunpack.c.h.b16 %v2144
        %v2236 = vunpack.c.l.b16 %v2145
        %v2237 = vunpack.c.h.b16 %v2145
        %v2238 = vunpack.c.l.b16 %v2146
        %v2239 = vunpack.c.h.b16 %v2146
        %v2240 = vunpack.c.l.b16 %v2147
        %v2241 = vunpack.c.h.b16 %v2147
        %v2242 = vunpack.c.l.b16 %v2148
        %v2243 = vunpack.c.h.b16 %v2148
        %v2244 = vunpack.c.l.b16 %v2149
        %v2245 = vunpack.c.h.b16 %v2149
        %v2246 = vpack.c.b16 %v2184, %v2182
        %v2247 = vpack.c.b16 %v2185, %v2183
        %v2248 = vpack.c.b16 %v2188, %v2186
        %v2249 = vpack.c.b16 %v2189, %v2187
        %v2250 = vpack.c.b16 %v2192, %v2190
        %v2251 = vpack.c.b16 %v2193, %v2191
        %v2252 = vpack.c.b16 %v2196, %v2194
        %v2253 = vpack.c.b16 %v2197, %v2195
        %v2254 = vpack.c.b16 %v2200, %v2198
        %v2255 = vpack.c.b16 %v2201, %v2199
        %v2256 = vpack.c.b16 %v2204, %v2202
        %v2257 = vpack.c.b16 %v2205, %v2203
        %v2258 = vpack.c.b16 %v2208, %v2206
        %v2259 = vpack.c.b16 %v2209, %v2207
        %v2260 = vpack.c.b16 %v2212, %v2210
        %v2261 = vpack.c.b16 %v2213, %v2211
        %v2262 = vpack.c.b16 %v2216, %v2214
        %v2263 = vpack.c.b16 %v2217, %v2215
        %v2264 = vpack.c.b16 %v2220, %v2218
        %v2265 = vpack.c.b16 %v2221, %v2219
        %v2266 = vpack.c.b16 %v2224, %v2222
        %v2267 = vpack.c.b16 %v2225, %v2223
        %v2268 = vpack.c.b16 %v2228, %v2226
        %v2269 = vpack.c.b16 %v2229, %v2227
        %v2270 = vpack.c.b16 %v2232, %v2230
        %v2271 = vpack.c.b16 %v2233, %v2231
        %v2272 = vpack.c.b16 %v2236, %v2234
        %v2273 = vpack.c.b16 %v2237, %v2235
        %v2274 = vpack.c.b16 %v2240, %v2238
        %v2275 = vpack.c.b16 %v2241, %v2239
        %v2276 = vpack.c.b16 %v2244, %v2242
        %v2277 = vpack.c.b16 %v2245, %v2243
        %2310 = vmatprep.subr.bf16.mxu0 %v2247
        %2311 = vmatpush1.bf16.msra.mxu0 %v2246
        %2312 = vmatprep.subr.bf16.mxu0 %v2249
        %2313 = vmatpush1.bf16.msra.mxu0 %v2248
        %2314 = vmatprep.subr.bf16.mxu0 %v2251
        %2315 = vmatpush1.bf16.msra.mxu0 %v2250
        %2316 = vmatprep.subr.bf16.mxu0 %v2253
        %2317 = vmatpush1.bf16.msra.mxu0 %v2252
        %2318 = vmatprep.subr.bf16.mxu0 %v2255
        %2319 = vmatpush1.bf16.msra.mxu0 %v2254
        %2320 = vmatprep.subr.bf16.mxu0 %v2257
        %2321 = vmatpush1.bf16.msra.mxu0 %v2256
        %2322 = vmatprep.subr.bf16.mxu0 %v2259
        %2323 = vmatpush1.bf16.msra.mxu0 %v2258
        %2324 = vmatprep.subr.bf16.mxu0 %v2261
        %2325 = vmatpush1.bf16.msra.mxu0 %v2260
        %2326 = vmatprep.subr.bf16.mxu0 %v2263
        %2327 = vmatpush1.bf16.msra.mxu0 %v2262
        %2328 = vmatprep.subr.bf16.mxu0 %v2265
        %2329 = vmatpush1.bf16.msra.mxu0 %v2264
        %2330 = vmatprep.subr.bf16.mxu0 %v2267
        %2331 = vmatpush1.bf16.msra.mxu0 %v2266
        %2332 = vmatprep.subr.bf16.mxu0 %v2269
        %2333 = vmatpush1.bf16.msra.mxu0 %v2268
        %2334 = vmatprep.subr.bf16.mxu0 %v2271
        %2335 = vmatpush1.bf16.msra.mxu0 %v2270
        %2336 = vmatprep.subr.bf16.mxu0 %v2273
        %2337 = vmatpush1.bf16.msra.mxu0 %v2272
        %2338 = vmatprep.subr.bf16.mxu0 %v2275
        %2339 = vmatpush1.bf16.msra.mxu0 %v2274
        %2340 = vmatprep.subr.bf16.mxu0 %v2277
        %2341 = vmatpush1.bf16.msra.mxu0 %v2276
        %2342 = vmatprep.mubr.bf16.mxu0 %v2117
        %2343 = vmatmul.mubr.bf16.gmra.mrb[0].mxu0 %v2116
        %v2344 = vpop.f32.mrb[0].mxu0
        %v2345 = vadd.f32 0.0, %v2344
        %v2346 = vpop.f32.mrb[0].mxu0
        %v2347 = vadd.f32 0.0, %v2346
        %v2348 = vpop.f32.mrb[0].mxu0
        %v2349 = vpop.f32.mrb[0].mxu0
        %2350 = vdwg.mxu0
        %v2351 = vld [vmem:[%s11] sm:$0xf]
        %v2352 = vld [vmem:[%s11 + $0x4] sm:$0xf]
        %v2353 = vld [vmem:[%s11 + $0x8] sm:$0xf]
        %v2354 = vld [vmem:[%s11 + $0xc] sm:$0xf]
        %v2355 = vld [vmem:[%s11 + $0x10] sm:$0xf]
        %v2356 = vld [vmem:[%s11 + $0x14] sm:$0xf]
        %v2357 = vld [vmem:[%s11 + $0x18] sm:$0xf]
        %v2358 = vld [vmem:[%s11 + $0x1c] sm:$0xf]
        %v2359 = vpack.c.bf16 %v2345, %v2345
        %v2360 = vpack.c.bf16 %v2347, %v2347
        %v2369 = vunpack.c.l.b16 %v2351
        %v2370 = vunpack.c.l.b16 %v2352
        %v2371 = vunpack.c.l.b16 %v2353
        %v2372 = vunpack.c.l.b16 %v2354
        %v2373 = vunpack.c.l.b16 %v2355
        %v2374 = vunpack.c.l.b16 %v2356
        %v2375 = vunpack.c.l.b16 %v2357
        %v2376 = vunpack.c.l.b16 %v2358
        %v2377 = vpack.c.b16 %v2370, %v2369
        %v2378 = vpack.c.b16 %v2372, %v2371
        %v2379 = vpack.c.b16 %v2374, %v2373
        %v2380 = vpack.c.b16 %v2376, %v2375
        %v2382 = vsel %vm1871, %v2377, 0
        %v2385 = vsel %vm1871, %v2378, 0
        %v2388 = vsel %vm1871, %v2379, 0
        %v2391 = vsel %vm1871, %v2380, 0
        %vm2393 = vcmask 1043456
        %v2395 = vsel %vm2393, %v2359, 0
        %v2398 = vsel %vm2393, %v2360, 0
        %2400 = vmatprep.subr.bf16.mxu0 %v2398
        %2401 = vmatpush1.bf16.msra.mxu0 %v2395
        %2402 = vmatprep.subr.bf16.mxu0 0
        %2403 = vmatpush1.bf16.msra.mxu0 0
        %2404 = vmatprep.subr.bf16.mxu0 0
        %2405 = vmatpush1.bf16.msra.mxu0 0
        %2406 = vmatprep.subr.bf16.mxu0 0
        %2407 = vmatpush1.bf16.msra.mxu0 0
        %2408 = vmatprep.subr.bf16.mxu0 0
        %2409 = vmatpush1.bf16.msra.mxu0 0
        %2410 = vmatprep.subr.bf16.mxu0 0
        %2411 = vmatpush1.bf16.msra.mxu0 0
        %2412 = vmatprep.subr.bf16.mxu0 0
        %2413 = vmatpush1.bf16.msra.mxu0 0
        %2414 = vmatprep.subr.bf16.mxu0 0
        %2415 = vmatpush1.bf16.msra.mxu0 0
        %2416 = vmatprep.subr.bf16.mxu0 0
        %2417 = vmatpush1.bf16.msra.mxu0 0
        %2418 = vmatprep.subr.bf16.mxu0 0
        %2419 = vmatpush1.bf16.msra.mxu0 0
        %2420 = vmatprep.subr.bf16.mxu0 0
        %2421 = vmatpush1.bf16.msra.mxu0 0
        %2422 = vmatprep.subr.bf16.mxu0 0
        %2423 = vmatpush1.bf16.msra.mxu0 0
        %2424 = vmatprep.subr.bf16.mxu0 0
        %2425 = vmatpush1.bf16.msra.mxu0 0
        %2426 = vmatprep.subr.bf16.mxu0 0
        %2427 = vmatpush1.bf16.msra.mxu0 0
        %2428 = vmatprep.subr.bf16.mxu0 0
        %2429 = vmatpush1.bf16.msra.mxu0 0
        %2430 = vmatprep.subr.bf16.mxu0 0
        %2431 = vmatpush1.bf16.msra.mxu0 0
        %2432 = vmatprep.mubr.bf16.mxu0 0
        %2433 = vmatmul.mubr.bf16.gmra.mrb[0].mxu0 %v2382
        %v2434 = vpop.f32.mrb[0].mxu0
        %v2435 = vadd.f32 0.0, %v2434
        %v2436 = vpop.f32.mrb[0].mxu0
        %v2437 = vadd.f32 0.0, %v2436
        %v2438 = vpop.f32.mrb[0].mxu0
        %v2439 = vadd.f32 0.0, %v2438
        %v2440 = vpop.f32.mrb[0].mxu0
        %v2441 = vadd.f32 0.0, %v2440
        %2442 = vmatprep.mubr.bf16.mxu0 0
        %2443 = vmatmul.mubr.bf16.gmra.mrb[0].mxu0 %v2385
        %v2444 = vpop.f32.mrb[0].mxu0
        %v2445 = vadd.f32 0.0, %v2444
        %v2446 = vpop.f32.mrb[0].mxu0
        %v2447 = vadd.f32 0.0, %v2446
        %v2448 = vpop.f32.mrb[0].mxu0
        %v2449 = vadd.f32 0.0, %v2448
        %v2450 = vpop.f32.mrb[0].mxu0
        %v2451 = vadd.f32 0.0, %v2450
        %2452 = vmatprep.mubr.bf16.mxu0 0
        %2453 = vmatmul.mubr.bf16.gmra.mrb[0].mxu0 %v2388
        %v2454 = vpop.f32.mrb[0].mxu0
        %v2455 = vadd.f32 0.0, %v2454
        %v2456 = vpop.f32.mrb[0].mxu0
        %v2457 = vadd.f32 0.0, %v2456
        %v2458 = vpop.f32.mrb[0].mxu0
        %v2459 = vadd.f32 0.0, %v2458
        %v2460 = vpop.f32.mrb[0].mxu0
        %v2461 = vadd.f32 0.0, %v2460
        %2462 = vmatprep.mubr.bf16.mxu0 0
        %2463 = vmatmul.mubr.bf16.gmra.mrb[0].mxu0 %v2391
        %v2464 = vpop.f32.mrb[0].mxu0
        %v2465 = vadd.f32 0.0, %v2464
        %v2466 = vpop.f32.mrb[0].mxu0
        %v2467 = vadd.f32 0.0, %v2466
        %v2468 = vpop.f32.mrb[0].mxu0
        %v2469 = vadd.f32 0.0, %v2468
        %v2470 = vpop.f32.mrb[0].mxu0
        %v2471 = vadd.f32 0.0, %v2470
        %2472 = vdwg.mxu0
        %v2473 = vld [vmem:[#allocation11] sm:$0x3]
        %v2475 = vlaneseq
        %v2476 = vshrl.u32 %v2475, 7
        %v2477 = vsub.s32 0, %v2476
        %v2478 = vrot.slane %v2473, %v2477
        %v2479 = vlaneseq
        %v2480 = vshrl.u32 %v2479, 7
        %v2481 = vsub.s32 1, %v2480
        %v2482 = vrot.slane %v2473, %v2481
        %v2485 = vmul.f32 %v2435, %v2478
        %v2486 = vmul.f32 %v2437, %v2482
        %2488 = vrot.lane.b32.xlu0 %v2437, 1
        %v2489 = vpop.permute.xlu0 %2488
        %2492 = vrot.lane.b32.xlu0 %v2435, 1
        %v2493 = vpop.permute.xlu0 %2492
        %v2494 = vsel %vm1174, %v2493, %v2489
        %v2497 = vsel %vm1174, %v2489, %v2493
        %s2498 = scalar_lea.vmem [#allocation11], 2
        %v2499 = vld [vmem:[%s2498] sm:$0x3]
        %v2501 = vlaneseq
        %v2502 = vshrl.u32 %v2501, 7
        %v2503 = vsub.s32 0, %v2502
        %v2504 = vrot.slane %v2499, %v2503
        %v2505 = vlaneseq
        %v2506 = vshrl.u32 %v2505, 7
        %v2507 = vsub.s32 1, %v2506
        %v2508 = vrot.slane %v2499, %v2507
        %v2511 = vmul.f32 %v2497, %v2504
        %v2512 = vmul.f32 %v2494, %v2508
        %v2515 = vrot.slane %v2511, 4
        %v2516 = vrot.slane %v2512, 4
        %v2519 = vadd.f32 %v2485, %v2515
        %v2520 = vadd.f32 %v2486, %v2516
        %2522 = vrot.lane.b32.xlu0 %v2441, 16
        %v2523 = vpop.permute.xlu0 %2522
        %2526 = vrot.lane.b32.xlu0 %v2439, 16
        %v2527 = vpop.permute.xlu0 %2526
        %v2528 = vsel %vm1558, %v2527, %v2523
        %v2531 = vsel %vm1558, %v2523, %v2527
        %s2532 = scalar_lea.vmem [#allocation11], 4
        %v2533 = vld [vmem:[%s2532] sm:$0x3]
        %v2535 = vlaneseq
        %v2536 = vshrl.u32 %v2535, 7
        %v2537 = vsub.s32 0, %v2536
        %v2538 = vrot.slane %v2533, %v2537
        %v2539 = vlaneseq
        %v2540 = vshrl.u32 %v2539, 7
        %v2541 = vsub.s32 1, %v2540
        %v2542 = vrot.slane %v2533, %v2541
        %v2545 = vmul.f32 %v2531, %v2538
        %v2546 = vmul.f32 %v2528, %v2542
        %v2547 = vadd.f32 %v2519, %v2545
        %v2548 = vadd.f32 %v2520, %v2546
        %2549 = vrot.lane.b32.xlu0 %v2441, 17
        %v2550 = vpop.permute.xlu0 %2549
        %2552 = vrot.lane.b32.xlu0 %v2439, 17
        %v2553 = vpop.permute.xlu0 %2552
        %vm2554 = vcmask 138240
        %v2555 = vsel %vm2554, %v2553, %v2550
        %v2558 = vsel %vm2554, %v2550, %v2553
        %s2559 = scalar_lea.vmem [#allocation11], 6
        %v2560 = vld [vmem:[%s2559] sm:$0x3]
        %v2562 = vlaneseq
        %v2563 = vshrl.u32 %v2562, 7
        %v2564 = vsub.s32 0, %v2563
        %v2565 = vrot.slane %v2560, %v2564
        %v2566 = vlaneseq
        %v2567 = vshrl.u32 %v2566, 7
        %v2568 = vsub.s32 1, %v2567
        %v2569 = vrot.slane %v2560, %v2568
        %v2572 = vmul.f32 %v2558, %v2565
        %v2573 = vmul.f32 %v2555, %v2569
        %v2576 = vrot.slane %v2572, 4
        %v2577 = vrot.slane %v2573, 4
        %v2580 = vadd.f32 %v2547, %v2576
        %v2581 = vadd.f32 %v2548, %v2577
        %2584 = vrot.lane.b32.xlu0 %v2445, 127
        %v2585 = vpop.permute.xlu0 %2584
        %2586 = vrot.lane.b32.xlu0 %v2447, 127
        %v2587 = vpop.permute.xlu0 %2586
        %vm2588 = vcmask 1039360
        %v2589 = vsel %vm2588, %v2585, %v2587
        %v2593 = vsel %vm2588, %v2587, %v2585
        %s2594 = scalar_lea.vmem [#allocation11], 8
        %v2595 = vld [vmem:[%s2594] sm:$0x3]
        %v2597 = vlaneseq
        %v2598 = vshrl.u32 %v2597, 7
        %v2599 = vsub.s32 0, %v2598
        %v2600 = vrot.slane %v2595, %v2599
        %v2601 = vlaneseq
        %v2602 = vshrl.u32 %v2601, 7
        %v2603 = vsub.s32 1, %v2602
        %v2604 = vrot.slane %v2595, %v2603
        %v2607 = vmul.f32 %v2589, %v2600
        %v2608 = vmul.f32 %v2593, %v2604
        %s2609 = scalar_lea.vmem [#allocation11], 10
        %v2610 = vld [vmem:[%s2609] sm:$0x3]
        %v2612 = vlaneseq
        %v2613 = vshrl.u32 %v2612, 7
        %v2614 = vsub.s32 0, %v2613
        %v2615 = vrot.slane %v2610, %v2614
        %v2616 = vlaneseq
        %v2617 = vshrl.u32 %v2616, 7
        %v2618 = vsub.s32 1, %v2617
        %v2619 = vrot.slane %v2610, %v2618
        %v2622 = vmul.f32 %v2445, %v2615
        %v2623 = vmul.f32 %v2447, %v2619
        %v2626 = vrot.slane %v2622, 4
        %v2627 = vrot.slane %v2623, 4
        %v2630 = vadd.f32 %v2607, %v2626
        %v2631 = vadd.f32 %v2608, %v2627
        %2633 = vrot.lane.b32.xlu0 %v2451, 15
        %v2634 = vpop.permute.xlu0 %2633
        %2637 = vrot.lane.b32.xlu0 %v2449, 15
        %v2638 = vpop.permute.xlu0 %2637
        %v2639 = vsel %vm1261, %v2638, %v2634
        %v2642 = vsel %vm1261, %v2634, %v2638
        %s2643 = scalar_lea.vmem [#allocation11], 12
        %v2644 = vld [vmem:[%s2643] sm:$0x3]
        %v2646 = vlaneseq
        %v2647 = vshrl.u32 %v2646, 7
        %v2648 = vsub.s32 0, %v2647
        %v2649 = vrot.slane %v2644, %v2648
        %v2650 = vlaneseq
        %v2651 = vshrl.u32 %v2650, 7
        %v2652 = vsub.s32 1, %v2651
        %v2653 = vrot.slane %v2644, %v2652
        %v2656 = vmul.f32 %v2642, %v2649
        %v2657 = vmul.f32 %v2639, %v2653
        %v2658 = vadd.f32 %v2630, %v2656
        %v2659 = vadd.f32 %v2631, %v2657
        %2660 = vrot.lane.b32.xlu0 %v2451, 16
        %v2661 = vpop.permute.xlu0 %2660
        %2663 = vrot.lane.b32.xlu0 %v2449, 16
        %v2664 = vpop.permute.xlu0 %2663
        %v2665 = vsel %vm1558, %v2664, %v2661
        %v2668 = vsel %vm1558, %v2661, %v2664
        %s2669 = scalar_lea.vmem [#allocation11], 14
        %v2670 = vld [vmem:[%s2669] sm:$0x3]
        %v2672 = vlaneseq
        %v2673 = vshrl.u32 %v2672, 7
        %v2674 = vsub.s32 0, %v2673
        %v2675 = vrot.slane %v2670, %v2674
        %v2676 = vlaneseq
        %v2677 = vshrl.u32 %v2676, 7
        %v2678 = vsub.s32 1, %v2677
        %v2679 = vrot.slane %v2670, %v2678
        %v2682 = vmul.f32 %v2668, %v2675
        %v2683 = vmul.f32 %v2665, %v2679
        %v2686 = vrot.slane %v2682, 4
        %v2687 = vrot.slane %v2683, 4
        %v2690 = vadd.f32 %v2658, %v2686
        %v2691 = vadd.f32 %v2659, %v2687
        %2694 = vrot.lane.b32.xlu0 %v2455, 112
        %v2695 = vpop.permute.xlu0 %2694
        %2696 = vrot.lane.b32.xlu0 %v2457, 112
        %v2697 = vpop.permute.xlu0 %2696
        %vm2698 = vcmask 916480
        %v2699 = vsel %vm2698, %v2695, %v2697
        %v2703 = vsel %vm2698, %v2697, %v2695
        %s2704 = scalar_lea.vmem [#allocation11], 16
        %v2705 = vld [vmem:[%s2704] sm:$0x3]
        %v2707 = vlaneseq
        %v2708 = vshrl.u32 %v2707, 7
        %v2709 = vsub.s32 0, %v2708
        %v2710 = vrot.slane %v2705, %v2709
        %v2711 = vlaneseq
        %v2712 = vshrl.u32 %v2711, 7
        %v2713 = vsub.s32 1, %v2712
        %v2714 = vrot.slane %v2705, %v2713
        %v2717 = vmul.f32 %v2699, %v2710
        %v2718 = vmul.f32 %v2703, %v2714
        %2719 = vrot.lane.b32.xlu0 %v2455, 113
        %v2720 = vpop.permute.xlu0 %2719
        %2721 = vrot.lane.b32.xlu0 %v2457, 113
        %v2722 = vpop.permute.xlu0 %2721
        %vm2723 = vcmask 924672
        %v2724 = vsel %vm2723, %v2720, %v2722
        %v2728 = vsel %vm2723, %v2722, %v2720
        %s2729 = scalar_lea.vmem [#allocation11], 18
        %v2730 = vld [vmem:[%s2729] sm:$0x3]
        %v2732 = vlaneseq
        %v2733 = vshrl.u32 %v2732, 7
        %v2734 = vsub.s32 0, %v2733
        %v2735 = vrot.slane %v2730, %v2734
        %v2736 = vlaneseq
        %v2737 = vshrl.u32 %v2736, 7
        %v2738 = vsub.s32 1, %v2737
        %v2739 = vrot.slane %v2730, %v2738
        %v2742 = vmul.f32 %v2724, %v2735
        %v2743 = vmul.f32 %v2728, %v2739
        %v2746 = vrot.slane %v2742, 4
        %v2747 = vrot.slane %v2743, 4
        %v2750 = vadd.f32 %v2717, %v2746
        %v2751 = vadd.f32 %v2718, %v2747
        %s2752 = scalar_lea.vmem [#allocation11], 20
        %v2753 = vld [vmem:[%s2752] sm:$0x3]
        %v2755 = vlaneseq
        %v2756 = vshrl.u32 %v2755, 7
        %v2757 = vsub.s32 0, %v2756
        %v2758 = vrot.slane %v2753, %v2757
        %v2759 = vlaneseq
        %v2760 = vshrl.u32 %v2759, 7
        %v2761 = vsub.s32 1, %v2760
        %v2762 = vrot.slane %v2753, %v2761
        %v2765 = vmul.f32 %v2459, %v2758
        %v2766 = vmul.f32 %v2461, %v2762
        %v2767 = vadd.f32 %v2750, %v2765
        %v2768 = vadd.f32 %v2751, %v2766
        %2770 = vrot.lane.b32.xlu0 %v2461, 1
        %v2771 = vpop.permute.xlu0 %2770
        %2774 = vrot.lane.b32.xlu0 %v2459, 1
        %v2775 = vpop.permute.xlu0 %2774
        %v2776 = vsel %vm1174, %v2775, %v2771
        %v2779 = vsel %vm1174, %v2771, %v2775
        %s2780 = scalar_lea.vmem [#allocation11], 22
        %v2781 = vld [vmem:[%s2780] sm:$0x3]
        %v2783 = vlaneseq
        %v2784 = vshrl.u32 %v2783, 7
        %v2785 = vsub.s32 0, %v2784
        %v2786 = vrot.slane %v2781, %v2785
        %v2787 = vlaneseq
        %v2788 = vshrl.u32 %v2787, 7
        %v2789 = vsub.s32 1, %v2788
        %v2790 = vrot.slane %v2781, %v2789
        %v2793 = vmul.f32 %v2779, %v2786
        %v2794 = vmul.f32 %v2776, %v2790
        %v2797 = vrot.slane %v2793, 4
        %v2798 = vrot.slane %v2794, 4
        %v2801 = vadd.f32 %v2767, %v2797
        %v2802 = vadd.f32 %v2768, %v2798
        %2805 = vrot.lane.b32.xlu0 %v2465, 111
        %v2806 = vpop.permute.xlu0 %2805
        %2807 = vrot.lane.b32.xlu0 %v2467, 111
        %v2808 = vpop.permute.xlu0 %2807
        %vm2809 = vcmask 908288
        %v2810 = vsel %vm2809, %v2806, %v2808
        %v2814 = vsel %vm2809, %v2808, %v2806
        %s2815 = scalar_lea.vmem [#allocation11], 24
        %v2816 = vld [vmem:[%s2815] sm:$0x3]
        %v2818 = vlaneseq
        %v2819 = vshrl.u32 %v2818, 7
        %v2820 = vsub.s32 0, %v2819
        %v2821 = vrot.slane %v2816, %v2820
        %v2822 = vlaneseq
        %v2823 = vshrl.u32 %v2822, 7
        %v2824 = vsub.s32 1, %v2823
        %v2825 = vrot.slane %v2816, %v2824
        %v2828 = vmul.f32 %v2810, %v2821
        %v2829 = vmul.f32 %v2814, %v2825
        %2830 = vrot.lane.b32.xlu0 %v2465, 112
        %v2831 = vpop.permute.xlu0 %2830
        %2832 = vrot.lane.b32.xlu0 %v2467, 112
        %v2833 = vpop.permute.xlu0 %2832
        %v2834 = vsel %vm2698, %v2831, %v2833
        %v2838 = vsel %vm2698, %v2833, %v2831
        %s2839 = scalar_lea.vmem [#allocation11], 26
        %v2840 = vld [vmem:[%s2839] sm:$0x3]
        %v2842 = vlaneseq
        %v2843 = vshrl.u32 %v2842, 7
        %v2844 = vsub.s32 0, %v2843
        %v2845 = vrot.slane %v2840, %v2844
        %v2846 = vlaneseq
        %v2847 = vshrl.u32 %v2846, 7
        %v2848 = vsub.s32 1, %v2847
        %v2849 = vrot.slane %v2840, %v2848
        %v2852 = vmul.f32 %v2834, %v2845
        %v2853 = vmul.f32 %v2838, %v2849
        %v2856 = vrot.slane %v2852, 4
        %v2857 = vrot.slane %v2853, 4
        %v2860 = vadd.f32 %v2828, %v2856
        %v2861 = vadd.f32 %v2829, %v2857
        %2864 = vrot.lane.b32.xlu0 %v2469, 127
        %v2865 = vpop.permute.xlu0 %2864
        %2866 = vrot.lane.b32.xlu0 %v2471, 127
        %v2867 = vpop.permute.xlu0 %2866
        %v2868 = vsel %vm2588, %v2865, %v2867
        %v2872 = vsel %vm2588, %v2867, %v2865
        %s2873 = scalar_lea.vmem [#allocation11], 28
        %v2874 = vld [vmem:[%s2873] sm:$0x3]
        %v2876 = vlaneseq
        %v2877 = vshrl.u32 %v2876, 7
        %v2878 = vsub.s32 0, %v2877
        %v2879 = vrot.slane %v2874, %v2878
        %v2880 = vlaneseq
        %v2881 = vshrl.u32 %v2880, 7
        %v2882 = vsub.s32 1, %v2881
        %v2883 = vrot.slane %v2874, %v2882
        %v2886 = vmul.f32 %v2868, %v2879
        %v2887 = vmul.f32 %v2872, %v2883
        %v2888 = vadd.f32 %v2860, %v2886
        %v2889 = vadd.f32 %v2861, %v2887
        %s2890 = scalar_lea.vmem [#allocation11], 30
        %v2891 = vld [vmem:[%s2890] sm:$0x3]
        %v2893 = vlaneseq
        %v2894 = vshrl.u32 %v2893, 7
        %v2895 = vsub.s32 0, %v2894
        %v2896 = vrot.slane %v2891, %v2895
        %v2897 = vlaneseq
        %v2898 = vshrl.u32 %v2897, 7
        %v2899 = vsub.s32 1, %v2898
        %v2900 = vrot.slane %v2891, %v2899
        %v2903 = vmul.f32 %v2469, %v2896
        %v2904 = vmul.f32 %v2471, %v2900
        %v2907 = vrot.slane %v2903, 4
        %v2908 = vrot.slane %v2904, 4
        %v2911 = vadd.f32 %v2888, %v2907
        %v2912 = vadd.f32 %v2889, %v2908
        %v2913 = vld [vmem:[%s12] sm:$0xf]
        %2915 = vset.pattern.permute.xlu0 0
        %2916 = vperm.xlu0 %2915, %v2913
        %v2917 = vpop.permute.xlu0 %2916
        %v2919 = vadd.f32 %v2580, %v2917
        %v2920 = vadd.f32 %v2581, %v2917
        %v2921 = vadd.f32 %v2690, %v2917
        %v2922 = vadd.f32 %v2691, %v2917
        %v2923 = vadd.f32 %v2801, %v2917
        %v2924 = vadd.f32 %v2802, %v2917
        %v2925 = vadd.f32 %v2911, %v2917
        %v2926 = vadd.f32 %v2912, %v2917
        %v2927 = vmax.f32 %v2919, 0.0
        %v2928 = vmax.f32 %v2920, 0.0
        %v2929 = vmax.f32 %v2921, 0.0
        %v2930 = vmax.f32 %v2922, 0.0
        %v2931 = vmax.f32 %v2923, 0.0
        %v2932 = vmax.f32 %v2924, 0.0
        %v2933 = vmax.f32 %v2925, 0.0
        %v2934 = vmax.f32 %v2926, 0.0
        %v2935 = vpack.c.bf16 %v2927, %v2927
        %v2936 = vpack.c.bf16 %v2928, %v2928
        %v2937 = vpack.c.bf16 %v2929, %v2929
        %v2938 = vpack.c.bf16 %v2930, %v2930
        %v2939 = vpack.c.bf16 %v2931, %v2931
        %v2940 = vpack.c.bf16 %v2932, %v2932
        %v2941 = vpack.c.bf16 %v2933, %v2933
        %v2942 = vpack.c.bf16 %v2934, %v2934
        %v2943 = vld [vmem:[#allocation13] sm:$0xff]
        %v2944 = vld [vmem:[#allocation13 + $0x8] sm:$0xff]
        %v2945 = vld [vmem:[#allocation13 + $0x10] sm:$0xff]
        %v2946 = vld [vmem:[#allocation13 + $0x18] sm:$0xff]
        %v2947 = vld [vmem:[#allocation13 + $0x20] sm:$0xff]
        %v2948 = vld [vmem:[#allocation13 + $0x28] sm:$0xff]
        %v2949 = vld [vmem:[#allocation13 + $0x30] sm:$0xff]
        %v2950 = vld [vmem:[#allocation13 + $0x38] sm:$0xff]
        %v2951 = vld [vmem:[#allocation13 + $0x40] sm:$0xff]
        %v2952 = vld [vmem:[#allocation13 + $0x48] sm:$0xff]
        %v2953 = vld [vmem:[#allocation13 + $0x50] sm:$0xff]
        %v2954 = vld [vmem:[#allocation13 + $0x58] sm:$0xff]
        %v2955 = vld [vmem:[#allocation13 + $0x60] sm:$0xff]
        %v2956 = vld [vmem:[#allocation13 + $0x68] sm:$0xff]
        %v2957 = vld [vmem:[#allocation13 + $0x70] sm:$0xff]
        %v2958 = vld [vmem:[#allocation13 + $0x78] sm:$0xff]
        %v2959 = vld [vmem:[#allocation13 + $0x80] sm:$0xff]
        %v2960 = vld [vmem:[#allocation13 + $0x88] sm:$0xff]
        %v2961 = vld [vmem:[#allocation13 + $0x90] sm:$0xff]
        %v2962 = vld [vmem:[#allocation13 + $0x98] sm:$0xff]
        %v2963 = vld [vmem:[#allocation13 + $0xa0] sm:$0xff]
        %v2964 = vld [vmem:[#allocation13 + $0xa8] sm:$0xff]
        %v2965 = vld [vmem:[#allocation13 + $0xb0] sm:$0xff]
        %v2966 = vld [vmem:[#allocation13 + $0xb8] sm:$0xff]
        %v2967 = vld [vmem:[#allocation13 + $0xc0] sm:$0xff]
        %v2968 = vld [vmem:[#allocation13 + $0xc8] sm:$0xff]
        %v2969 = vld [vmem:[#allocation13 + $0xd0] sm:$0xff]
        %v2970 = vld [vmem:[#allocation13 + $0xd8] sm:$0xff]
        %v2971 = vld [vmem:[#allocation13 + $0xe0] sm:$0xff]
        %v2972 = vld [vmem:[#allocation13 + $0xe8] sm:$0xff]
        %v2973 = vld [vmem:[#allocation13 + $0xf0] sm:$0xff]
        %v2974 = vld [vmem:[#allocation13 + $0xf8] sm:$0xff]
        %v2975 = vld [vmem:[#allocation13 + $0x100] sm:$0xff]
        %v2976 = vld [vmem:[#allocation13 + $0x108] sm:$0xff]
        %v2977 = vld [vmem:[#allocation13 + $0x110] sm:$0xff]
        %v2978 = vld [vmem:[#allocation13 + $0x118] sm:$0xff]
        %v2979 = vld [vmem:[#allocation13 + $0x120] sm:$0xff]
        %v2980 = vld [vmem:[#allocation13 + $0x128] sm:$0xff]
        %v2981 = vld [vmem:[#allocation13 + $0x130] sm:$0xff]
        %v2982 = vld [vmem:[#allocation13 + $0x138] sm:$0xff]
        %v2983 = vld [vmem:[#allocation13 + $0x140] sm:$0xff]
        %v2984 = vld [vmem:[#allocation13 + $0x148] sm:$0xff]
        %v2985 = vld [vmem:[#allocation13 + $0x150] sm:$0xff]
        %v2986 = vld [vmem:[#allocation13 + $0x158] sm:$0xff]
        %v2987 = vld [vmem:[#allocation13 + $0x160] sm:$0xff]
        %v2988 = vld [vmem:[#allocation13 + $0x168] sm:$0xff]
        %v2989 = vld [vmem:[#allocation13 + $0x170] sm:$0xff]
        %v2990 = vld [vmem:[#allocation13 + $0x178] sm:$0xff]
        %v2991 = vld [vmem:[#allocation13 + $0x180] sm:$0xff]
        %v2992 = vld [vmem:[#allocation13 + $0x188] sm:$0xff]
        %v2993 = vld [vmem:[#allocation13 + $0x190] sm:$0xff]
        %v2994 = vld [vmem:[#allocation13 + $0x198] sm:$0xff]
        %v2995 = vld [vmem:[#allocation13 + $0x1a0] sm:$0xff]
        %v2996 = vld [vmem:[#allocation13 + $0x1a8] sm:$0xff]
        %v2997 = vld [vmem:[#allocation13 + $0x1b0] sm:$0xff]
        %v2998 = vld [vmem:[#allocation13 + $0x1b8] sm:$0xff]
        %v2999 = vld [vmem:[#allocation13 + $0x1c0] sm:$0xff]
        %v3000 = vld [vmem:[#allocation13 + $0x1c8] sm:$0xff]
        %v3001 = vld [vmem:[#allocation13 + $0x1d0] sm:$0xff]
        %v3002 = vld [vmem:[#allocation13 + $0x1d8] sm:$0xff]
        %v3003 = vld [vmem:[#allocation13 + $0x1e0] sm:$0xff]
        %v3004 = vld [vmem:[#allocation13 + $0x1e8] sm:$0xff]
        %v3005 = vld [vmem:[#allocation13 + $0x1f0] sm:$0xff]
        %v3006 = vld [vmem:[#allocation13 + $0x1f8] sm:$0xff]
        %v3007 = vld [vmem:[#allocation13 + $0x200] sm:$0xff]
        %v3008 = vld [vmem:[#allocation13 + $0x208] sm:$0xff]
        %v3009 = vld [vmem:[#allocation13 + $0x210] sm:$0xff]
        %v3010 = vld [vmem:[#allocation13 + $0x218] sm:$0xff]
        %v3011 = vld [vmem:[#allocation13 + $0x220] sm:$0xff]
        %v3012 = vld [vmem:[#allocation13 + $0x228] sm:$0xff]
        %v3013 = vld [vmem:[#allocation13 + $0x230] sm:$0xff]
        %v3014 = vld [vmem:[#allocation13 + $0x238] sm:$0xff]
        %v3015 = vld [vmem:[#allocation13 + $0x240] sm:$0xff]
        %v3016 = vld [vmem:[#allocation13 + $0x248] sm:$0xff]
        %v3017 = vld [vmem:[#allocation13 + $0x250] sm:$0xff]
        %v3018 = vld [vmem:[#allocation13 + $0x258] sm:$0xff]
        %v3019 = vld [vmem:[#allocation13 + $0x260] sm:$0xff]
        %v3020 = vld [vmem:[#allocation13 + $0x268] sm:$0xff]
        %v3021 = vld [vmem:[#allocation13 + $0x270] sm:$0xff]
        %v3022 = vld [vmem:[#allocation13 + $0x278] sm:$0xff]
        %v3023 = vld [vmem:[#allocation13 + $0x280] sm:$0xff]
        %v3024 = vld [vmem:[#allocation13 + $0x288] sm:$0xff]
        %v3025 = vld [vmem:[#allocation13 + $0x290] sm:$0xff]
        %v3026 = vld [vmem:[#allocation13 + $0x298] sm:$0xff]
        %v3027 = vld [vmem:[#allocation13 + $0x2a0] sm:$0xff]
        %v3028 = vld [vmem:[#allocation13 + $0x2a8] sm:$0xff]
        %v3029 = vld [vmem:[#allocation13 + $0x2b0] sm:$0xff]
        %v3030 = vld [vmem:[#allocation13 + $0x2b8] sm:$0xff]
        %v3031 = vld [vmem:[#allocation13 + $0x2c0] sm:$0xff]
        %v3032 = vld [vmem:[#allocation13 + $0x2c8] sm:$0xff]
        %v3033 = vld [vmem:[#allocation13 + $0x2d0] sm:$0xff]
        %v3034 = vld [vmem:[#allocation13 + $0x2d8] sm:$0xff]
        %v3035 = vld [vmem:[#allocation13 + $0x2e0] sm:$0xff]
        %v3036 = vld [vmem:[#allocation13 + $0x2e8] sm:$0xff]
        %v3037 = vld [vmem:[#allocation13 + $0x2f0] sm:$0xff]
        %v3038 = vld [vmem:[#allocation13 + $0x2f8] sm:$0xff]
        %v3039 = vld [vmem:[#allocation13 + $0x300] sm:$0xff]
        %v3040 = vld [vmem:[#allocation13 + $0x308] sm:$0xff]
        %v3041 = vld [vmem:[#allocation13 + $0x310] sm:$0xff]
        %v3042 = vld [vmem:[#allocation13 + $0x318] sm:$0xff]
        %v3043 = vld [vmem:[#allocation13 + $0x320] sm:$0xff]
        %v3044 = vld [vmem:[#allocation13 + $0x328] sm:$0xff]
        %v3045 = vld [vmem:[#allocation13 + $0x330] sm:$0xff]
        %v3046 = vld [vmem:[#allocation13 + $0x338] sm:$0xff]
        %v3047 = vld [vmem:[#allocation13 + $0x340] sm:$0xff]
        %v3048 = vld [vmem:[#allocation13 + $0x348] sm:$0xff]
        %v3049 = vld [vmem:[#allocation13 + $0x350] sm:$0xff]
        %v3050 = vld [vmem:[#allocation13 + $0x358] sm:$0xff]
        %v3051 = vld [vmem:[#allocation13 + $0x360] sm:$0xff]
        %v3052 = vld [vmem:[#allocation13 + $0x368] sm:$0xff]
        %v3053 = vld [vmem:[#allocation13 + $0x370] sm:$0xff]
        %v3054 = vld [vmem:[#allocation13 + $0x378] sm:$0xff]
        %v3055 = vld [vmem:[#allocation13 + $0x380] sm:$0xff]
        %v3056 = vld [vmem:[#allocation13 + $0x388] sm:$0xff]
        %v3057 = vld [vmem:[#allocation13 + $0x390] sm:$0xff]
        %v3058 = vld [vmem:[#allocation13 + $0x398] sm:$0xff]
        %v3059 = vld [vmem:[#allocation13 + $0x3a0] sm:$0xff]
        %v3060 = vld [vmem:[#allocation13 + $0x3a8] sm:$0xff]
        %v3061 = vld [vmem:[#allocation13 + $0x3b0] sm:$0xff]
        %v3062 = vld [vmem:[#allocation13 + $0x3b8] sm:$0xff]
        %v3063 = vld [vmem:[#allocation13 + $0x3c0] sm:$0xff]
        %v3064 = vld [vmem:[#allocation13 + $0x3c8] sm:$0xff]
        %v3065 = vld [vmem:[#allocation13 + $0x3d0] sm:$0xff]
        %v3066 = vld [vmem:[#allocation13 + $0x3d8] sm:$0xff]
        %v3067 = vld [vmem:[#allocation13 + $0x3e0] sm:$0xff]
        %v3068 = vld [vmem:[#allocation13 + $0x3e8] sm:$0xff]
        %v3069 = vld [vmem:[#allocation13 + $0x3f0] sm:$0xff]
        %v3070 = vld [vmem:[#allocation13 + $0x3f8] sm:$0xff]
        %v3071 = vld [vmem:[#allocation13 + $0x400] sm:$0xff]
        %v3072 = vld [vmem:[#allocation13 + $0x408] sm:$0xff]
        %v3073 = vld [vmem:[#allocation13 + $0x410] sm:$0xff]
        %v3074 = vld [vmem:[#allocation13 + $0x418] sm:$0xff]
        %v3075 = vld [vmem:[#allocation13 + $0x420] sm:$0xff]
        %v3076 = vld [vmem:[#allocation13 + $0x428] sm:$0xff]
        %v3077 = vld [vmem:[#allocation13 + $0x430] sm:$0xff]
        %v3078 = vld [vmem:[#allocation13 + $0x438] sm:$0xff]
        %v3079 = vld [vmem:[#allocation13 + $0x440] sm:$0xff]
        %v3080 = vld [vmem:[#allocation13 + $0x448] sm:$0xff]
        %v3081 = vld [vmem:[#allocation13 + $0x450] sm:$0xff]
        %v3082 = vld [vmem:[#allocation13 + $0x458] sm:$0xff]
        %v3083 = vld [vmem:[#allocation13 + $0x460] sm:$0xff]
        %v3084 = vld [vmem:[#allocation13 + $0x468] sm:$0xff]
        %v3085 = vld [vmem:[#allocation13 + $0x470] sm:$0xff]
        %v3086 = vld [vmem:[#allocation13 + $0x478] sm:$0xff]
        %v3087 = vld [vmem:[#allocation13 + $0x480] sm:$0xff]
        %v3088 = vld [vmem:[#allocation13 + $0x488] sm:$0xff]
        %v3089 = vld [vmem:[#allocation13 + $0x490] sm:$0xff]
        %v3090 = vld [vmem:[#allocation13 + $0x498] sm:$0xff]
        %v3091 = vld [vmem:[#allocation13 + $0x4a0] sm:$0xff]
        %v3092 = vld [vmem:[#allocation13 + $0x4a8] sm:$0xff]
        %v3093 = vld [vmem:[#allocation13 + $0x4b0] sm:$0xff]
        %v3094 = vld [vmem:[#allocation13 + $0x4b8] sm:$0xff]
        %v3095 = vld [vmem:[#allocation13 + $0x4c0] sm:$0xff]
        %v3096 = vld [vmem:[#allocation13 + $0x4c8] sm:$0xff]
        %v3097 = vld [vmem:[#allocation13 + $0x4d0] sm:$0xff]
        %v3098 = vld [vmem:[#allocation13 + $0x4d8] sm:$0xff]
        %v3099 = vld [vmem:[#allocation13 + $0x4e0] sm:$0xff]
        %v3100 = vld [vmem:[#allocation13 + $0x4e8] sm:$0xff]
        %v3101 = vld [vmem:[#allocation13 + $0x4f0] sm:$0xff]
        %v3102 = vld [vmem:[#allocation13 + $0x4f8] sm:$0xff]
        %v3103 = vld [vmem:[#allocation13 + $0x500] sm:$0xff]
        %v3104 = vld [vmem:[#allocation13 + $0x508] sm:$0xff]
        %v3105 = vld [vmem:[#allocation13 + $0x510] sm:$0xff]
        %v3106 = vld [vmem:[#allocation13 + $0x518] sm:$0xff]
        %v3107 = vld [vmem:[#allocation13 + $0x520] sm:$0xff]
        %v3108 = vld [vmem:[#allocation13 + $0x528] sm:$0xff]
        %v3109 = vld [vmem:[#allocation13 + $0x530] sm:$0xff]
        %v3110 = vld [vmem:[#allocation13 + $0x538] sm:$0xff]
        %v3111 = vld [vmem:[#allocation13 + $0x540] sm:$0xff]
        %v3112 = vld [vmem:[#allocation13 + $0x548] sm:$0xff]
        %v3113 = vld [vmem:[#allocation13 + $0x550] sm:$0xff]
        %v3114 = vld [vmem:[#allocation13 + $0x558] sm:$0xff]
        %v3115 = vld [vmem:[#allocation13 + $0x560] sm:$0xff]
        %v3116 = vld [vmem:[#allocation13 + $0x568] sm:$0xff]
        %v3117 = vld [vmem:[#allocation13 + $0x570] sm:$0xff]
        %v3118 = vld [vmem:[#allocation13 + $0x578] sm:$0xff]
        %v3119 = vld [vmem:[#allocation13 + $0x580] sm:$0xff]
        %v3120 = vld [vmem:[#allocation13 + $0x588] sm:$0xff]
        %v3121 = vld [vmem:[#allocation13 + $0x590] sm:$0xff]
        %v3122 = vld [vmem:[#allocation13 + $0x598] sm:$0xff]
        %v3123 = vld [vmem:[#allocation13 + $0x5a0] sm:$0xff]
        %v3124 = vld [vmem:[#allocation13 + $0x5a8] sm:$0xff]
        %v3125 = vld [vmem:[#allocation13 + $0x5b0] sm:$0xff]
        %v3126 = vld [vmem:[#allocation13 + $0x5b8] sm:$0xff]
        %v3127 = vld [vmem:[#allocation13 + $0x5c0] sm:$0xff]
        %v3128 = vld [vmem:[#allocation13 + $0x5c8] sm:$0xff]
        %v3129 = vld [vmem:[#allocation13 + $0x5d0] sm:$0xff]
        %v3130 = vld [vmem:[#allocation13 + $0x5d8] sm:$0xff]
        %v3131 = vld [vmem:[#allocation13 + $0x5e0] sm:$0xff]
        %v3132 = vld [vmem:[#allocation13 + $0x5e8] sm:$0xff]
        %v3133 = vld [vmem:[#allocation13 + $0x5f0] sm:$0xff]
        %v3134 = vld [vmem:[#allocation13 + $0x5f8] sm:$0xff]
        %v3135 = vld [vmem:[#allocation13 + $0x600] sm:$0xff]
        %v3136 = vld [vmem:[#allocation13 + $0x608] sm:$0xff]
        %v3137 = vld [vmem:[#allocation13 + $0x610] sm:$0xff]
        %v3138 = vld [vmem:[#allocation13 + $0x618] sm:$0xff]
        %v3139 = vld [vmem:[#allocation13 + $0x620] sm:$0xff]
        %v3140 = vld [vmem:[#allocation13 + $0x628] sm:$0xff]
        %v3141 = vld [vmem:[#allocation13 + $0x630] sm:$0xff]
        %v3142 = vld [vmem:[#allocation13 + $0x638] sm:$0xff]
        %v3143 = vld [vmem:[#allocation13 + $0x640] sm:$0xff]
        %v3144 = vld [vmem:[#allocation13 + $0x648] sm:$0xff]
        %v3145 = vld [vmem:[#allocation13 + $0x650] sm:$0xff]
        %v3146 = vld [vmem:[#allocation13 + $0x658] sm:$0xff]
        %v3147 = vld [vmem:[#allocation13 + $0x660] sm:$0xff]
        %v3148 = vld [vmem:[#allocation13 + $0x668] sm:$0xff]
        %v3149 = vld [vmem:[#allocation13 + $0x670] sm:$0xff]
        %v3150 = vld [vmem:[#allocation13 + $0x678] sm:$0xff]
        %v3151 = vld [vmem:[#allocation13 + $0x680] sm:$0xff]
        %v3152 = vld [vmem:[#allocation13 + $0x688] sm:$0xff]
        %v3153 = vld [vmem:[#allocation13 + $0x690] sm:$0xff]
        %v3154 = vld [vmem:[#allocation13 + $0x698] sm:$0xff]
        %v3155 = vld [vmem:[#allocation13 + $0x6a0] sm:$0xff]
        %v3156 = vld [vmem:[#allocation13 + $0x6a8] sm:$0xff]
        %v3157 = vld [vmem:[#allocation13 + $0x6b0] sm:$0xff]
        %v3158 = vld [vmem:[#allocation13 + $0x6b8] sm:$0xff]
        %v3159 = vld [vmem:[#allocation13 + $0x6c0] sm:$0xff]
        %v3160 = vld [vmem:[#allocation13 + $0x6c8] sm:$0xff]
        %v3161 = vld [vmem:[#allocation13 + $0x6d0] sm:$0xff]
        %v3162 = vld [vmem:[#allocation13 + $0x6d8] sm:$0xff]
        %v3163 = vld [vmem:[#allocation13 + $0x6e0] sm:$0xff]
        %v3164 = vld [vmem:[#allocation13 + $0x6e8] sm:$0xff]
        %v3165 = vld [vmem:[#allocation13 + $0x6f0] sm:$0xff]
        %v3166 = vld [vmem:[#allocation13 + $0x6f8] sm:$0xff]
        %v3167 = vld [vmem:[#allocation13 + $0x700] sm:$0xff]
        %v3168 = vld [vmem:[#allocation13 + $0x708] sm:$0xff]
        %v3169 = vld [vmem:[#allocation13 + $0x710] sm:$0xff]
        %v3170 = vld [vmem:[#allocation13 + $0x718] sm:$0xff]
        %v3171 = vld [vmem:[#allocation13 + $0x720] sm:$0xff]
        %v3172 = vld [vmem:[#allocation13 + $0x728] sm:$0xff]
        %v3173 = vld [vmem:[#allocation13 + $0x730] sm:$0xff]
        %v3174 = vld [vmem:[#allocation13 + $0x738] sm:$0xff]
        %v3175 = vld [vmem:[#allocation13 + $0x740] sm:$0xff]
        %v3176 = vld [vmem:[#allocation13 + $0x748] sm:$0xff]
        %v3177 = vld [vmem:[#allocation13 + $0x750] sm:$0xff]
        %v3178 = vld [vmem:[#allocation13 + $0x758] sm:$0xff]
        %v3179 = vld [vmem:[#allocation13 + $0x760] sm:$0xff]
        %v3180 = vld [vmem:[#allocation13 + $0x768] sm:$0xff]
        %v3181 = vld [vmem:[#allocation13 + $0x770] sm:$0xff]
        %v3182 = vld [vmem:[#allocation13 + $0x778] sm:$0xff]
        %v3183 = vld [vmem:[#allocation13 + $0x780] sm:$0xff]
        %v3184 = vld [vmem:[#allocation13 + $0x788] sm:$0xff]
        %v3185 = vld [vmem:[#allocation13 + $0x790] sm:$0xff]
        %v3186 = vld [vmem:[#allocation13 + $0x798] sm:$0xff]
        %v3187 = vld [vmem:[#allocation13 + $0x7a0] sm:$0xff]
        %v3188 = vld [vmem:[#allocation13 + $0x7a8] sm:$0xff]
        %v3189 = vld [vmem:[#allocation13 + $0x7b0] sm:$0xff]
        %v3190 = vld [vmem:[#allocation13 + $0x7b8] sm:$0xff]
        %v3191 = vld [vmem:[#allocation13 + $0x7c0] sm:$0xff]
        %v3192 = vld [vmem:[#allocation13 + $0x7c8] sm:$0xff]
        %v3193 = vld [vmem:[#allocation13 + $0x7d0] sm:$0xff]
        %v3194 = vld [vmem:[#allocation13 + $0x7d8] sm:$0xff]
        %v3195 = vld [vmem:[#allocation13 + $0x7e0] sm:$0xff]
        %v3196 = vld [vmem:[#allocation13 + $0x7e8] sm:$0xff]
        %v3197 = vld [vmem:[#allocation13 + $0x7f0] sm:$0xff]
        %v3198 = vld [vmem:[#allocation13 + $0x7f8] sm:$0xff]
        %v3199 = vld [vmem:[#allocation13 + $0x800] sm:$0xff]
        %v3200 = vld [vmem:[#allocation13 + $0x808] sm:$0xff]
        %v3201 = vld [vmem:[#allocation13 + $0x810] sm:$0xff]
        %v3202 = vld [vmem:[#allocation13 + $0x818] sm:$0xff]
        %v3203 = vld [vmem:[#allocation13 + $0x820] sm:$0xff]
        %v3204 = vld [vmem:[#allocation13 + $0x828] sm:$0xff]
        %v3205 = vld [vmem:[#allocation13 + $0x830] sm:$0xff]
        %v3206 = vld [vmem:[#allocation13 + $0x838] sm:$0xff]
        %v3207 = vld [vmem:[#allocation13 + $0x840] sm:$0xff]
        %v3208 = vld [vmem:[#allocation13 + $0x848] sm:$0xff]
        %v3209 = vld [vmem:[#allocation13 + $0x850] sm:$0xff]
        %v3210 = vld [vmem:[#allocation13 + $0x858] sm:$0xff]
        %v3211 = vld [vmem:[#allocation13 + $0x860] sm:$0xff]
        %v3212 = vld [vmem:[#allocation13 + $0x868] sm:$0xff]
        %v3213 = vld [vmem:[#allocation13 + $0x870] sm:$0xff]
        %v3214 = vld [vmem:[#allocation13 + $0x878] sm:$0xff]
        %v3215 = vld [vmem:[#allocation13 + $0x880] sm:$0xff]
        %v3216 = vld [vmem:[#allocation13 + $0x888] sm:$0xff]
        %v3217 = vld [vmem:[#allocation13 + $0x890] sm:$0xff]
        %v3218 = vld [vmem:[#allocation13 + $0x898] sm:$0xff]
        %v3219 = vld [vmem:[#allocation13 + $0x8a0] sm:$0xff]
        %v3220 = vld [vmem:[#allocation13 + $0x8a8] sm:$0xff]
        %v3221 = vld [vmem:[#allocation13 + $0x8b0] sm:$0xff]
        %v3222 = vld [vmem:[#allocation13 + $0x8b8] sm:$0xff]
        %v3223 = vld [vmem:[#allocation13 + $0x8c0] sm:$0xff]
        %v3224 = vld [vmem:[#allocation13 + $0x8c8] sm:$0xff]
        %v3225 = vld [vmem:[#allocation13 + $0x8d0] sm:$0xff]
        %v3226 = vld [vmem:[#allocation13 + $0x8d8] sm:$0xff]
        %v3227 = vld [vmem:[#allocation13 + $0x8e0] sm:$0xff]
        %v3228 = vld [vmem:[#allocation13 + $0x8e8] sm:$0xff]
        %v3229 = vld [vmem:[#allocation13 + $0x8f0] sm:$0xff]
        %v3230 = vld [vmem:[#allocation13 + $0x8f8] sm:$0xff]
        %v3231 = vld [vmem:[#allocation13 + $0x900] sm:$0xff]
        %v3232 = vld [vmem:[#allocation13 + $0x908] sm:$0xff]
        %v3233 = vld [vmem:[#allocation13 + $0x910] sm:$0xff]
        %v3234 = vld [vmem:[#allocation13 + $0x918] sm:$0xff]
        %v3235 = vld [vmem:[#allocation13 + $0x920] sm:$0xff]
        %v3236 = vld [vmem:[#allocation13 + $0x928] sm:$0xff]
        %v3237 = vld [vmem:[#allocation13 + $0x930] sm:$0xff]
        %v3238 = vld [vmem:[#allocation13 + $0x938] sm:$0xff]
        %v3239 = vld [vmem:[#allocation13 + $0x940] sm:$0xff]
        %v3240 = vld [vmem:[#allocation13 + $0x948] sm:$0xff]
        %v3241 = vld [vmem:[#allocation13 + $0x950] sm:$0xff]
        %v3242 = vld [vmem:[#allocation13 + $0x958] sm:$0xff]
        %v3243 = vld [vmem:[#allocation13 + $0x960] sm:$0xff]
        %v3244 = vld [vmem:[#allocation13 + $0x968] sm:$0xff]
        %v3245 = vld [vmem:[#allocation13 + $0x970] sm:$0xff]
        %v3246 = vld [vmem:[#allocation13 + $0x978] sm:$0xff]
        %v3247 = vld [vmem:[#allocation13 + $0x980] sm:$0xff]
        %v3248 = vld [vmem:[#allocation13 + $0x988] sm:$0xff]
        %v3249 = vld [vmem:[#allocation13 + $0x990] sm:$0xff]
        %v3250 = vld [vmem:[#allocation13 + $0x998] sm:$0xff]
        %v3251 = vld [vmem:[#allocation13 + $0x9a0] sm:$0xff]
        %v3252 = vld [vmem:[#allocation13 + $0x9a8] sm:$0xff]
        %v3253 = vld [vmem:[#allocation13 + $0x9b0] sm:$0xff]
        %v3254 = vld [vmem:[#allocation13 + $0x9b8] sm:$0xff]
        %v3255 = vld [vmem:[#allocation13 + $0x9c0] sm:$0xff]
        %v3256 = vld [vmem:[#allocation13 + $0x9c8] sm:$0xff]
        %v3257 = vld [vmem:[#allocation13 + $0x9d0] sm:$0xff]
        %v3258 = vld [vmem:[#allocation13 + $0x9d8] sm:$0xff]
        %v3259 = vld [vmem:[#allocation13 + $0x9e0] sm:$0xff]
        %v3260 = vld [vmem:[#allocation13 + $0x9e8] sm:$0xff]
        %v3261 = vld [vmem:[#allocation13 + $0x9f0] sm:$0xff]
        %v3262 = vld [vmem:[#allocation13 + $0x9f8] sm:$0xff]
        %v3263 = vld [vmem:[#allocation13 + $0xa00] sm:$0xff]
        %v3264 = vld [vmem:[#allocation13 + $0xa08] sm:$0xff]
        %v3265 = vld [vmem:[#allocation13 + $0xa10] sm:$0xff]
        %v3266 = vld [vmem:[#allocation13 + $0xa18] sm:$0xff]
        %v3267 = vld [vmem:[#allocation13 + $0xa20] sm:$0xff]
        %v3268 = vld [vmem:[#allocation13 + $0xa28] sm:$0xff]
        %v3269 = vld [vmem:[#allocation13 + $0xa30] sm:$0xff]
        %v3270 = vld [vmem:[#allocation13 + $0xa38] sm:$0xff]
        %v3271 = vld [vmem:[#allocation13 + $0xa40] sm:$0xff]
        %v3272 = vld [vmem:[#allocation13 + $0xa48] sm:$0xff]
        %v3273 = vld [vmem:[#allocation13 + $0xa50] sm:$0xff]
        %v3274 = vld [vmem:[#allocation13 + $0xa58] sm:$0xff]
        %v3275 = vld [vmem:[#allocation13 + $0xa60] sm:$0xff]
        %v3276 = vld [vmem:[#allocation13 + $0xa68] sm:$0xff]
        %v3277 = vld [vmem:[#allocation13 + $0xa70] sm:$0xff]
        %v3278 = vld [vmem:[#allocation13 + $0xa78] sm:$0xff]
        %v3279 = vld [vmem:[#allocation13 + $0xa80] sm:$0xff]
        %v3280 = vld [vmem:[#allocation13 + $0xa88] sm:$0xff]
        %v3281 = vld [vmem:[#allocation13 + $0xa90] sm:$0xff]
        %v3282 = vld [vmem:[#allocation13 + $0xa98] sm:$0xff]
        %v3283 = vld [vmem:[#allocation13 + $0xaa0] sm:$0xff]
        %v3284 = vld [vmem:[#allocation13 + $0xaa8] sm:$0xff]
        %v3285 = vld [vmem:[#allocation13 + $0xab0] sm:$0xff]
        %v3286 = vld [vmem:[#allocation13 + $0xab8] sm:$0xff]
        %v3287 = vld [vmem:[#allocation13 + $0xac0] sm:$0xff]
        %v3288 = vld [vmem:[#allocation13 + $0xac8] sm:$0xff]
        %v3289 = vld [vmem:[#allocation13 + $0xad0] sm:$0xff]
        %v3290 = vld [vmem:[#allocation13 + $0xad8] sm:$0xff]
        %v3291 = vld [vmem:[#allocation13 + $0xae0] sm:$0xff]
        %v3292 = vld [vmem:[#allocation13 + $0xae8] sm:$0xff]
        %v3293 = vld [vmem:[#allocation13 + $0xaf0] sm:$0xff]
        %v3294 = vld [vmem:[#allocation13 + $0xaf8] sm:$0xff]
        %v3295 = vld [vmem:[#allocation13 + $0xb00] sm:$0xff]
        %v3296 = vld [vmem:[#allocation13 + $0xb08] sm:$0xff]
        %v3297 = vld [vmem:[#allocation13 + $0xb10] sm:$0xff]
        %v3298 = vld [vmem:[#allocation13 + $0xb18] sm:$0xff]
        %v3299 = vld [vmem:[#allocation13 + $0xb20] sm:$0xff]
        %v3300 = vld [vmem:[#allocation13 + $0xb28] sm:$0xff]
        %v3301 = vld [vmem:[#allocation13 + $0xb30] sm:$0xff]
        %v3302 = vld [vmem:[#allocation13 + $0xb38] sm:$0xff]
        %v3303 = vld [vmem:[#allocation13 + $0xb40] sm:$0xff]
        %v3304 = vld [vmem:[#allocation13 + $0xb48] sm:$0xff]
        %v3305 = vld [vmem:[#allocation13 + $0xb50] sm:$0xff]
        %v3306 = vld [vmem:[#allocation13 + $0xb58] sm:$0xff]
        %v3307 = vld [vmem:[#allocation13 + $0xb60] sm:$0xff]
        %v3308 = vld [vmem:[#allocation13 + $0xb68] sm:$0xff]
        %v3309 = vld [vmem:[#allocation13 + $0xb70] sm:$0xff]
        %v3310 = vld [vmem:[#allocation13 + $0xb78] sm:$0xff]
        %v3311 = vld [vmem:[#allocation13 + $0xb80] sm:$0xff]
        %v3312 = vld [vmem:[#allocation13 + $0xb88] sm:$0xff]
        %v3313 = vld [vmem:[#allocation13 + $0xb90] sm:$0xff]
        %v3314 = vld [vmem:[#allocation13 + $0xb98] sm:$0xff]
        %v3315 = vld [vmem:[#allocation13 + $0xba0] sm:$0xff]
        %v3316 = vld [vmem:[#allocation13 + $0xba8] sm:$0xff]
        %v3317 = vld [vmem:[#allocation13 + $0xbb0] sm:$0xff]
        %v3318 = vld [vmem:[#allocation13 + $0xbb8] sm:$0xff]
        %v3319 = vld [vmem:[#allocation13 + $0xbc0] sm:$0xff]
        %v3320 = vld [vmem:[#allocation13 + $0xbc8] sm:$0xff]
        %v3321 = vld [vmem:[#allocation13 + $0xbd0] sm:$0xff]
        %v3322 = vld [vmem:[#allocation13 + $0xbd8] sm:$0xff]
        %v3323 = vld [vmem:[#allocation13 + $0xbe0] sm:$0xff]
        %v3324 = vld [vmem:[#allocation13 + $0xbe8] sm:$0xff]
        %v3325 = vld [vmem:[#allocation13 + $0xbf0] sm:$0xff]
        %v3326 = vld [vmem:[#allocation13 + $0xbf8] sm:$0xff]
        %v3327 = vld [vmem:[#allocation13 + $0xc00] sm:$0xff]
        %v3328 = vld [vmem:[#allocation13 + $0xc08] sm:$0xff]
        %v3329 = vld [vmem:[#allocation13 + $0xc10] sm:$0xff]
        %v3330 = vld [vmem:[#allocation13 + $0xc18] sm:$0xff]
        %v3331 = vld [vmem:[#allocation13 + $0xc20] sm:$0xff]
        %v3332 = vld [vmem:[#allocation13 + $0xc28] sm:$0xff]
        %v3333 = vld [vmem:[#allocation13 + $0xc30] sm:$0xff]
        %v3334 = vld [vmem:[#allocation13 + $0xc38] sm:$0xff]
        %v3335 = vld [vmem:[#allocation13 + $0xc40] sm:$0xff]
        %v3336 = vld [vmem:[#allocation13 + $0xc48] sm:$0xff]
        %v3337 = vld [vmem:[#allocation13 + $0xc50] sm:$0xff]
        %v3338 = vld [vmem:[#allocation13 + $0xc58] sm:$0xff]
        %v3339 = vld [vmem:[#allocation13 + $0xc60] sm:$0xff]
        %v3340 = vld [vmem:[#allocation13 + $0xc68] sm:$0xff]
        %v3341 = vld [vmem:[#allocation13 + $0xc70] sm:$0xff]
        %v3342 = vld [vmem:[#allocation13 + $0xc78] sm:$0xff]
        %v3343 = vld [vmem:[#allocation13 + $0xc80] sm:$0xff]
        %v3344 = vld [vmem:[#allocation13 + $0xc88] sm:$0xff]
        %v3345 = vld [vmem:[#allocation13 + $0xc90] sm:$0xff]
        %v3346 = vld [vmem:[#allocation13 + $0xc98] sm:$0xff]
        %v3347 = vld [vmem:[#allocation13 + $0xca0] sm:$0xff]
        %v3348 = vld [vmem:[#allocation13 + $0xca8] sm:$0xff]
        %v3349 = vld [vmem:[#allocation13 + $0xcb0] sm:$0xff]
        %v3350 = vld [vmem:[#allocation13 + $0xcb8] sm:$0xff]
        %v3351 = vld [vmem:[#allocation13 + $0xcc0] sm:$0xff]
        %v3352 = vld [vmem:[#allocation13 + $0xcc8] sm:$0xff]
        %v3353 = vld [vmem:[#allocation13 + $0xcd0] sm:$0xff]
        %v3354 = vld [vmem:[#allocation13 + $0xcd8] sm:$0xff]
        %v3355 = vld [vmem:[#allocation13 + $0xce0] sm:$0xff]
        %v3356 = vld [vmem:[#allocation13 + $0xce8] sm:$0xff]
        %v3357 = vld [vmem:[#allocation13 + $0xcf0] sm:$0xff]
        %v3358 = vld [vmem:[#allocation13 + $0xcf8] sm:$0xff]
        %v3359 = vld [vmem:[#allocation13 + $0xd00] sm:$0xff]
        %v3360 = vld [vmem:[#allocation13 + $0xd08] sm:$0xff]
        %v3361 = vld [vmem:[#allocation13 + $0xd10] sm:$0xff]
        %v3362 = vld [vmem:[#allocation13 + $0xd18] sm:$0xff]
        %v3363 = vld [vmem:[#allocation13 + $0xd20] sm:$0xff]
        %v3364 = vld [vmem:[#allocation13 + $0xd28] sm:$0xff]
        %v3365 = vld [vmem:[#allocation13 + $0xd30] sm:$0xff]
        %v3366 = vld [vmem:[#allocation13 + $0xd38] sm:$0xff]
        %v3367 = vld [vmem:[#allocation13 + $0xd40] sm:$0xff]
        %v3368 = vld [vmem:[#allocation13 + $0xd48] sm:$0xff]
        %v3369 = vld [vmem:[#allocation13 + $0xd50] sm:$0xff]
        %v3370 = vld [vmem:[#allocation13 + $0xd58] sm:$0xff]
        %v3371 = vld [vmem:[#allocation13 + $0xd60] sm:$0xff]
        %v3372 = vld [vmem:[#allocation13 + $0xd68] sm:$0xff]
        %v3373 = vld [vmem:[#allocation13 + $0xd70] sm:$0xff]
        %v3374 = vld [vmem:[#allocation13 + $0xd78] sm:$0xff]
        %v3375 = vld [vmem:[#allocation13 + $0xd80] sm:$0xff]
        %v3376 = vld [vmem:[#allocation13 + $0xd88] sm:$0xff]
        %v3377 = vld [vmem:[#allocation13 + $0xd90] sm:$0xff]
        %v3378 = vld [vmem:[#allocation13 + $0xd98] sm:$0xff]
        %v3379 = vld [vmem:[#allocation13 + $0xda0] sm:$0xff]
        %v3380 = vld [vmem:[#allocation13 + $0xda8] sm:$0xff]
        %v3381 = vld [vmem:[#allocation13 + $0xdb0] sm:$0xff]
        %v3382 = vld [vmem:[#allocation13 + $0xdb8] sm:$0xff]
        %v3383 = vld [vmem:[#allocation13 + $0xdc0] sm:$0xff]
        %v3384 = vld [vmem:[#allocation13 + $0xdc8] sm:$0xff]
        %v3385 = vld [vmem:[#allocation13 + $0xdd0] sm:$0xff]
        %v3386 = vld [vmem:[#allocation13 + $0xdd8] sm:$0xff]
        %v3387 = vld [vmem:[#allocation13 + $0xde0] sm:$0xff]
        %v3388 = vld [vmem:[#allocation13 + $0xde8] sm:$0xff]
        %v3389 = vld [vmem:[#allocation13 + $0xdf0] sm:$0xff]
        %v3390 = vld [vmem:[#allocation13 + $0xdf8] sm:$0xff]
        %v3391 = vld [vmem:[#allocation13 + $0xe00] sm:$0xff]
        %v3392 = vld [vmem:[#allocation13 + $0xe08] sm:$0xff]
        %v3393 = vld [vmem:[#allocation13 + $0xe10] sm:$0xff]
        %v3394 = vld [vmem:[#allocation13 + $0xe18] sm:$0xff]
        %v3395 = vld [vmem:[#allocation13 + $0xe20] sm:$0xff]
        %v3396 = vld [vmem:[#allocation13 + $0xe28] sm:$0xff]
        %v3397 = vld [vmem:[#allocation13 + $0xe30] sm:$0xff]
        %v3398 = vld [vmem:[#allocation13 + $0xe38] sm:$0xff]
        %v3399 = vld [vmem:[#allocation13 + $0xe40] sm:$0xff]
        %v3400 = vld [vmem:[#allocation13 + $0xe48] sm:$0xff]
        %v3401 = vld [vmem:[#allocation13 + $0xe50] sm:$0xff]
        %v3402 = vld [vmem:[#allocation13 + $0xe58] sm:$0xff]
        %v3403 = vld [vmem:[#allocation13 + $0xe60] sm:$0xff]
        %v3404 = vld [vmem:[#allocation13 + $0xe68] sm:$0xff]
        %v3405 = vld [vmem:[#allocation13 + $0xe70] sm:$0xff]
        %v3406 = vld [vmem:[#allocation13 + $0xe78] sm:$0xff]
        %v3407 = vld [vmem:[#allocation13 + $0xe80] sm:$0xff]
        %v3408 = vld [vmem:[#allocation13 + $0xe88] sm:$0xff]
        %v3409 = vld [vmem:[#allocation13 + $0xe90] sm:$0xff]
        %v3410 = vld [vmem:[#allocation13 + $0xe98] sm:$0xff]
        %v3411 = vld [vmem:[#allocation13 + $0xea0] sm:$0xff]
        %v3412 = vld [vmem:[#allocation13 + $0xea8] sm:$0xff]
        %v3413 = vld [vmem:[#allocation13 + $0xeb0] sm:$0xff]
        %v3414 = vld [vmem:[#allocation13 + $0xeb8] sm:$0xff]
        %v3415 = vld [vmem:[#allocation13 + $0xec0] sm:$0xff]
        %v3416 = vld [vmem:[#allocation13 + $0xec8] sm:$0xff]
        %v3417 = vld [vmem:[#allocation13 + $0xed0] sm:$0xff]
        %v3418 = vld [vmem:[#allocation13 + $0xed8] sm:$0xff]
        %v3419 = vld [vmem:[#allocation13 + $0xee0] sm:$0xff]
        %v3420 = vld [vmem:[#allocation13 + $0xee8] sm:$0xff]
        %v3421 = vld [vmem:[#allocation13 + $0xef0] sm:$0xff]
        %v3422 = vld [vmem:[#allocation13 + $0xef8] sm:$0xff]
        %v3423 = vld [vmem:[#allocation13 + $0xf00] sm:$0xff]
        %v3424 = vld [vmem:[#allocation13 + $0xf08] sm:$0xff]
        %v3425 = vld [vmem:[#allocation13 + $0xf10] sm:$0xff]
        %v3426 = vld [vmem:[#allocation13 + $0xf18] sm:$0xff]
        %v3427 = vld [vmem:[#allocation13 + $0xf20] sm:$0xff]
        %v3428 = vld [vmem:[#allocation13 + $0xf28] sm:$0xff]
        %v3429 = vld [vmem:[#allocation13 + $0xf30] sm:$0xff]
        %v3430 = vld [vmem:[#allocation13 + $0xf38] sm:$0xff]
        %v3431 = vld [vmem:[#allocation13 + $0xf40] sm:$0xff]
        %v3432 = vld [vmem:[#allocation13 + $0xf48] sm:$0xff]
        %v3433 = vld [vmem:[#allocation13 + $0xf50] sm:$0xff]
        %v3434 = vld [vmem:[#allocation13 + $0xf58] sm:$0xff]
        %v3435 = vld [vmem:[#allocation13 + $0xf60] sm:$0xff]
        %v3436 = vld [vmem:[#allocation13 + $0xf68] sm:$0xff]
        %v3437 = vld [vmem:[#allocation13 + $0xf70] sm:$0xff]
        %v3438 = vld [vmem:[#allocation13 + $0xf78] sm:$0xff]
        %v3439 = vld [vmem:[#allocation13 + $0xf80] sm:$0xff]
        %v3440 = vld [vmem:[#allocation13 + $0xf88] sm:$0xff]
        %v3441 = vld [vmem:[#allocation13 + $0xf90] sm:$0xff]
        %v3442 = vld [vmem:[#allocation13 + $0xf98] sm:$0xff]
        %v3443 = vld [vmem:[#allocation13 + $0xfa0] sm:$0xff]
        %v3444 = vld [vmem:[#allocation13 + $0xfa8] sm:$0xff]
        %v3445 = vld [vmem:[#allocation13 + $0xfb0] sm:$0xff]
        %v3446 = vld [vmem:[#allocation13 + $0xfb8] sm:$0xff]
        %v3447 = vld [vmem:[#allocation13 + $0xfc0] sm:$0xff]
        %v3448 = vld [vmem:[#allocation13 + $0xfc8] sm:$0xff]
        %v3449 = vld [vmem:[#allocation13 + $0xfd0] sm:$0xff]
        %v3450 = vld [vmem:[#allocation13 + $0xfd8] sm:$0xff]
        %v3451 = vld [vmem:[#allocation13 + $0xfe0] sm:$0xff]
        %v3452 = vld [vmem:[#allocation13 + $0xfe8] sm:$0xff]
        %v3453 = vld [vmem:[#allocation13 + $0xff0] sm:$0xff]
        %v3454 = vld [vmem:[#allocation13 + $0xff8] sm:$0xff]
        %v3967 = vunpack.c.l.b16 %v2943
        %v3968 = vunpack.c.h.b16 %v2943
        %v3969 = vunpack.c.l.b16 %v2944
        %v3970 = vunpack.c.h.b16 %v2944
        %v3971 = vunpack.c.l.b16 %v2945
        %v3972 = vunpack.c.h.b16 %v2945
        %v3973 = vunpack.c.l.b16 %v2946
        %v3974 = vunpack.c.h.b16 %v2946
        %v3975 = vunpack.c.l.b16 %v2947
        %v3976 = vunpack.c.h.b16 %v2947
        %v3977 = vunpack.c.l.b16 %v2948
        %v3978 = vunpack.c.h.b16 %v2948
        %v3979 = vunpack.c.l.b16 %v2949
        %v3980 = vunpack.c.h.b16 %v2949
        %v3981 = vunpack.c.l.b16 %v2950
        %v3982 = vunpack.c.h.b16 %v2950
        %v3983 = vunpack.c.l.b16 %v2951
        %v3984 = vunpack.c.h.b16 %v2951
        %v3985 = vunpack.c.l.b16 %v2952
        %v3986 = vunpack.c.h.b16 %v2952
        %v3987 = vunpack.c.l.b16 %v2953
        %v3988 = vunpack.c.h.b16 %v2953
        %v3989 = vunpack.c.l.b16 %v2954
        %v3990 = vunpack.c.h.b16 %v2954
        %v3991 = vunpack.c.l.b16 %v2955
        %v3992 = vunpack.c.h.b16 %v2955
        %v3993 = vunpack.c.l.b16 %v2956
        %v3994 = vunpack.c.h.b16 %v2956
        %v3995 = vunpack.c.l.b16 %v2957
        %v3996 = vunpack.c.h.b16 %v2957
        %v3997 = vunpack.c.l.b16 %v2958
        %v3998 = vunpack.c.h.b16 %v2958
        %v3999 = vunpack.c.l.b16 %v2959
        %v4000 = vunpack.c.h.b16 %v2959
        %v4001 = vunpack.c.l.b16 %v2960
        %v4002 = vunpack.c.h.b16 %v2960
        %v4003 = vunpack.c.l.b16 %v2961
        %v4004 = vunpack.c.h.b16 %v2961
        %v4005 = vunpack.c.l.b16 %v2962
        %v4006 = vunpack.c.h.b16 %v2962
        %v4007 = vunpack.c.l.b16 %v2963
        %v4008 = vunpack.c.h.b16 %v2963
        %v4009 = vunpack.c.l.b16 %v2964
        %v4010 = vunpack.c.h.b16 %v2964
        %v4011 = vunpack.c.l.b16 %v2965
        %v4012 = vunpack.c.h.b16 %v2965
        %v4013 = vunpack.c.l.b16 %v2966
        %v4014 = vunpack.c.h.b16 %v2966
        %v4015 = vunpack.c.l.b16 %v2967
        %v4016 = vunpack.c.h.b16 %v2967
        %v4017 = vunpack.c.l.b16 %v2968
        %v4018 = vunpack.c.h.b16 %v2968
        %v4019 = vunpack.c.l.b16 %v2969
        %v4020 = vunpack.c.h.b16 %v2969
        %v4021 = vunpack.c.l.b16 %v2970
        %v4022 = vunpack.c.h.b16 %v2970
        %v4023 = vunpack.c.l.b16 %v2971
        %v4024 = vunpack.c.h.b16 %v2971
        %v4025 = vunpack.c.l.b16 %v2972
        %v4026 = vunpack.c.h.b16 %v2972
        %v4027 = vunpack.c.l.b16 %v2973
        %v4028 = vunpack.c.h.b16 %v2973
        %v4029 = vunpack.c.l.b16 %v2974
        %v4030 = vunpack.c.h.b16 %v2974
        %v4031 = vunpack.c.l.b16 %v2975
        %v4032 = vunpack.c.h.b16 %v2975
        %v4033 = vunpack.c.l.b16 %v2976
        %v4034 = vunpack.c.h.b16 %v2976
        %v4035 = vunpack.c.l.b16 %v2977
        %v4036 = vunpack.c.h.b16 %v2977
        %v4037 = vunpack.c.l.b16 %v2978
        %v4038 = vunpack.c.h.b16 %v2978
        %v4039 = vunpack.c.l.b16 %v2979
        %v4040 = vunpack.c.h.b16 %v2979
        %v4041 = vunpack.c.l.b16 %v2980
        %v4042 = vunpack.c.h.b16 %v2980
        %v4043 = vunpack.c.l.b16 %v2981
        %v4044 = vunpack.c.h.b16 %v2981
        %v4045 = vunpack.c.l.b16 %v2982
        %v4046 = vunpack.c.h.b16 %v2982
        %v4047 = vunpack.c.l.b16 %v2983
        %v4048 = vunpack.c.h.b16 %v2983
        %v4049 = vunpack.c.l.b16 %v2984
        %v4050 = vunpack.c.h.b16 %v2984
        %v4051 = vunpack.c.l.b16 %v2985
        %v4052 = vunpack.c.h.b16 %v2985
        %v4053 = vunpack.c.l.b16 %v2986
        %v4054 = vunpack.c.h.b16 %v2986
        %v4055 = vunpack.c.l.b16 %v2987
        %v4056 = vunpack.c.h.b16 %v2987
        %v4057 = vunpack.c.l.b16 %v2988
        %v4058 = vunpack.c.h.b16 %v2988
        %v4059 = vunpack.c.l.b16 %v2989
        %v4060 = vunpack.c.h.b16 %v2989
        %v4061 = vunpack.c.l.b16 %v2990
        %v4062 = vunpack.c.h.b16 %v2990
        %v4063 = vunpack.c.l.b16 %v2991
        %v4064 = vunpack.c.h.b16 %v2991
        %v4065 = vunpack.c.l.b16 %v2992
        %v4066 = vunpack.c.h.b16 %v2992
        %v4067 = vunpack.c.l.b16 %v2993
        %v4068 = vunpack.c.h.b16 %v2993
        %v4069 = vunpack.c.l.b16 %v2994
        %v4070 = vunpack.c.h.b16 %v2994
        %v4071 = vunpack.c.l.b16 %v2995
        %v4072 = vunpack.c.h.b16 %v2995
        %v4073 = vunpack.c.l.b16 %v2996
        %v4074 = vunpack.c.h.b16 %v2996
        %v4075 = vunpack.c.l.b16 %v2997
        %v4076 = vunpack.c.h.b16 %v2997
        %v4077 = vunpack.c.l.b16 %v2998
        %v4078 = vunpack.c.h.b16 %v2998
        %v4079 = vunpack.c.l.b16 %v2999
        %v4080 = vunpack.c.h.b16 %v2999
        %v4081 = vunpack.c.l.b16 %v3000
        %v4082 = vunpack.c.h.b16 %v3000
        %v4083 = vunpack.c.l.b16 %v3001
        %v4084 = vunpack.c.h.b16 %v3001
        %v4085 = vunpack.c.l.b16 %v3002
        %v4086 = vunpack.c.h.b16 %v3002
        %v4087 = vunpack.c.l.b16 %v3003
        %v4088 = vunpack.c.h.b16 %v3003
        %v4089 = vunpack.c.l.b16 %v3004
        %v4090 = vunpack.c.h.b16 %v3004
        %v4091 = vunpack.c.l.b16 %v3005
        %v4092 = vunpack.c.h.b16 %v3005
        %v4093 = vunpack.c.l.b16 %v3006
        %v4094 = vunpack.c.h.b16 %v3006
        %v4095 = vunpack.c.l.b16 %v3007
        %v4096 = vunpack.c.h.b16 %v3007
        %v4097 = vunpack.c.l.b16 %v3008
        %v4098 = vunpack.c.h.b16 %v3008
        %v4099 = vunpack.c.l.b16 %v3009
        %v4100 = vunpack.c.h.b16 %v3009
        %v4101 = vunpack.c.l.b16 %v3010
        %v4102 = vunpack.c.h.b16 %v3010
        %v4103 = vunpack.c.l.b16 %v3011
        %v4104 = vunpack.c.h.b16 %v3011
        %v4105 = vunpack.c.l.b16 %v3012
        %v4106 = vunpack.c.h.b16 %v3012
        %v4107 = vunpack.c.l.b16 %v3013
        %v4108 = vunpack.c.h.b16 %v3013
        %v4109 = vunpack.c.l.b16 %v3014
        %v4110 = vunpack.c.h.b16 %v3014
        %v4111 = vunpack.c.l.b16 %v3015
        %v4112 = vunpack.c.h.b16 %v3015
        %v4113 = vunpack.c.l.b16 %v3016
        %v4114 = vunpack.c.h.b16 %v3016
        %v4115 = vunpack.c.l.b16 %v3017
        %v4116 = vunpack.c.h.b16 %v3017
        %v4117 = vunpack.c.l.b16 %v3018
        %v4118 = vunpack.c.h.b16 %v3018
        %v4119 = vunpack.c.l.b16 %v3019
        %v4120 = vunpack.c.h.b16 %v3019
        %v4121 = vunpack.c.l.b16 %v3020
        %v4122 = vunpack.c.h.b16 %v3020
        %v4123 = vunpack.c.l.b16 %v3021
        %v4124 = vunpack.c.h.b16 %v3021
        %v4125 = vunpack.c.l.b16 %v3022
        %v4126 = vunpack.c.h.b16 %v3022
        %v4127 = vunpack.c.l.b16 %v3023
        %v4128 = vunpack.c.h.b16 %v3023
        %v4129 = vunpack.c.l.b16 %v3024
        %v4130 = vunpack.c.h.b16 %v3024
        %v4131 = vunpack.c.l.b16 %v3025
        %v4132 = vunpack.c.h.b16 %v3025
        %v4133 = vunpack.c.l.b16 %v3026
        %v4134 = vunpack.c.h.b16 %v3026
        %v4135 = vunpack.c.l.b16 %v3027
        %v4136 = vunpack.c.h.b16 %v3027
        %v4137 = vunpack.c.l.b16 %v3028
        %v4138 = vunpack.c.h.b16 %v3028
        %v4139 = vunpack.c.l.b16 %v3029
        %v4140 = vunpack.c.h.b16 %v3029
        %v4141 = vunpack.c.l.b16 %v3030
        %v4142 = vunpack.c.h.b16 %v3030
        %v4143 = vunpack.c.l.b16 %v3031
        %v4144 = vunpack.c.h.b16 %v3031
        %v4145 = vunpack.c.l.b16 %v3032
        %v4146 = vunpack.c.h.b16 %v3032
        %v4147 = vunpack.c.l.b16 %v3033
        %v4148 = vunpack.c.h.b16 %v3033
        %v4149 = vunpack.c.l.b16 %v3034
        %v4150 = vunpack.c.h.b16 %v3034
        %v4151 = vunpack.c.l.b16 %v3035
        %v4152 = vunpack.c.h.b16 %v3035
        %v4153 = vunpack.c.l.b16 %v3036
        %v4154 = vunpack.c.h.b16 %v3036
        %v4155 = vunpack.c.l.b16 %v3037
        %v4156 = vunpack.c.h.b16 %v3037
        %v4157 = vunpack.c.l.b16 %v3038
        %v4158 = vunpack.c.h.b16 %v3038
        %v4159 = vunpack.c.l.b16 %v3039
        %v4160 = vunpack.c.h.b16 %v3039
        %v4161 = vunpack.c.l.b16 %v3040
        %v4162 = vunpack.c.h.b16 %v3040
        %v4163 = vunpack.c.l.b16 %v3041
        %v4164 = vunpack.c.h.b16 %v3041
        %v4165 = vunpack.c.l.b16 %v3042
        %v4166 = vunpack.c.h.b16 %v3042
        %v4167 = vunpack.c.l.b16 %v3043
        %v4168 = vunpack.c.h.b16 %v3043
        %v4169 = vunpack.c.l.b16 %v3044
        %v4170 = vunpack.c.h.b16 %v3044
        %v4171 = vunpack.c.l.b16 %v3045
        %v4172 = vunpack.c.h.b16 %v3045
        %v4173 = vunpack.c.l.b16 %v3046
        %v4174 = vunpack.c.h.b16 %v3046
        %v4175 = vunpack.c.l.b16 %v3047
        %v4176 = vunpack.c.h.b16 %v3047
        %v4177 = vunpack.c.l.b16 %v3048
        %v4178 = vunpack.c.h.b16 %v3048
        %v4179 = vunpack.c.l.b16 %v3049
        %v4180 = vunpack.c.h.b16 %v3049
        %v4181 = vunpack.c.l.b16 %v3050
        %v4182 = vunpack.c.h.b16 %v3050
        %v4183 = vunpack.c.l.b16 %v3051
        %v4184 = vunpack.c.h.b16 %v3051
        %v4185 = vunpack.c.l.b16 %v3052
        %v4186 = vunpack.c.h.b16 %v3052
        %v4187 = vunpack.c.l.b16 %v3053
        %v4188 = vunpack.c.h.b16 %v3053
        %v4189 = vunpack.c.l.b16 %v3054
        %v4190 = vunpack.c.h.b16 %v3054
        %v4191 = vunpack.c.l.b16 %v3055
        %v4192 = vunpack.c.h.b16 %v3055
        %v4193 = vunpack.c.l.b16 %v3056
        %v4194 = vunpack.c.h.b16 %v3056
        %v4195 = vunpack.c.l.b16 %v3057
        %v4196 = vunpack.c.h.b16 %v3057
        %v4197 = vunpack.c.l.b16 %v3058
        %v4198 = vunpack.c.h.b16 %v3058
        %v4199 = vunpack.c.l.b16 %v3059
        %v4200 = vunpack.c.h.b16 %v3059
        %v4201 = vunpack.c.l.b16 %v3060
        %v4202 = vunpack.c.h.b16 %v3060
        %v4203 = vunpack.c.l.b16 %v3061
        %v4204 = vunpack.c.h.b16 %v3061
        %v4205 = vunpack.c.l.b16 %v3062
        %v4206 = vunpack.c.h.b16 %v3062
        %v4207 = vunpack.c.l.b16 %v3063
        %v4208 = vunpack.c.h.b16 %v3063
        %v4209 = vunpack.c.l.b16 %v3064
        %v4210 = vunpack.c.h.b16 %v3064
        %v4211 = vunpack.c.l.b16 %v3065
        %v4212 = vunpack.c.h.b16 %v3065
        %v4213 = vunpack.c.l.b16 %v3066
        %v4214 = vunpack.c.h.b16 %v3066
        %v4215 = vunpack.c.l.b16 %v3067
        %v4216 = vunpack.c.h.b16 %v3067
        %v4217 = vunpack.c.l.b16 %v3068
        %v4218 = vunpack.c.h.b16 %v3068
        %v4219 = vunpack.c.l.b16 %v3069
        %v4220 = vunpack.c.h.b16 %v3069
        %v4221 = vunpack.c.l.b16 %v3070
        %v4222 = vunpack.c.h.b16 %v3070
        %v4223 = vunpack.c.l.b16 %v3071
        %v4224 = vunpack.c.h.b16 %v3071
        %v4225 = vunpack.c.l.b16 %v3072
        %v4226 = vunpack.c.h.b16 %v3072
        %v4227 = vunpack.c.l.b16 %v3073
        %v4228 = vunpack.c.h.b16 %v3073
        %v4229 = vunpack.c.l.b16 %v3074
        %v4230 = vunpack.c.h.b16 %v3074
        %v4231 = vunpack.c.l.b16 %v3075
        %v4232 = vunpack.c.h.b16 %v3075
        %v4233 = vunpack.c.l.b16 %v3076
        %v4234 = vunpack.c.h.b16 %v3076
        %v4235 = vunpack.c.l.b16 %v3077
        %v4236 = vunpack.c.h.b16 %v3077
        %v4237 = vunpack.c.l.b16 %v3078
        %v4238 = vunpack.c.h.b16 %v3078
        %v4239 = vunpack.c.l.b16 %v3079
        %v4240 = vunpack.c.h.b16 %v3079
        %v4241 = vunpack.c.l.b16 %v3080
        %v4242 = vunpack.c.h.b16 %v3080
        %v4243 = vunpack.c.l.b16 %v3081
        %v4244 = vunpack.c.h.b16 %v3081
        %v4245 = vunpack.c.l.b16 %v3082
        %v4246 = vunpack.c.h.b16 %v3082
        %v4247 = vunpack.c.l.b16 %v3083
        %v4248 = vunpack.c.h.b16 %v3083
        %v4249 = vunpack.c.l.b16 %v3084
        %v4250 = vunpack.c.h.b16 %v3084
        %v4251 = vunpack.c.l.b16 %v3085
        %v4252 = vunpack.c.h.b16 %v3085
        %v4253 = vunpack.c.l.b16 %v3086
        %v4254 = vunpack.c.h.b16 %v3086
        %v4255 = vunpack.c.l.b16 %v3087
        %v4256 = vunpack.c.h.b16 %v3087
        %v4257 = vunpack.c.l.b16 %v3088
        %v4258 = vunpack.c.h.b16 %v3088
        %v4259 = vunpack.c.l.b16 %v3089
        %v4260 = vunpack.c.h.b16 %v3089
        %v4261 = vunpack.c.l.b16 %v3090
        %v4262 = vunpack.c.h.b16 %v3090
        %v4263 = vunpack.c.l.b16 %v3091
        %v4264 = vunpack.c.h.b16 %v3091
        %v4265 = vunpack.c.l.b16 %v3092
        %v4266 = vunpack.c.h.b16 %v3092
        %v4267 = vunpack.c.l.b16 %v3093
        %v4268 = vunpack.c.h.b16 %v3093
        %v4269 = vunpack.c.l.b16 %v3094
        %v4270 = vunpack.c.h.b16 %v3094
        %v4271 = vunpack.c.l.b16 %v3095
        %v4272 = vunpack.c.h.b16 %v3095
        %v4273 = vunpack.c.l.b16 %v3096
        %v4274 = vunpack.c.h.b16 %v3096
        %v4275 = vunpack.c.l.b16 %v3097
        %v4276 = vunpack.c.h.b16 %v3097
        %v4277 = vunpack.c.l.b16 %v3098
        %v4278 = vunpack.c.h.b16 %v3098
        %v4279 = vunpack.c.l.b16 %v3099
        %v4280 = vunpack.c.h.b16 %v3099
        %v4281 = vunpack.c.l.b16 %v3100
        %v4282 = vunpack.c.h.b16 %v3100
        %v4283 = vunpack.c.l.b16 %v3101
        %v4284 = vunpack.c.h.b16 %v3101
        %v4285 = vunpack.c.l.b16 %v3102
        %v4286 = vunpack.c.h.b16 %v3102
        %v4287 = vunpack.c.l.b16 %v3103
        %v4288 = vunpack.c.h.b16 %v3103
        %v4289 = vunpack.c.l.b16 %v3104
        %v4290 = vunpack.c.h.b16 %v3104
        %v4291 = vunpack.c.l.b16 %v3105
        %v4292 = vunpack.c.h.b16 %v3105
        %v4293 = vunpack.c.l.b16 %v3106
        %v4294 = vunpack.c.h.b16 %v3106
        %v4295 = vunpack.c.l.b16 %v3107
        %v4296 = vunpack.c.h.b16 %v3107
        %v4297 = vunpack.c.l.b16 %v3108
        %v4298 = vunpack.c.h.b16 %v3108
        %v4299 = vunpack.c.l.b16 %v3109
        %v4300 = vunpack.c.h.b16 %v3109
        %v4301 = vunpack.c.l.b16 %v3110
        %v4302 = vunpack.c.h.b16 %v3110
        %v4303 = vunpack.c.l.b16 %v3111
        %v4304 = vunpack.c.h.b16 %v3111
        %v4305 = vunpack.c.l.b16 %v3112
        %v4306 = vunpack.c.h.b16 %v3112
        %v4307 = vunpack.c.l.b16 %v3113
        %v4308 = vunpack.c.h.b16 %v3113
        %v4309 = vunpack.c.l.b16 %v3114
        %v4310 = vunpack.c.h.b16 %v3114
        %v4311 = vunpack.c.l.b16 %v3115
        %v4312 = vunpack.c.h.b16 %v3115
        %v4313 = vunpack.c.l.b16 %v3116
        %v4314 = vunpack.c.h.b16 %v3116
        %v4315 = vunpack.c.l.b16 %v3117
        %v4316 = vunpack.c.h.b16 %v3117
        %v4317 = vunpack.c.l.b16 %v3118
        %v4318 = vunpack.c.h.b16 %v3118
        %v4319 = vunpack.c.l.b16 %v3119
        %v4320 = vunpack.c.h.b16 %v3119
        %v4321 = vunpack.c.l.b16 %v3120
        %v4322 = vunpack.c.h.b16 %v3120
        %v4323 = vunpack.c.l.b16 %v3121
        %v4324 = vunpack.c.h.b16 %v3121
        %v4325 = vunpack.c.l.b16 %v3122
        %v4326 = vunpack.c.h.b16 %v3122
        %v4327 = vunpack.c.l.b16 %v3123
        %v4328 = vunpack.c.h.b16 %v3123
        %v4329 = vunpack.c.l.b16 %v3124
        %v4330 = vunpack.c.h.b16 %v3124
        %v4331 = vunpack.c.l.b16 %v3125
        %v4332 = vunpack.c.h.b16 %v3125
        %v4333 = vunpack.c.l.b16 %v3126
        %v4334 = vunpack.c.h.b16 %v3126
        %v4335 = vunpack.c.l.b16 %v3127
        %v4336 = vunpack.c.h.b16 %v3127
        %v4337 = vunpack.c.l.b16 %v3128
        %v4338 = vunpack.c.h.b16 %v3128
        %v4339 = vunpack.c.l.b16 %v3129
        %v4340 = vunpack.c.h.b16 %v3129
        %v4341 = vunpack.c.l.b16 %v3130
        %v4342 = vunpack.c.h.b16 %v3130
        %v4343 = vunpack.c.l.b16 %v3131
        %v4344 = vunpack.c.h.b16 %v3131
        %v4345 = vunpack.c.l.b16 %v3132
        %v4346 = vunpack.c.h.b16 %v3132
        %v4347 = vunpack.c.l.b16 %v3133
        %v4348 = vunpack.c.h.b16 %v3133
        %v4349 = vunpack.c.l.b16 %v3134
        %v4350 = vunpack.c.h.b16 %v3134
        %v4351 = vunpack.c.l.b16 %v3135
        %v4352 = vunpack.c.h.b16 %v3135
        %v4353 = vunpack.c.l.b16 %v3136
        %v4354 = vunpack.c.h.b16 %v3136
        %v4355 = vunpack.c.l.b16 %v3137
        %v4356 = vunpack.c.h.b16 %v3137
        %v4357 = vunpack.c.l.b16 %v3138
        %v4358 = vunpack.c.h.b16 %v3138
        %v4359 = vunpack.c.l.b16 %v3139
        %v4360 = vunpack.c.h.b16 %v3139
        %v4361 = vunpack.c.l.b16 %v3140
        %v4362 = vunpack.c.h.b16 %v3140
        %v4363 = vunpack.c.l.b16 %v3141
        %v4364 = vunpack.c.h.b16 %v3141
        %v4365 = vunpack.c.l.b16 %v3142
        %v4366 = vunpack.c.h.b16 %v3142
        %v4367 = vunpack.c.l.b16 %v3143
        %v4368 = vunpack.c.h.b16 %v3143
        %v4369 = vunpack.c.l.b16 %v3144
        %v4370 = vunpack.c.h.b16 %v3144
        %v4371 = vunpack.c.l.b16 %v3145
        %v4372 = vunpack.c.h.b16 %v3145
        %v4373 = vunpack.c.l.b16 %v3146
        %v4374 = vunpack.c.h.b16 %v3146
        %v4375 = vunpack.c.l.b16 %v3147
        %v4376 = vunpack.c.h.b16 %v3147
        %v4377 = vunpack.c.l.b16 %v3148
        %v4378 = vunpack.c.h.b16 %v3148
        %v4379 = vunpack.c.l.b16 %v3149
        %v4380 = vunpack.c.h.b16 %v3149
        %v4381 = vunpack.c.l.b16 %v3150
        %v4382 = vunpack.c.h.b16 %v3150
        %v4383 = vunpack.c.l.b16 %v3151
        %v4384 = vunpack.c.h.b16 %v3151
        %v4385 = vunpack.c.l.b16 %v3152
        %v4386 = vunpack.c.h.b16 %v3152
        %v4387 = vunpack.c.l.b16 %v3153
        %v4388 = vunpack.c.h.b16 %v3153
        %v4389 = vunpack.c.l.b16 %v3154
        %v4390 = vunpack.c.h.b16 %v3154
        %v4391 = vunpack.c.l.b16 %v3155
        %v4392 = vunpack.c.h.b16 %v3155
        %v4393 = vunpack.c.l.b16 %v3156
        %v4394 = vunpack.c.h.b16 %v3156
        %v4395 = vunpack.c.l.b16 %v3157
        %v4396 = vunpack.c.h.b16 %v3157
        %v4397 = vunpack.c.l.b16 %v3158
        %v4398 = vunpack.c.h.b16 %v3158
        %v4399 = vunpack.c.l.b16 %v3159
        %v4400 = vunpack.c.h.b16 %v3159
        %v4401 = vunpack.c.l.b16 %v3160
        %v4402 = vunpack.c.h.b16 %v3160
        %v4403 = vunpack.c.l.b16 %v3161
        %v4404 = vunpack.c.h.b16 %v3161
        %v4405 = vunpack.c.l.b16 %v3162
        %v4406 = vunpack.c.h.b16 %v3162
        %v4407 = vunpack.c.l.b16 %v3163
        %v4408 = vunpack.c.h.b16 %v3163
        %v4409 = vunpack.c.l.b16 %v3164
        %v4410 = vunpack.c.h.b16 %v3164
        %v4411 = vunpack.c.l.b16 %v3165
        %v4412 = vunpack.c.h.b16 %v3165
        %v4413 = vunpack.c.l.b16 %v3166
        %v4414 = vunpack.c.h.b16 %v3166
        %v4415 = vunpack.c.l.b16 %v3167
        %v4416 = vunpack.c.h.b16 %v3167
        %v4417 = vunpack.c.l.b16 %v3168
        %v4418 = vunpack.c.h.b16 %v3168
        %v4419 = vunpack.c.l.b16 %v3169
        %v4420 = vunpack.c.h.b16 %v3169
        %v4421 = vunpack.c.l.b16 %v3170
        %v4422 = vunpack.c.h.b16 %v3170
        %v4423 = vunpack.c.l.b16 %v3171
        %v4424 = vunpack.c.h.b16 %v3171
        %v4425 = vunpack.c.l.b16 %v3172
        %v4426 = vunpack.c.h.b16 %v3172
        %v4427 = vunpack.c.l.b16 %v3173
        %v4428 = vunpack.c.h.b16 %v3173
        %v4429 = vunpack.c.l.b16 %v3174
        %v4430 = vunpack.c.h.b16 %v3174
        %v4431 = vunpack.c.l.b16 %v3175
        %v4432 = vunpack.c.h.b16 %v3175
        %v4433 = vunpack.c.l.b16 %v3176
        %v4434 = vunpack.c.h.b16 %v3176
        %v4435 = vunpack.c.l.b16 %v3177
        %v4436 = vunpack.c.h.b16 %v3177
        %v4437 = vunpack.c.l.b16 %v3178
        %v4438 = vunpack.c.h.b16 %v3178
        %v4439 = vunpack.c.l.b16 %v3179
        %v4440 = vunpack.c.h.b16 %v3179
        %v4441 = vunpack.c.l.b16 %v3180
        %v4442 = vunpack.c.h.b16 %v3180
        %v4443 = vunpack.c.l.b16 %v3181
        %v4444 = vunpack.c.h.b16 %v3181
        %v4445 = vunpack.c.l.b16 %v3182
        %v4446 = vunpack.c.h.b16 %v3182
        %v4447 = vunpack.c.l.b16 %v3183
        %v4448 = vunpack.c.h.b16 %v3183
        %v4449 = vunpack.c.l.b16 %v3184
        %v4450 = vunpack.c.h.b16 %v3184
        %v4451 = vunpack.c.l.b16 %v3185
        %v4452 = vunpack.c.h.b16 %v3185
        %v4453 = vunpack.c.l.b16 %v3186
        %v4454 = vunpack.c.h.b16 %v3186
        %v4455 = vunpack.c.l.b16 %v3187
        %v4456 = vunpack.c.h.b16 %v3187
        %v4457 = vunpack.c.l.b16 %v3188
        %v4458 = vunpack.c.h.b16 %v3188
        %v4459 = vunpack.c.l.b16 %v3189
        %v4460 = vunpack.c.h.b16 %v3189
        %v4461 = vunpack.c.l.b16 %v3190
        %v4462 = vunpack.c.h.b16 %v3190
        %v4463 = vunpack.c.l.b16 %v3191
        %v4464 = vunpack.c.h.b16 %v3191
        %v4465 = vunpack.c.l.b16 %v3192
        %v4466 = vunpack.c.h.b16 %v3192
        %v4467 = vunpack.c.l.b16 %v3193
        %v4468 = vunpack.c.h.b16 %v3193
        %v4469 = vunpack.c.l.b16 %v3194
        %v4470 = vunpack.c.h.b16 %v3194
        %v4471 = vunpack.c.l.b16 %v3195
        %v4472 = vunpack.c.h.b16 %v3195
        %v4473 = vunpack.c.l.b16 %v3196
        %v4474 = vunpack.c.h.b16 %v3196
        %v4475 = vunpack.c.l.b16 %v3197
        %v4476 = vunpack.c.h.b16 %v3197
        %v4477 = vunpack.c.l.b16 %v3198
        %v4478 = vunpack.c.h.b16 %v3198
        %v4479 = vunpack.c.l.b16 %v3199
        %v4480 = vunpack.c.h.b16 %v3199
        %v4481 = vunpack.c.l.b16 %v3200
        %v4482 = vunpack.c.h.b16 %v3200
        %v4483 = vunpack.c.l.b16 %v3201
        %v4484 = vunpack.c.h.b16 %v3201
        %v4485 = vunpack.c.l.b16 %v3202
        %v4486 = vunpack.c.h.b16 %v3202
        %v4487 = vunpack.c.l.b16 %v3203
        %v4488 = vunpack.c.h.b16 %v3203
        %v4489 = vunpack.c.l.b16 %v3204
        %v4490 = vunpack.c.h.b16 %v3204
        %v4491 = vunpack.c.l.b16 %v3205
        %v4492 = vunpack.c.h.b16 %v3205
        %v4493 = vunpack.c.l.b16 %v3206
        %v4494 = vunpack.c.h.b16 %v3206
        %v4495 = vunpack.c.l.b16 %v3207
        %v4496 = vunpack.c.h.b16 %v3207
        %v4497 = vunpack.c.l.b16 %v3208
        %v4498 = vunpack.c.h.b16 %v3208
        %v4499 = vunpack.c.l.b16 %v3209
        %v4500 = vunpack.c.h.b16 %v3209
        %v4501 = vunpack.c.l.b16 %v3210
        %v4502 = vunpack.c.h.b16 %v3210
        %v4503 = vunpack.c.l.b16 %v3211
        %v4504 = vunpack.c.h.b16 %v3211
        %v4505 = vunpack.c.l.b16 %v3212
        %v4506 = vunpack.c.h.b16 %v3212
        %v4507 = vunpack.c.l.b16 %v3213
        %v4508 = vunpack.c.h.b16 %v3213
        %v4509 = vunpack.c.l.b16 %v3214
        %v4510 = vunpack.c.h.b16 %v3214
        %v4511 = vunpack.c.l.b16 %v3215
        %v4512 = vunpack.c.h.b16 %v3215
        %v4513 = vunpack.c.l.b16 %v3216
        %v4514 = vunpack.c.h.b16 %v3216
        %v4515 = vunpack.c.l.b16 %v3217
        %v4516 = vunpack.c.h.b16 %v3217
        %v4517 = vunpack.c.l.b16 %v3218
        %v4518 = vunpack.c.h.b16 %v3218
        %v4519 = vunpack.c.l.b16 %v3219
        %v4520 = vunpack.c.h.b16 %v3219
        %v4521 = vunpack.c.l.b16 %v3220
        %v4522 = vunpack.c.h.b16 %v3220
        %v4523 = vunpack.c.l.b16 %v3221
        %v4524 = vunpack.c.h.b16 %v3221
        %v4525 = vunpack.c.l.b16 %v3222
        %v4526 = vunpack.c.h.b16 %v3222
        %v4527 = vunpack.c.l.b16 %v3223
        %v4528 = vunpack.c.h.b16 %v3223
        %v4529 = vunpack.c.l.b16 %v3224
        %v4530 = vunpack.c.h.b16 %v3224
        %v4531 = vunpack.c.l.b16 %v3225
        %v4532 = vunpack.c.h.b16 %v3225
        %v4533 = vunpack.c.l.b16 %v3226
        %v4534 = vunpack.c.h.b16 %v3226
        %v4535 = vunpack.c.l.b16 %v3227
        %v4536 = vunpack.c.h.b16 %v3227
        %v4537 = vunpack.c.l.b16 %v3228
        %v4538 = vunpack.c.h.b16 %v3228
        %v4539 = vunpack.c.l.b16 %v3229
        %v4540 = vunpack.c.h.b16 %v3229
        %v4541 = vunpack.c.l.b16 %v3230
        %v4542 = vunpack.c.h.b16 %v3230
        %v4543 = vunpack.c.l.b16 %v3231
        %v4544 = vunpack.c.h.b16 %v3231
        %v4545 = vunpack.c.l.b16 %v3232
        %v4546 = vunpack.c.h.b16 %v3232
        %v4547 = vunpack.c.l.b16 %v3233
        %v4548 = vunpack.c.h.b16 %v3233
        %v4549 = vunpack.c.l.b16 %v3234
        %v4550 = vunpack.c.h.b16 %v3234
        %v4551 = vunpack.c.l.b16 %v3235
        %v4552 = vunpack.c.h.b16 %v3235
        %v4553 = vunpack.c.l.b16 %v3236
        %v4554 = vunpack.c.h.b16 %v3236
        %v4555 = vunpack.c.l.b16 %v3237
        %v4556 = vunpack.c.h.b16 %v3237
        %v4557 = vunpack.c.l.b16 %v3238
        %v4558 = vunpack.c.h.b16 %v3238
        %v4559 = vunpack.c.l.b16 %v3239
        %v4560 = vunpack.c.h.b16 %v3239
        %v4561 = vunpack.c.l.b16 %v3240
        %v4562 = vunpack.c.h.b16 %v3240
        %v4563 = vunpack.c.l.b16 %v3241
        %v4564 = vunpack.c.h.b16 %v3241
        %v4565 = vunpack.c.l.b16 %v3242
        %v4566 = vunpack.c.h.b16 %v3242
        %v4567 = vunpack.c.l.b16 %v3243
        %v4568 = vunpack.c.h.b16 %v3243
        %v4569 = vunpack.c.l.b16 %v3244
        %v4570 = vunpack.c.h.b16 %v3244
        %v4571 = vunpack.c.l.b16 %v3245
        %v4572 = vunpack.c.h.b16 %v3245
        %v4573 = vunpack.c.l.b16 %v3246
        %v4574 = vunpack.c.h.b16 %v3246
        %v4575 = vunpack.c.l.b16 %v3247
        %v4576 = vunpack.c.h.b16 %v3247
        %v4577 = vunpack.c.l.b16 %v3248
        %v4578 = vunpack.c.h.b16 %v3248
        %v4579 = vunpack.c.l.b16 %v3249
        %v4580 = vunpack.c.h.b16 %v3249
        %v4581 = vunpack.c.l.b16 %v3250
        %v4582 = vunpack.c.h.b16 %v3250
        %v4583 = vunpack.c.l.b16 %v3251
        %v4584 = vunpack.c.h.b16 %v3251
        %v4585 = vunpack.c.l.b16 %v3252
        %v4586 = vunpack.c.h.b16 %v3252
        %v4587 = vunpack.c.l.b16 %v3253
        %v4588 = vunpack.c.h.b16 %v3253
        %v4589 = vunpack.c.l.b16 %v3254
        %v4590 = vunpack.c.h.b16 %v3254
        %v4591 = vunpack.c.l.b16 %v3255
        %v4592 = vunpack.c.h.b16 %v3255
        %v4593 = vunpack.c.l.b16 %v3256
        %v4594 = vunpack.c.h.b16 %v3256
        %v4595 = vunpack.c.l.b16 %v3257
        %v4596 = vunpack.c.h.b16 %v3257
        %v4597 = vunpack.c.l.b16 %v3258
        %v4598 = vunpack.c.h.b16 %v3258
        %v4599 = vunpack.c.l.b16 %v3259
        %v4600 = vunpack.c.h.b16 %v3259
        %v4601 = vunpack.c.l.b16 %v3260
        %v4602 = vunpack.c.h.b16 %v3260
        %v4603 = vunpack.c.l.b16 %v3261
        %v4604 = vunpack.c.h.b16 %v3261
        %v4605 = vunpack.c.l.b16 %v3262
        %v4606 = vunpack.c.h.b16 %v3262
        %v4607 = vunpack.c.l.b16 %v3263
        %v4608 = vunpack.c.h.b16 %v3263
        %v4609 = vunpack.c.l.b16 %v3264
        %v4610 = vunpack.c.h.b16 %v3264
        %v4611 = vunpack.c.l.b16 %v3265
        %v4612 = vunpack.c.h.b16 %v3265
        %v4613 = vunpack.c.l.b16 %v3266
        %v4614 = vunpack.c.h.b16 %v3266
        %v4615 = vunpack.c.l.b16 %v3267
        %v4616 = vunpack.c.h.b16 %v3267
        %v4617 = vunpack.c.l.b16 %v3268
        %v4618 = vunpack.c.h.b16 %v3268
        %v4619 = vunpack.c.l.b16 %v3269
        %v4620 = vunpack.c.h.b16 %v3269
        %v4621 = vunpack.c.l.b16 %v3270
        %v4622 = vunpack.c.h.b16 %v3270
        %v4623 = vunpack.c.l.b16 %v3271
        %v4624 = vunpack.c.h.b16 %v3271
        %v4625 = vunpack.c.l.b16 %v3272
        %v4626 = vunpack.c.h.b16 %v3272
        %v4627 = vunpack.c.l.b16 %v3273
        %v4628 = vunpack.c.h.b16 %v3273
        %v4629 = vunpack.c.l.b16 %v3274
        %v4630 = vunpack.c.h.b16 %v3274
        %v4631 = vunpack.c.l.b16 %v3275
        %v4632 = vunpack.c.h.b16 %v3275
        %v4633 = vunpack.c.l.b16 %v3276
        %v4634 = vunpack.c.h.b16 %v3276
        %v4635 = vunpack.c.l.b16 %v3277
        %v4636 = vunpack.c.h.b16 %v3277
        %v4637 = vunpack.c.l.b16 %v3278
        %v4638 = vunpack.c.h.b16 %v3278
        %v4639 = vunpack.c.l.b16 %v3279
        %v4640 = vunpack.c.h.b16 %v3279
        %v4641 = vunpack.c.l.b16 %v3280
        %v4642 = vunpack.c.h.b16 %v3280
        %v4643 = vunpack.c.l.b16 %v3281
        %v4644 = vunpack.c.h.b16 %v3281
        %v4645 = vunpack.c.l.b16 %v3282
        %v4646 = vunpack.c.h.b16 %v3282
        %v4647 = vunpack.c.l.b16 %v3283
        %v4648 = vunpack.c.h.b16 %v3283
        %v4649 = vunpack.c.l.b16 %v3284
        %v4650 = vunpack.c.h.b16 %v3284
        %v4651 = vunpack.c.l.b16 %v3285
        %v4652 = vunpack.c.h.b16 %v3285
        %v4653 = vunpack.c.l.b16 %v3286
        %v4654 = vunpack.c.h.b16 %v3286
        %v4655 = vunpack.c.l.b16 %v3287
        %v4656 = vunpack.c.h.b16 %v3287
        %v4657 = vunpack.c.l.b16 %v3288
        %v4658 = vunpack.c.h.b16 %v3288
        %v4659 = vunpack.c.l.b16 %v3289
        %v4660 = vunpack.c.h.b16 %v3289
        %v4661 = vunpack.c.l.b16 %v3290
        %v4662 = vunpack.c.h.b16 %v3290
        %v4663 = vunpack.c.l.b16 %v3291
        %v4664 = vunpack.c.h.b16 %v3291
        %v4665 = vunpack.c.l.b16 %v3292
        %v4666 = vunpack.c.h.b16 %v3292
        %v4667 = vunpack.c.l.b16 %v3293
        %v4668 = vunpack.c.h.b16 %v3293
        %v4669 = vunpack.c.l.b16 %v3294
        %v4670 = vunpack.c.h.b16 %v3294
        %v4671 = vunpack.c.l.b16 %v3295
        %v4672 = vunpack.c.h.b16 %v3295
        %v4673 = vunpack.c.l.b16 %v3296
        %v4674 = vunpack.c.h.b16 %v3296
        %v4675 = vunpack.c.l.b16 %v3297
        %v4676 = vunpack.c.h.b16 %v3297
        %v4677 = vunpack.c.l.b16 %v3298
        %v4678 = vunpack.c.h.b16 %v3298
        %v4679 = vunpack.c.l.b16 %v3299
        %v4680 = vunpack.c.h.b16 %v3299
        %v4681 = vunpack.c.l.b16 %v3300
        %v4682 = vunpack.c.h.b16 %v3300
        %v4683 = vunpack.c.l.b16 %v3301
        %v4684 = vunpack.c.h.b16 %v3301
        %v4685 = vunpack.c.l.b16 %v3302
        %v4686 = vunpack.c.h.b16 %v3302
        %v4687 = vunpack.c.l.b16 %v3303
        %v4688 = vunpack.c.h.b16 %v3303
        %v4689 = vunpack.c.l.b16 %v3304
        %v4690 = vunpack.c.h.b16 %v3304
        %v4691 = vunpack.c.l.b16 %v3305
        %v4692 = vunpack.c.h.b16 %v3305
        %v4693 = vunpack.c.l.b16 %v3306
        %v4694 = vunpack.c.h.b16 %v3306
        %v4695 = vunpack.c.l.b16 %v3307
        %v4696 = vunpack.c.h.b16 %v3307
        %v4697 = vunpack.c.l.b16 %v3308
        %v4698 = vunpack.c.h.b16 %v3308
        %v4699 = vunpack.c.l.b16 %v3309
        %v4700 = vunpack.c.h.b16 %v3309
        %v4701 = vunpack.c.l.b16 %v3310
        %v4702 = vunpack.c.h.b16 %v3310
        %v4703 = vunpack.c.l.b16 %v3311
        %v4704 = vunpack.c.h.b16 %v3311
        %v4705 = vunpack.c.l.b16 %v3312
        %v4706 = vunpack.c.h.b16 %v3312
        %v4707 = vunpack.c.l.b16 %v3313
        %v4708 = vunpack.c.h.b16 %v3313
        %v4709 = vunpack.c.l.b16 %v3314
        %v4710 = vunpack.c.h.b16 %v3314
        %v4711 = vunpack.c.l.b16 %v3315
        %v4712 = vunpack.c.h.b16 %v3315
        %v4713 = vunpack.c.l.b16 %v3316
        %v4714 = vunpack.c.h.b16 %v3316
        %v4715 = vunpack.c.l.b16 %v3317
        %v4716 = vunpack.c.h.b16 %v3317
        %v4717 = vunpack.c.l.b16 %v3318
        %v4718 = vunpack.c.h.b16 %v3318
        %v4719 = vunpack.c.l.b16 %v3319
        %v4720 = vunpack.c.h.b16 %v3319
        %v4721 = vunpack.c.l.b16 %v3320
        %v4722 = vunpack.c.h.b16 %v3320
        %v4723 = vunpack.c.l.b16 %v3321
        %v4724 = vunpack.c.h.b16 %v3321
        %v4725 = vunpack.c.l.b16 %v3322
        %v4726 = vunpack.c.h.b16 %v3322
        %v4727 = vunpack.c.l.b16 %v3323
        %v4728 = vunpack.c.h.b16 %v3323
        %v4729 = vunpack.c.l.b16 %v3324
        %v4730 = vunpack.c.h.b16 %v3324
        %v4731 = vunpack.c.l.b16 %v3325
        %v4732 = vunpack.c.h.b16 %v3325
        %v4733 = vunpack.c.l.b16 %v3326
        %v4734 = vunpack.c.h.b16 %v3326
        %v4735 = vunpack.c.l.b16 %v3327
        %v4736 = vunpack.c.h.b16 %v3327
        %v4737 = vunpack.c.l.b16 %v3328
        %v4738 = vunpack.c.h.b16 %v3328
        %v4739 = vunpack.c.l.b16 %v3329
        %v4740 = vunpack.c.h.b16 %v3329
        %v4741 = vunpack.c.l.b16 %v3330
        %v4742 = vunpack.c.h.b16 %v3330
        %v4743 = vunpack.c.l.b16 %v3331
        %v4744 = vunpack.c.h.b16 %v3331
        %v4745 = vunpack.c.l.b16 %v3332
        %v4746 = vunpack.c.h.b16 %v3332
        %v4747 = vunpack.c.l.b16 %v3333
        %v4748 = vunpack.c.h.b16 %v3333
        %v4749 = vunpack.c.l.b16 %v3334
        %v4750 = vunpack.c.h.b16 %v3334
        %v4751 = vunpack.c.l.b16 %v3335
        %v4752 = vunpack.c.h.b16 %v3335
        %v4753 = vunpack.c.l.b16 %v3336
        %v4754 = vunpack.c.h.b16 %v3336
        %v4755 = vunpack.c.l.b16 %v3337
        %v4756 = vunpack.c.h.b16 %v3337
        %v4757 = vunpack.c.l.b16 %v3338
        %v4758 = vunpack.c.h.b16 %v3338
        %v4759 = vunpack.c.l.b16 %v3339
        %v4760 = vunpack.c.h.b16 %v3339
        %v4761 = vunpack.c.l.b16 %v3340
        %v4762 = vunpack.c.h.b16 %v3340
        %v4763 = vunpack.c.l.b16 %v3341
        %v4764 = vunpack.c.h.b16 %v3341
        %v4765 = vunpack.c.l.b16 %v3342
        %v4766 = vunpack.c.h.b16 %v3342
        %v4767 = vunpack.c.l.b16 %v3343
        %v4768 = vunpack.c.h.b16 %v3343
        %v4769 = vunpack.c.l.b16 %v3344
        %v4770 = vunpack.c.h.b16 %v3344
        %v4771 = vunpack.c.l.b16 %v3345
        %v4772 = vunpack.c.h.b16 %v3345
        %v4773 = vunpack.c.l.b16 %v3346
        %v4774 = vunpack.c.h.b16 %v3346
        %v4775 = vunpack.c.l.b16 %v3347
        %v4776 = vunpack.c.h.b16 %v3347
        %v4777 = vunpack.c.l.b16 %v3348
        %v4778 = vunpack.c.h.b16 %v3348
        %v4779 = vunpack.c.l.b16 %v3349
        %v4780 = vunpack.c.h.b16 %v3349
        %v4781 = vunpack.c.l.b16 %v3350
        %v4782 = vunpack.c.h.b16 %v3350
        %v4783 = vunpack.c.l.b16 %v3351
        %v4784 = vunpack.c.h.b16 %v3351
        %v4785 = vunpack.c.l.b16 %v3352
        %v4786 = vunpack.c.h.b16 %v3352
        %v4787 = vunpack.c.l.b16 %v3353
        %v4788 = vunpack.c.h.b16 %v3353
        %v4789 = vunpack.c.l.b16 %v3354
        %v4790 = vunpack.c.h.b16 %v3354
        %v4791 = vunpack.c.l.b16 %v3355
        %v4792 = vunpack.c.h.b16 %v3355
        %v4793 = vunpack.c.l.b16 %v3356
        %v4794 = vunpack.c.h.b16 %v3356
        %v4795 = vunpack.c.l.b16 %v3357
        %v4796 = vunpack.c.h.b16 %v3357
        %v4797 = vunpack.c.l.b16 %v3358
        %v4798 = vunpack.c.h.b16 %v3358
        %v4799 = vunpack.c.l.b16 %v3359
        %v4800 = vunpack.c.h.b16 %v3359
        %v4801 = vunpack.c.l.b16 %v3360
        %v4802 = vunpack.c.h.b16 %v3360
        %v4803 = vunpack.c.l.b16 %v3361
        %v4804 = vunpack.c.h.b16 %v3361
        %v4805 = vunpack.c.l.b16 %v3362
        %v4806 = vunpack.c.h.b16 %v3362
        %v4807 = vunpack.c.l.b16 %v3363
        %v4808 = vunpack.c.h.b16 %v3363
        %v4809 = vunpack.c.l.b16 %v3364
        %v4810 = vunpack.c.h.b16 %v3364
        %v4811 = vunpack.c.l.b16 %v3365
        %v4812 = vunpack.c.h.b16 %v3365
        %v4813 = vunpack.c.l.b16 %v3366
        %v4814 = vunpack.c.h.b16 %v3366
        %v4815 = vunpack.c.l.b16 %v3367
        %v4816 = vunpack.c.h.b16 %v3367
        %v4817 = vunpack.c.l.b16 %v3368
        %v4818 = vunpack.c.h.b16 %v3368
        %v4819 = vunpack.c.l.b16 %v3369
        %v4820 = vunpack.c.h.b16 %v3369
        %v4821 = vunpack.c.l.b16 %v3370
        %v4822 = vunpack.c.h.b16 %v3370
        %v4823 = vunpack.c.l.b16 %v3371
        %v4824 = vunpack.c.h.b16 %v3371
        %v4825 = vunpack.c.l.b16 %v3372
        %v4826 = vunpack.c.h.b16 %v3372
        %v4827 = vunpack.c.l.b16 %v3373
        %v4828 = vunpack.c.h.b16 %v3373
        %v4829 = vunpack.c.l.b16 %v3374
        %v4830 = vunpack.c.h.b16 %v3374
        %v4831 = vunpack.c.l.b16 %v3375
        %v4832 = vunpack.c.h.b16 %v3375
        %v4833 = vunpack.c.l.b16 %v3376
        %v4834 = vunpack.c.h.b16 %v3376
        %v4835 = vunpack.c.l.b16 %v3377
        %v4836 = vunpack.c.h.b16 %v3377
        %v4837 = vunpack.c.l.b16 %v3378
        %v4838 = vunpack.c.h.b16 %v3378
        %v4839 = vunpack.c.l.b16 %v3379
        %v4840 = vunpack.c.h.b16 %v3379
        %v4841 = vunpack.c.l.b16 %v3380
        %v4842 = vunpack.c.h.b16 %v3380
        %v4843 = vunpack.c.l.b16 %v3381
        %v4844 = vunpack.c.h.b16 %v3381
        %v4845 = vunpack.c.l.b16 %v3382
        %v4846 = vunpack.c.h.b16 %v3382
        %v4847 = vunpack.c.l.b16 %v3383
        %v4848 = vunpack.c.h.b16 %v3383
        %v4849 = vunpack.c.l.b16 %v3384
        %v4850 = vunpack.c.h.b16 %v3384
        %v4851 = vunpack.c.l.b16 %v3385
        %v4852 = vunpack.c.h.b16 %v3385
        %v4853 = vunpack.c.l.b16 %v3386
        %v4854 = vunpack.c.h.b16 %v3386
        %v4855 = vunpack.c.l.b16 %v3387
        %v4856 = vunpack.c.h.b16 %v3387
        %v4857 = vunpack.c.l.b16 %v3388
        %v4858 = vunpack.c.h.b16 %v3388
        %v4859 = vunpack.c.l.b16 %v3389
        %v4860 = vunpack.c.h.b16 %v3389
        %v4861 = vunpack.c.l.b16 %v3390
        %v4862 = vunpack.c.h.b16 %v3390
        %v4863 = vunpack.c.l.b16 %v3391
        %v4864 = vunpack.c.h.b16 %v3391
        %v4865 = vunpack.c.l.b16 %v3392
        %v4866 = vunpack.c.h.b16 %v3392
        %v4867 = vunpack.c.l.b16 %v3393
        %v4868 = vunpack.c.h.b16 %v3393
        %v4869 = vunpack.c.l.b16 %v3394
        %v4870 = vunpack.c.h.b16 %v3394
        %v4871 = vunpack.c.l.b16 %v3395
        %v4872 = vunpack.c.h.b16 %v3395
        %v4873 = vunpack.c.l.b16 %v3396
        %v4874 = vunpack.c.h.b16 %v3396
        %v4875 = vunpack.c.l.b16 %v3397
        %v4876 = vunpack.c.h.b16 %v3397
        %v4877 = vunpack.c.l.b16 %v3398
        %v4878 = vunpack.c.h.b16 %v3398
        %v4879 = vunpack.c.l.b16 %v3399
        %v4880 = vunpack.c.h.b16 %v3399
        %v4881 = vunpack.c.l.b16 %v3400
        %v4882 = vunpack.c.h.b16 %v3400
        %v4883 = vunpack.c.l.b16 %v3401
        %v4884 = vunpack.c.h.b16 %v3401
        %v4885 = vunpack.c.l.b16 %v3402
        %v4886 = vunpack.c.h.b16 %v3402
        %v4887 = vunpack.c.l.b16 %v3403
        %v4888 = vunpack.c.h.b16 %v3403
        %v4889 = vunpack.c.l.b16 %v3404
        %v4890 = vunpack.c.h.b16 %v3404
        %v4891 = vunpack.c.l.b16 %v3405
        %v4892 = vunpack.c.h.b16 %v3405
        %v4893 = vunpack.c.l.b16 %v3406
        %v4894 = vunpack.c.h.b16 %v3406
        %v4895 = vunpack.c.l.b16 %v3407
        %v4896 = vunpack.c.h.b16 %v3407
        %v4897 = vunpack.c.l.b16 %v3408
        %v4898 = vunpack.c.h.b16 %v3408
        %v4899 = vunpack.c.l.b16 %v3409
        %v4900 = vunpack.c.h.b16 %v3409
        %v4901 = vunpack.c.l.b16 %v3410
        %v4902 = vunpack.c.h.b16 %v3410
        %v4903 = vunpack.c.l.b16 %v3411
        %v4904 = vunpack.c.h.b16 %v3411
        %v4905 = vunpack.c.l.b16 %v3412
        %v4906 = vunpack.c.h.b16 %v3412
        %v4907 = vunpack.c.l.b16 %v3413
        %v4908 = vunpack.c.h.b16 %v3413
        %v4909 = vunpack.c.l.b16 %v3414
        %v4910 = vunpack.c.h.b16 %v3414
        %v4911 = vunpack.c.l.b16 %v3415
        %v4912 = vunpack.c.h.b16 %v3415
        %v4913 = vunpack.c.l.b16 %v3416
        %v4914 = vunpack.c.h.b16 %v3416
        %v4915 = vunpack.c.l.b16 %v3417
        %v4916 = vunpack.c.h.b16 %v3417
        %v4917 = vunpack.c.l.b16 %v3418
        %v4918 = vunpack.c.h.b16 %v3418
        %v4919 = vunpack.c.l.b16 %v3419
        %v4920 = vunpack.c.h.b16 %v3419
        %v4921 = vunpack.c.l.b16 %v3420
        %v4922 = vunpack.c.h.b16 %v3420
        %v4923 = vunpack.c.l.b16 %v3421
        %v4924 = vunpack.c.h.b16 %v3421
        %v4925 = vunpack.c.l.b16 %v3422
        %v4926 = vunpack.c.h.b16 %v3422
        %v4927 = vunpack.c.l.b16 %v3423
        %v4928 = vunpack.c.h.b16 %v3423
        %v4929 = vunpack.c.l.b16 %v3424
        %v4930 = vunpack.c.h.b16 %v3424
        %v4931 = vunpack.c.l.b16 %v3425
        %v4932 = vunpack.c.h.b16 %v3425
        %v4933 = vunpack.c.l.b16 %v3426
        %v4934 = vunpack.c.h.b16 %v3426
        %v4935 = vunpack.c.l.b16 %v3427
        %v4936 = vunpack.c.h.b16 %v3427
        %v4937 = vunpack.c.l.b16 %v3428
        %v4938 = vunpack.c.h.b16 %v3428
        %v4939 = vunpack.c.l.b16 %v3429
        %v4940 = vunpack.c.h.b16 %v3429
        %v4941 = vunpack.c.l.b16 %v3430
        %v4942 = vunpack.c.h.b16 %v3430
        %v4943 = vunpack.c.l.b16 %v3431
        %v4944 = vunpack.c.h.b16 %v3431
        %v4945 = vunpack.c.l.b16 %v3432
        %v4946 = vunpack.c.h.b16 %v3432
        %v4947 = vunpack.c.l.b16 %v3433
        %v4948 = vunpack.c.h.b16 %v3433
        %v4949 = vunpack.c.l.b16 %v3434
        %v4950 = vunpack.c.h.b16 %v3434
        %v4951 = vunpack.c.l.b16 %v3435
        %v4952 = vunpack.c.h.b16 %v3435
        %v4953 = vunpack.c.l.b16 %v3436
        %v4954 = vunpack.c.h.b16 %v3436
        %v4955 = vunpack.c.l.b16 %v3437
        %v4956 = vunpack.c.h.b16 %v3437
        %v4957 = vunpack.c.l.b16 %v3438
        %v4958 = vunpack.c.h.b16 %v3438
        %v4959 = vunpack.c.l.b16 %v3439
        %v4960 = vunpack.c.h.b16 %v3439
        %v4961 = vunpack.c.l.b16 %v3440
        %v4962 = vunpack.c.h.b16 %v3440
        %v4963 = vunpack.c.l.b16 %v3441
        %v4964 = vunpack.c.h.b16 %v3441
        %v4965 = vunpack.c.l.b16 %v3442
        %v4966 = vunpack.c.h.b16 %v3442
        %v4967 = vunpack.c.l.b16 %v3443
        %v4968 = vunpack.c.h.b16 %v3443
        %v4969 = vunpack.c.l.b16 %v3444
        %v4970 = vunpack.c.h.b16 %v3444
        %v4971 = vunpack.c.l.b16 %v3445
        %v4972 = vunpack.c.h.b16 %v3445
        %v4973 = vunpack.c.l.b16 %v3446
        %v4974 = vunpack.c.h.b16 %v3446
        %v4975 = vunpack.c.l.b16 %v3447
        %v4976 = vunpack.c.h.b16 %v3447
        %v4977 = vunpack.c.l.b16 %v3448
        %v4978 = vunpack.c.h.b16 %v3448
        %v4979 = vunpack.c.l.b16 %v3449
        %v4980 = vunpack.c.h.b16 %v3449
        %v4981 = vunpack.c.l.b16 %v3450
        %v4982 = vunpack.c.h.b16 %v3450
        %v4983 = vunpack.c.l.b16 %v3451
        %v4984 = vunpack.c.h.b16 %v3451
        %v4985 = vunpack.c.l.b16 %v3452
        %v4986 = vunpack.c.h.b16 %v3452
        %v4987 = vunpack.c.l.b16 %v3453
        %v4988 = vunpack.c.h.b16 %v3453
        %v4989 = vunpack.c.l.b16 %v3454
        %v4990 = vunpack.c.h.b16 %v3454
        %v4991 = vpack.c.b16 %v3975, %v3967
        %v4992 = vpack.c.b16 %v3976, %v3968
        %v4993 = vpack.c.b16 %v3977, %v3969
        %v4994 = vpack.c.b16 %v3978, %v3970
        %v4995 = vpack.c.b16 %v3979, %v3971
        %v4996 = vpack.c.b16 %v3980, %v3972
        %v4997 = vpack.c.b16 %v3981, %v3973
        %v4998 = vpack.c.b16 %v3982, %v3974
        %v4999 = vpack.c.b16 %v3991, %v3983
        %v5000 = vpack.c.b16 %v3992, %v3984
        %v5001 = vpack.c.b16 %v3993, %v3985
        %v5002 = vpack.c.b16 %v3994, %v3986
        %v5003 = vpack.c.b16 %v3995, %v3987
        %v5004 = vpack.c.b16 %v3996, %v3988
        %v5005 = vpack.c.b16 %v3997, %v3989
        %v5006 = vpack.c.b16 %v3998, %v3990
        %v5007 = vpack.c.b16 %v4007, %v3999
        %v5008 = vpack.c.b16 %v4008, %v4000
        %v5009 = vpack.c.b16 %v4009, %v4001
        %v5010 = vpack.c.b16 %v4010, %v4002
        %v5011 = vpack.c.b16 %v4011, %v4003
        %v5012 = vpack.c.b16 %v4012, %v4004
        %v5013 = vpack.c.b16 %v4013, %v4005
        %v5014 = vpack.c.b16 %v4014, %v4006
        %v5015 = vpack.c.b16 %v4023, %v4015
        %v5016 = vpack.c.b16 %v4024, %v4016
        %v5017 = vpack.c.b16 %v4025, %v4017
        %v5018 = vpack.c.b16 %v4026, %v4018
        %v5019 = vpack.c.b16 %v4027, %v4019
        %v5020 = vpack.c.b16 %v4028, %v4020
        %v5021 = vpack.c.b16 %v4029, %v4021
        %v5022 = vpack.c.b16 %v4030, %v4022
        %v5023 = vpack.c.b16 %v4039, %v4031
        %v5024 = vpack.c.b16 %v4040, %v4032
        %v5025 = vpack.c.b16 %v4041, %v4033
        %v5026 = vpack.c.b16 %v4042, %v4034
        %v5027 = vpack.c.b16 %v4043, %v4035
        %v5028 = vpack.c.b16 %v4044, %v4036
        %v5029 = vpack.c.b16 %v4045, %v4037
        %v5030 = vpack.c.b16 %v4046, %v4038
        %v5031 = vpack.c.b16 %v4055, %v4047
        %v5032 = vpack.c.b16 %v4056, %v4048
        %v5033 = vpack.c.b16 %v4057, %v4049
        %v5034 = vpack.c.b16 %v4058, %v4050
        %v5035 = vpack.c.b16 %v4059, %v4051
        %v5036 = vpack.c.b16 %v4060, %v4052
        %v5037 = vpack.c.b16 %v4061, %v4053
        %v5038 = vpack.c.b16 %v4062, %v4054
        %v5039 = vpack.c.b16 %v4071, %v4063
        %v5040 = vpack.c.b16 %v4072, %v4064
        %v5041 = vpack.c.b16 %v4073, %v4065
        %v5042 = vpack.c.b16 %v4074, %v4066
        %v5043 = vpack.c.b16 %v4075, %v4067
        %v5044 = vpack.c.b16 %v4076, %v4068
        %v5045 = vpack.c.b16 %v4077, %v4069
        %v5046 = vpack.c.b16 %v4078, %v4070
        %v5047 = vpack.c.b16 %v4087, %v4079
        %v5048 = vpack.c.b16 %v4088, %v4080
        %v5049 = vpack.c.b16 %v4089, %v4081
        %v5050 = vpack.c.b16 %v4090, %v4082
        %v5051 = vpack.c.b16 %v4091, %v4083
        %v5052 = vpack.c.b16 %v4092, %v4084
        %v5053 = vpack.c.b16 %v4093, %v4085
        %v5054 = vpack.c.b16 %v4094, %v4086
        %v5055 = vpack.c.b16 %v4103, %v4095
        %v5056 = vpack.c.b16 %v4104, %v4096
        %v5057 = vpack.c.b16 %v4105, %v4097
        %v5058 = vpack.c.b16 %v4106, %v4098
        %v5059 = vpack.c.b16 %v4107, %v4099
        %v5060 = vpack.c.b16 %v4108, %v4100
        %v5061 = vpack.c.b16 %v4109, %v4101
        %v5062 = vpack.c.b16 %v4110, %v4102
        %v5063 = vpack.c.b16 %v4119, %v4111
        %v5064 = vpack.c.b16 %v4120, %v4112
        %v5065 = vpack.c.b16 %v4121, %v4113
        %v5066 = vpack.c.b16 %v4122, %v4114
        %v5067 = vpack.c.b16 %v4123, %v4115
        %v5068 = vpack.c.b16 %v4124, %v4116
        %v5069 = vpack.c.b16 %v4125, %v4117
        %v5070 = vpack.c.b16 %v4126, %v4118
        %v5071 = vpack.c.b16 %v4135, %v4127
        %v5072 = vpack.c.b16 %v4136, %v4128
        %v5073 = vpack.c.b16 %v4137, %v4129
        %v5074 = vpack.c.b16 %v4138, %v4130
        %v5075 = vpack.c.b16 %v4139, %v4131
        %v5076 = vpack.c.b16 %v4140, %v4132
        %v5077 = vpack.c.b16 %v4141, %v4133
        %v5078 = vpack.c.b16 %v4142, %v4134
        %v5079 = vpack.c.b16 %v4151, %v4143
        %v5080 = vpack.c.b16 %v4152, %v4144
        %v5081 = vpack.c.b16 %v4153, %v4145
        %v5082 = vpack.c.b16 %v4154, %v4146
        %v5083 = vpack.c.b16 %v4155, %v4147
        %v5084 = vpack.c.b16 %v4156, %v4148
        %v5085 = vpack.c.b16 %v4157, %v4149
        %v5086 = vpack.c.b16 %v4158, %v4150
        %v5087 = vpack.c.b16 %v4167, %v4159
        %v5088 = vpack.c.b16 %v4168, %v4160
        %v5089 = vpack.c.b16 %v4169, %v4161
        %v5090 = vpack.c.b16 %v4170, %v4162
        %v5091 = vpack.c.b16 %v4171, %v4163
        %v5092 = vpack.c.b16 %v4172, %v4164
        %v5093 = vpack.c.b16 %v4173, %v4165
        %v5094 = vpack.c.b16 %v4174, %v4166
        %v5095 = vpack.c.b16 %v4183, %v4175
        %v5096 = vpack.c.b16 %v4184, %v4176
        %v5097 = vpack.c.b16 %v4185, %v4177
        %v5098 = vpack.c.b16 %v4186, %v4178
        %v5099 = vpack.c.b16 %v4187, %v4179
        %v5100 = vpack.c.b16 %v4188, %v4180
        %v5101 = vpack.c.b16 %v4189, %v4181
        %v5102 = vpack.c.b16 %v4190, %v4182
        %v5103 = vpack.c.b16 %v4199, %v4191
        %v5104 = vpack.c.b16 %v4200, %v4192
        %v5105 = vpack.c.b16 %v4201, %v4193
        %v5106 = vpack.c.b16 %v4202, %v4194
        %v5107 = vpack.c.b16 %v4203, %v4195
        %v5108 = vpack.c.b16 %v4204, %v4196
        %v5109 = vpack.c.b16 %v4205, %v4197
        %v5110 = vpack.c.b16 %v4206, %v4198
        %v5111 = vpack.c.b16 %v4215, %v4207
        %v5112 = vpack.c.b16 %v4216, %v4208
        %v5113 = vpack.c.b16 %v4217, %v4209
        %v5114 = vpack.c.b16 %v4218, %v4210
        %v5115 = vpack.c.b16 %v4219, %v4211
        %v5116 = vpack.c.b16 %v4220, %v4212
        %v5117 = vpack.c.b16 %v4221, %v4213
        %v5118 = vpack.c.b16 %v4222, %v4214
        %v5119 = vpack.c.b16 %v4231, %v4223
        %v5120 = vpack.c.b16 %v4232, %v4224
        %v5121 = vpack.c.b16 %v4233, %v4225
        %v5122 = vpack.c.b16 %v4234, %v4226
        %v5123 = vpack.c.b16 %v4235, %v4227
        %v5124 = vpack.c.b16 %v4236, %v4228
        %v5125 = vpack.c.b16 %v4237, %v4229
        %v5126 = vpack.c.b16 %v4238, %v4230
        %v5127 = vpack.c.b16 %v4247, %v4239
        %v5128 = vpack.c.b16 %v4248, %v4240
        %v5129 = vpack.c.b16 %v4249, %v4241
        %v5130 = vpack.c.b16 %v4250, %v4242
        %v5131 = vpack.c.b16 %v4251, %v4243
        %v5132 = vpack.c.b16 %v4252, %v4244
        %v5133 = vpack.c.b16 %v4253, %v4245
        %v5134 = vpack.c.b16 %v4254, %v4246
        %v5135 = vpack.c.b16 %v4263, %v4255
        %v5136 = vpack.c.b16 %v4264, %v4256
        %v5137 = vpack.c.b16 %v4265, %v4257
        %v5138 = vpack.c.b16 %v4266, %v4258
        %v5139 = vpack.c.b16 %v4267, %v4259
        %v5140 = vpack.c.b16 %v4268, %v4260
        %v5141 = vpack.c.b16 %v4269, %v4261
        %v5142 = vpack.c.b16 %v4270, %v4262
        %v5143 = vpack.c.b16 %v4279, %v4271
        %v5144 = vpack.c.b16 %v4280, %v4272
        %v5145 = vpack.c.b16 %v4281, %v4273
        %v5146 = vpack.c.b16 %v4282, %v4274
        %v5147 = vpack.c.b16 %v4283, %v4275
        %v5148 = vpack.c.b16 %v4284, %v4276
        %v5149 = vpack.c.b16 %v4285, %v4277
        %v5150 = vpack.c.b16 %v4286, %v4278
        %v5151 = vpack.c.b16 %v4295, %v4287
        %v5152 = vpack.c.b16 %v4296, %v4288
        %v5153 = vpack.c.b16 %v4297, %v4289
        %v5154 = vpack.c.b16 %v4298, %v4290
        %v5155 = vpack.c.b16 %v4299, %v4291
        %v5156 = vpack.c.b16 %v4300, %v4292
        %v5157 = vpack.c.b16 %v4301, %v4293
        %v5158 = vpack.c.b16 %v4302, %v4294
        %v5159 = vpack.c.b16 %v4311, %v4303
        %v5160 = vpack.c.b16 %v4312, %v4304
        %v5161 = vpack.c.b16 %v4313, %v4305
        %v5162 = vpack.c.b16 %v4314, %v4306
        %v5163 = vpack.c.b16 %v4315, %v4307
        %v5164 = vpack.c.b16 %v4316, %v4308
        %v5165 = vpack.c.b16 %v4317, %v4309
        %v5166 = vpack.c.b16 %v4318, %v4310
        %v5167 = vpack.c.b16 %v4327, %v4319
        %v5168 = vpack.c.b16 %v4328, %v4320
        %v5169 = vpack.c.b16 %v4329, %v4321
        %v5170 = vpack.c.b16 %v4330, %v4322
        %v5171 = vpack.c.b16 %v4331, %v4323
        %v5172 = vpack.c.b16 %v4332, %v4324
        %v5173 = vpack.c.b16 %v4333, %v4325
        %v5174 = vpack.c.b16 %v4334, %v4326
        %v5175 = vpack.c.b16 %v4343, %v4335
        %v5176 = vpack.c.b16 %v4344, %v4336
        %v5177 = vpack.c.b16 %v4345, %v4337
        %v5178 = vpack.c.b16 %v4346, %v4338
        %v5179 = vpack.c.b16 %v4347, %v4339
        %v5180 = vpack.c.b16 %v4348, %v4340
        %v5181 = vpack.c.b16 %v4349, %v4341
        %v5182 = vpack.c.b16 %v4350, %v4342
        %v5183 = vpack.c.b16 %v4359, %v4351
        %v5184 = vpack.c.b16 %v4360, %v4352
        %v5185 = vpack.c.b16 %v4361, %v4353
        %v5186 = vpack.c.b16 %v4362, %v4354
        %v5187 = vpack.c.b16 %v4363, %v4355
        %v5188 = vpack.c.b16 %v4364, %v4356
        %v5189 = vpack.c.b16 %v4365, %v4357
        %v5190 = vpack.c.b16 %v4366, %v4358
        %v5191 = vpack.c.b16 %v4375, %v4367
        %v5192 = vpack.c.b16 %v4376, %v4368
        %v5193 = vpack.c.b16 %v4377, %v4369
        %v5194 = vpack.c.b16 %v4378, %v4370
        %v5195 = vpack.c.b16 %v4379, %v4371
        %v5196 = vpack.c.b16 %v4380, %v4372
        %v5197 = vpack.c.b16 %v4381, %v4373
        %v5198 = vpack.c.b16 %v4382, %v4374
        %v5199 = vpack.c.b16 %v4391, %v4383
        %v5200 = vpack.c.b16 %v4392, %v4384
        %v5201 = vpack.c.b16 %v4393, %v4385
        %v5202 = vpack.c.b16 %v4394, %v4386
        %v5203 = vpack.c.b16 %v4395, %v4387
        %v5204 = vpack.c.b16 %v4396, %v4388
        %v5205 = vpack.c.b16 %v4397, %v4389
        %v5206 = vpack.c.b16 %v4398, %v4390
        %v5207 = vpack.c.b16 %v4407, %v4399
        %v5208 = vpack.c.b16 %v4408, %v4400
        %v5209 = vpack.c.b16 %v4409, %v4401
        %v5210 = vpack.c.b16 %v4410, %v4402
        %v5211 = vpack.c.b16 %v4411, %v4403
        %v5212 = vpack.c.b16 %v4412, %v4404
        %v5213 = vpack.c.b16 %v4413, %v4405
        %v5214 = vpack.c.b16 %v4414, %v4406
        %v5215 = vpack.c.b16 %v4423, %v4415
        %v5216 = vpack.c.b16 %v4424, %v4416
        %v5217 = vpack.c.b16 %v4425, %v4417
        %v5218 = vpack.c.b16 %v4426, %v4418
        %v5219 = vpack.c.b16 %v4427, %v4419
        %v5220 = vpack.c.b16 %v4428, %v4420
        %v5221 = vpack.c.b16 %v4429, %v4421
        %v5222 = vpack.c.b16 %v4430, %v4422
        %v5223 = vpack.c.b16 %v4439, %v4431
        %v5224 = vpack.c.b16 %v4440, %v4432
        %v5225 = vpack.c.b16 %v4441, %v4433
        %v5226 = vpack.c.b16 %v4442, %v4434
        %v5227 = vpack.c.b16 %v4443, %v4435
        %v5228 = vpack.c.b16 %v4444, %v4436
        %v5229 = vpack.c.b16 %v4445, %v4437
        %v5230 = vpack.c.b16 %v4446, %v4438
        %v5231 = vpack.c.b16 %v4455, %v4447
        %v5232 = vpack.c.b16 %v4456, %v4448
        %v5233 = vpack.c.b16 %v4457, %v4449
        %v5234 = vpack.c.b16 %v4458, %v4450
        %v5235 = vpack.c.b16 %v4459, %v4451
        %v5236 = vpack.c.b16 %v4460, %v4452
        %v5237 = vpack.c.b16 %v4461, %v4453
        %v5238 = vpack.c.b16 %v4462, %v4454
        %v5239 = vpack.c.b16 %v4471, %v4463
        %v5240 = vpack.c.b16 %v4472, %v4464
        %v5241 = vpack.c.b16 %v4473, %v4465
        %v5242 = vpack.c.b16 %v4474, %v4466
        %v5243 = vpack.c.b16 %v4475, %v4467
        %v5244 = vpack.c.b16 %v4476, %v4468
        %v5245 = vpack.c.b16 %v4477, %v4469
        %v5246 = vpack.c.b16 %v4478, %v4470
        %v5247 = vpack.c.b16 %v4487, %v4479
        %v5248 = vpack.c.b16 %v4488, %v4480
        %v5249 = vpack.c.b16 %v4489, %v4481
        %v5250 = vpack.c.b16 %v4490, %v4482
        %v5251 = vpack.c.b16 %v4491, %v4483
        %v5252 = vpack.c.b16 %v4492, %v4484
        %v5253 = vpack.c.b16 %v4493, %v4485
        %v5254 = vpack.c.b16 %v4494, %v4486
        %v5255 = vpack.c.b16 %v4503, %v4495
        %v5256 = vpack.c.b16 %v4504, %v4496
        %v5257 = vpack.c.b16 %v4505, %v4497
        %v5258 = vpack.c.b16 %v4506, %v4498
        %v5259 = vpack.c.b16 %v4507, %v4499
        %v5260 = vpack.c.b16 %v4508, %v4500
        %v5261 = vpack.c.b16 %v4509, %v4501
        %v5262 = vpack.c.b16 %v4510, %v4502
        %v5263 = vpack.c.b16 %v4519, %v4511
        %v5264 = vpack.c.b16 %v4520, %v4512
        %v5265 = vpack.c.b16 %v4521, %v4513
        %v5266 = vpack.c.b16 %v4522, %v4514
        %v5267 = vpack.c.b16 %v4523, %v4515
        %v5268 = vpack.c.b16 %v4524, %v4516
        %v5269 = vpack.c.b16 %v4525, %v4517
        %v5270 = vpack.c.b16 %v4526, %v4518
        %v5271 = vpack.c.b16 %v4535, %v4527
        %v5272 = vpack.c.b16 %v4536, %v4528
        %v5273 = vpack.c.b16 %v4537, %v4529
        %v5274 = vpack.c.b16 %v4538, %v4530
        %v5275 = vpack.c.b16 %v4539, %v4531
        %v5276 = vpack.c.b16 %v4540, %v4532
        %v5277 = vpack.c.b16 %v4541, %v4533
        %v5278 = vpack.c.b16 %v4542, %v4534
        %v5279 = vpack.c.b16 %v4551, %v4543
        %v5280 = vpack.c.b16 %v4552, %v4544
        %v5281 = vpack.c.b16 %v4553, %v4545
        %v5282 = vpack.c.b16 %v4554, %v4546
        %v5283 = vpack.c.b16 %v4555, %v4547
        %v5284 = vpack.c.b16 %v4556, %v4548
        %v5285 = vpack.c.b16 %v4557, %v4549
        %v5286 = vpack.c.b16 %v4558, %v4550
        %v5287 = vpack.c.b16 %v4567, %v4559
        %v5288 = vpack.c.b16 %v4568, %v4560
        %v5289 = vpack.c.b16 %v4569, %v4561
        %v5290 = vpack.c.b16 %v4570, %v4562
        %v5291 = vpack.c.b16 %v4571, %v4563
        %v5292 = vpack.c.b16 %v4572, %v4564
        %v5293 = vpack.c.b16 %v4573, %v4565
        %v5294 = vpack.c.b16 %v4574, %v4566
        %v5295 = vpack.c.b16 %v4583, %v4575
        %v5296 = vpack.c.b16 %v4584, %v4576
        %v5297 = vpack.c.b16 %v4585, %v4577
        %v5298 = vpack.c.b16 %v4586, %v4578
        %v5299 = vpack.c.b16 %v4587, %v4579
        %v5300 = vpack.c.b16 %v4588, %v4580
        %v5301 = vpack.c.b16 %v4589, %v4581
        %v5302 = vpack.c.b16 %v4590, %v4582
        %v5303 = vpack.c.b16 %v4599, %v4591
        %v5304 = vpack.c.b16 %v4600, %v4592
        %v5305 = vpack.c.b16 %v4601, %v4593
        %v5306 = vpack.c.b16 %v4602, %v4594
        %v5307 = vpack.c.b16 %v4603, %v4595
        %v5308 = vpack.c.b16 %v4604, %v4596
        %v5309 = vpack.c.b16 %v4605, %v4597
        %v5310 = vpack.c.b16 %v4606, %v4598
        %v5311 = vpack.c.b16 %v4615, %v4607
        %v5312 = vpack.c.b16 %v4616, %v4608
        %v5313 = vpack.c.b16 %v4617, %v4609
        %v5314 = vpack.c.b16 %v4618, %v4610
        %v5315 = vpack.c.b16 %v4619, %v4611
        %v5316 = vpack.c.b16 %v4620, %v4612
        %v5317 = vpack.c.b16 %v4621, %v4613
        %v5318 = vpack.c.b16 %v4622, %v4614
        %v5319 = vpack.c.b16 %v4631, %v4623
        %v5320 = vpack.c.b16 %v4632, %v4624
        %v5321 = vpack.c.b16 %v4633, %v4625
        %v5322 = vpack.c.b16 %v4634, %v4626
        %v5323 = vpack.c.b16 %v4635, %v4627
        %v5324 = vpack.c.b16 %v4636, %v4628
        %v5325 = vpack.c.b16 %v4637, %v4629
        %v5326 = vpack.c.b16 %v4638, %v4630
        %v5327 = vpack.c.b16 %v4647, %v4639
        %v5328 = vpack.c.b16 %v4648, %v4640
        %v5329 = vpack.c.b16 %v4649, %v4641
        %v5330 = vpack.c.b16 %v4650, %v4642
        %v5331 = vpack.c.b16 %v4651, %v4643
        %v5332 = vpack.c.b16 %v4652, %v4644
        %v5333 = vpack.c.b16 %v4653, %v4645
        %v5334 = vpack.c.b16 %v4654, %v4646
        %v5335 = vpack.c.b16 %v4663, %v4655
        %v5336 = vpack.c.b16 %v4664, %v4656
        %v5337 = vpack.c.b16 %v4665, %v4657
        %v5338 = vpack.c.b16 %v4666, %v4658
        %v5339 = vpack.c.b16 %v4667, %v4659
        %v5340 = vpack.c.b16 %v4668, %v4660
        %v5341 = vpack.c.b16 %v4669, %v4661
        %v5342 = vpack.c.b16 %v4670, %v4662
        %v5343 = vpack.c.b16 %v4679, %v4671
        %v5344 = vpack.c.b16 %v4680, %v4672
        %v5345 = vpack.c.b16 %v4681, %v4673
        %v5346 = vpack.c.b16 %v4682, %v4674
        %v5347 = vpack.c.b16 %v4683, %v4675
        %v5348 = vpack.c.b16 %v4684, %v4676
        %v5349 = vpack.c.b16 %v4685, %v4677
        %v5350 = vpack.c.b16 %v4686, %v4678
        %v5351 = vpack.c.b16 %v4695, %v4687
        %v5352 = vpack.c.b16 %v4696, %v4688
        %v5353 = vpack.c.b16 %v4697, %v4689
        %v5354 = vpack.c.b16 %v4698, %v4690
        %v5355 = vpack.c.b16 %v4699, %v4691
        %v5356 = vpack.c.b16 %v4700, %v4692
        %v5357 = vpack.c.b16 %v4701, %v4693
        %v5358 = vpack.c.b16 %v4702, %v4694
        %v5359 = vpack.c.b16 %v4711, %v4703
        %v5360 = vpack.c.b16 %v4712, %v4704
        %v5361 = vpack.c.b16 %v4713, %v4705
        %v5362 = vpack.c.b16 %v4714, %v4706
        %v5363 = vpack.c.b16 %v4715, %v4707
        %v5364 = vpack.c.b16 %v4716, %v4708
        %v5365 = vpack.c.b16 %v4717, %v4709
        %v5366 = vpack.c.b16 %v4718, %v4710
        %v5367 = vpack.c.b16 %v4727, %v4719
        %v5368 = vpack.c.b16 %v4728, %v4720
        %v5369 = vpack.c.b16 %v4729, %v4721
        %v5370 = vpack.c.b16 %v4730, %v4722
        %v5371 = vpack.c.b16 %v4731, %v4723
        %v5372 = vpack.c.b16 %v4732, %v4724
        %v5373 = vpack.c.b16 %v4733, %v4725
        %v5374 = vpack.c.b16 %v4734, %v4726
        %v5375 = vpack.c.b16 %v4743, %v4735
        %v5376 = vpack.c.b16 %v4744, %v4736
        %v5377 = vpack.c.b16 %v4745, %v4737
        %v5378 = vpack.c.b16 %v4746, %v4738
        %v5379 = vpack.c.b16 %v4747, %v4739
        %v5380 = vpack.c.b16 %v4748, %v4740
        %v5381 = vpack.c.b16 %v4749, %v4741
        %v5382 = vpack.c.b16 %v4750, %v4742
        %v5383 = vpack.c.b16 %v4759, %v4751
        %v5384 = vpack.c.b16 %v4760, %v4752
        %v5385 = vpack.c.b16 %v4761, %v4753
        %v5386 = vpack.c.b16 %v4762, %v4754
        %v5387 = vpack.c.b16 %v4763, %v4755
        %v5388 = vpack.c.b16 %v4764, %v4756
        %v5389 = vpack.c.b16 %v4765, %v4757
        %v5390 = vpack.c.b16 %v4766, %v4758
        %v5391 = vpack.c.b16 %v4775, %v4767
        %v5392 = vpack.c.b16 %v4776, %v4768
        %v5393 = vpack.c.b16 %v4777, %v4769
        %v5394 = vpack.c.b16 %v4778, %v4770
        %v5395 = vpack.c.b16 %v4779, %v4771
        %v5396 = vpack.c.b16 %v4780, %v4772
        %v5397 = vpack.c.b16 %v4781, %v4773
        %v5398 = vpack.c.b16 %v4782, %v4774
        %v5399 = vpack.c.b16 %v4791, %v4783
        %v5400 = vpack.c.b16 %v4792, %v4784
        %v5401 = vpack.c.b16 %v4793, %v4785
        %v5402 = vpack.c.b16 %v4794, %v4786
        %v5403 = vpack.c.b16 %v4795, %v4787
        %v5404 = vpack.c.b16 %v4796, %v4788
        %v5405 = vpack.c.b16 %v4797, %v4789
        %v5406 = vpack.c.b16 %v4798, %v4790
        %v5407 = vpack.c.b16 %v4807, %v4799
        %v5408 = vpack.c.b16 %v4808, %v4800
        %v5409 = vpack.c.b16 %v4809, %v4801
        %v5410 = vpack.c.b16 %v4810, %v4802
        %v5411 = vpack.c.b16 %v4811, %v4803
        %v5412 = vpack.c.b16 %v4812, %v4804
        %v5413 = vpack.c.b16 %v4813, %v4805
        %v5414 = vpack.c.b16 %v4814, %v4806
        %v5415 = vpack.c.b16 %v4823, %v4815
        %v5416 = vpack.c.b16 %v4824, %v4816
        %v5417 = vpack.c.b16 %v4825, %v4817
        %v5418 = vpack.c.b16 %v4826, %v4818
        %v5419 = vpack.c.b16 %v4827, %v4819
        %v5420 = vpack.c.b16 %v4828, %v4820
        %v5421 = vpack.c.b16 %v4829, %v4821
        %v5422 = vpack.c.b16 %v4830, %v4822
        %v5423 = vpack.c.b16 %v4839, %v4831
        %v5424 = vpack.c.b16 %v4840, %v4832
        %v5425 = vpack.c.b16 %v4841, %v4833
        %v5426 = vpack.c.b16 %v4842, %v4834
        %v5427 = vpack.c.b16 %v4843, %v4835
        %v5428 = vpack.c.b16 %v4844, %v4836
        %v5429 = vpack.c.b16 %v4845, %v4837
        %v5430 = vpack.c.b16 %v4846, %v4838
        %v5431 = vpack.c.b16 %v4855, %v4847
        %v5432 = vpack.c.b16 %v4856, %v4848
        %v5433 = vpack.c.b16 %v4857, %v4849
        %v5434 = vpack.c.b16 %v4858, %v4850
        %v5435 = vpack.c.b16 %v4859, %v4851
        %v5436 = vpack.c.b16 %v4860, %v4852
        %v5437 = vpack.c.b16 %v4861, %v4853
        %v5438 = vpack.c.b16 %v4862, %v4854
        %v5439 = vpack.c.b16 %v4871, %v4863
        %v5440 = vpack.c.b16 %v4872, %v4864
        %v5441 = vpack.c.b16 %v4873, %v4865
        %v5442 = vpack.c.b16 %v4874, %v4866
        %v5443 = vpack.c.b16 %v4875, %v4867
        %v5444 = vpack.c.b16 %v4876, %v4868
        %v5445 = vpack.c.b16 %v4877, %v4869
        %v5446 = vpack.c.b16 %v4878, %v4870
        %v5447 = vpack.c.b16 %v4887, %v4879
        %v5448 = vpack.c.b16 %v4888, %v4880
        %v5449 = vpack.c.b16 %v4889, %v4881
        %v5450 = vpack.c.b16 %v4890, %v4882
        %v5451 = vpack.c.b16 %v4891, %v4883
        %v5452 = vpack.c.b16 %v4892, %v4884
        %v5453 = vpack.c.b16 %v4893, %v4885
        %v5454 = vpack.c.b16 %v4894, %v4886
        %v5455 = vpack.c.b16 %v4903, %v4895
        %v5456 = vpack.c.b16 %v4904, %v4896
        %v5457 = vpack.c.b16 %v4905, %v4897
        %v5458 = vpack.c.b16 %v4906, %v4898
        %v5459 = vpack.c.b16 %v4907, %v4899
        %v5460 = vpack.c.b16 %v4908, %v4900
        %v5461 = vpack.c.b16 %v4909, %v4901
        %v5462 = vpack.c.b16 %v4910, %v4902
        %v5463 = vpack.c.b16 %v4919, %v4911
        %v5464 = vpack.c.b16 %v4920, %v4912
        %v5465 = vpack.c.b16 %v4921, %v4913
        %v5466 = vpack.c.b16 %v4922, %v4914
        %v5467 = vpack.c.b16 %v4923, %v4915
        %v5468 = vpack.c.b16 %v4924, %v4916
        %v5469 = vpack.c.b16 %v4925, %v4917
        %v5470 = vpack.c.b16 %v4926, %v4918
        %v5471 = vpack.c.b16 %v4935, %v4927
        %v5472 = vpack.c.b16 %v4936, %v4928
        %v5473 = vpack.c.b16 %v4937, %v4929
        %v5474 = vpack.c.b16 %v4938, %v4930
        %v5475 = vpack.c.b16 %v4939, %v4931
        %v5476 = vpack.c.b16 %v4940, %v4932
        %v5477 = vpack.c.b16 %v4941, %v4933
        %v5478 = vpack.c.b16 %v4942, %v4934
        %v5479 = vpack.c.b16 %v4951, %v4943
        %v5480 = vpack.c.b16 %v4952, %v4944
        %v5481 = vpack.c.b16 %v4953, %v4945
        %v5482 = vpack.c.b16 %v4954, %v4946
        %v5483 = vpack.c.b16 %v4955, %v4947
        %v5484 = vpack.c.b16 %v4956, %v4948
        %v5485 = vpack.c.b16 %v4957, %v4949
        %v5486 = vpack.c.b16 %v4958, %v4950
        %v5487 = vpack.c.b16 %v4967, %v4959
        %v5488 = vpack.c.b16 %v4968, %v4960
        %v5489 = vpack.c.b16 %v4969, %v4961
        %v5490 = vpack.c.b16 %v4970, %v4962
        %v5491 = vpack.c.b16 %v4971, %v4963
        %v5492 = vpack.c.b16 %v4972, %v4964
        %v5493 = vpack.c.b16 %v4973, %v4965
        %v5494 = vpack.c.b16 %v4974, %v4966
        %v5495 = vpack.c.b16 %v4983, %v4975
        %v5496 = vpack.c.b16 %v4984, %v4976
        %v5497 = vpack.c.b16 %v4985, %v4977
        %v5498 = vpack.c.b16 %v4986, %v4978
        %v5499 = vpack.c.b16 %v4987, %v4979
        %v5500 = vpack.c.b16 %v4988, %v4980
        %v5501 = vpack.c.b16 %v4989, %v4981
        %v5502 = vpack.c.b16 %v4990, %v4982
        %6015 = vmatprep.subr.bf16.mxu0 %v4992
        %6016 = vmatpush1.bf16.msra.mxu0 %v4991
        %6017 = vmatprep.subr.bf16.mxu0 %v5000
        %6018 = vmatpush1.bf16.msra.mxu0 %v4999
        %6019 = vmatprep.subr.bf16.mxu0 %v5008
        %6020 = vmatpush1.bf16.msra.mxu0 %v5007
        %6021 = vmatprep.subr.bf16.mxu0 %v5016
        %6022 = vmatpush1.bf16.msra.mxu0 %v5015
        %6023 = vmatprep.subr.bf16.mxu0 %v5024
        %6024 = vmatpush1.bf16.msra.mxu0 %v5023
        %6025 = vmatprep.subr.bf16.mxu0 %v5032
        %6026 = vmatpush1.bf16.msra.mxu0 %v5031
        %6027 = vmatprep.subr.bf16.mxu0 %v5040
        %6028 = vmatpush1.bf16.msra.mxu0 %v5039
        %6029 = vmatprep.subr.bf16.mxu0 %v5048
        %6030 = vmatpush1.bf16.msra.mxu0 %v5047
        %6031 = vmatprep.subr.bf16.mxu0 %v5056
        %6032 = vmatpush1.bf16.msra.mxu0 %v5055
        %6033 = vmatprep.subr.bf16.mxu0 %v5064
        %6034 = vmatpush1.bf16.msra.mxu0 %v5063
        %6035 = vmatprep.subr.bf16.mxu0 %v5072
        %6036 = vmatpush1.bf16.msra.mxu0 %v5071
        %6037 = vmatprep.subr.bf16.mxu0 %v5080
        %6038 = vmatpush1.bf16.msra.mxu0 %v5079
        %6039 = vmatprep.subr.bf16.mxu0 %v5088
        %6040 = vmatpush1.bf16.msra.mxu0 %v5087
        %6041 = vmatprep.subr.bf16.mxu0 %v5096
        %6042 = vmatpush1.bf16.msra.mxu0 %v5095
        %6043 = vmatprep.subr.bf16.mxu0 %v5104
        %6044 = vmatpush1.bf16.msra.mxu0 %v5103
        %6045 = vmatprep.subr.bf16.mxu0 %v5112
        %6046 = vmatpush1.bf16.msra.mxu0 %v5111
        %6047 = vmatprep.mubr.bf16.mxu0 %v2936
        %6048 = vmatmul.mubr.bf16.gmra.mrb[0].mxu0 %v2935
        %v6049 = vpop.f32.mrb[0].mxu0
        %v6050 = vadd.f32 0.0, %v6049
        %v6051 = vpop.f32.mrb[0].mxu0
        %v6052 = vadd.f32 0.0, %v6051
        %v6053 = vpop.f32.mrb[0].mxu0
        %v6054 = vpop.f32.mrb[0].mxu0
        %6055 = vdwg.mxu0
        %6056 = vmatprep.subr.bf16.mxu0 %v5120
        %6057 = vmatpush1.bf16.msra.mxu0 %v5119
        %6058 = vmatprep.subr.bf16.mxu0 %v5128
        %6059 = vmatpush1.bf16.msra.mxu0 %v5127
        %6060 = vmatprep.subr.bf16.mxu0 %v5136
        %6061 = vmatpush1.bf16.msra.mxu0 %v5135
        %6062 = vmatprep.subr.bf16.mxu0 %v5144
        %6063 = vmatpush1.bf16.msra.mxu0 %v5143
        %6064 = vmatprep.subr.bf16.mxu0 %v5152
        %6065 = vmatpush1.bf16.msra.mxu0 %v5151
        %6066 = vmatprep.subr.bf16.mxu0 %v5160
        %6067 = vmatpush1.bf16.msra.mxu0 %v5159
        %6068 = vmatprep.subr.bf16.mxu0 %v5168
        %6069 = vmatpush1.bf16.msra.mxu0 %v5167
        %6070 = vmatprep.subr.bf16.mxu0 %v5176
        %6071 = vmatpush1.bf16.msra.mxu0 %v5175
        %6072 = vmatprep.subr.bf16.mxu0 %v5184
        %6073 = vmatpush1.bf16.msra.mxu0 %v5183
        %6074 = vmatprep.subr.bf16.mxu0 %v5192
        %6075 = vmatpush1.bf16.msra.mxu0 %v5191
        %6076 = vmatprep.subr.bf16.mxu0 %v5200
        %6077 = vmatpush1.bf16.msra.mxu0 %v5199
        %6078 = vmatprep.subr.bf16.mxu0 %v5208
        %6079 = vmatpush1.bf16.msra.mxu0 %v5207
        %6080 = vmatprep.subr.bf16.mxu0 %v5216
        %6081 = vmatpush1.bf16.msra.mxu0 %v5215
        %6082 = vmatprep.subr.bf16.mxu0 %v5224
        %6083 = vmatpush1.bf16.msra.mxu0 %v5223
        %6084 = vmatprep.subr.bf16.mxu0 %v5232
        %6085 = vmatpush1.bf16.msra.mxu0 %v5231
        %6086 = vmatprep.subr.bf16.mxu0 %v5240
        %6087 = vmatpush1.bf16.msra.mxu0 %v5239
        %6088 = vmatprep.mubr.bf16.mxu0 %v2938
        %6089 = vmatmul.mubr.bf16.gmra.mrb[0].mxu0 %v2937
        %v6090 = vpop.f32.mrb[0].mxu0
        %v6091 = vadd.f32 %v6050, %v6090
        %v6092 = vpop.f32.mrb[0].mxu0
        %v6093 = vadd.f32 %v6052, %v6092
        %v6094 = vpop.f32.mrb[0].mxu0
        %v6095 = vpop.f32.mrb[0].mxu0
        %6096 = vdwg.mxu0
        %6097 = vmatprep.subr.bf16.mxu0 %v5248
        %6098 = vmatpush1.bf16.msra.mxu0 %v5247
        %6099 = vmatprep.subr.bf16.mxu0 %v5256
        %6100 = vmatpush1.bf16.msra.mxu0 %v5255
        %6101 = vmatprep.subr.bf16.mxu0 %v5264
        %6102 = vmatpush1.bf16.msra.mxu0 %v5263
        %6103 = vmatprep.subr.bf16.mxu0 %v5272
        %6104 = vmatpush1.bf16.msra.mxu0 %v5271
        %6105 = vmatprep.subr.bf16.mxu0 %v5280
        %6106 = vmatpush1.bf16.msra.mxu0 %v5279
        %6107 = vmatprep.subr.bf16.mxu0 %v5288
        %6108 = vmatpush1.bf16.msra.mxu0 %v5287
        %6109 = vmatprep.subr.bf16.mxu0 %v5296
        %6110 = vmatpush1.bf16.msra.mxu0 %v5295
        %6111 = vmatprep.subr.bf16.mxu0 %v5304
        %6112 = vmatpush1.bf16.msra.mxu0 %v5303
        %6113 = vmatprep.subr.bf16.mxu0 %v5312
        %6114 = vmatpush1.bf16.msra.mxu0 %v5311
        %6115 = vmatprep.subr.bf16.mxu0 %v5320
        %6116 = vmatpush1.bf16.msra.mxu0 %v5319
        %6117 = vmatprep.subr.bf16.mxu0 %v5328
        %6118 = vmatpush1.bf16.msra.mxu0 %v5327
        %6119 = vmatprep.subr.bf16.mxu0 %v5336
        %6120 = vmatpush1.bf16.msra.mxu0 %v5335
        %6121 = vmatprep.subr.bf16.mxu0 %v5344
        %6122 = vmatpush1.bf16.msra.mxu0 %v5343
        %6123 = vmatprep.subr.bf16.mxu0 %v5352
        %6124 = vmatpush1.bf16.msra.mxu0 %v5351
        %6125 = vmatprep.subr.bf16.mxu0 %v5360
        %6126 = vmatpush1.bf16.msra.mxu0 %v5359
        %6127 = vmatprep.subr.bf16.mxu0 %v5368
        %6128 = vmatpush1.bf16.msra.mxu0 %v5367
        %6129 = vmatprep.mubr.bf16.mxu0 %v2940
        %6130 = vmatmul.mubr.bf16.gmra.mrb[0].mxu0 %v2939
        %v6131 = vpop.f32.mrb[0].mxu0
        %v6132 = vadd.f32 %v6091, %v6131
        %v6133 = vpop.f32.mrb[0].mxu0
        %v6134 = vadd.f32 %v6093, %v6133
        %v6135 = vpop.f32.mrb[0].mxu0
        %v6136 = vpop.f32.mrb[0].mxu0
        %6137 = vdwg.mxu0
        %6138 = vmatprep.subr.bf16.mxu0 %v5376
        %6139 = vmatpush1.bf16.msra.mxu0 %v5375
        %6140 = vmatprep.subr.bf16.mxu0 %v5384
        %6141 = vmatpush1.bf16.msra.mxu0 %v5383
        %6142 = vmatprep.subr.bf16.mxu0 %v5392
        %6143 = vmatpush1.bf16.msra.mxu0 %v5391
        %6144 = vmatprep.subr.bf16.mxu0 %v5400
        %6145 = vmatpush1.bf16.msra.mxu0 %v5399
        %6146 = vmatprep.subr.bf16.mxu0 %v5408
        %6147 = vmatpush1.bf16.msra.mxu0 %v5407
        %6148 = vmatprep.subr.bf16.mxu0 %v5416
        %6149 = vmatpush1.bf16.msra.mxu0 %v5415
        %6150 = vmatprep.subr.bf16.mxu0 %v5424
        %6151 = vmatpush1.bf16.msra.mxu0 %v5423
        %6152 = vmatprep.subr.bf16.mxu0 %v5432
        %6153 = vmatpush1.bf16.msra.mxu0 %v5431
        %6154 = vmatprep.subr.bf16.mxu0 %v5440
        %6155 = vmatpush1.bf16.msra.mxu0 %v5439
        %6156 = vmatprep.subr.bf16.mxu0 %v5448
        %6157 = vmatpush1.bf16.msra.mxu0 %v5447
        %6158 = vmatprep.subr.bf16.mxu0 %v5456
        %6159 = vmatpush1.bf16.msra.mxu0 %v5455
        %6160 = vmatprep.subr.bf16.mxu0 %v5464
        %6161 = vmatpush1.bf16.msra.mxu0 %v5463
        %6162 = vmatprep.subr.bf16.mxu0 %v5472
        %6163 = vmatpush1.bf16.msra.mxu0 %v5471
        %6164 = vmatprep.subr.bf16.mxu0 %v5480
        %6165 = vmatpush1.bf16.msra.mxu0 %v5479
        %6166 = vmatprep.subr.bf16.mxu0 %v5488
        %6167 = vmatpush1.bf16.msra.mxu0 %v5487
        %6168 = vmatprep.subr.bf16.mxu0 %v5496
        %6169 = vmatpush1.bf16.msra.mxu0 %v5495
        %6170 = vmatprep.mubr.bf16.mxu0 %v2942
        %6171 = vmatmul.mubr.bf16.gmra.mrb[0].mxu0 %v2941
        %v6172 = vpop.f32.mrb[0].mxu0
        %v6173 = vadd.f32 %v6132, %v6172
        %v6174 = vpop.f32.mrb[0].mxu0
        %v6175 = vadd.f32 %v6134, %v6174
        %v6176 = vpop.f32.mrb[0].mxu0
        %v6177 = vpop.f32.mrb[0].mxu0
        %6178 = vdwg.mxu0
        %6179 = vmatprep.subr.bf16.mxu0 %v4994
        %6180 = vmatpush1.bf16.msra.mxu0 %v4993
        %6181 = vmatprep.subr.bf16.mxu0 %v5002
        %6182 = vmatpush1.bf16.msra.mxu0 %v5001
        %6183 = vmatprep.subr.bf16.mxu0 %v5010
        %6184 = vmatpush1.bf16.msra.mxu0 %v5009
        %6185 = vmatprep.subr.bf16.mxu0 %v5018
        %6186 = vmatpush1.bf16.msra.mxu0 %v5017
        %6187 = vmatprep.subr.bf16.mxu0 %v5026
        %6188 = vmatpush1.bf16.msra.mxu0 %v5025
        %6189 = vmatprep.subr.bf16.mxu0 %v5034
        %6190 = vmatpush1.bf16.msra.mxu0 %v5033
        %6191 = vmatprep.subr.bf16.mxu0 %v5042
        %6192 = vmatpush1.bf16.msra.mxu0 %v5041
        %6193 = vmatprep.subr.bf16.mxu0 %v5050
        %6194 = vmatpush1.bf16.msra.mxu0 %v5049
        %6195 = vmatprep.subr.bf16.mxu0 %v5058
        %6196 = vmatpush1.bf16.msra.mxu0 %v5057
        %6197 = vmatprep.subr.bf16.mxu0 %v5066
        %6198 = vmatpush1.bf16.msra.mxu0 %v5065
        %6199 = vmatprep.subr.bf16.mxu0 %v5074
        %6200 = vmatpush1.bf16.msra.mxu0 %v5073
        %6201 = vmatprep.subr.bf16.mxu0 %v5082
        %6202 = vmatpush1.bf16.msra.mxu0 %v5081
        %6203 = vmatprep.subr.bf16.mxu0 %v5090
        %6204 = vmatpush1.bf16.msra.mxu0 %v5089
        %6205 = vmatprep.subr.bf16.mxu0 %v5098
        %6206 = vmatpush1.bf16.msra.mxu0 %v5097
        %6207 = vmatprep.subr.bf16.mxu0 %v5106
        %6208 = vmatpush1.bf16.msra.mxu0 %v5105
        %6209 = vmatprep.subr.bf16.mxu0 %v5114
        %6210 = vmatpush1.bf16.msra.mxu0 %v5113
        %6211 = vmatprep.mubr.bf16.mxu0 %v2936
        %6212 = vmatmul.mubr.bf16.gmra.mrb[0].mxu0 %v2935
        %v6213 = vpop.f32.mrb[0].mxu0
        %v6214 = vadd.f32 0.0, %v6213
        %v6215 = vpop.f32.mrb[0].mxu0
        %v6216 = vadd.f32 0.0, %v6215
        %v6217 = vpop.f32.mrb[0].mxu0
        %v6218 = vpop.f32.mrb[0].mxu0
        %6219 = vdwg.mxu0
        %6220 = vmatprep.subr.bf16.mxu0 %v5122
        %6221 = vmatpush1.bf16.msra.mxu0 %v5121
        %6222 = vmatprep.subr.bf16.mxu0 %v5130
        %6223 = vmatpush1.bf16.msra.mxu0 %v5129
        %6224 = vmatprep.subr.bf16.mxu0 %v5138
        %6225 = vmatpush1.bf16.msra.mxu0 %v5137
        %6226 = vmatprep.subr.bf16.mxu0 %v5146
        %6227 = vmatpush1.bf16.msra.mxu0 %v5145
        %6228 = vmatprep.subr.bf16.mxu0 %v5154
        %6229 = vmatpush1.bf16.msra.mxu0 %v5153
        %6230 = vmatprep.subr.bf16.mxu0 %v5162
        %6231 = vmatpush1.bf16.msra.mxu0 %v5161
        %6232 = vmatprep.subr.bf16.mxu0 %v5170
        %6233 = vmatpush1.bf16.msra.mxu0 %v5169
        %6234 = vmatprep.subr.bf16.mxu0 %v5178
        %6235 = vmatpush1.bf16.msra.mxu0 %v5177
        %6236 = vmatprep.subr.bf16.mxu0 %v5186
        %6237 = vmatpush1.bf16.msra.mxu0 %v5185
        %6238 = vmatprep.subr.bf16.mxu0 %v5194
        %6239 = vmatpush1.bf16.msra.mxu0 %v5193
        %6240 = vmatprep.subr.bf16.mxu0 %v5202
        %6241 = vmatpush1.bf16.msra.mxu0 %v5201
        %6242 = vmatprep.subr.bf16.mxu0 %v5210
        %6243 = vmatpush1.bf16.msra.mxu0 %v5209
        %6244 = vmatprep.subr.bf16.mxu0 %v5218
        %6245 = vmatpush1.bf16.msra.mxu0 %v5217
        %6246 = vmatprep.subr.bf16.mxu0 %v5226
        %6247 = vmatpush1.bf16.msra.mxu0 %v5225
        %6248 = vmatprep.subr.bf16.mxu0 %v5234
        %6249 = vmatpush1.bf16.msra.mxu0 %v5233
        %6250 = vmatprep.subr.bf16.mxu0 %v5242
        %6251 = vmatpush1.bf16.msra.mxu0 %v5241
        %6252 = vmatprep.mubr.bf16.mxu0 %v2938
        %6253 = vmatmul.mubr.bf16.gmra.mrb[0].mxu0 %v2937
        %v6254 = vpop.f32.mrb[0].mxu0
        %v6255 = vadd.f32 %v6214, %v6254
        %v6256 = vpop.f32.mrb[0].mxu0
        %v6257 = vadd.f32 %v6216, %v6256
        %v6258 = vpop.f32.mrb[0].mxu0
        %v6259 = vpop.f32.mrb[0].mxu0
        %6260 = vdwg.mxu0
        %6261 = vmatprep.subr.bf16.mxu0 %v5250
        %6262 = vmatpush1.bf16.msra.mxu0 %v5249
        %6263 = vmatprep.subr.bf16.mxu0 %v5258
        %6264 = vmatpush1.bf16.msra.mxu0 %v5257
        %6265 = vmatprep.subr.bf16.mxu0 %v5266
        %6266 = vmatpush1.bf16.msra.mxu0 %v5265
        %6267 = vmatprep.subr.bf16.mxu0 %v5274
        %6268 = vmatpush1.bf16.msra.mxu0 %v5273
        %6269 = vmatprep.subr.bf16.mxu0 %v5282
        %6270 = vmatpush1.bf16.msra.mxu0 %v5281
        %6271 = vmatprep.subr.bf16.mxu0 %v5290
        %6272 = vmatpush1.bf16.msra.mxu0 %v5289
        %6273 = vmatprep.subr.bf16.mxu0 %v5298
        %6274 = vmatpush1.bf16.msra.mxu0 %v5297
        %6275 = vmatprep.subr.bf16.mxu0 %v5306
        %6276 = vmatpush1.bf16.msra.mxu0 %v5305
        %6277 = vmatprep.subr.bf16.mxu0 %v5314
        %6278 = vmatpush1.bf16.msra.mxu0 %v5313
        %6279 = vmatprep.subr.bf16.mxu0 %v5322
        %6280 = vmatpush1.bf16.msra.mxu0 %v5321
        %6281 = vmatprep.subr.bf16.mxu0 %v5330
        %6282 = vmatpush1.bf16.msra.mxu0 %v5329
        %6283 = vmatprep.subr.bf16.mxu0 %v5338
        %6284 = vmatpush1.bf16.msra.mxu0 %v5337
        %6285 = vmatprep.subr.bf16.mxu0 %v5346
        %6286 = vmatpush1.bf16.msra.mxu0 %v5345
        %6287 = vmatprep.subr.bf16.mxu0 %v5354
        %6288 = vmatpush1.bf16.msra.mxu0 %v5353
        %6289 = vmatprep.subr.bf16.mxu0 %v5362
        %6290 = vmatpush1.bf16.msra.mxu0 %v5361
        %6291 = vmatprep.subr.bf16.mxu0 %v5370
        %6292 = vmatpush1.bf16.msra.mxu0 %v5369
        %6293 = vmatprep.mubr.bf16.mxu0 %v2940
        %6294 = vmatmul.mubr.bf16.gmra.mrb[0].mxu0 %v2939
        %v6295 = vpop.f32.mrb[0].mxu0
        %v6296 = vadd.f32 %v6255, %v6295
        %v6297 = vpop.f32.mrb[0].mxu0
        %v6298 = vadd.f32 %v6257, %v6297
        %v6299 = vpop.f32.mrb[0].mxu0
        %v6300 = vpop.f32.mrb[0].mxu0
        %6301 = vdwg.mxu0
        %6302 = vmatprep.subr.bf16.mxu0 %v5378
        %6303 = vmatpush1.bf16.msra.mxu0 %v5377
        %6304 = vmatprep.subr.bf16.mxu0 %v5386
        %6305 = vmatpush1.bf16.msra.mxu0 %v5385
        %6306 = vmatprep.subr.bf16.mxu0 %v5394
        %6307 = vmatpush1.bf16.msra.mxu0 %v5393
        %6308 = vmatprep.subr.bf16.mxu0 %v5402
        %6309 = vmatpush1.bf16.msra.mxu0 %v5401
        %6310 = vmatprep.subr.bf16.mxu0 %v5410
        %6311 = vmatpush1.bf16.msra.mxu0 %v5409
        %6312 = vmatprep.subr.bf16.mxu0 %v5418
        %6313 = vmatpush1.bf16.msra.mxu0 %v5417
        %6314 = vmatprep.subr.bf16.mxu0 %v5426
        %6315 = vmatpush1.bf16.msra.mxu0 %v5425
        %6316 = vmatprep.subr.bf16.mxu0 %v5434
        %6317 = vmatpush1.bf16.msra.mxu0 %v5433
        %6318 = vmatprep.subr.bf16.mxu0 %v5442
        %6319 = vmatpush1.bf16.msra.mxu0 %v5441
        %6320 = vmatprep.subr.bf16.mxu0 %v5450
        %6321 = vmatpush1.bf16.msra.mxu0 %v5449
        %6322 = vmatprep.subr.bf16.mxu0 %v5458
        %6323 = vmatpush1.bf16.msra.mxu0 %v5457
        %6324 = vmatprep.subr.bf16.mxu0 %v5466
        %6325 = vmatpush1.bf16.msra.mxu0 %v5465
        %6326 = vmatprep.subr.bf16.mxu0 %v5474
        %6327 = vmatpush1.bf16.msra.mxu0 %v5473
        %6328 = vmatprep.subr.bf16.mxu0 %v5482
        %6329 = vmatpush1.bf16.msra.mxu0 %v5481
        %6330 = vmatprep.subr.bf16.mxu0 %v5490
        %6331 = vmatpush1.bf16.msra.mxu0 %v5489
        %6332 = vmatprep.subr.bf16.mxu0 %v5498
        %6333 = vmatpush1.bf16.msra.mxu0 %v5497
        %6334 = vmatprep.mubr.bf16.mxu0 %v2942
        %6335 = vmatmul.mubr.bf16.gmra.mrb[0].mxu0 %v2941
        %v6336 = vpop.f32.mrb[0].mxu0
        %v6337 = vadd.f32 %v6296, %v6336
        %v6338 = vpop.f32.mrb[0].mxu0
        %v6339 = vadd.f32 %v6298, %v6338
        %v6340 = vpop.f32.mrb[0].mxu0
        %v6341 = vpop.f32.mrb[0].mxu0
        %6342 = vdwg.mxu0
        %6343 = vmatprep.subr.bf16.mxu0 %v4996
        %6344 = vmatpush1.bf16.msra.mxu0 %v4995
        %6345 = vmatprep.subr.bf16.mxu0 %v5004
        %6346 = vmatpush1.bf16.msra.mxu0 %v5003
        %6347 = vmatprep.subr.bf16.mxu0 %v5012
        %6348 = vmatpush1.bf16.msra.mxu0 %v5011
        %6349 = vmatprep.subr.bf16.mxu0 %v5020
        %6350 = vmatpush1.bf16.msra.mxu0 %v5019
        %6351 = vmatprep.subr.bf16.mxu0 %v5028
        %6352 = vmatpush1.bf16.msra.mxu0 %v5027
        %6353 = vmatprep.subr.bf16.mxu0 %v5036
        %6354 = vmatpush1.bf16.msra.mxu0 %v5035
        %6355 = vmatprep.subr.bf16.mxu0 %v5044
        %6356 = vmatpush1.bf16.msra.mxu0 %v5043
        %6357 = vmatprep.subr.bf16.mxu0 %v5052
        %6358 = vmatpush1.bf16.msra.mxu0 %v5051
        %6359 = vmatprep.subr.bf16.mxu0 %v5060
        %6360 = vmatpush1.bf16.msra.mxu0 %v5059
        %6361 = vmatprep.subr.bf16.mxu0 %v5068
        %6362 = vmatpush1.bf16.msra.mxu0 %v5067
        %6363 = vmatprep.subr.bf16.mxu0 %v5076
        %6364 = vmatpush1.bf16.msra.mxu0 %v5075
        %6365 = vmatprep.subr.bf16.mxu0 %v5084
        %6366 = vmatpush1.bf16.msra.mxu0 %v5083
        %6367 = vmatprep.subr.bf16.mxu0 %v5092
        %6368 = vmatpush1.bf16.msra.mxu0 %v5091
        %6369 = vmatprep.subr.bf16.mxu0 %v5100
        %6370 = vmatpush1.bf16.msra.mxu0 %v5099
        %6371 = vmatprep.subr.bf16.mxu0 %v5108
        %6372 = vmatpush1.bf16.msra.mxu0 %v5107
        %6373 = vmatprep.subr.bf16.mxu0 %v5116
        %6374 = vmatpush1.bf16.msra.mxu0 %v5115
        %6375 = vmatprep.mubr.bf16.mxu0 %v2936
        %6376 = vmatmul.mubr.bf16.gmra.mrb[0].mxu0 %v2935
        %v6377 = vpop.f32.mrb[0].mxu0
        %v6378 = vadd.f32 0.0, %v6377
        %v6379 = vpop.f32.mrb[0].mxu0
        %v6380 = vadd.f32 0.0, %v6379
        %v6381 = vpop.f32.mrb[0].mxu0
        %v6382 = vpop.f32.mrb[0].mxu0
        %6383 = vdwg.mxu0
        %6384 = vmatprep.subr.bf16.mxu0 %v5124
        %6385 = vmatpush1.bf16.msra.mxu0 %v5123
        %6386 = vmatprep.subr.bf16.mxu0 %v5132
        %6387 = vmatpush1.bf16.msra.mxu0 %v5131
        %6388 = vmatprep.subr.bf16.mxu0 %v5140
        %6389 = vmatpush1.bf16.msra.mxu0 %v5139
        %6390 = vmatprep.subr.bf16.mxu0 %v5148
        %6391 = vmatpush1.bf16.msra.mxu0 %v5147
        %6392 = vmatprep.subr.bf16.mxu0 %v5156
        %6393 = vmatpush1.bf16.msra.mxu0 %v5155
        %6394 = vmatprep.subr.bf16.mxu0 %v5164
        %6395 = vmatpush1.bf16.msra.mxu0 %v5163
        %6396 = vmatprep.subr.bf16.mxu0 %v5172
        %6397 = vmatpush1.bf16.msra.mxu0 %v5171
        %6398 = vmatprep.subr.bf16.mxu0 %v5180
        %6399 = vmatpush1.bf16.msra.mxu0 %v5179
        %6400 = vmatprep.subr.bf16.mxu0 %v5188
        %6401 = vmatpush1.bf16.msra.mxu0 %v5187
        %6402 = vmatprep.subr.bf16.mxu0 %v5196
        %6403 = vmatpush1.bf16.msra.mxu0 %v5195
        %6404 = vmatprep.subr.bf16.mxu0 %v5204
        %6405 = vmatpush1.bf16.msra.mxu0 %v5203
        %6406 = vmatprep.subr.bf16.mxu0 %v5212
        %6407 = vmatpush1.bf16.msra.mxu0 %v5211
        %6408 = vmatprep.subr.bf16.mxu0 %v5220
        %6409 = vmatpush1.bf16.msra.mxu0 %v5219
        %6410 = vmatprep.subr.bf16.mxu0 %v5228
        %6411 = vmatpush1.bf16.msra.mxu0 %v5227
        %6412 = vmatprep.subr.bf16.mxu0 %v5236
        %6413 = vmatpush1.bf16.msra.mxu0 %v5235
        %6414 = vmatprep.subr.bf16.mxu0 %v5244
        %6415 = vmatpush1.bf16.msra.mxu0 %v5243
        %6416 = vmatprep.mubr.bf16.mxu0 %v2938
        %6417 = vmatmul.mubr.bf16.gmra.mrb[0].mxu0 %v2937
        %v6418 = vpop.f32.mrb[0].mxu0
        %v6419 = vadd.f32 %v6378, %v6418
        %v6420 = vpop.f32.mrb[0].mxu0
        %v6421 = vadd.f32 %v6380, %v6420
        %v6422 = vpop.f32.mrb[0].mxu0
        %v6423 = vpop.f32.mrb[0].mxu0
        %6424 = vdwg.mxu0
        %6425 = vmatprep.subr.bf16.mxu0 %v5252
        %6426 = vmatpush1.bf16.msra.mxu0 %v5251
        %6427 = vmatprep.subr.bf16.mxu0 %v5260
        %6428 = vmatpush1.bf16.msra.mxu0 %v5259
        %6429 = vmatprep.subr.bf16.mxu0 %v5268
        %6430 = vmatpush1.bf16.msra.mxu0 %v5267
        %6431 = vmatprep.subr.bf16.mxu0 %v5276
        %6432 = vmatpush1.bf16.msra.mxu0 %v5275
        %6433 = vmatprep.subr.bf16.mxu0 %v5284
        %6434 = vmatpush1.bf16.msra.mxu0 %v5283
        %6435 = vmatprep.subr.bf16.mxu0 %v5292
        %6436 = vmatpush1.bf16.msra.mxu0 %v5291
        %6437 = vmatprep.subr.bf16.mxu0 %v5300
        %6438 = vmatpush1.bf16.msra.mxu0 %v5299
        %6439 = vmatprep.subr.bf16.mxu0 %v5308
        %6440 = vmatpush1.bf16.msra.mxu0 %v5307
        %6441 = vmatprep.subr.bf16.mxu0 %v5316
        %6442 = vmatpush1.bf16.msra.mxu0 %v5315
        %6443 = vmatprep.subr.bf16.mxu0 %v5324
        %6444 = vmatpush1.bf16.msra.mxu0 %v5323
        %6445 = vmatprep.subr.bf16.mxu0 %v5332
        %6446 = vmatpush1.bf16.msra.mxu0 %v5331
        %6447 = vmatprep.subr.bf16.mxu0 %v5340
        %6448 = vmatpush1.bf16.msra.mxu0 %v5339
        %6449 = vmatprep.subr.bf16.mxu0 %v5348
        %6450 = vmatpush1.bf16.msra.mxu0 %v5347
        %6451 = vmatprep.subr.bf16.mxu0 %v5356
        %6452 = vmatpush1.bf16.msra.mxu0 %v5355
        %6453 = vmatprep.subr.bf16.mxu0 %v5364
        %6454 = vmatpush1.bf16.msra.mxu0 %v5363
        %6455 = vmatprep.subr.bf16.mxu0 %v5372
        %6456 = vmatpush1.bf16.msra.mxu0 %v5371
        %6457 = vmatprep.mubr.bf16.mxu0 %v2940
        %6458 = vmatmul.mubr.bf16.gmra.mrb[0].mxu0 %v2939
        %v6459 = vpop.f32.mrb[0].mxu0
        %v6460 = vadd.f32 %v6419, %v6459
        %v6461 = vpop.f32.mrb[0].mxu0
        %v6462 = vadd.f32 %v6421, %v6461
        %v6463 = vpop.f32.mrb[0].mxu0
        %v6464 = vpop.f32.mrb[0].mxu0
        %6465 = vdwg.mxu0
        %6466 = vmatprep.subr.bf16.mxu0 %v5380
        %6467 = vmatpush1.bf16.msra.mxu0 %v5379
        %6468 = vmatprep.subr.bf16.mxu0 %v5388
        %6469 = vmatpush1.bf16.msra.mxu0 %v5387
        %6470 = vmatprep.subr.bf16.mxu0 %v5396
        %6471 = vmatpush1.bf16.msra.mxu0 %v5395
        %6472 = vmatprep.subr.bf16.mxu0 %v5404
        %6473 = vmatpush1.bf16.msra.mxu0 %v5403
        %6474 = vmatprep.subr.bf16.mxu0 %v5412
        %6475 = vmatpush1.bf16.msra.mxu0 %v5411
        %6476 = vmatprep.subr.bf16.mxu0 %v5420
        %6477 = vmatpush1.bf16.msra.mxu0 %v5419
        %6478 = vmatprep.subr.bf16.mxu0 %v5428
        %6479 = vmatpush1.bf16.msra.mxu0 %v5427
        %6480 = vmatprep.subr.bf16.mxu0 %v5436
        %6481 = vmatpush1.bf16.msra.mxu0 %v5435
        %6482 = vmatprep.subr.bf16.mxu0 %v5444
        %6483 = vmatpush1.bf16.msra.mxu0 %v5443
        %6484 = vmatprep.subr.bf16.mxu0 %v5452
        %6485 = vmatpush1.bf16.msra.mxu0 %v5451
        %6486 = vmatprep.subr.bf16.mxu0 %v5460
        %6487 = vmatpush1.bf16.msra.mxu0 %v5459
        %6488 = vmatprep.subr.bf16.mxu0 %v5468
        %6489 = vmatpush1.bf16.msra.mxu0 %v5467
        %6490 = vmatprep.subr.bf16.mxu0 %v5476
        %6491 = vmatpush1.bf16.msra.mxu0 %v5475
        %6492 = vmatprep.subr.bf16.mxu0 %v5484
        %6493 = vmatpush1.bf16.msra.mxu0 %v5483
        %6494 = vmatprep.subr.bf16.mxu0 %v5492
        %6495 = vmatpush1.bf16.msra.mxu0 %v5491
        %6496 = vmatprep.subr.bf16.mxu0 %v5500
        %6497 = vmatpush1.bf16.msra.mxu0 %v5499
        %6498 = vmatprep.mubr.bf16.mxu0 %v2942
        %6499 = vmatmul.mubr.bf16.gmra.mrb[0].mxu0 %v2941
        %v6500 = vpop.f32.mrb[0].mxu0
        %v6501 = vadd.f32 %v6460, %v6500
        %v6502 = vpop.f32.mrb[0].mxu0
        %v6503 = vadd.f32 %v6462, %v6502
        %v6504 = vpop.f32.mrb[0].mxu0
        %v6505 = vpop.f32.mrb[0].mxu0
        %6506 = vdwg.mxu0
        %6507 = vmatprep.subr.bf16.mxu0 %v4998
        %6508 = vmatpush1.bf16.msra.mxu0 %v4997
        %6509 = vmatprep.subr.bf16.mxu0 %v5006
        %6510 = vmatpush1.bf16.msra.mxu0 %v5005
        %6511 = vmatprep.subr.bf16.mxu0 %v5014
        %6512 = vmatpush1.bf16.msra.mxu0 %v5013
        %6513 = vmatprep.subr.bf16.mxu0 %v5022
        %6514 = vmatpush1.bf16.msra.mxu0 %v5021
        %6515 = vmatprep.subr.bf16.mxu0 %v5030
        %6516 = vmatpush1.bf16.msra.mxu0 %v5029
        %6517 = vmatprep.subr.bf16.mxu0 %v5038
        %6518 = vmatpush1.bf16.msra.mxu0 %v5037
        %6519 = vmatprep.subr.bf16.mxu0 %v5046
        %6520 = vmatpush1.bf16.msra.mxu0 %v5045
        %6521 = vmatprep.subr.bf16.mxu0 %v5054
        %6522 = vmatpush1.bf16.msra.mxu0 %v5053
        %6523 = vmatprep.subr.bf16.mxu0 %v5062
        %6524 = vmatpush1.bf16.msra.mxu0 %v5061
        %6525 = vmatprep.subr.bf16.mxu0 %v5070
        %6526 = vmatpush1.bf16.msra.mxu0 %v5069
        %6527 = vmatprep.subr.bf16.mxu0 %v5078
        %6528 = vmatpush1.bf16.msra.mxu0 %v5077
        %6529 = vmatprep.subr.bf16.mxu0 %v5086
        %6530 = vmatpush1.bf16.msra.mxu0 %v5085
        %6531 = vmatprep.subr.bf16.mxu0 %v5094
        %6532 = vmatpush1.bf16.msra.mxu0 %v5093
        %6533 = vmatprep.subr.bf16.mxu0 %v5102
        %6534 = vmatpush1.bf16.msra.mxu0 %v5101
        %6535 = vmatprep.subr.bf16.mxu0 %v5110
        %6536 = vmatpush1.bf16.msra.mxu0 %v5109
        %6537 = vmatprep.subr.bf16.mxu0 %v5118
        %6538 = vmatpush1.bf16.msra.mxu0 %v5117
        %6539 = vmatprep.mubr.bf16.mxu0 %v2936
        %6540 = vmatmul.mubr.bf16.gmra.mrb[0].mxu0 %v2935
        %v6541 = vpop.f32.mrb[0].mxu0
        %v6542 = vadd.f32 0.0, %v6541
        %v6543 = vpop.f32.mrb[0].mxu0
        %v6544 = vadd.f32 0.0, %v6543
        %v6545 = vpop.f32.mrb[0].mxu0
        %v6546 = vpop.f32.mrb[0].mxu0
        %6547 = vdwg.mxu0
        %6548 = vmatprep.subr.bf16.mxu0 %v5126
        %6549 = vmatpush1.bf16.msra.mxu0 %v5125
        %6550 = vmatprep.subr.bf16.mxu0 %v5134
        %6551 = vmatpush1.bf16.msra.mxu0 %v5133
        %6552 = vmatprep.subr.bf16.mxu0 %v5142
        %6553 = vmatpush1.bf16.msra.mxu0 %v5141
        %6554 = vmatprep.subr.bf16.mxu0 %v5150
        %6555 = vmatpush1.bf16.msra.mxu0 %v5149
        %6556 = vmatprep.subr.bf16.mxu0 %v5158
        %6557 = vmatpush1.bf16.msra.mxu0 %v5157
        %6558 = vmatprep.subr.bf16.mxu0 %v5166
        %6559 = vmatpush1.bf16.msra.mxu0 %v5165
        %6560 = vmatprep.subr.bf16.mxu0 %v5174
        %6561 = vmatpush1.bf16.msra.mxu0 %v5173
        %6562 = vmatprep.subr.bf16.mxu0 %v5182
        %6563 = vmatpush1.bf16.msra.mxu0 %v5181
        %6564 = vmatprep.subr.bf16.mxu0 %v5190
        %6565 = vmatpush1.bf16.msra.mxu0 %v5189
        %6566 = vmatprep.subr.bf16.mxu0 %v5198
        %6567 = vmatpush1.bf16.msra.mxu0 %v5197
        %6568 = vmatprep.subr.bf16.mxu0 %v5206
        %6569 = vmatpush1.bf16.msra.mxu0 %v5205
        %6570 = vmatprep.subr.bf16.mxu0 %v5214
        %6571 = vmatpush1.bf16.msra.mxu0 %v5213
        %6572 = vmatprep.subr.bf16.mxu0 %v5222
        %6573 = vmatpush1.bf16.msra.mxu0 %v5221
        %6574 = vmatprep.subr.bf16.mxu0 %v5230
        %6575 = vmatpush1.bf16.msra.mxu0 %v5229
        %6576 = vmatprep.subr.bf16.mxu0 %v5238
        %6577 = vmatpush1.bf16.msra.mxu0 %v5237
        %6578 = vmatprep.subr.bf16.mxu0 %v5246
        %6579 = vmatpush1.bf16.msra.mxu0 %v5245
        %6580 = vmatprep.mubr.bf16.mxu0 %v2938
        %6581 = vmatmul.mubr.bf16.gmra.mrb[0].mxu0 %v2937
        %v6582 = vpop.f32.mrb[0].mxu0
        %v6583 = vadd.f32 %v6542, %v6582
        %v6584 = vpop.f32.mrb[0].mxu0
        %v6585 = vadd.f32 %v6544, %v6584
        %v6586 = vpop.f32.mrb[0].mxu0
        %v6587 = vpop.f32.mrb[0].mxu0
        %6588 = vdwg.mxu0
        %6589 = vmatprep.subr.bf16.mxu0 %v5254
        %6590 = vmatpush1.bf16.msra.mxu0 %v5253
        %6591 = vmatprep.subr.bf16.mxu0 %v5262
        %6592 = vmatpush1.bf16.msra.mxu0 %v5261
        %6593 = vmatprep.subr.bf16.mxu0 %v5270
        %6594 = vmatpush1.bf16.msra.mxu0 %v5269
        %6595 = vmatprep.subr.bf16.mxu0 %v5278
        %6596 = vmatpush1.bf16.msra.mxu0 %v5277
        %6597 = vmatprep.subr.bf16.mxu0 %v5286
        %6598 = vmatpush1.bf16.msra.mxu0 %v5285
        %6599 = vmatprep.subr.bf16.mxu0 %v5294
        %6600 = vmatpush1.bf16.msra.mxu0 %v5293
        %6601 = vmatprep.subr.bf16.mxu0 %v5302
        %6602 = vmatpush1.bf16.msra.mxu0 %v5301
        %6603 = vmatprep.subr.bf16.mxu0 %v5310
        %6604 = vmatpush1.bf16.msra.mxu0 %v5309
        %6605 = vmatprep.subr.bf16.mxu0 %v5318
        %6606 = vmatpush1.bf16.msra.mxu0 %v5317
        %6607 = vmatprep.subr.bf16.mxu0 %v5326
        %6608 = vmatpush1.bf16.msra.mxu0 %v5325
        %6609 = vmatprep.subr.bf16.mxu0 %v5334
        %6610 = vmatpush1.bf16.msra.mxu0 %v5333
        %6611 = vmatprep.subr.bf16.mxu0 %v5342
        %6612 = vmatpush1.bf16.msra.mxu0 %v5341
        %6613 = vmatprep.subr.bf16.mxu0 %v5350
        %6614 = vmatpush1.bf16.msra.mxu0 %v5349
        %6615 = vmatprep.subr.bf16.mxu0 %v5358
        %6616 = vmatpush1.bf16.msra.mxu0 %v5357
        %6617 = vmatprep.subr.bf16.mxu0 %v5366
        %6618 = vmatpush1.bf16.msra.mxu0 %v5365
        %6619 = vmatprep.subr.bf16.mxu0 %v5374
        %6620 = vmatpush1.bf16.msra.mxu0 %v5373
        %6621 = vmatprep.mubr.bf16.mxu0 %v2940
        %6622 = vmatmul.mubr.bf16.gmra.mrb[0].mxu0 %v2939
        %v6623 = vpop.f32.mrb[0].mxu0
        %v6624 = vadd.f32 %v6583, %v6623
        %v6625 = vpop.f32.mrb[0].mxu0
        %v6626 = vadd.f32 %v6585, %v6625
        %v6627 = vpop.f32.mrb[0].mxu0
        %v6628 = vpop.f32.mrb[0].mxu0
        %6629 = vdwg.mxu0
        %6630 = vmatprep.subr.bf16.mxu0 %v5382
        %6631 = vmatpush1.bf16.msra.mxu0 %v5381
        %6632 = vmatprep.subr.bf16.mxu0 %v5390
        %6633 = vmatpush1.bf16.msra.mxu0 %v5389
        %6634 = vmatprep.subr.bf16.mxu0 %v5398
        %6635 = vmatpush1.bf16.msra.mxu0 %v5397
        %6636 = vmatprep.subr.bf16.mxu0 %v5406
        %6637 = vmatpush1.bf16.msra.mxu0 %v5405
        %6638 = vmatprep.subr.bf16.mxu0 %v5414
        %6639 = vmatpush1.bf16.msra.mxu0 %v5413
        %6640 = vmatprep.subr.bf16.mxu0 %v5422
        %6641 = vmatpush1.bf16.msra.mxu0 %v5421
        %6642 = vmatprep.subr.bf16.mxu0 %v5430
        %6643 = vmatpush1.bf16.msra.mxu0 %v5429
        %6644 = vmatprep.subr.bf16.mxu0 %v5438
        %6645 = vmatpush1.bf16.msra.mxu0 %v5437
        %6646 = vmatprep.subr.bf16.mxu0 %v5446
        %6647 = vmatpush1.bf16.msra.mxu0 %v5445
        %6648 = vmatprep.subr.bf16.mxu0 %v5454
        %6649 = vmatpush1.bf16.msra.mxu0 %v5453
        %6650 = vmatprep.subr.bf16.mxu0 %v5462
        %6651 = vmatpush1.bf16.msra.mxu0 %v5461
        %6652 = vmatprep.subr.bf16.mxu0 %v5470
        %6653 = vmatpush1.bf16.msra.mxu0 %v5469
        %6654 = vmatprep.subr.bf16.mxu0 %v5478
        %6655 = vmatpush1.bf16.msra.mxu0 %v5477
        %6656 = vmatprep.subr.bf16.mxu0 %v5486
        %6657 = vmatpush1.bf16.msra.mxu0 %v5485
        %6658 = vmatprep.subr.bf16.mxu0 %v5494
        %6659 = vmatpush1.bf16.msra.mxu0 %v5493
        %6660 = vmatprep.subr.bf16.mxu0 %v5502
        %6661 = vmatpush1.bf16.msra.mxu0 %v5501
        %6662 = vmatprep.mubr.bf16.mxu0 %v2942
        %6663 = vmatmul.mubr.bf16.gmra.mrb[0].mxu0 %v2941
        %v6664 = vpop.f32.mrb[0].mxu0
        %v6665 = vadd.f32 %v6624, %v6664
        %v6666 = vpop.f32.mrb[0].mxu0
        %v6667 = vadd.f32 %v6626, %v6666
        %v6668 = vpop.f32.mrb[0].mxu0
        %v6669 = vpop.f32.mrb[0].mxu0
        %6670 = vdwg.mxu0
        %v6671 = vld [vmem:[%s15] sm:$0xf]
        %v6672 = vld [vmem:[%s15 + $0x4] sm:$0xf]
        %v6673 = vpack.c.bf16 %v6173, %v6173
        %v6674 = vpack.c.bf16 %v6175, %v6175
        %v6675 = vpack.c.bf16 %v6337, %v6337
        %v6676 = vpack.c.bf16 %v6339, %v6339
        %v6677 = vpack.c.bf16 %v6501, %v6501
        %v6678 = vpack.c.bf16 %v6503, %v6503
        %v6679 = vpack.c.bf16 %v6665, %v6665
        %v6680 = vpack.c.bf16 %v6667, %v6667
        %v6683 = vunpack.c.l.b16 %v6671
        %v6684 = vunpack.c.l.b16 %v6672
        %v6685 = vpack.c.b16 %v6684, %v6683
        %v6687 = vsel %vm1203, %v6685, 0
        %vm6689 = vcmask 1041408
        %v6691 = vsel %vm6689, %v6673, 0
        %v6694 = vsel %vm6689, %v6674, 0
        %v6697 = vsel %vm6689, %v6675, 0
        %v6700 = vsel %vm6689, %v6676, 0
        %v6703 = vsel %vm6689, %v6677, 0
        %v6706 = vsel %vm6689, %v6678, 0
        %v6709 = vsel %vm6689, %v6679, 0
        %v6712 = vsel %vm6689, %v6680, 0
        %6714 = vmatprep.subr.bf16.mxu0 %v6694
        %6715 = vmatpush1.bf16.msra.mxu0 %v6691
        %6716 = vmatprep.subr.bf16.mxu0 0
        %6717 = vmatpush1.bf16.msra.mxu0 0
        %6718 = vmatprep.subr.bf16.mxu0 0
        %6719 = vmatpush1.bf16.msra.mxu0 0
        %6720 = vmatprep.subr.bf16.mxu0 0
        %6721 = vmatpush1.bf16.msra.mxu0 0
        %6722 = vmatprep.subr.bf16.mxu0 0
        %6723 = vmatpush1.bf16.msra.mxu0 0
        %6724 = vmatprep.subr.bf16.mxu0 0
        %6725 = vmatpush1.bf16.msra.mxu0 0
        %6726 = vmatprep.subr.bf16.mxu0 0
        %6727 = vmatpush1.bf16.msra.mxu0 0
        %6728 = vmatprep.subr.bf16.mxu0 0
        %6729 = vmatpush1.bf16.msra.mxu0 0
        %6730 = vmatprep.subr.bf16.mxu0 0
        %6731 = vmatpush1.bf16.msra.mxu0 0
        %6732 = vmatprep.subr.bf16.mxu0 0
        %6733 = vmatpush1.bf16.msra.mxu0 0
        %6734 = vmatprep.subr.bf16.mxu0 0
        %6735 = vmatpush1.bf16.msra.mxu0 0
        %6736 = vmatprep.subr.bf16.mxu0 0
        %6737 = vmatpush1.bf16.msra.mxu0 0
        %6738 = vmatprep.subr.bf16.mxu0 0
        %6739 = vmatpush1.bf16.msra.mxu0 0
        %6740 = vmatprep.subr.bf16.mxu0 0
        %6741 = vmatpush1.bf16.msra.mxu0 0
        %6742 = vmatprep.subr.bf16.mxu0 0
        %6743 = vmatpush1.bf16.msra.mxu0 0
        %6744 = vmatprep.subr.bf16.mxu0 0
        %6745 = vmatpush1.bf16.msra.mxu0 0
        %6746 = vmatprep.mubr.bf16.mxu0 0
        %6747 = vmatmul.mubr.bf16.gmra.mrb[0].mxu0 %v6687
        %v6748 = vpop.f32.mrb[0].mxu0
        %v6749 = vadd.f32 0.0, %v6748
        %v6750 = vpop.f32.mrb[0].mxu0
        %v6751 = vadd.f32 0.0, %v6750
        %v6752 = vpop.f32.mrb[0].mxu0
        %v6753 = vadd.f32 0.0, %v6752
        %v6754 = vpop.f32.mrb[0].mxu0
        %v6755 = vadd.f32 0.0, %v6754
        %6756 = vdwg.mxu0
        %6757 = vmatprep.subr.bf16.mxu0 %v6700
        %6758 = vmatpush1.bf16.msra.mxu0 %v6697
        %6759 = vmatprep.subr.bf16.mxu0 0
        %6760 = vmatpush1.bf16.msra.mxu0 0
        %6761 = vmatprep.subr.bf16.mxu0 0
        %6762 = vmatpush1.bf16.msra.mxu0 0
        %6763 = vmatprep.subr.bf16.mxu0 0
        %6764 = vmatpush1.bf16.msra.mxu0 0
        %6765 = vmatprep.subr.bf16.mxu0 0
        %6766 = vmatpush1.bf16.msra.mxu0 0
        %6767 = vmatprep.subr.bf16.mxu0 0
        %6768 = vmatpush1.bf16.msra.mxu0 0
        %6769 = vmatprep.subr.bf16.mxu0 0
        %6770 = vmatpush1.bf16.msra.mxu0 0
        %6771 = vmatprep.subr.bf16.mxu0 0
        %6772 = vmatpush1.bf16.msra.mxu0 0
        %6773 = vmatprep.subr.bf16.mxu0 0
        %6774 = vmatpush1.bf16.msra.mxu0 0
        %6775 = vmatprep.subr.bf16.mxu0 0
        %6776 = vmatpush1.bf16.msra.mxu0 0
        %6777 = vmatprep.subr.bf16.mxu0 0
        %6778 = vmatpush1.bf16.msra.mxu0 0
        %6779 = vmatprep.subr.bf16.mxu0 0
        %6780 = vmatpush1.bf16.msra.mxu0 0
        %6781 = vmatprep.subr.bf16.mxu0 0
        %6782 = vmatpush1.bf16.msra.mxu0 0
        %6783 = vmatprep.subr.bf16.mxu0 0
        %6784 = vmatpush1.bf16.msra.mxu0 0
        %6785 = vmatprep.subr.bf16.mxu0 0
        %6786 = vmatpush1.bf16.msra.mxu0 0
        %6787 = vmatprep.subr.bf16.mxu0 0
        %6788 = vmatpush1.bf16.msra.mxu0 0
        %6789 = vmatprep.mubr.bf16.mxu0 0
        %6790 = vmatmul.mubr.bf16.gmra.mrb[0].mxu0 %v6687
        %v6791 = vpop.f32.mrb[0].mxu0
        %v6792 = vadd.f32 0.0, %v6791
        %v6793 = vpop.f32.mrb[0].mxu0
        %v6794 = vadd.f32 0.0, %v6793
        %v6795 = vpop.f32.mrb[0].mxu0
        %v6796 = vadd.f32 0.0, %v6795
        %v6797 = vpop.f32.mrb[0].mxu0
        %v6798 = vadd.f32 0.0, %v6797
        %6799 = vdwg.mxu0
        %6800 = vmatprep.subr.bf16.mxu0 %v6706
        %6801 = vmatpush1.bf16.msra.mxu0 %v6703
        %6802 = vmatprep.subr.bf16.mxu0 0
        %6803 = vmatpush1.bf16.msra.mxu0 0
        %6804 = vmatprep.subr.bf16.mxu0 0
        %6805 = vmatpush1.bf16.msra.mxu0 0
        %6806 = vmatprep.subr.bf16.mxu0 0
        %6807 = vmatpush1.bf16.msra.mxu0 0
        %6808 = vmatprep.subr.bf16.mxu0 0
        %6809 = vmatpush1.bf16.msra.mxu0 0
        %6810 = vmatprep.subr.bf16.mxu0 0
        %6811 = vmatpush1.bf16.msra.mxu0 0
        %6812 = vmatprep.subr.bf16.mxu0 0
        %6813 = vmatpush1.bf16.msra.mxu0 0
        %6814 = vmatprep.subr.bf16.mxu0 0
        %6815 = vmatpush1.bf16.msra.mxu0 0
        %6816 = vmatprep.subr.bf16.mxu0 0
        %6817 = vmatpush1.bf16.msra.mxu0 0
        %6818 = vmatprep.subr.bf16.mxu0 0
        %6819 = vmatpush1.bf16.msra.mxu0 0
        %6820 = vmatprep.subr.bf16.mxu0 0
        %6821 = vmatpush1.bf16.msra.mxu0 0
        %6822 = vmatprep.subr.bf16.mxu0 0
        %6823 = vmatpush1.bf16.msra.mxu0 0
        %6824 = vmatprep.subr.bf16.mxu0 0
        %6825 = vmatpush1.bf16.msra.mxu0 0
        %6826 = vmatprep.subr.bf16.mxu0 0
        %6827 = vmatpush1.bf16.msra.mxu0 0
        %6828 = vmatprep.subr.bf16.mxu0 0
        %6829 = vmatpush1.bf16.msra.mxu0 0
        %6830 = vmatprep.subr.bf16.mxu0 0
        %6831 = vmatpush1.bf16.msra.mxu0 0
        %6832 = vmatprep.mubr.bf16.mxu0 0
        %6833 = vmatmul.mubr.bf16.gmra.mrb[0].mxu0 %v6687
        %v6834 = vpop.f32.mrb[0].mxu0
        %v6835 = vadd.f32 0.0, %v6834
        %v6836 = vpop.f32.mrb[0].mxu0
        %v6837 = vadd.f32 0.0, %v6836
        %v6838 = vpop.f32.mrb[0].mxu0
        %v6839 = vadd.f32 0.0, %v6838
        %v6840 = vpop.f32.mrb[0].mxu0
        %v6841 = vadd.f32 0.0, %v6840
        %6842 = vdwg.mxu0
        %6843 = vmatprep.subr.bf16.mxu0 %v6712
        %6844 = vmatpush1.bf16.msra.mxu0 %v6709
        %6845 = vmatprep.subr.bf16.mxu0 0
        %6846 = vmatpush1.bf16.msra.mxu0 0
        %6847 = vmatprep.subr.bf16.mxu0 0
        %6848 = vmatpush1.bf16.msra.mxu0 0
        %6849 = vmatprep.subr.bf16.mxu0 0
        %6850 = vmatpush1.bf16.msra.mxu0 0
        %6851 = vmatprep.subr.bf16.mxu0 0
        %6852 = vmatpush1.bf16.msra.mxu0 0
        %6853 = vmatprep.subr.bf16.mxu0 0
        %6854 = vmatpush1.bf16.msra.mxu0 0
        %6855 = vmatprep.subr.bf16.mxu0 0
        %6856 = vmatpush1.bf16.msra.mxu0 0
        %6857 = vmatprep.subr.bf16.mxu0 0
        %6858 = vmatpush1.bf16.msra.mxu0 0
        %6859 = vmatprep.subr.bf16.mxu0 0
        %6860 = vmatpush1.bf16.msra.mxu0 0
        %6861 = vmatprep.subr.bf16.mxu0 0
        %6862 = vmatpush1.bf16.msra.mxu0 0
        %6863 = vmatprep.subr.bf16.mxu0 0
        %6864 = vmatpush1.bf16.msra.mxu0 0
        %6865 = vmatprep.subr.bf16.mxu0 0
        %6866 = vmatpush1.bf16.msra.mxu0 0
        %6867 = vmatprep.subr.bf16.mxu0 0
        %6868 = vmatpush1.bf16.msra.mxu0 0
        %6869 = vmatprep.subr.bf16.mxu0 0
        %6870 = vmatpush1.bf16.msra.mxu0 0
        %6871 = vmatprep.subr.bf16.mxu0 0
        %6872 = vmatpush1.bf16.msra.mxu0 0
        %6873 = vmatprep.subr.bf16.mxu0 0
        %6874 = vmatpush1.bf16.msra.mxu0 0
        %6875 = vmatprep.mubr.bf16.mxu0 0
        %6876 = vmatmul.mubr.bf16.gmra.mrb[0].mxu0 %v6687
        %v6877 = vpop.f32.mrb[0].mxu0
        %v6878 = vadd.f32 0.0, %v6877
        %v6879 = vpop.f32.mrb[0].mxu0
        %v6880 = vadd.f32 0.0, %v6879
        %v6881 = vpop.f32.mrb[0].mxu0
        %v6882 = vadd.f32 0.0, %v6881
        %v6883 = vpop.f32.mrb[0].mxu0
        %v6884 = vadd.f32 0.0, %v6883
        %6885 = vdwg.mxu0
        %v6886 = vld [vmem:[#allocation14] sm:$0xff]
        %v6888 = vlaneseq
        %v6889 = vshrl.u32 %v6888, 7
        %v6890 = vsub.s32 0, %v6889
        %v6891 = vrot.slane %v6886, %v6890
        %v6892 = vlaneseq
        %v6893 = vshrl.u32 %v6892, 7
        %v6894 = vsub.s32 1, %v6893
        %v6895 = vrot.slane %v6886, %v6894
        %v6896 = vlaneseq
        %v6897 = vshrl.u32 %v6896, 7
        %v6898 = vsub.s32 2, %v6897
        %v6899 = vrot.slane %v6886, %v6898
        %v6900 = vlaneseq
        %v6901 = vshrl.u32 %v6900, 7
        %v6902 = vsub.s32 3, %v6901
        %v6903 = vrot.slane %v6886, %v6902
        %v6904 = vlaneseq
        %v6905 = vshrl.u32 %v6904, 7
        %v6906 = vsub.s32 4, %v6905
        %v6907 = vrot.slane %v6886, %v6906
        %v6908 = vlaneseq
        %v6909 = vshrl.u32 %v6908, 7
        %v6910 = vsub.s32 5, %v6909
        %v6911 = vrot.slane %v6886, %v6910
        %v6912 = vlaneseq
        %v6913 = vshrl.u32 %v6912, 7
        %v6914 = vsub.s32 6, %v6913
        %v6915 = vrot.slane %v6886, %v6914
        %v6916 = vlaneseq
        %v6917 = vshrl.u32 %v6916, 7
        %v6918 = vsub.s32 7, %v6917
        %v6919 = vrot.slane %v6886, %v6918
        %v6928 = vmul.f32 %v6749, %v6891
        %v6929 = vmul.f32 %v6751, %v6895
        %v6930 = vmul.f32 %v6792, %v6899
        %v6931 = vmul.f32 %v6794, %v6903
        %v6932 = vmul.f32 %v6835, %v6907
        %v6933 = vmul.f32 %v6837, %v6911
        %v6934 = vmul.f32 %v6878, %v6915
        %v6935 = vmul.f32 %v6880, %v6919
        %6937 = vrot.lane.b32.xlu0 %v6880, 1
        %v6938 = vpop.permute.xlu0 %6937
        %6947 = vrot.lane.b32.xlu0 %v6749, 1
        %v6948 = vpop.permute.xlu0 %6947
        %6949 = vrot.lane.b32.xlu0 %v6751, 1
        %v6950 = vpop.permute.xlu0 %6949
        %6951 = vrot.lane.b32.xlu0 %v6792, 1
        %v6952 = vpop.permute.xlu0 %6951
        %6953 = vrot.lane.b32.xlu0 %v6794, 1
        %v6954 = vpop.permute.xlu0 %6953
        %6955 = vrot.lane.b32.xlu0 %v6835, 1
        %v6956 = vpop.permute.xlu0 %6955
        %6957 = vrot.lane.b32.xlu0 %v6837, 1
        %v6958 = vpop.permute.xlu0 %6957
        %6959 = vrot.lane.b32.xlu0 %v6878, 1
        %v6960 = vpop.permute.xlu0 %6959
        %v6961 = vsel %vm1174, %v6948, %v6950
        %v6962 = vsel %vm1174, %v6950, %v6952
        %v6963 = vsel %vm1174, %v6952, %v6954
        %v6964 = vsel %vm1174, %v6954, %v6956
        %v6965 = vsel %vm1174, %v6956, %v6958
        %v6966 = vsel %vm1174, %v6958, %v6960
        %v6967 = vsel %vm1174, %v6960, %v6938
        %v6976 = vsel %vm1174, %v6938, %v6948
        %s6977 = scalar_lea.vmem [#allocation14], 8
        %v6978 = vld [vmem:[%s6977] sm:$0xff]
        %v6980 = vlaneseq
        %v6981 = vshrl.u32 %v6980, 7
        %v6982 = vsub.s32 0, %v6981
        %v6983 = vrot.slane %v6978, %v6982
        %v6984 = vlaneseq
        %v6985 = vshrl.u32 %v6984, 7
        %v6986 = vsub.s32 1, %v6985
        %v6987 = vrot.slane %v6978, %v6986
        %v6988 = vlaneseq
        %v6989 = vshrl.u32 %v6988, 7
        %v6990 = vsub.s32 2, %v6989
        %v6991 = vrot.slane %v6978, %v6990
        %v6992 = vlaneseq
        %v6993 = vshrl.u32 %v6992, 7
        %v6994 = vsub.s32 3, %v6993
        %v6995 = vrot.slane %v6978, %v6994
        %v6996 = vlaneseq
        %v6997 = vshrl.u32 %v6996, 7
        %v6998 = vsub.s32 4, %v6997
        %v6999 = vrot.slane %v6978, %v6998
        %v7000 = vlaneseq
        %v7001 = vshrl.u32 %v7000, 7
        %v7002 = vsub.s32 5, %v7001
        %v7003 = vrot.slane %v6978, %v7002
        %v7004 = vlaneseq
        %v7005 = vshrl.u32 %v7004, 7
        %v7006 = vsub.s32 6, %v7005
        %v7007 = vrot.slane %v6978, %v7006
        %v7008 = vlaneseq
        %v7009 = vshrl.u32 %v7008, 7
        %v7010 = vsub.s32 7, %v7009
        %v7011 = vrot.slane %v6978, %v7010
        %v7020 = vmul.f32 %v6976, %v6983
        %v7021 = vmul.f32 %v6961, %v6987
        %v7022 = vmul.f32 %v6962, %v6991
        %v7023 = vmul.f32 %v6963, %v6995
        %v7024 = vmul.f32 %v6964, %v6999
        %v7025 = vmul.f32 %v6965, %v7003
        %v7026 = vmul.f32 %v6966, %v7007
        %v7027 = vmul.f32 %v6967, %v7011
        %v7036 = vrot.slane %v7020, 1
        %v7037 = vrot.slane %v7021, 1
        %v7038 = vrot.slane %v7022, 1
        %v7039 = vrot.slane %v7023, 1
        %v7040 = vrot.slane %v7024, 1
        %v7041 = vrot.slane %v7025, 1
        %v7042 = vrot.slane %v7026, 1
        %v7043 = vrot.slane %v7027, 1
        %v7052 = vadd.f32 %v6928, %v7036
        %v7053 = vadd.f32 %v6929, %v7037
        %v7054 = vadd.f32 %v6930, %v7038
        %v7055 = vadd.f32 %v6931, %v7039
        %v7056 = vadd.f32 %v6932, %v7040
        %v7057 = vadd.f32 %v6933, %v7041
        %v7058 = vadd.f32 %v6934, %v7042
        %v7059 = vadd.f32 %v6935, %v7043
        %7060 = vrot.lane.b32.xlu0 %v6880, 32
        %v7061 = vpop.permute.xlu0 %7060
        %7063 = vrot.lane.b32.xlu0 %v6749, 32
        %v7064 = vpop.permute.xlu0 %7063
        %7065 = vrot.lane.b32.xlu0 %v6751, 32
        %v7066 = vpop.permute.xlu0 %7065
        %7067 = vrot.lane.b32.xlu0 %v6792, 32
        %v7068 = vpop.permute.xlu0 %7067
        %7069 = vrot.lane.b32.xlu0 %v6794, 32
        %v7070 = vpop.permute.xlu0 %7069
        %7071 = vrot.lane.b32.xlu0 %v6835, 32
        %v7072 = vpop.permute.xlu0 %7071
        %7073 = vrot.lane.b32.xlu0 %v6837, 32
        %v7074 = vpop.permute.xlu0 %7073
        %7075 = vrot.lane.b32.xlu0 %v6878, 32
        %v7076 = vpop.permute.xlu0 %7075
        %v7077 = vsel %vm941, %v7064, %v7066
        %v7078 = vsel %vm941, %v7066, %v7068
        %v7079 = vsel %vm941, %v7068, %v7070
        %v7080 = vsel %vm941, %v7070, %v7072
        %v7081 = vsel %vm941, %v7072, %v7074
        %v7082 = vsel %vm941, %v7074, %v7076
        %v7083 = vsel %vm941, %v7076, %v7061
        %v7092 = vsel %vm941, %v7061, %v7064
        %s7093 = scalar_lea.vmem [#allocation14], 16
        %v7094 = vld [vmem:[%s7093] sm:$0xff]
        %v7096 = vlaneseq
        %v7097 = vshrl.u32 %v7096, 7
        %v7098 = vsub.s32 0, %v7097
        %v7099 = vrot.slane %v7094, %v7098
        %v7100 = vlaneseq
        %v7101 = vshrl.u32 %v7100, 7
        %v7102 = vsub.s32 1, %v7101
        %v7103 = vrot.slane %v7094, %v7102
        %v7104 = vlaneseq
        %v7105 = vshrl.u32 %v7104, 7
        %v7106 = vsub.s32 2, %v7105
        %v7107 = vrot.slane %v7094, %v7106
        %v7108 = vlaneseq
        %v7109 = vshrl.u32 %v7108, 7
        %v7110 = vsub.s32 3, %v7109
        %v7111 = vrot.slane %v7094, %v7110
        %v7112 = vlaneseq
        %v7113 = vshrl.u32 %v7112, 7
        %v7114 = vsub.s32 4, %v7113
        %v7115 = vrot.slane %v7094, %v7114
        %v7116 = vlaneseq
        %v7117 = vshrl.u32 %v7116, 7
        %v7118 = vsub.s32 5, %v7117
        %v7119 = vrot.slane %v7094, %v7118
        %v7120 = vlaneseq
        %v7121 = vshrl.u32 %v7120, 7
        %v7122 = vsub.s32 6, %v7121
        %v7123 = vrot.slane %v7094, %v7122
        %v7124 = vlaneseq
        %v7125 = vshrl.u32 %v7124, 7
        %v7126 = vsub.s32 7, %v7125
        %v7127 = vrot.slane %v7094, %v7126
        %v7136 = vmul.f32 %v7092, %v7099
        %v7137 = vmul.f32 %v7077, %v7103
        %v7138 = vmul.f32 %v7078, %v7107
        %v7139 = vmul.f32 %v7079, %v7111
        %v7140 = vmul.f32 %v7080, %v7115
        %v7141 = vmul.f32 %v7081, %v7119
        %v7142 = vmul.f32 %v7082, %v7123
        %v7143 = vmul.f32 %v7083, %v7127
        %v7152 = vrot.slane %v7136, 2
        %v7153 = vrot.slane %v7137, 2
        %v7154 = vrot.slane %v7138, 2
        %v7155 = vrot.slane %v7139, 2
        %v7156 = vrot.slane %v7140, 2
        %v7157 = vrot.slane %v7141, 2
        %v7158 = vrot.slane %v7142, 2
        %v7159 = vrot.slane %v7143, 2
        %v7168 = vadd.f32 %v7052, %v7152
        %v7169 = vadd.f32 %v7053, %v7153
        %v7170 = vadd.f32 %v7054, %v7154
        %v7171 = vadd.f32 %v7055, %v7155
        %v7172 = vadd.f32 %v7056, %v7156
        %v7173 = vadd.f32 %v7057, %v7157
        %v7174 = vadd.f32 %v7058, %v7158
        %v7175 = vadd.f32 %v7059, %v7159
        %7176 = vrot.lane.b32.xlu0 %v6880, 33
        %v7177 = vpop.permute.xlu0 %7176
        %7179 = vrot.lane.b32.xlu0 %v6749, 33
        %v7180 = vpop.permute.xlu0 %7179
        %7181 = vrot.lane.b32.xlu0 %v6751, 33
        %v7182 = vpop.permute.xlu0 %7181
        %7183 = vrot.lane.b32.xlu0 %v6792, 33
        %v7184 = vpop.permute.xlu0 %7183
        %7185 = vrot.lane.b32.xlu0 %v6794, 33
        %v7186 = vpop.permute.xlu0 %7185
        %7187 = vrot.lane.b32.xlu0 %v6835, 33
        %v7188 = vpop.permute.xlu0 %7187
        %7189 = vrot.lane.b32.xlu0 %v6837, 33
        %v7190 = vpop.permute.xlu0 %7189
        %7191 = vrot.lane.b32.xlu0 %v6878, 33
        %v7192 = vpop.permute.xlu0 %7191
        %vm7193 = vcmask 269312
        %v7194 = vsel %vm7193, %v7180, %v7182
        %v7195 = vsel %vm7193, %v7182, %v7184
        %v7196 = vsel %vm7193, %v7184, %v7186
        %v7197 = vsel %vm7193, %v7186, %v7188
        %v7198 = vsel %vm7193, %v7188, %v7190
        %v7199 = vsel %vm7193, %v7190, %v7192
        %v7200 = vsel %vm7193, %v7192, %v7177
        %v7209 = vsel %vm7193, %v7177, %v7180
        %s7210 = scalar_lea.vmem [#allocation14], 24
        %v7211 = vld [vmem:[%s7210] sm:$0xff]
        %v7213 = vlaneseq
        %v7214 = vshrl.u32 %v7213, 7
        %v7215 = vsub.s32 0, %v7214
        %v7216 = vrot.slane %v7211, %v7215
        %v7217 = vlaneseq
        %v7218 = vshrl.u32 %v7217, 7
        %v7219 = vsub.s32 1, %v7218
        %v7220 = vrot.slane %v7211, %v7219
        %v7221 = vlaneseq
        %v7222 = vshrl.u32 %v7221, 7
        %v7223 = vsub.s32 2, %v7222
        %v7224 = vrot.slane %v7211, %v7223
        %v7225 = vlaneseq
        %v7226 = vshrl.u32 %v7225, 7
        %v7227 = vsub.s32 3, %v7226
        %v7228 = vrot.slane %v7211, %v7227
        %v7229 = vlaneseq
        %v7230 = vshrl.u32 %v7229, 7
        %v7231 = vsub.s32 4, %v7230
        %v7232 = vrot.slane %v7211, %v7231
        %v7233 = vlaneseq
        %v7234 = vshrl.u32 %v7233, 7
        %v7235 = vsub.s32 5, %v7234
        %v7236 = vrot.slane %v7211, %v7235
        %v7237 = vlaneseq
        %v7238 = vshrl.u32 %v7237, 7
        %v7239 = vsub.s32 6, %v7238
        %v7240 = vrot.slane %v7211, %v7239
        %v7241 = vlaneseq
        %v7242 = vshrl.u32 %v7241, 7
        %v7243 = vsub.s32 7, %v7242
        %v7244 = vrot.slane %v7211, %v7243
        %v7253 = vmul.f32 %v7209, %v7216
        %v7254 = vmul.f32 %v7194, %v7220
        %v7255 = vmul.f32 %v7195, %v7224
        %v7256 = vmul.f32 %v7196, %v7228
        %v7257 = vmul.f32 %v7197, %v7232
        %v7258 = vmul.f32 %v7198, %v7236
        %v7259 = vmul.f32 %v7199, %v7240
        %v7260 = vmul.f32 %v7200, %v7244
        %v7269 = vrot.slane %v7253, 3
        %v7270 = vrot.slane %v7254, 3
        %v7271 = vrot.slane %v7255, 3
        %v7272 = vrot.slane %v7256, 3
        %v7273 = vrot.slane %v7257, 3
        %v7274 = vrot.slane %v7258, 3
        %v7275 = vrot.slane %v7259, 3
        %v7276 = vrot.slane %v7260, 3
        %v7285 = vadd.f32 %v7168, %v7269
        %v7286 = vadd.f32 %v7169, %v7270
        %v7287 = vadd.f32 %v7170, %v7271
        %v7288 = vadd.f32 %v7171, %v7272
        %v7289 = vadd.f32 %v7172, %v7273
        %v7290 = vadd.f32 %v7173, %v7274
        %v7291 = vadd.f32 %v7174, %v7275
        %v7292 = vadd.f32 %v7175, %v7276
        %7293 = vrot.lane.b32.xlu0 %v6749, 127
        %v7294 = vpop.permute.xlu0 %7293
        %7295 = vrot.lane.b32.xlu0 %v6751, 127
        %v7296 = vpop.permute.xlu0 %7295
        %7297 = vrot.lane.b32.xlu0 %v6792, 127
        %v7298 = vpop.permute.xlu0 %7297
        %7299 = vrot.lane.b32.xlu0 %v6794, 127
        %v7300 = vpop.permute.xlu0 %7299
        %7301 = vrot.lane.b32.xlu0 %v6835, 127
        %v7302 = vpop.permute.xlu0 %7301
        %7303 = vrot.lane.b32.xlu0 %v6837, 127
        %v7304 = vpop.permute.xlu0 %7303
        %7305 = vrot.lane.b32.xlu0 %v6878, 127
        %v7306 = vpop.permute.xlu0 %7305
        %7307 = vrot.lane.b32.xlu0 %v6880, 127
        %v7308 = vpop.permute.xlu0 %7307
        %v7309 = vsel %vm2588, %v7294, %v7296
        %v7310 = vsel %vm2588, %v7296, %v7298
        %v7311 = vsel %vm2588, %v7298, %v7300
        %v7312 = vsel %vm2588, %v7300, %v7302
        %v7313 = vsel %vm2588, %v7302, %v7304
        %v7314 = vsel %vm2588, %v7304, %v7306
        %v7315 = vsel %vm2588, %v7306, %v7308
        %v7325 = vsel %vm2588, %v7308, %v7294
        %s7326 = scalar_lea.vmem [#allocation14], 32
        %v7327 = vld [vmem:[%s7326] sm:$0xff]
        %v7329 = vlaneseq
        %v7330 = vshrl.u32 %v7329, 7
        %v7331 = vsub.s32 0, %v7330
        %v7332 = vrot.slane %v7327, %v7331
        %v7333 = vlaneseq
        %v7334 = vshrl.u32 %v7333, 7
        %v7335 = vsub.s32 1, %v7334
        %v7336 = vrot.slane %v7327, %v7335
        %v7337 = vlaneseq
        %v7338 = vshrl.u32 %v7337, 7
        %v7339 = vsub.s32 2, %v7338
        %v7340 = vrot.slane %v7327, %v7339
        %v7341 = vlaneseq
        %v7342 = vshrl.u32 %v7341, 7
        %v7343 = vsub.s32 3, %v7342
        %v7344 = vrot.slane %v7327, %v7343
        %v7345 = vlaneseq
        %v7346 = vshrl.u32 %v7345, 7
        %v7347 = vsub.s32 4, %v7346
        %v7348 = vrot.slane %v7327, %v7347
        %v7349 = vlaneseq
        %v7350 = vshrl.u32 %v7349, 7
        %v7351 = vsub.s32 5, %v7350
        %v7352 = vrot.slane %v7327, %v7351
        %v7353 = vlaneseq
        %v7354 = vshrl.u32 %v7353, 7
        %v7355 = vsub.s32 6, %v7354
        %v7356 = vrot.slane %v7327, %v7355
        %v7357 = vlaneseq
        %v7358 = vshrl.u32 %v7357, 7
        %v7359 = vsub.s32 7, %v7358
        %v7360 = vrot.slane %v7327, %v7359
        %v7369 = vmul.f32 %v7309, %v7332
        %v7370 = vmul.f32 %v7310, %v7336
        %v7371 = vmul.f32 %v7311, %v7340
        %v7372 = vmul.f32 %v7312, %v7344
        %v7373 = vmul.f32 %v7313, %v7348
        %v7374 = vmul.f32 %v7314, %v7352
        %v7375 = vmul.f32 %v7315, %v7356
        %v7376 = vmul.f32 %v7325, %v7360
        %s7377 = scalar_lea.vmem [#allocation14], 40
        %v7378 = vld [vmem:[%s7377] sm:$0xff]
        %v7380 = vlaneseq
        %v7381 = vshrl.u32 %v7380, 7
        %v7382 = vsub.s32 0, %v7381
        %v7383 = vrot.slane %v7378, %v7382
        %v7384 = vlaneseq
        %v7385 = vshrl.u32 %v7384, 7
        %v7386 = vsub.s32 1, %v7385
        %v7387 = vrot.slane %v7378, %v7386
        %v7388 = vlaneseq
        %v7389 = vshrl.u32 %v7388, 7
        %v7390 = vsub.s32 2, %v7389
        %v7391 = vrot.slane %v7378, %v7390
        %v7392 = vlaneseq
        %v7393 = vshrl.u32 %v7392, 7
        %v7394 = vsub.s32 3, %v7393
        %v7395 = vrot.slane %v7378, %v7394
        %v7396 = vlaneseq
        %v7397 = vshrl.u32 %v7396, 7
        %v7398 = vsub.s32 4, %v7397
        %v7399 = vrot.slane %v7378, %v7398
        %v7400 = vlaneseq
        %v7401 = vshrl.u32 %v7400, 7
        %v7402 = vsub.s32 5, %v7401
        %v7403 = vrot.slane %v7378, %v7402
        %v7404 = vlaneseq
        %v7405 = vshrl.u32 %v7404, 7
        %v7406 = vsub.s32 6, %v7405
        %v7407 = vrot.slane %v7378, %v7406
        %v7408 = vlaneseq
        %v7409 = vshrl.u32 %v7408, 7
        %v7410 = vsub.s32 7, %v7409
        %v7411 = vrot.slane %v7378, %v7410
        %v7420 = vmul.f32 %v6749, %v7383
        %v7421 = vmul.f32 %v6751, %v7387
        %v7422 = vmul.f32 %v6792, %v7391
        %v7423 = vmul.f32 %v6794, %v7395
        %v7424 = vmul.f32 %v6835, %v7399
        %v7425 = vmul.f32 %v6837, %v7403
        %v7426 = vmul.f32 %v6878, %v7407
        %v7427 = vmul.f32 %v6880, %v7411
        %v7436 = vrot.slane %v7420, 1
        %v7437 = vrot.slane %v7421, 1
        %v7438 = vrot.slane %v7422, 1
        %v7439 = vrot.slane %v7423, 1
        %v7440 = vrot.slane %v7424, 1
        %v7441 = vrot.slane %v7425, 1
        %v7442 = vrot.slane %v7426, 1
        %v7443 = vrot.slane %v7427, 1
        %v7452 = vadd.f32 %v7369, %v7436
        %v7453 = vadd.f32 %v7370, %v7437
        %v7454 = vadd.f32 %v7371, %v7438
        %v7455 = vadd.f32 %v7372, %v7439
        %v7456 = vadd.f32 %v7373, %v7440
        %v7457 = vadd.f32 %v7374, %v7441
        %v7458 = vadd.f32 %v7375, %v7442
        %v7459 = vadd.f32 %v7376, %v7443
        %7460 = vrot.lane.b32.xlu0 %v6880, 31
        %v7461 = vpop.permute.xlu0 %7460
        %7463 = vrot.lane.b32.xlu0 %v6749, 31
        %v7464 = vpop.permute.xlu0 %7463
        %7465 = vrot.lane.b32.xlu0 %v6751, 31
        %v7466 = vpop.permute.xlu0 %7465
        %7467 = vrot.lane.b32.xlu0 %v6792, 31
        %v7468 = vpop.permute.xlu0 %7467
        %7469 = vrot.lane.b32.xlu0 %v6794, 31
        %v7470 = vpop.permute.xlu0 %7469
        %7471 = vrot.lane.b32.xlu0 %v6835, 31
        %v7472 = vpop.permute.xlu0 %7471
        %7473 = vrot.lane.b32.xlu0 %v6837, 31
        %v7474 = vpop.permute.xlu0 %7473
        %7475 = vrot.lane.b32.xlu0 %v6878, 31
        %v7476 = vpop.permute.xlu0 %7475
        %vm7477 = vcmask 252928
        %v7478 = vsel %vm7477, %v7464, %v7466
        %v7479 = vsel %vm7477, %v7466, %v7468
        %v7480 = vsel %vm7477, %v7468, %v7470
        %v7481 = vsel %vm7477, %v7470, %v7472
        %v7482 = vsel %vm7477, %v7472, %v7474
        %v7483 = vsel %vm7477, %v7474, %v7476
        %v7484 = vsel %vm7477, %v7476, %v7461
        %v7493 = vsel %vm7477, %v7461, %v7464
        %s7494 = scalar_lea.vmem [#allocation14], 48
        %v7495 = vld [vmem:[%s7494] sm:$0xff]
        %v7497 = vlaneseq
        %v7498 = vshrl.u32 %v7497, 7
        %v7499 = vsub.s32 0, %v7498
        %v7500 = vrot.slane %v7495, %v7499
        %v7501 = vlaneseq
        %v7502 = vshrl.u32 %v7501, 7
        %v7503 = vsub.s32 1, %v7502
        %v7504 = vrot.slane %v7495, %v7503
        %v7505 = vlaneseq
        %v7506 = vshrl.u32 %v7505, 7
        %v7507 = vsub.s32 2, %v7506
        %v7508 = vrot.slane %v7495, %v7507
        %v7509 = vlaneseq
        %v7510 = vshrl.u32 %v7509, 7
        %v7511 = vsub.s32 3, %v7510
        %v7512 = vrot.slane %v7495, %v7511
        %v7513 = vlaneseq
        %v7514 = vshrl.u32 %v7513, 7
        %v7515 = vsub.s32 4, %v7514
        %v7516 = vrot.slane %v7495, %v7515
        %v7517 = vlaneseq
        %v7518 = vshrl.u32 %v7517, 7
        %v7519 = vsub.s32 5, %v7518
        %v7520 = vrot.slane %v7495, %v7519
        %v7521 = vlaneseq
        %v7522 = vshrl.u32 %v7521, 7
        %v7523 = vsub.s32 6, %v7522
        %v7524 = vrot.slane %v7495, %v7523
        %v7525 = vlaneseq
        %v7526 = vshrl.u32 %v7525, 7
        %v7527 = vsub.s32 7, %v7526
        %v7528 = vrot.slane %v7495, %v7527
        %v7537 = vmul.f32 %v7493, %v7500
        %v7538 = vmul.f32 %v7478, %v7504
        %v7539 = vmul.f32 %v7479, %v7508
        %v7540 = vmul.f32 %v7480, %v7512
        %v7541 = vmul.f32 %v7481, %v7516
        %v7542 = vmul.f32 %v7482, %v7520
        %v7543 = vmul.f32 %v7483, %v7524
        %v7544 = vmul.f32 %v7484, %v7528
        %v7553 = vrot.slane %v7537, 2
        %v7554 = vrot.slane %v7538, 2
        %v7555 = vrot.slane %v7539, 2
        %v7556 = vrot.slane %v7540, 2
        %v7557 = vrot.slane %v7541, 2
        %v7558 = vrot.slane %v7542, 2
        %v7559 = vrot.slane %v7543, 2
        %v7560 = vrot.slane %v7544, 2
        %v7569 = vadd.f32 %v7452, %v7553
        %v7570 = vadd.f32 %v7453, %v7554
        %v7571 = vadd.f32 %v7454, %v7555
        %v7572 = vadd.f32 %v7455, %v7556
        %v7573 = vadd.f32 %v7456, %v7557
        %v7574 = vadd.f32 %v7457, %v7558
        %v7575 = vadd.f32 %v7458, %v7559
        %v7576 = vadd.f32 %v7459, %v7560
        %s7577 = scalar_lea.vmem [#allocation14], 56
        %v7578 = vld [vmem:[%s7577] sm:$0xff]
        %v7580 = vlaneseq
        %v7581 = vshrl.u32 %v7580, 7
        %v7582 = vsub.s32 0, %v7581
        %v7583 = vrot.slane %v7578, %v7582
        %v7584 = vlaneseq
        %v7585 = vshrl.u32 %v7584, 7
        %v7586 = vsub.s32 1, %v7585
        %v7587 = vrot.slane %v7578, %v7586
        %v7588 = vlaneseq
        %v7589 = vshrl.u32 %v7588, 7
        %v7590 = vsub.s32 2, %v7589
        %v7591 = vrot.slane %v7578, %v7590
        %v7592 = vlaneseq
        %v7593 = vshrl.u32 %v7592, 7
        %v7594 = vsub.s32 3, %v7593
        %v7595 = vrot.slane %v7578, %v7594
        %v7596 = vlaneseq
        %v7597 = vshrl.u32 %v7596, 7
        %v7598 = vsub.s32 4, %v7597
        %v7599 = vrot.slane %v7578, %v7598
        %v7600 = vlaneseq
        %v7601 = vshrl.u32 %v7600, 7
        %v7602 = vsub.s32 5, %v7601
        %v7603 = vrot.slane %v7578, %v7602
        %v7604 = vlaneseq
        %v7605 = vshrl.u32 %v7604, 7
        %v7606 = vsub.s32 6, %v7605
        %v7607 = vrot.slane %v7578, %v7606
        %v7608 = vlaneseq
        %v7609 = vshrl.u32 %v7608, 7
        %v7610 = vsub.s32 7, %v7609
        %v7611 = vrot.slane %v7578, %v7610
        %v7620 = vmul.f32 %v7092, %v7583
        %v7621 = vmul.f32 %v7077, %v7587
        %v7622 = vmul.f32 %v7078, %v7591
        %v7623 = vmul.f32 %v7079, %v7595
        %v7624 = vmul.f32 %v7080, %v7599
        %v7625 = vmul.f32 %v7081, %v7603
        %v7626 = vmul.f32 %v7082, %v7607
        %v7627 = vmul.f32 %v7083, %v7611
        %v7636 = vrot.slane %v7620, 3
        %v7637 = vrot.slane %v7621, 3
        %v7638 = vrot.slane %v7622, 3
        %v7639 = vrot.slane %v7623, 3
        %v7640 = vrot.slane %v7624, 3
        %v7641 = vrot.slane %v7625, 3
        %v7642 = vrot.slane %v7626, 3
        %v7643 = vrot.slane %v7627, 3
        %v7652 = vadd.f32 %v7569, %v7636
        %v7653 = vadd.f32 %v7570, %v7637
        %v7654 = vadd.f32 %v7571, %v7638
        %v7655 = vadd.f32 %v7572, %v7639
        %v7656 = vadd.f32 %v7573, %v7640
        %v7657 = vadd.f32 %v7574, %v7641
        %v7658 = vadd.f32 %v7575, %v7642
        %v7659 = vadd.f32 %v7576, %v7643
        %7668 = vrot.lane.b32.xlu0 %v6753, 96
        %v7669 = vpop.permute.xlu0 %7668
        %7670 = vrot.lane.b32.xlu0 %v6755, 96
        %v7671 = vpop.permute.xlu0 %7670
        %7672 = vrot.lane.b32.xlu0 %v6796, 96
        %v7673 = vpop.permute.xlu0 %7672
        %7674 = vrot.lane.b32.xlu0 %v6798, 96
        %v7675 = vpop.permute.xlu0 %7674
        %7676 = vrot.lane.b32.xlu0 %v6839, 96
        %v7677 = vpop.permute.xlu0 %7676
        %7678 = vrot.lane.b32.xlu0 %v6841, 96
        %v7679 = vpop.permute.xlu0 %7678
        %7680 = vrot.lane.b32.xlu0 %v6882, 96
        %v7681 = vpop.permute.xlu0 %7680
        %7682 = vrot.lane.b32.xlu0 %v6884, 96
        %v7683 = vpop.permute.xlu0 %7682
        %vm7684 = vcmask 785408
        %v7685 = vsel %vm7684, %v7669, %v7671
        %v7686 = vsel %vm7684, %v7671, %v7673
        %v7687 = vsel %vm7684, %v7673, %v7675
        %v7688 = vsel %vm7684, %v7675, %v7677
        %v7689 = vsel %vm7684, %v7677, %v7679
        %v7690 = vsel %vm7684, %v7679, %v7681
        %v7691 = vsel %vm7684, %v7681, %v7683
        %v7701 = vsel %vm7684, %v7683, %v7669
        %s7702 = scalar_lea.vmem [#allocation14], 64
        %v7703 = vld [vmem:[%s7702] sm:$0xff]
        %v7705 = vlaneseq
        %v7706 = vshrl.u32 %v7705, 7
        %v7707 = vsub.s32 0, %v7706
        %v7708 = vrot.slane %v7703, %v7707
        %v7709 = vlaneseq
        %v7710 = vshrl.u32 %v7709, 7
        %v7711 = vsub.s32 1, %v7710
        %v7712 = vrot.slane %v7703, %v7711
        %v7713 = vlaneseq
        %v7714 = vshrl.u32 %v7713, 7
        %v7715 = vsub.s32 2, %v7714
        %v7716 = vrot.slane %v7703, %v7715
        %v7717 = vlaneseq
        %v7718 = vshrl.u32 %v7717, 7
        %v7719 = vsub.s32 3, %v7718
        %v7720 = vrot.slane %v7703, %v7719
        %v7721 = vlaneseq
        %v7722 = vshrl.u32 %v7721, 7
        %v7723 = vsub.s32 4, %v7722
        %v7724 = vrot.slane %v7703, %v7723
        %v7725 = vlaneseq
        %v7726 = vshrl.u32 %v7725, 7
        %v7727 = vsub.s32 5, %v7726
        %v7728 = vrot.slane %v7703, %v7727
        %v7729 = vlaneseq
        %v7730 = vshrl.u32 %v7729, 7
        %v7731 = vsub.s32 6, %v7730
        %v7732 = vrot.slane %v7703, %v7731
        %v7733 = vlaneseq
        %v7734 = vshrl.u32 %v7733, 7
        %v7735 = vsub.s32 7, %v7734
        %v7736 = vrot.slane %v7703, %v7735
        %v7745 = vmul.f32 %v7685, %v7708
        %v7746 = vmul.f32 %v7686, %v7712
        %v7747 = vmul.f32 %v7687, %v7716
        %v7748 = vmul.f32 %v7688, %v7720
        %v7749 = vmul.f32 %v7689, %v7724
        %v7750 = vmul.f32 %v7690, %v7728
        %v7751 = vmul.f32 %v7691, %v7732
        %v7752 = vmul.f32 %v7701, %v7736
        %7753 = vrot.lane.b32.xlu0 %v6753, 97
        %v7754 = vpop.permute.xlu0 %7753
        %7755 = vrot.lane.b32.xlu0 %v6755, 97
        %v7756 = vpop.permute.xlu0 %7755
        %7757 = vrot.lane.b32.xlu0 %v6796, 97
        %v7758 = vpop.permute.xlu0 %7757
        %7759 = vrot.lane.b32.xlu0 %v6798, 97
        %v7760 = vpop.permute.xlu0 %7759
        %7761 = vrot.lane.b32.xlu0 %v6839, 97
        %v7762 = vpop.permute.xlu0 %7761
        %7763 = vrot.lane.b32.xlu0 %v6841, 97
        %v7764 = vpop.permute.xlu0 %7763
        %7765 = vrot.lane.b32.xlu0 %v6882, 97
        %v7766 = vpop.permute.xlu0 %7765
        %7767 = vrot.lane.b32.xlu0 %v6884, 97
        %v7768 = vpop.permute.xlu0 %7767
        %vm7769 = vcmask 793600
        %v7770 = vsel %vm7769, %v7754, %v7756
        %v7771 = vsel %vm7769, %v7756, %v7758
        %v7772 = vsel %vm7769, %v7758, %v7760
        %v7773 = vsel %vm7769, %v7760, %v7762
        %v7774 = vsel %vm7769, %v7762, %v7764
        %v7775 = vsel %vm7769, %v7764, %v7766
        %v7776 = vsel %vm7769, %v7766, %v7768
        %v7786 = vsel %vm7769, %v7768, %v7754
        %s7787 = scalar_lea.vmem [#allocation14], 72
        %v7788 = vld [vmem:[%s7787] sm:$0xff]
        %v7790 = vlaneseq
        %v7791 = vshrl.u32 %v7790, 7
        %v7792 = vsub.s32 0, %v7791
        %v7793 = vrot.slane %v7788, %v7792
        %v7794 = vlaneseq
        %v7795 = vshrl.u32 %v7794, 7
        %v7796 = vsub.s32 1, %v7795
        %v7797 = vrot.slane %v7788, %v7796
        %v7798 = vlaneseq
        %v7799 = vshrl.u32 %v7798, 7
        %v7800 = vsub.s32 2, %v7799
        %v7801 = vrot.slane %v7788, %v7800
        %v7802 = vlaneseq
        %v7803 = vshrl.u32 %v7802, 7
        %v7804 = vsub.s32 3, %v7803
        %v7805 = vrot.slane %v7788, %v7804
        %v7806 = vlaneseq
        %v7807 = vshrl.u32 %v7806, 7
        %v7808 = vsub.s32 4, %v7807
        %v7809 = vrot.slane %v7788, %v7808
        %v7810 = vlaneseq
        %v7811 = vshrl.u32 %v7810, 7
        %v7812 = vsub.s32 5, %v7811
        %v7813 = vrot.slane %v7788, %v7812
        %v7814 = vlaneseq
        %v7815 = vshrl.u32 %v7814, 7
        %v7816 = vsub.s32 6, %v7815
        %v7817 = vrot.slane %v7788, %v7816
        %v7818 = vlaneseq
        %v7819 = vshrl.u32 %v7818, 7
        %v7820 = vsub.s32 7, %v7819
        %v7821 = vrot.slane %v7788, %v7820
        %v7830 = vmul.f32 %v7770, %v7793
        %v7831 = vmul.f32 %v7771, %v7797
        %v7832 = vmul.f32 %v7772, %v7801
        %v7833 = vmul.f32 %v7773, %v7805
        %v7834 = vmul.f32 %v7774, %v7809
        %v7835 = vmul.f32 %v7775, %v7813
        %v7836 = vmul.f32 %v7776, %v7817
        %v7837 = vmul.f32 %v7786, %v7821
        %v7846 = vrot.slane %v7830, 1
        %v7847 = vrot.slane %v7831, 1
        %v7848 = vrot.slane %v7832, 1
        %v7849 = vrot.slane %v7833, 1
        %v7850 = vrot.slane %v7834, 1
        %v7851 = vrot.slane %v7835, 1
        %v7852 = vrot.slane %v7836, 1
        %v7853 = vrot.slane %v7837, 1
        %v7862 = vadd.f32 %v7745, %v7846
        %v7863 = vadd.f32 %v7746, %v7847
        %v7864 = vadd.f32 %v7747, %v7848
        %v7865 = vadd.f32 %v7748, %v7849
        %v7866 = vadd.f32 %v7749, %v7850
        %v7867 = vadd.f32 %v7750, %v7851
        %v7868 = vadd.f32 %v7751, %v7852
        %v7869 = vadd.f32 %v7752, %v7853
        %s7870 = scalar_lea.vmem [#allocation14], 80
        %v7871 = vld [vmem:[%s7870] sm:$0xff]
        %v7873 = vlaneseq
        %v7874 = vshrl.u32 %v7873, 7
        %v7875 = vsub.s32 0, %v7874
        %v7876 = vrot.slane %v7871, %v7875
        %v7877 = vlaneseq
        %v7878 = vshrl.u32 %v7877, 7
        %v7879 = vsub.s32 1, %v7878
        %v7880 = vrot.slane %v7871, %v7879
        %v7881 = vlaneseq
        %v7882 = vshrl.u32 %v7881, 7
        %v7883 = vsub.s32 2, %v7882
        %v7884 = vrot.slane %v7871, %v7883
        %v7885 = vlaneseq
        %v7886 = vshrl.u32 %v7885, 7
        %v7887 = vsub.s32 3, %v7886
        %v7888 = vrot.slane %v7871, %v7887
        %v7889 = vlaneseq
        %v7890 = vshrl.u32 %v7889, 7
        %v7891 = vsub.s32 4, %v7890
        %v7892 = vrot.slane %v7871, %v7891
        %v7893 = vlaneseq
        %v7894 = vshrl.u32 %v7893, 7
        %v7895 = vsub.s32 5, %v7894
        %v7896 = vrot.slane %v7871, %v7895
        %v7897 = vlaneseq
        %v7898 = vshrl.u32 %v7897, 7
        %v7899 = vsub.s32 6, %v7898
        %v7900 = vrot.slane %v7871, %v7899
        %v7901 = vlaneseq
        %v7902 = vshrl.u32 %v7901, 7
        %v7903 = vsub.s32 7, %v7902
        %v7904 = vrot.slane %v7871, %v7903
        %v7913 = vmul.f32 %v6753, %v7876
        %v7914 = vmul.f32 %v6755, %v7880
        %v7915 = vmul.f32 %v6796, %v7884
        %v7916 = vmul.f32 %v6798, %v7888
        %v7917 = vmul.f32 %v6839, %v7892
        %v7918 = vmul.f32 %v6841, %v7896
        %v7919 = vmul.f32 %v6882, %v7900
        %v7920 = vmul.f32 %v6884, %v7904
        %v7929 = vrot.slane %v7913, 2
        %v7930 = vrot.slane %v7914, 2
        %v7931 = vrot.slane %v7915, 2
        %v7932 = vrot.slane %v7916, 2
        %v7933 = vrot.slane %v7917, 2
        %v7934 = vrot.slane %v7918, 2
        %v7935 = vrot.slane %v7919, 2
        %v7936 = vrot.slane %v7920, 2
        %v7945 = vadd.f32 %v7862, %v7929
        %v7946 = vadd.f32 %v7863, %v7930
        %v7947 = vadd.f32 %v7864, %v7931
        %v7948 = vadd.f32 %v7865, %v7932
        %v7949 = vadd.f32 %v7866, %v7933
        %v7950 = vadd.f32 %v7867, %v7934
        %v7951 = vadd.f32 %v7868, %v7935
        %v7952 = vadd.f32 %v7869, %v7936
        %7953 = vrot.lane.b32.xlu0 %v6884, 1
        %v7954 = vpop.permute.xlu0 %7953
        %7956 = vrot.lane.b32.xlu0 %v6753, 1
        %v7957 = vpop.permute.xlu0 %7956
        %7958 = vrot.lane.b32.xlu0 %v6755, 1
        %v7959 = vpop.permute.xlu0 %7958
        %7960 = vrot.lane.b32.xlu0 %v6796, 1
        %v7961 = vpop.permute.xlu0 %7960
        %7962 = vrot.lane.b32.xlu0 %v6798, 1
        %v7963 = vpop.permute.xlu0 %7962
        %7964 = vrot.lane.b32.xlu0 %v6839, 1
        %v7965 = vpop.permute.xlu0 %7964
        %7966 = vrot.lane.b32.xlu0 %v6841, 1
        %v7967 = vpop.permute.xlu0 %7966
        %7968 = vrot.lane.b32.xlu0 %v6882, 1
        %v7969 = vpop.permute.xlu0 %7968
        %v7970 = vsel %vm1174, %v7957, %v7959
        %v7971 = vsel %vm1174, %v7959, %v7961
        %v7972 = vsel %vm1174, %v7961, %v7963
        %v7973 = vsel %vm1174, %v7963, %v7965
        %v7974 = vsel %vm1174, %v7965, %v7967
        %v7975 = vsel %vm1174, %v7967, %v7969
        %v7976 = vsel %vm1174, %v7969, %v7954
        %v7985 = vsel %vm1174, %v7954, %v7957
        %s7986 = scalar_lea.vmem [#allocation14], 88
        %v7987 = vld [vmem:[%s7986] sm:$0xff]
        %v7989 = vlaneseq
        %v7990 = vshrl.u32 %v7989, 7
        %v7991 = vsub.s32 0, %v7990
        %v7992 = vrot.slane %v7987, %v7991
        %v7993 = vlaneseq
        %v7994 = vshrl.u32 %v7993, 7
        %v7995 = vsub.s32 1, %v7994
        %v7996 = vrot.slane %v7987, %v7995
        %v7997 = vlaneseq
        %v7998 = vshrl.u32 %v7997, 7
        %v7999 = vsub.s32 2, %v7998
        %v8000 = vrot.slane %v7987, %v7999
        %v8001 = vlaneseq
        %v8002 = vshrl.u32 %v8001, 7
        %v8003 = vsub.s32 3, %v8002
        %v8004 = vrot.slane %v7987, %v8003
        %v8005 = vlaneseq
        %v8006 = vshrl.u32 %v8005, 7
        %v8007 = vsub.s32 4, %v8006
        %v8008 = vrot.slane %v7987, %v8007
        %v8009 = vlaneseq
        %v8010 = vshrl.u32 %v8009, 7
        %v8011 = vsub.s32 5, %v8010
        %v8012 = vrot.slane %v7987, %v8011
        %v8013 = vlaneseq
        %v8014 = vshrl.u32 %v8013, 7
        %v8015 = vsub.s32 6, %v8014
        %v8016 = vrot.slane %v7987, %v8015
        %v8017 = vlaneseq
        %v8018 = vshrl.u32 %v8017, 7
        %v8019 = vsub.s32 7, %v8018
        %v8020 = vrot.slane %v7987, %v8019
        %v8029 = vmul.f32 %v7985, %v7992
        %v8030 = vmul.f32 %v7970, %v7996
        %v8031 = vmul.f32 %v7971, %v8000
        %v8032 = vmul.f32 %v7972, %v8004
        %v8033 = vmul.f32 %v7973, %v8008
        %v8034 = vmul.f32 %v7974, %v8012
        %v8035 = vmul.f32 %v7975, %v8016
        %v8036 = vmul.f32 %v7976, %v8020
        %v8045 = vrot.slane %v8029, 3
        %v8046 = vrot.slane %v8030, 3
        %v8047 = vrot.slane %v8031, 3
        %v8048 = vrot.slane %v8032, 3
        %v8049 = vrot.slane %v8033, 3
        %v8050 = vrot.slane %v8034, 3
        %v8051 = vrot.slane %v8035, 3
        %v8052 = vrot.slane %v8036, 3
        %v8061 = vadd.f32 %v7945, %v8045
        %v8062 = vadd.f32 %v7946, %v8046
        %v8063 = vadd.f32 %v7947, %v8047
        %v8064 = vadd.f32 %v7948, %v8048
        %v8065 = vadd.f32 %v7949, %v8049
        %v8066 = vadd.f32 %v7950, %v8050
        %v8067 = vadd.f32 %v7951, %v8051
        %v8068 = vadd.f32 %v7952, %v8052
        %8069 = vrot.lane.b32.xlu0 %v6753, 95
        %v8070 = vpop.permute.xlu0 %8069
        %8071 = vrot.lane.b32.xlu0 %v6755, 95
        %v8072 = vpop.permute.xlu0 %8071
        %8073 = vrot.lane.b32.xlu0 %v6796, 95
        %v8074 = vpop.permute.xlu0 %8073
        %8075 = vrot.lane.b32.xlu0 %v6798, 95
        %v8076 = vpop.permute.xlu0 %8075
        %8077 = vrot.lane.b32.xlu0 %v6839, 95
        %v8078 = vpop.permute.xlu0 %8077
        %8079 = vrot.lane.b32.xlu0 %v6841, 95
        %v8080 = vpop.permute.xlu0 %8079
        %8081 = vrot.lane.b32.xlu0 %v6882, 95
        %v8082 = vpop.permute.xlu0 %8081
        %8083 = vrot.lane.b32.xlu0 %v6884, 95
        %v8084 = vpop.permute.xlu0 %8083
        %vm8085 = vcmask 777216
        %v8086 = vsel %vm8085, %v8070, %v8072
        %v8087 = vsel %vm8085, %v8072, %v8074
        %v8088 = vsel %vm8085, %v8074, %v8076
        %v8089 = vsel %vm8085, %v8076, %v8078
        %v8090 = vsel %vm8085, %v8078, %v8080
        %v8091 = vsel %vm8085, %v8080, %v8082
        %v8092 = vsel %vm8085, %v8082, %v8084
        %v8102 = vsel %vm8085, %v8084, %v8070
        %s8103 = scalar_lea.vmem [#allocation14], 96
        %v8104 = vld [vmem:[%s8103] sm:$0xff]
        %v8106 = vlaneseq
        %v8107 = vshrl.u32 %v8106, 7
        %v8108 = vsub.s32 0, %v8107
        %v8109 = vrot.slane %v8104, %v8108
        %v8110 = vlaneseq
        %v8111 = vshrl.u32 %v8110, 7
        %v8112 = vsub.s32 1, %v8111
        %v8113 = vrot.slane %v8104, %v8112
        %v8114 = vlaneseq
        %v8115 = vshrl.u32 %v8114, 7
        %v8116 = vsub.s32 2, %v8115
        %v8117 = vrot.slane %v8104, %v8116
        %v8118 = vlaneseq
        %v8119 = vshrl.u32 %v8118, 7
        %v8120 = vsub.s32 3, %v8119
        %v8121 = vrot.slane %v8104, %v8120
        %v8122 = vlaneseq
        %v8123 = vshrl.u32 %v8122, 7
        %v8124 = vsub.s32 4, %v8123
        %v8125 = vrot.slane %v8104, %v8124
        %v8126 = vlaneseq
        %v8127 = vshrl.u32 %v8126, 7
        %v8128 = vsub.s32 5, %v8127
        %v8129 = vrot.slane %v8104, %v8128
        %v8130 = vlaneseq
        %v8131 = vshrl.u32 %v8130, 7
        %v8132 = vsub.s32 6, %v8131
        %v8133 = vrot.slane %v8104, %v8132
        %v8134 = vlaneseq
        %v8135 = vshrl.u32 %v8134, 7
        %v8136 = vsub.s32 7, %v8135
        %v8137 = vrot.slane %v8104, %v8136
        %v8146 = vmul.f32 %v8086, %v8109
        %v8147 = vmul.f32 %v8087, %v8113
        %v8148 = vmul.f32 %v8088, %v8117
        %v8149 = vmul.f32 %v8089, %v8121
        %v8150 = vmul.f32 %v8090, %v8125
        %v8151 = vmul.f32 %v8091, %v8129
        %v8152 = vmul.f32 %v8092, %v8133
        %v8153 = vmul.f32 %v8102, %v8137
        %s8154 = scalar_lea.vmem [#allocation14], 104
        %v8155 = vld [vmem:[%s8154] sm:$0xff]
        %v8157 = vlaneseq
        %v8158 = vshrl.u32 %v8157, 7
        %v8159 = vsub.s32 0, %v8158
        %v8160 = vrot.slane %v8155, %v8159
        %v8161 = vlaneseq
        %v8162 = vshrl.u32 %v8161, 7
        %v8163 = vsub.s32 1, %v8162
        %v8164 = vrot.slane %v8155, %v8163
        %v8165 = vlaneseq
        %v8166 = vshrl.u32 %v8165, 7
        %v8167 = vsub.s32 2, %v8166
        %v8168 = vrot.slane %v8155, %v8167
        %v8169 = vlaneseq
        %v8170 = vshrl.u32 %v8169, 7
        %v8171 = vsub.s32 3, %v8170
        %v8172 = vrot.slane %v8155, %v8171
        %v8173 = vlaneseq
        %v8174 = vshrl.u32 %v8173, 7
        %v8175 = vsub.s32 4, %v8174
        %v8176 = vrot.slane %v8155, %v8175
        %v8177 = vlaneseq
        %v8178 = vshrl.u32 %v8177, 7
        %v8179 = vsub.s32 5, %v8178
        %v8180 = vrot.slane %v8155, %v8179
        %v8181 = vlaneseq
        %v8182 = vshrl.u32 %v8181, 7
        %v8183 = vsub.s32 6, %v8182
        %v8184 = vrot.slane %v8155, %v8183
        %v8185 = vlaneseq
        %v8186 = vshrl.u32 %v8185, 7
        %v8187 = vsub.s32 7, %v8186
        %v8188 = vrot.slane %v8155, %v8187
        %v8197 = vmul.f32 %v7685, %v8160
        %v8198 = vmul.f32 %v7686, %v8164
        %v8199 = vmul.f32 %v7687, %v8168
        %v8200 = vmul.f32 %v7688, %v8172
        %v8201 = vmul.f32 %v7689, %v8176
        %v8202 = vmul.f32 %v7690, %v8180
        %v8203 = vmul.f32 %v7691, %v8184
        %v8204 = vmul.f32 %v7701, %v8188
        %v8213 = vrot.slane %v8197, 1
        %v8214 = vrot.slane %v8198, 1
        %v8215 = vrot.slane %v8199, 1
        %v8216 = vrot.slane %v8200, 1
        %v8217 = vrot.slane %v8201, 1
        %v8218 = vrot.slane %v8202, 1
        %v8219 = vrot.slane %v8203, 1
        %v8220 = vrot.slane %v8204, 1
        %v8229 = vadd.f32 %v8146, %v8213
        %v8230 = vadd.f32 %v8147, %v8214
        %v8231 = vadd.f32 %v8148, %v8215
        %v8232 = vadd.f32 %v8149, %v8216
        %v8233 = vadd.f32 %v8150, %v8217
        %v8234 = vadd.f32 %v8151, %v8218
        %v8235 = vadd.f32 %v8152, %v8219
        %v8236 = vadd.f32 %v8153, %v8220
        %8237 = vrot.lane.b32.xlu0 %v6753, 127
        %v8238 = vpop.permute.xlu0 %8237
        %8239 = vrot.lane.b32.xlu0 %v6755, 127
        %v8240 = vpop.permute.xlu0 %8239
        %8241 = vrot.lane.b32.xlu0 %v6796, 127
        %v8242 = vpop.permute.xlu0 %8241
        %8243 = vrot.lane.b32.xlu0 %v6798, 127
        %v8244 = vpop.permute.xlu0 %8243
        %8245 = vrot.lane.b32.xlu0 %v6839, 127
        %v8246 = vpop.permute.xlu0 %8245
        %8247 = vrot.lane.b32.xlu0 %v6841, 127
        %v8248 = vpop.permute.xlu0 %8247
        %8249 = vrot.lane.b32.xlu0 %v6882, 127
        %v8250 = vpop.permute.xlu0 %8249
        %8251 = vrot.lane.b32.xlu0 %v6884, 127
        %v8252 = vpop.permute.xlu0 %8251
        %v8253 = vsel %vm2588, %v8238, %v8240
        %v8254 = vsel %vm2588, %v8240, %v8242
        %v8255 = vsel %vm2588, %v8242, %v8244
        %v8256 = vsel %vm2588, %v8244, %v8246
        %v8257 = vsel %vm2588, %v8246, %v8248
        %v8258 = vsel %vm2588, %v8248, %v8250
        %v8259 = vsel %vm2588, %v8250, %v8252
        %v8269 = vsel %vm2588, %v8252, %v8238
        %s8270 = scalar_lea.vmem [#allocation14], 112
        %v8271 = vld [vmem:[%s8270] sm:$0xff]
        %v8273 = vlaneseq
        %v8274 = vshrl.u32 %v8273, 7
        %v8275 = vsub.s32 0, %v8274
        %v8276 = vrot.slane %v8271, %v8275
        %v8277 = vlaneseq
        %v8278 = vshrl.u32 %v8277, 7
        %v8279 = vsub.s32 1, %v8278
        %v8280 = vrot.slane %v8271, %v8279
        %v8281 = vlaneseq
        %v8282 = vshrl.u32 %v8281, 7
        %v8283 = vsub.s32 2, %v8282
        %v8284 = vrot.slane %v8271, %v8283
        %v8285 = vlaneseq
        %v8286 = vshrl.u32 %v8285, 7
        %v8287 = vsub.s32 3, %v8286
        %v8288 = vrot.slane %v8271, %v8287
        %v8289 = vlaneseq
        %v8290 = vshrl.u32 %v8289, 7
        %v8291 = vsub.s32 4, %v8290
        %v8292 = vrot.slane %v8271, %v8291
        %v8293 = vlaneseq
        %v8294 = vshrl.u32 %v8293, 7
        %v8295 = vsub.s32 5, %v8294
        %v8296 = vrot.slane %v8271, %v8295
        %v8297 = vlaneseq
        %v8298 = vshrl.u32 %v8297, 7
        %v8299 = vsub.s32 6, %v8298
        %v8300 = vrot.slane %v8271, %v8299
        %v8301 = vlaneseq
        %v8302 = vshrl.u32 %v8301, 7
        %v8303 = vsub.s32 7, %v8302
        %v8304 = vrot.slane %v8271, %v8303
        %v8313 = vmul.f32 %v8253, %v8276
        %v8314 = vmul.f32 %v8254, %v8280
        %v8315 = vmul.f32 %v8255, %v8284
        %v8316 = vmul.f32 %v8256, %v8288
        %v8317 = vmul.f32 %v8257, %v8292
        %v8318 = vmul.f32 %v8258, %v8296
        %v8319 = vmul.f32 %v8259, %v8300
        %v8320 = vmul.f32 %v8269, %v8304
        %v8329 = vrot.slane %v8313, 2
        %v8330 = vrot.slane %v8314, 2
        %v8331 = vrot.slane %v8315, 2
        %v8332 = vrot.slane %v8316, 2
        %v8333 = vrot.slane %v8317, 2
        %v8334 = vrot.slane %v8318, 2
        %v8335 = vrot.slane %v8319, 2
        %v8336 = vrot.slane %v8320, 2
        %v8345 = vadd.f32 %v8229, %v8329
        %v8346 = vadd.f32 %v8230, %v8330
        %v8347 = vadd.f32 %v8231, %v8331
        %v8348 = vadd.f32 %v8232, %v8332
        %v8349 = vadd.f32 %v8233, %v8333
        %v8350 = vadd.f32 %v8234, %v8334
        %v8351 = vadd.f32 %v8235, %v8335
        %v8352 = vadd.f32 %v8236, %v8336
        %s8353 = scalar_lea.vmem [#allocation14], 120
        %v8354 = vld [vmem:[%s8353] sm:$0xff]
        %v8356 = vlaneseq
        %v8357 = vshrl.u32 %v8356, 7
        %v8358 = vsub.s32 0, %v8357
        %v8359 = vrot.slane %v8354, %v8358
        %v8360 = vlaneseq
        %v8361 = vshrl.u32 %v8360, 7
        %v8362 = vsub.s32 1, %v8361
        %v8363 = vrot.slane %v8354, %v8362
        %v8364 = vlaneseq
        %v8365 = vshrl.u32 %v8364, 7
        %v8366 = vsub.s32 2, %v8365
        %v8367 = vrot.slane %v8354, %v8366
        %v8368 = vlaneseq
        %v8369 = vshrl.u32 %v8368, 7
        %v8370 = vsub.s32 3, %v8369
        %v8371 = vrot.slane %v8354, %v8370
        %v8372 = vlaneseq
        %v8373 = vshrl.u32 %v8372, 7
        %v8374 = vsub.s32 4, %v8373
        %v8375 = vrot.slane %v8354, %v8374
        %v8376 = vlaneseq
        %v8377 = vshrl.u32 %v8376, 7
        %v8378 = vsub.s32 5, %v8377
        %v8379 = vrot.slane %v8354, %v8378
        %v8380 = vlaneseq
        %v8381 = vshrl.u32 %v8380, 7
        %v8382 = vsub.s32 6, %v8381
        %v8383 = vrot.slane %v8354, %v8382
        %v8384 = vlaneseq
        %v8385 = vshrl.u32 %v8384, 7
        %v8386 = vsub.s32 7, %v8385
        %v8387 = vrot.slane %v8354, %v8386
        %v8396 = vmul.f32 %v6753, %v8359
        %v8397 = vmul.f32 %v6755, %v8363
        %v8398 = vmul.f32 %v6796, %v8367
        %v8399 = vmul.f32 %v6798, %v8371
        %v8400 = vmul.f32 %v6839, %v8375
        %v8401 = vmul.f32 %v6841, %v8379
        %v8402 = vmul.f32 %v6882, %v8383
        %v8403 = vmul.f32 %v6884, %v8387
        %v8412 = vrot.slane %v8396, 3
        %v8413 = vrot.slane %v8397, 3
        %v8414 = vrot.slane %v8398, 3
        %v8415 = vrot.slane %v8399, 3
        %v8416 = vrot.slane %v8400, 3
        %v8417 = vrot.slane %v8401, 3
        %v8418 = vrot.slane %v8402, 3
        %v8419 = vrot.slane %v8403, 3
        %v8428 = vadd.f32 %v8345, %v8412
        %v8429 = vadd.f32 %v8346, %v8413
        %v8430 = vadd.f32 %v8347, %v8414
        %v8431 = vadd.f32 %v8348, %v8415
        %v8432 = vadd.f32 %v8349, %v8416
        %v8433 = vadd.f32 %v8350, %v8417
        %v8434 = vadd.f32 %v8351, %v8418
        %v8435 = vadd.f32 %v8352, %v8419
        %v8444 = vrot.slane %v7652, 4
        %v8445 = vrot.slane %v7653, 4
        %v8446 = vrot.slane %v7654, 4
        %v8447 = vrot.slane %v7655, 4
        %v8448 = vrot.slane %v7656, 4
        %v8449 = vrot.slane %v7657, 4
        %v8450 = vrot.slane %v7658, 4
        %v8451 = vrot.slane %v7659, 4
        %v8468 = vrot.slane %v8428, 4
        %v8469 = vrot.slane %v8429, 4
        %v8470 = vrot.slane %v8430, 4
        %v8471 = vrot.slane %v8431, 4
        %v8472 = vrot.slane %v8432, 4
        %v8473 = vrot.slane %v8433, 4
        %v8474 = vrot.slane %v8434, 4
        %v8475 = vrot.slane %v8435, 4
        %v8484 = vld [vmem:[#allocation2] sm:$0x1]
        %8486 = vset.pattern.permute.xlu0 0
        %8487 = vperm.xlu0 %8486, %v8484
        %v8488 = vpop.permute.xlu0 %8487
        %v8490 = vlaneseq
        %v8491 = vshrl.u32 %v8490, 7
        %v8492 = vsub.s32 0, %v8491
        %v8493 = vrot.slane %v8488, %v8492
        %v8494 = vadd.f32 %v7285, %v8493
        %v8495 = vadd.f32 %v7286, %v8493
        %v8496 = vadd.f32 %v7287, %v8493
        %v8497 = vadd.f32 %v7288, %v8493
        %v8498 = vadd.f32 %v7289, %v8493
        %v8499 = vadd.f32 %v7290, %v8493
        %v8500 = vadd.f32 %v7291, %v8493
        %v8501 = vadd.f32 %v7292, %v8493
        %v8502 = vadd.f32 %v8444, %v8493
        %v8503 = vadd.f32 %v8445, %v8493
        %v8504 = vadd.f32 %v8446, %v8493
        %v8505 = vadd.f32 %v8447, %v8493
        %v8506 = vadd.f32 %v8448, %v8493
        %v8507 = vadd.f32 %v8449, %v8493
        %v8508 = vadd.f32 %v8450, %v8493
        %v8509 = vadd.f32 %v8451, %v8493
        %v8510 = vadd.f32 %v8061, %v8493
        %v8511 = vadd.f32 %v8062, %v8493
        %v8512 = vadd.f32 %v8063, %v8493
        %v8513 = vadd.f32 %v8064, %v8493
        %v8514 = vadd.f32 %v8065, %v8493
        %v8515 = vadd.f32 %v8066, %v8493
        %v8516 = vadd.f32 %v8067, %v8493
        %v8517 = vadd.f32 %v8068, %v8493
        %v8518 = vadd.f32 %v8468, %v8493
        %v8519 = vadd.f32 %v8469, %v8493
        %v8520 = vadd.f32 %v8470, %v8493
        %v8521 = vadd.f32 %v8471, %v8493
        %v8522 = vadd.f32 %v8472, %v8493
        %v8523 = vadd.f32 %v8473, %v8493
        %v8524 = vadd.f32 %v8474, %v8493
        %v8525 = vadd.f32 %v8475, %v8493
        %v8558 = vcombine.low %v8494, %v8495
        %v8559 = vcombine.low %v8496, %v8497
        %v8560 = vcombine.low %v8498, %v8499
        %v8561 = vcombine.low %v8500, %v8501
        %v8563 = vunpack.c.l.s4 1966171168
        %v8564 = vunpack.c.0.s8 %v8563
        %v8565 = vlaneseq
        %v8566 = vshrl.u32 %v8565, 7
        %v8567 = vsub.s32 %v8564, %v8566
        %v8568 = vrot.slane %v8558, %v8567
        %v8570 = vunpack.c.l.s4 1966171168
        %v8571 = vunpack.c.0.s8 %v8570
        %v8572 = vlaneseq
        %v8573 = vshrl.u32 %v8572, 7
        %v8574 = vsub.s32 %v8571, %v8573
        %v8575 = vrot.slane %v8559, %v8574
        %v8577 = vunpack.c.l.s4 1966171168
        %v8578 = vunpack.c.0.s8 %v8577
        %v8579 = vlaneseq
        %v8580 = vshrl.u32 %v8579, 7
        %v8581 = vsub.s32 %v8578, %v8580
        %v8582 = vrot.slane %v8560, %v8581
        %v8584 = vunpack.c.l.s4 1966171168
        %v8585 = vunpack.c.0.s8 %v8584
        %v8586 = vlaneseq
        %v8587 = vshrl.u32 %v8586, 7
        %v8588 = vsub.s32 %v8585, %v8587
        %v8589 = vrot.slane %v8561, %v8588
        %v8590 = vcombine.low %v8568, %v8575
        %v8591 = vcombine.low %v8582, %v8589
        %v8593 = vunpack.c.l.s4 1966171168
        %v8594 = vunpack.c.0.s8 %v8593
        %v8595 = vlaneseq
        %v8596 = vshrl.u32 %v8595, 7
        %v8597 = vsub.s32 %v8594, %v8596
        %v8598 = vrot.slane %v8590, %v8597
        %v8600 = vunpack.c.l.s4 1966171168
        %v8601 = vunpack.c.0.s8 %v8600
        %v8602 = vlaneseq
        %v8603 = vshrl.u32 %v8602, 7
        %v8604 = vsub.s32 %v8601, %v8603
        %v8605 = vrot.slane %v8591, %v8604
        %v8606 = vcombine.low %v8598, %v8605
        %v8607 = vcombine.low %v8502, %v8503
        %v8608 = vcombine.low %v8504, %v8505
        %v8609 = vcombine.low %v8506, %v8507
        %v8610 = vcombine.low %v8508, %v8509
        %v8612 = vunpack.c.l.s4 1966171168
        %v8613 = vunpack.c.0.s8 %v8612
        %v8614 = vlaneseq
        %v8615 = vshrl.u32 %v8614, 7
        %v8616 = vsub.s32 %v8613, %v8615
        %v8617 = vrot.slane %v8607, %v8616
        %v8619 = vunpack.c.l.s4 1966171168
        %v8620 = vunpack.c.0.s8 %v8619
        %v8621 = vlaneseq
        %v8622 = vshrl.u32 %v8621, 7
        %v8623 = vsub.s32 %v8620, %v8622
        %v8624 = vrot.slane %v8608, %v8623
        %v8626 = vunpack.c.l.s4 1966171168
        %v8627 = vunpack.c.0.s8 %v8626
        %v8628 = vlaneseq
        %v8629 = vshrl.u32 %v8628, 7
        %v8630 = vsub.s32 %v8627, %v8629
        %v8631 = vrot.slane %v8609, %v8630
        %v8633 = vunpack.c.l.s4 1966171168
        %v8634 = vunpack.c.0.s8 %v8633
        %v8635 = vlaneseq
        %v8636 = vshrl.u32 %v8635, 7
        %v8637 = vsub.s32 %v8634, %v8636
        %v8638 = vrot.slane %v8610, %v8637
        %v8639 = vcombine.low %v8617, %v8624
        %v8640 = vcombine.low %v8631, %v8638
        %v8642 = vunpack.c.l.s4 1966171168
        %v8643 = vunpack.c.0.s8 %v8642
        %v8644 = vlaneseq
        %v8645 = vshrl.u32 %v8644, 7
        %v8646 = vsub.s32 %v8643, %v8645
        %v8647 = vrot.slane %v8639, %v8646
        %v8649 = vunpack.c.l.s4 1966171168
        %v8650 = vunpack.c.0.s8 %v8649
        %v8651 = vlaneseq
        %v8652 = vshrl.u32 %v8651, 7
        %v8653 = vsub.s32 %v8650, %v8652
        %v8654 = vrot.slane %v8640, %v8653
        %v8655 = vcombine.low %v8647, %v8654
        %v8656 = vcombine.low %v8510, %v8511
        %v8657 = vcombine.low %v8512, %v8513
        %v8658 = vcombine.low %v8514, %v8515
        %v8659 = vcombine.low %v8516, %v8517
        %v8661 = vunpack.c.l.s4 1966171168
        %v8662 = vunpack.c.0.s8 %v8661
        %v8663 = vlaneseq
        %v8664 = vshrl.u32 %v8663, 7
        %v8665 = vsub.s32 %v8662, %v8664
        %v8666 = vrot.slane %v8656, %v8665
        %v8668 = vunpack.c.l.s4 1966171168
        %v8669 = vunpack.c.0.s8 %v8668
        %v8670 = vlaneseq
        %v8671 = vshrl.u32 %v8670, 7
        %v8672 = vsub.s32 %v8669, %v8671
        %v8673 = vrot.slane %v8657, %v8672
        %v8675 = vunpack.c.l.s4 1966171168
        %v8676 = vunpack.c.0.s8 %v8675
        %v8677 = vlaneseq
        %v8678 = vshrl.u32 %v8677, 7
        %v8679 = vsub.s32 %v8676, %v8678
        %v8680 = vrot.slane %v8658, %v8679
        %v8682 = vunpack.c.l.s4 1966171168
        %v8683 = vunpack.c.0.s8 %v8682
        %v8684 = vlaneseq
        %v8685 = vshrl.u32 %v8684, 7
        %v8686 = vsub.s32 %v8683, %v8685
        %v8687 = vrot.slane %v8659, %v8686
        %v8688 = vcombine.low %v8666, %v8673
        %v8689 = vcombine.low %v8680, %v8687
        %v8691 = vunpack.c.l.s4 1966171168
        %v8692 = vunpack.c.0.s8 %v8691
        %v8693 = vlaneseq
        %v8694 = vshrl.u32 %v8693, 7
        %v8695 = vsub.s32 %v8692, %v8694
        %v8696 = vrot.slane %v8688, %v8695
        %v8698 = vunpack.c.l.s4 1966171168
        %v8699 = vunpack.c.0.s8 %v8698
        %v8700 = vlaneseq
        %v8701 = vshrl.u32 %v8700, 7
        %v8702 = vsub.s32 %v8699, %v8701
        %v8703 = vrot.slane %v8689, %v8702
        %v8704 = vcombine.low %v8696, %v8703
        %v8705 = vcombine.low %v8518, %v8519
        %v8706 = vcombine.low %v8520, %v8521
        %v8707 = vcombine.low %v8522, %v8523
        %v8708 = vcombine.low %v8524, %v8525
        %v8710 = vunpack.c.l.s4 1966171168
        %v8711 = vunpack.c.0.s8 %v8710
        %v8712 = vlaneseq
        %v8713 = vshrl.u32 %v8712, 7
        %v8714 = vsub.s32 %v8711, %v8713
        %v8715 = vrot.slane %v8705, %v8714
        %v8717 = vunpack.c.l.s4 1966171168
        %v8718 = vunpack.c.0.s8 %v8717
        %v8719 = vlaneseq
        %v8720 = vshrl.u32 %v8719, 7
        %v8721 = vsub.s32 %v8718, %v8720
        %v8722 = vrot.slane %v8706, %v8721
        %v8724 = vunpack.c.l.s4 1966171168
        %v8725 = vunpack.c.0.s8 %v8724
        %v8726 = vlaneseq
        %v8727 = vshrl.u32 %v8726, 7
        %v8728 = vsub.s32 %v8725, %v8727
        %v8729 = vrot.slane %v8707, %v8728
        %v8731 = vunpack.c.l.s4 1966171168
        %v8732 = vunpack.c.0.s8 %v8731
        %v8733 = vlaneseq
        %v8734 = vshrl.u32 %v8733, 7
        %v8735 = vsub.s32 %v8732, %v8734
        %v8736 = vrot.slane %v8708, %v8735
        %v8737 = vcombine.low %v8715, %v8722
        %v8738 = vcombine.low %v8729, %v8736
        %v8740 = vunpack.c.l.s4 1966171168
        %v8741 = vunpack.c.0.s8 %v8740
        %v8742 = vlaneseq
        %v8743 = vshrl.u32 %v8742, 7
        %v8744 = vsub.s32 %v8741, %v8743
        %v8745 = vrot.slane %v8737, %v8744
        %v8747 = vunpack.c.l.s4 1966171168
        %v8748 = vunpack.c.0.s8 %v8747
        %v8749 = vlaneseq
        %v8750 = vshrl.u32 %v8749, 7
        %v8751 = vsub.s32 %v8748, %v8750
        %v8752 = vrot.slane %v8738, %v8751
        %v8753 = vcombine.low %v8745, %v8752
        %8758 = vst [vmem:[%s692] sm:$0xff] %v8606
        %8759 = vst [vmem:[%s692 + $0x8] sm:$0xff] %v8655
        %8760 = vst [vmem:[%s692 + $0x10] sm:$0xff] %v8704
        %8761 = vst [vmem:[%s692 + $0x18] sm:$0xff] %v8753
        %p8762 = scmp.lt.s32.totalorder %s36, 1
        %s8763 = scalar_select %p8762, %s36, 1
        %s8764 = smul.addr %s8763, 32
        %s8765 = scalar_lea.vmem %s18, %s8764
        // Predicated region
        $region125: #{conv_decoder_forward.1} parent=91 // pred_check
          %p8766 = pneg %p437
        $region126: #{conv_decoder_forward.1} parent=91 // pred_check_branch
          %8768 = sbr.rel (%p8766) target = $region128
        $region127: #{conv_decoder_forward.1} parent=91 // pred_region
          _
        $region128: #{conv_decoder_forward.1} parent=91 // pred_fallthru
          _
      $region92: #{conv_decoder_forward.1} parent=5 // pred_fallthru
        _
      %p8769 = scmp.le.s32.totalorder 2, %s31
      // Predicated region
      $region129: #{conv_decoder_forward.1} parent=5 // pred_check
        %p8770 = pneg %p8769
      $region130: #{conv_decoder_forward.1} parent=5 // pred_check_branch
        %8772 = sbr.rel (%p8770) target = $region132
      $region131: #{conv_decoder_forward.1} parent=5 // pred_region
        %s8773 = ssub.s32 %s31, 2
        // Predicated region
        $region133: #{conv_decoder_forward.1} parent=131 // pred_check
          %p8774 = pneg %p443
        $region134: #{conv_decoder_forward.1} parent=131 // pred_check_branch
          %8776 = sbr.rel (%p8774) target = $region136
        $region135: #{conv_decoder_forward.1} parent=131 // pred_region
          %p8777 = scmp.lt.s32.totalorder %s37, 1
          %s8778 = scalar_select %p8777, %s37, 1
          %s8779 = smul.addr %s8778, 32
          %s8780 = scalar_lea.vmem %s18, %s8779
        $region136: #{conv_decoder_forward.1} parent=131 // pred_fallthru
          _
      $region132: #{conv_decoder_forward.1} parent=5 // pred_fallthru
        _
    $region6: #{conv_decoder_forward.1} parent=1 // loop_footer
      %s35 = sadd.s32 1, %s31
    $region7: #{conv_decoder_forward.1} parent=1 // loop_footer_branch
      %30 = sbr.rel target = $region3
    $region8: #{conv_decoder_forward.1} parent=1 // loop_exit
      _
    %8781 = vsyncpa [#allocation4], 1
    %s8782 = scalar_lea.sflag [#allocation4], 1
    %8783 = vsyncpa %s8782, 1
    %8784 = vsyncpa [#allocation6], 1
    %8785 = vsyncpa [#allocation9], 1
    %8786 = vsyncpa [#allocation12], 1
    %8787 = vsyncpa [#allocation15], 1

</llo_original>
